<compile_context>
chip_gen: v7x
topology: tpu7x:2x2x1
jax: 0.10.0
libtpu: 0.0.40
codegen_flags: <defaults>
</compile_context>

<pallas_src>
import math

import numpy as np
import jax
import jax.numpy as jnp
from jax.experimental import pallas as pl
from jax.experimental.pallas import tpu as pltpu


def _round_up(x, m):
    return (x + m - 1) // m * m


def _pe_kernel(x_ref, r_ref, scale_ref, phase_ref, idm_ref, o_ref):
    # x_ref:     (T, LC)   LC = G rows * C channels (multiple of 128 lanes)
    # r_ref:     (LC, LF)  block-diagonal replicate+frequency matrix (resident)
    # scale_ref: (1, LF)   per-output-lane window weight (0 on identity lanes)
    # phase_ref: (1, LF)   0 (identity / sin lanes) or pi/2 (cos lanes)
    # idm_ref:   (1, LF)   1 on identity lanes, 0 elsewhere
    # o_ref:     (T, LF)   grouped output rows
    x = x_ref[...].astype(jnp.float32)
    # arg[:, g*F + k] = freq(k) * x[:, g*C + (k % C)] ; identity lanes -> x exactly.
    # HIGHEST precision keeps the f32 operand exact on the MXU.
    arg = jnp.dot(x, r_ref[...],
                  precision=jax.lax.Precision.HIGHEST,
                  preferred_element_type=jnp.float32)
    # Single transcendental per output element: cos(a) == sin(a + pi/2).
    trig = jnp.sin(arg + phase_ref[...])
    # Mask-based epilogue: two FMAs per vreg, no int compares / vselects.
    out = idm_ref[...] * arg + scale_ref[...] * trig
    o_ref[...] = out.astype(o_ref.dtype)   # single lane-dense, unmasked full-tile store


def windowed_weight(j, *, cur_iter, wait_iters, max_freq_iter, n_freqs):
    """Host-side replica of WeightedWindowedPE.weight(j)."""
    if max_freq_iter == 0:
        return 1.0
    if cur_iter < wait_iters:
        return 0.0
    if cur_iter > max_freq_iter:
        return 1.0
    ci = cur_iter - wait_iters
    alpha = ci / max_freq_iter * n_freqs
    return (1.0 - math.cos(math.pi * float(np.clip(alpha - j, 0.0, 1.0)))) / 2.0


def _vmem_capacity_bytes():
    try:
        return int(pltpu.get_tpu_info().vmem_capacity_bytes)
    except Exception:
        return 64 * 1024 * 1024   # conservative fallback: v7x per-TensorCore VMEM


def weighted_windowed_pe(x, freq_bands, band_weights, *, exclude_identity=False,
                         pe_weight=None, tile_rows=32768):
    """Pallas forward of WeightedWindowedPE.

    x: (..., C).  freq_bands / band_weights: length-n_freqs host arrays
    (band_weights already evaluated for the current iteration).
    Returns (..., C * (2*n_freqs + (0 if exclude_identity else 1))).
    """
    x = jnp.asarray(x)
    *lead, C = x.shape
    N = int(np.prod(lead)) if lead else 1

    freq_bands = np.asarray(freq_bands, dtype=np.float64)
    w = np.asarray(band_weights, dtype=np.float64)
    if pe_weight is not None:
        w = w * np.asarray(pe_weight, dtype=np.float64)
    n_freqs = int(freq_bands.shape[0])

    # ---- Per-output-lane tables for a single input row (tiny, host side) -----
    lf, ls, lp, li = [], [], [], []
    if not exclude_identity:
        lf.append(np.ones(C)); ls.append(np.zeros(C))
        lp.append(np.zeros(C)); li.append(np.ones(C))
    for j in range(n_freqs):
        f = float(freq_bands[j]); wj = float(w[j])
        lf.append(np.full(C, f)); ls.append(np.full(C, wj))          # sin lanes
        lp.append(np.zeros(C));   li.append(np.zeros(C))
        lf.append(np.full(C, f)); ls.append(np.full(C, wj))          # cos lanes
        lp.append(np.full(C, np.pi / 2.0)); li.append(np.zeros(C))
    lane_freq = np.concatenate(lf)
    F = int(lane_freq.shape[0])
    lane_scale = np.concatenate(ls)
    lane_phase = np.concatenate(lp)
    lane_idm = np.concatenate(li)
    # Per-row replicate+frequency matrix: R[c, k] = freq(k) if (k % C == c) else 0.
    rep = (np.arange(F)[None, :] % C) == np.arange(C)[:, None]
    r_small = rep * lane_freq[None, :]                                # (C, F)

    # ---- 128-lane row grouping (free row-major reshape, no transpose) --------
    G = 128 // math.gcd(C, 128)           # rows folded per super-row
    LC = G * C                            # grouped input lane width (mult. of 128)
    LF = G * F                            # grouped output lane width (mult. of 128)
    r_big = np.kron(np.eye(G), r_small).astype(np.float32)            # (LC, LF)
    scale_b = np.tile(lane_scale, G).reshape(1, LF).astype(np.float32)
    phase_b = np.tile(lane_phase, G).reshape(1, LF).astype(np.float32)
    idm_b = np.tile(lane_idm, G).reshape(1, LF).astype(np.float32)

    x_item = jnp.dtype(x.dtype).itemsize
    out_item = x_item

    # ---- Row tiling (in super-rows of G original rows) ------------------------
    SR = max(1, -(-N // G))               # super-rows of real data
    req_sr = max(8, _round_up(max(tile_rows // G, 1), 8))
    tile_sr = max(8, _round_up(min(req_sr, SR), 8))
    # Keep >= 2 grid steps when there is real work so the "parallel" axis can
    # be split across the two v7x TensorCores (irrelevant but harmless on v5e/v6e).
    if SR >= 16:
        tile_sr = min(tile_sr, _round_up((SR + 1) // 2, 8))

    def _footprint(t):
        return (2 * t * (LC * x_item + LF * out_item)   # double-buffered in/out tiles
                + LC * LF * 4                            # resident R
                + 3 * 8 * LF * 4)                        # resident lane tables (sublane pad)

    vmem_cap = _vmem_capacity_bytes()
    budget = (vmem_cap * 11) // 20        # ~55%: headroom for compiler scratch
    while tile_sr > 8 and _footprint(tile_sr) > budget:
        tile_sr -= 8

    grid_n = -(-SR // tile_sr)
    SR_pad = grid_n * tile_sr
    rows_pad = SR_pad * G

    xf = x.reshape(N, C)
    if rows_pad != N:
        xf = jnp.pad(xf, ((0, rows_pad - N), (0, 0)))
    xg = xf.reshape(SR_pad, LC)

    vmem_limit = int(min(vmem_cap - 4 * 1024 * 1024,
                         max(_footprint(tile_sr) + 8 * 1024 * 1024, 32 * 1024 * 1024)))

    cost = pl.CostEstimate(
        flops=int(2 * SR_pad * LC * LF + 4 * SR_pad * LF),
        transcendentals=int(SR_pad * LF),
        bytes_accessed=int(x_item * SR_pad * LC + out_item * SR_pad * LF
                           + 4 * (LC * LF + 3 * LF)),
    )

    out = pl.pallas_call(
        _pe_kernel,
        out_shape=jax.ShapeDtypeStruct((SR_pad, LF), x.dtype),
        grid_spec=pltpu.PrefetchScalarGridSpec(
            num_scalar_prefetch=0,
            grid=(grid_n,),
            in_specs=[
                pl.BlockSpec((tile_sr, LC), lambda i: (i, 0)),   # x rows (pipelined)
                pl.BlockSpec((LC, LF), lambda i: (0, 0)),        # R (resident)
                pl.BlockSpec((1, LF), lambda i: (0, 0)),         # scale (resident)
                pl.BlockSpec((1, LF), lambda i: (0, 0)),         # phase (resident)
                pl.BlockSpec((1, LF), lambda i: (0, 0)),         # identity mask (resident)
            ],
            out_specs=pl.BlockSpec((tile_sr, LF), lambda i: (i, 0)),
        ),
        compiler_params=pltpu.CompilerParams(
            dimension_semantics=("parallel",),
            vmem_limit_bytes=vmem_limit,
        ),
        cost_estimate=cost,
    )(xg, jnp.asarray(r_big), jnp.asarray(scale_b), jnp.asarray(phase_b),
      jnp.asarray(idm_b))

    out = out.reshape(rows_pad, F)
    if rows_pad != N:
        out = out[:N]
    return out.reshape(*lead, F)


if __name__ == "__main__":
    # Small config consistent with the module (nlf: 4-D ray parameterization).
    in_channels = 4
    n_freqs = 6
    freq_multiplier = 2.0
    wait_iters = 0
    max_freq_iter = 100.0
    cur_iter = 30            # mid-schedule -> mixed window weights
    exclude_identity = False

    # Host-side schedule (same math as the PyTorch module's __init__ / weight()).
    freq_bands = freq_multiplier ** np.linspace(1.0, n_freqs, n_freqs)
    band_weights = np.array([
        windowed_weight(j, cur_iter=cur_iter, wait_iters=wait_iters,
                        max_freq_iter=max_freq_iter, n_freqs=n_freqs)
        for j in range(n_freqs)
    ])
    # NOTE: self.dummy_layer (nn.Linear(1,1)) is never used in forward(), so it
    # is intentionally not instantiated here.

    key = jax.random.PRNGKey(0)
    x = jax.random.normal(key, (2, 128, in_channels), dtype=jnp.float32)

    out = weighted_windowed_pe(x, freq_bands, band_weights,
                               exclude_identity=exclude_identity)
    out = jax.block_until_ready(out)

    # Pure-JAX reference mirroring WeightedWindowedPE.forward (no pe_weight path).
    parts = [] if exclude_identity else [x]
    for j in range(n_freqs):
        f = jnp.float32(freq_bands[j])
        wj = jnp.float32(band_weights[j])
        parts += [wj * jnp.sin(f * x), wj * jnp.cos(f * x)]
    ref = jnp.concatenate(parts, axis=-1)

    out_channels = in_channels * (2 * n_freqs + (0 if exclude_identity else 1))
    assert out.shape == (2, 128, out_channels), out.shape
    assert jnp.allclose(out, ref, atol=2e-4, rtol=2e-4), \
        float(jnp.max(jnp.abs(out - ref)))
    print("KERNEL_OK")
</pallas_src>

<mosaic_0001>
module attributes {stable_mosaic.version = 11 : i64} {
  func.func @_pe_kernel(%arg0: i32, %arg1: memref<8x128xf32, #tpu.memory_space<vmem>>, %arg2: memref<128x1664xf32, #tpu.memory_space<vmem>>, %arg3: memref<1x1664xf32, #tpu.memory_space<vmem>>, %arg4: memref<1x1664xf32, #tpu.memory_space<vmem>>, %arg5: memref<1x1664xf32, #tpu.memory_space<vmem>>, %arg6: memref<8x1664xf32, #tpu.memory_space<vmem>>) attributes {dimension_semantics = [#tpu.dimension_semantics<parallel>], iteration_bounds = array<i64: 1>, scalar_prefetch = 0 : i64, scratch_operands = 0 : i64, tpu.core_type = #tpu.core_type<tc>, window_params = [{transform_indices = @transform_0, window_bounds = array<i64: 8, 128>}, {pipeline_mode = #tpu.pipeline_mode<synchronous>, transform_indices = @transform_1, window_bounds = array<i64: 128, 1664>}, {pipeline_mode = #tpu.pipeline_mode<synchronous>, transform_indices = @transform_2, window_bounds = array<i64: 1, 1664>}, {pipeline_mode = #tpu.pipeline_mode<synchronous>, transform_indices = @transform_3, window_bounds = array<i64: 1, 1664>}, {pipeline_mode = #tpu.pipeline_mode<synchronous>, transform_indices = @transform_4, window_bounds = array<i64: 1, 1664>}, {transform_indices = @transform_5, window_bounds = array<i64: 8, 1664>}]} {
    %c0 = arith.constant 0 : index
    %c0_0 = arith.constant 0 : index
    %0 = vector.load %arg1[%c0, %c0_0] : memref<8x128xf32, #tpu.memory_space<vmem>>, vector<8x128xf32>
    %c0_1 = arith.constant 0 : index
    %c0_2 = arith.constant 0 : index
    %1 = vector.load %arg2[%c0_1, %c0_2] : memref<128x1664xf32, #tpu.memory_space<vmem>>, vector<128x1664xf32>
    %cst = arith.constant dense<0.000000e+00> : vector<8x1664xf32>
    %2 = tpu.matmul %0, %1, %cst {dimension_numbers = #tpu.dot_dimension_numbers<[1], [0], [0], [1], [0, 0, 1, 1], [], []>, precision = #tpu.contract_precision<fp32>} : vector<8x128xf32>, vector<128x1664xf32>, vector<8x1664xf32> -> vector<8x1664xf32>
    %c0_3 = arith.constant 0 : index
    %c0_4 = arith.constant 0 : index
    %3 = vector.load %arg4[%c0_3, %c0_4] : memref<1x1664xf32, #tpu.memory_space<vmem>>, vector<1x1664xf32>
    %4 = vector.broadcast %3 : vector<1x1664xf32> to vector<8x1664xf32>
    %5 = arith.addf %2, %4 : vector<8x1664xf32>
    %6 = math.sin %5 : vector<8x1664xf32>
    %c0_5 = arith.constant 0 : index
    %c0_6 = arith.constant 0 : index
    %7 = vector.load %arg5[%c0_5, %c0_6] : memref<1x1664xf32, #tpu.memory_space<vmem>>, vector<1x1664xf32>
    %8 = vector.broadcast %7 : vector<1x1664xf32> to vector<8x1664xf32>
    %9 = arith.mulf %8, %2 : vector<8x1664xf32>
    %c0_7 = arith.constant 0 : index
    %c0_8 = arith.constant 0 : index
    %10 = vector.load %arg3[%c0_7, %c0_8] : memref<1x1664xf32, #tpu.memory_space<vmem>>, vector<1x1664xf32>
    %11 = vector.broadcast %10 : vector<1x1664xf32> to vector<8x1664xf32>
    %12 = arith.mulf %11, %6 : vector<8x1664xf32>
    %13 = arith.addf %9, %12 : vector<8x1664xf32>
    %c0_9 = arith.constant 0 : index
    %c0_10 = arith.constant 0 : index
    %14 = vector.load %arg6[%c0_9, %c0_10] : memref<8x1664xf32, #tpu.memory_space<vmem>>, vector<8x1664xf32>
    tpu.vector_store %arg6[%c0_9, %c0_10], %13 {strides = array<i32>} : memref<8x1664xf32, #tpu.memory_space<vmem>>, vector<8x1664xf32>,
    return
  }
  func.func @transform_0(%arg0: i32) -> (i32, i32) {
    %c0_i32 = arith.constant 0 : i32
    %c0_i32_0 = arith.constant 0 : i32
    return %arg0, %c0_i32 : i32, i32
  }
  func.func @transform_1(%arg0: i32) -> (i32, i32) {
    %c0_i32 = arith.constant 0 : i32
    %c0_i32_0 = arith.constant 0 : i32
    %c0_i32_1 = arith.constant 0 : i32
    return %c0_i32, %c0_i32_0 : i32, i32
  }
  func.func @transform_2(%arg0: i32) -> (i32, i32) {
    %c0_i32 = arith.constant 0 : i32
    %c0_i32_0 = arith.constant 0 : i32
    %c0_i32_1 = arith.constant 0 : i32
    return %c0_i32, %c0_i32_0 : i32, i32
  }
  func.func @transform_3(%arg0: i32) -> (i32, i32) {
    %c0_i32 = arith.constant 0 : i32
    %c0_i32_0 = arith.constant 0 : i32
    %c0_i32_1 = arith.constant 0 : i32
    return %c0_i32, %c0_i32_0 : i32, i32
  }
  func.func @transform_4(%arg0: i32) -> (i32, i32) {
    %c0_i32 = arith.constant 0 : i32
    %c0_i32_0 = arith.constant 0 : i32
    %c0_i32_1 = arith.constant 0 : i32
    return %c0_i32, %c0_i32_0 : i32, i32
  }
  func.func @transform_5(%arg0: i32) -> (i32, i32) {
    %c0_i32 = arith.constant 0 : i32
    %c0_i32_0 = arith.constant 0 : i32
    return %arg0, %c0_i32 : i32, i32
  }
}

</mosaic_0001>

<llo_original>
// kernel: tpu_custom_call.1
$region0: #{tpu_custom_call.1}
  #allocation0 [shape = 'u32[]', space=smem, size = 0x4, offset = 0x4, fixed_abs, tag = 'smem constant byte address 0x4 - core index']
  #allocation1 [shape = 'u32[144,128]{1,0:T(1,128)}', space=vmem, size = 0x12000, scoped, tag = 'internal scratch']
  %s0 = inlined_call_operand.hbm [shape: f32[8,128], index: 0, kind: input, shape index: {}]
  %s1 = inlined_call_operand.hbm [shape: f32[128,1664], index: 1, kind: input, shape index: {}]
  %s2 = inlined_call_operand.hbm [shape: f32[1,1664], index: 2, kind: input, shape index: {}]
  %s3 = inlined_call_operand.hbm [shape: f32[1,1664], index: 3, kind: input, shape index: {}]
  %s4 = inlined_call_operand.vmem [shape: f32[1,1664], index: 4, kind: input, shape index: {}]
  %s5 = inlined_call_operand.hbm [shape: f32[8,1664], index: 5, kind: output, shape index: {}]
  %s6 = sld [smem:[#allocation0]]
  $region46: #{tpu_custom_call.1} parent=0
    _
  %s8 = ssub.s32 1, %s6
  %s9 = scalar_select 0, %s8, %s6
  $region1: #{tpu_custom_call.1} parent=0
    #allocation2 [shape = 'u8[4096]{0}', space=vmem, size = 0x1000, scoped, tag = 'input window, operand 0, single buffered']
    #allocation3 [shape = 's32[1]{0}', space=sflag, size = 0x4, scoped, tag = 'scoped memory for tpu_custom_call.1']
    #allocation4 [shape = 's32[1]{0}', space=sflag, size = 0x4, scoped, tag = 'scoped memory for tpu_custom_call.1']
    #allocation5 [shape = 'u8[851968]{0}', space=vmem, size = 0xd0000, scoped, tag = 'input window, operand 1, single buffered']
    #allocation6 [shape = 's32[1]{0}', space=sflag, size = 0x4, scoped, tag = 'scoped memory for tpu_custom_call.1']
    #allocation7 [shape = 'u8[6656]{0}', space=vmem, size = 0x1c00, scoped, tag = 'input window, operand 2, single buffered']
    #allocation8 [shape = 'u8[6656]{0}', space=vmem, size = 0x1c00, scoped, tag = 'input window, operand 3, single buffered']
    #allocation9 [shape = 's32[1]{0}', space=sflag, size = 0x4, scoped, tag = 'scoped memory for tpu_custom_call.1']
    #allocation10 [shape = 'u8[53248]{0}', space=vmem, size = 0xd000, scoped, tag = 'output window, operand 0, single buffered']
    %10 = vsyncpa [#allocation3], 0
    %11 = vsyncpa [#allocation6], 0
    %12 = vsyncpa [#allocation9], 0
    %13 = vsyncpa [#allocation4], 0
    // Predicated region
    $region2: #{tpu_custom_call.1} parent=1 // pred_check
      _
    $region3: #{tpu_custom_call.1} parent=1 // pred_check_branch
      %15 = sbr.rel (0) target = $region5
    $region4: #{tpu_custom_call.1} parent=1 // pred_region
      %s17 = ssub.s32 128, 128
      %18 = vsyncadd [#allocation3], %s17
      %s20 = sshll.u32 [#allocation2], 4
      %s21 = int_to_ptr.vmem [resolvable:$true] %s20
      %23 = dma.hbm_to_vmem [thread:$0]  %s0, 128, %s21, [#allocation3]
    $region5: #{tpu_custom_call.1} parent=1 // pred_fallthru
      _
    // Predicated region
    $region6: #{tpu_custom_call.1} parent=1 // pred_check
      _
    $region7: #{tpu_custom_call.1} parent=1 // pred_check_branch
      %25 = sbr.rel (0) target = $region9
    $region8: #{tpu_custom_call.1} parent=1 // pred_region
      %s27 = ssub.s32 26624, 26624
      %28 = vsyncadd [#allocation6], %s27
      %s29 = sshll.u32 [#allocation5], 4
      %s30 = int_to_ptr.vmem [resolvable:$true] %s29
      %35 = dma.hbm_to_vmem [thread:$0]  %s1, 26624, %s30, [#allocation6], 1664, 1664, 104
    $region9: #{tpu_custom_call.1} parent=1 // pred_fallthru
      _
    // Predicated region
    $region10: #{tpu_custom_call.1} parent=1 // pred_check
      _
    $region11: #{tpu_custom_call.1} parent=1 // pred_check_branch
      %37 = sbr.rel (0) target = $region13
    $region12: #{tpu_custom_call.1} parent=1 // pred_region
      %s39 = ssub.s32 208, 208
      %40 = vsyncadd [#allocation6], %s39
      %s42 = sshll.u32 [#allocation7], 4
      %s43 = int_to_ptr.vmem [resolvable:$true] %s42
      %45 = dma.hbm_to_vmem [thread:$0]  %s2, 208, %s43, [#allocation6]
    $region13: #{tpu_custom_call.1} parent=1 // pred_fallthru
      _
    // Predicated region
    $region14: #{tpu_custom_call.1} parent=1 // pred_check
      _
    $region15: #{tpu_custom_call.1} parent=1 // pred_check_branch
      %47 = sbr.rel (0) target = $region17
    $region16: #{tpu_custom_call.1} parent=1 // pred_region
      %s49 = ssub.s32 208, 208
      %50 = vsyncadd [#allocation9], %s49
      %s52 = sshll.u32 [#allocation8], 4
      %s53 = int_to_ptr.vmem [resolvable:$true] %s52
      %55 = dma.hbm_to_vmem [thread:$0]  %s3, 208, %s53, [#allocation9]
    $region17: #{tpu_custom_call.1} parent=1 // pred_fallthru
      _
    // Predicated region
    $region18: #{tpu_custom_call.1} parent=1 // pred_check
      _
    $region19: #{tpu_custom_call.1} parent=1 // pred_check_branch
      %57 = sbr.rel (0) target = $region21
    $region20: #{tpu_custom_call.1} parent=1 // pred_region
      _
    $region21: #{tpu_custom_call.1} parent=1 // pred_fallthru
      _
    // Predicated region
    $region22: #{tpu_custom_call.1} parent=1 // pred_check
      _
    $region23: #{tpu_custom_call.1} parent=1 // pred_check_branch
      %59 = sbr.rel (0) target = $region25
    $region24: #{tpu_custom_call.1} parent=1 // pred_region
      %60 = dma.done [#allocation3], 128
    $region25: #{tpu_custom_call.1} parent=1 // pred_fallthru
      _
    // Predicated region
    $region26: #{tpu_custom_call.1} parent=1 // pred_check
      _
    $region27: #{tpu_custom_call.1} parent=1 // pred_check_branch
      %62 = sbr.rel (0) target = $region29
    $region28: #{tpu_custom_call.1} parent=1 // pred_region
      %63 = dma.done [#allocation6], 26624
    $region29: #{tpu_custom_call.1} parent=1 // pred_fallthru
      _
    // Predicated region
    $region30: #{tpu_custom_call.1} parent=1 // pred_check
      _
    $region31: #{tpu_custom_call.1} parent=1 // pred_check_branch
      %65 = sbr.rel (0) target = $region33
    $region32: #{tpu_custom_call.1} parent=1 // pred_region
      %66 = dma.done [#allocation6], 208
    $region33: #{tpu_custom_call.1} parent=1 // pred_fallthru
      _
    // Predicated region
    $region34: #{tpu_custom_call.1} parent=1 // pred_check
      _
    $region35: #{tpu_custom_call.1} parent=1 // pred_check_branch
      %68 = sbr.rel (0) target = $region37
    $region36: #{tpu_custom_call.1} parent=1 // pred_region
      %69 = dma.done [#allocation9], 208
    $region37: #{tpu_custom_call.1} parent=1 // pred_fallthru
      _
    %v70 = vld [vmem:[#allocation2] sm:$0xff]
    %v71 = vld [vmem:[#allocation5] sm:$0xff]
    %v72 = vld [vmem:[#allocation5 + $0x8] sm:$0xff]
    %v73 = vld [vmem:[#allocation5 + $0x10] sm:$0xff]
    %v74 = vld [vmem:[#allocation5 + $0x18] sm:$0xff]
    %v75 = vld [vmem:[#allocation5 + $0x20] sm:$0xff]
    %v76 = vld [vmem:[#allocation5 + $0x28] sm:$0xff]
    %v77 = vld [vmem:[#allocation5 + $0x30] sm:$0xff]
    %v78 = vld [vmem:[#allocation5 + $0x38] sm:$0xff]
    %v79 = vld [vmem:[#allocation5 + $0x40] sm:$0xff]
    %v80 = vld [vmem:[#allocation5 + $0x48] sm:$0xff]
    %v81 = vld [vmem:[#allocation5 + $0x50] sm:$0xff]
    %v82 = vld [vmem:[#allocation5 + $0x58] sm:$0xff]
    %v83 = vld [vmem:[#allocation5 + $0x60] sm:$0xff]
    %v84 = vld [vmem:[#allocation5 + $0x68] sm:$0xff]
    %v85 = vld [vmem:[#allocation5 + $0x70] sm:$0xff]
    %v86 = vld [vmem:[#allocation5 + $0x78] sm:$0xff]
    %v87 = vld [vmem:[#allocation5 + $0x80] sm:$0xff]
    %v88 = vld [vmem:[#allocation5 + $0x88] sm:$0xff]
    %v89 = vld [vmem:[#allocation5 + $0x90] sm:$0xff]
    %v90 = vld [vmem:[#allocation5 + $0x98] sm:$0xff]
    %v91 = vld [vmem:[#allocation5 + $0xa0] sm:$0xff]
    %v92 = vld [vmem:[#allocation5 + $0xa8] sm:$0xff]
    %v93 = vld [vmem:[#allocation5 + $0xb0] sm:$0xff]
    %v94 = vld [vmem:[#allocation5 + $0xb8] sm:$0xff]
    %v95 = vld [vmem:[#allocation5 + $0xc0] sm:$0xff]
    %v96 = vld [vmem:[#allocation5 + $0xc8] sm:$0xff]
    %v97 = vld [vmem:[#allocation5 + $0xd0] sm:$0xff]
    %v98 = vld [vmem:[#allocation5 + $0xd8] sm:$0xff]
    %v99 = vld [vmem:[#allocation5 + $0xe0] sm:$0xff]
    %v100 = vld [vmem:[#allocation5 + $0xe8] sm:$0xff]
    %v101 = vld [vmem:[#allocation5 + $0xf0] sm:$0xff]
    %v102 = vld [vmem:[#allocation5 + $0xf8] sm:$0xff]
    %v103 = vld [vmem:[#allocation5 + $0x100] sm:$0xff]
    %v104 = vld [vmem:[#allocation5 + $0x108] sm:$0xff]
    %v105 = vld [vmem:[#allocation5 + $0x110] sm:$0xff]
    %v106 = vld [vmem:[#allocation5 + $0x118] sm:$0xff]
    %v107 = vld [vmem:[#allocation5 + $0x120] sm:$0xff]
    %v108 = vld [vmem:[#allocation5 + $0x128] sm:$0xff]
    %v109 = vld [vmem:[#allocation5 + $0x130] sm:$0xff]
    %v110 = vld [vmem:[#allocation5 + $0x138] sm:$0xff]
    %v111 = vld [vmem:[#allocation5 + $0x140] sm:$0xff]
    %v112 = vld [vmem:[#allocation5 + $0x148] sm:$0xff]
    %v113 = vld [vmem:[#allocation5 + $0x150] sm:$0xff]
    %v114 = vld [vmem:[#allocation5 + $0x158] sm:$0xff]
    %v115 = vld [vmem:[#allocation5 + $0x160] sm:$0xff]
    %v116 = vld [vmem:[#allocation5 + $0x168] sm:$0xff]
    %v117 = vld [vmem:[#allocation5 + $0x170] sm:$0xff]
    %v118 = vld [vmem:[#allocation5 + $0x178] sm:$0xff]
    %v119 = vld [vmem:[#allocation5 + $0x180] sm:$0xff]
    %v120 = vld [vmem:[#allocation5 + $0x188] sm:$0xff]
    %v121 = vld [vmem:[#allocation5 + $0x190] sm:$0xff]
    %v122 = vld [vmem:[#allocation5 + $0x198] sm:$0xff]
    %v123 = vld [vmem:[#allocation5 + $0x1a0] sm:$0xff]
    %v124 = vld [vmem:[#allocation5 + $0x1a8] sm:$0xff]
    %v125 = vld [vmem:[#allocation5 + $0x1b0] sm:$0xff]
    %v126 = vld [vmem:[#allocation5 + $0x1b8] sm:$0xff]
    %v127 = vld [vmem:[#allocation5 + $0x1c0] sm:$0xff]
    %v128 = vld [vmem:[#allocation5 + $0x1c8] sm:$0xff]
    %v129 = vld [vmem:[#allocation5 + $0x1d0] sm:$0xff]
    %v130 = vld [vmem:[#allocation5 + $0x1d8] sm:$0xff]
    %v131 = vld [vmem:[#allocation5 + $0x1e0] sm:$0xff]
    %v132 = vld [vmem:[#allocation5 + $0x1e8] sm:$0xff]
    %v133 = vld [vmem:[#allocation5 + $0x1f0] sm:$0xff]
    %v134 = vld [vmem:[#allocation5 + $0x1f8] sm:$0xff]
    %v135 = vld [vmem:[#allocation5 + $0x200] sm:$0xff]
    %v136 = vld [vmem:[#allocation5 + $0x208] sm:$0xff]
    %v137 = vld [vmem:[#allocation5 + $0x210] sm:$0xff]
    %v138 = vld [vmem:[#allocation5 + $0x218] sm:$0xff]
    %v139 = vld [vmem:[#allocation5 + $0x220] sm:$0xff]
    %v140 = vld [vmem:[#allocation5 + $0x228] sm:$0xff]
    %v141 = vld [vmem:[#allocation5 + $0x230] sm:$0xff]
    %v142 = vld [vmem:[#allocation5 + $0x238] sm:$0xff]
    %v143 = vld [vmem:[#allocation5 + $0x240] sm:$0xff]
    %v144 = vld [vmem:[#allocation5 + $0x248] sm:$0xff]
    %v145 = vld [vmem:[#allocation5 + $0x250] sm:$0xff]
    %v146 = vld [vmem:[#allocation5 + $0x258] sm:$0xff]
    %v147 = vld [vmem:[#allocation5 + $0x260] sm:$0xff]
    %v148 = vld [vmem:[#allocation5 + $0x268] sm:$0xff]
    %v149 = vld [vmem:[#allocation5 + $0x270] sm:$0xff]
    %v150 = vld [vmem:[#allocation5 + $0x278] sm:$0xff]
    %v151 = vld [vmem:[#allocation5 + $0x280] sm:$0xff]
    %v152 = vld [vmem:[#allocation5 + $0x288] sm:$0xff]
    %v153 = vld [vmem:[#allocation5 + $0x290] sm:$0xff]
    %v154 = vld [vmem:[#allocation5 + $0x298] sm:$0xff]
    %v155 = vld [vmem:[#allocation5 + $0x2a0] sm:$0xff]
    %v156 = vld [vmem:[#allocation5 + $0x2a8] sm:$0xff]
    %v157 = vld [vmem:[#allocation5 + $0x2b0] sm:$0xff]
    %v158 = vld [vmem:[#allocation5 + $0x2b8] sm:$0xff]
    %v159 = vld [vmem:[#allocation5 + $0x2c0] sm:$0xff]
    %v160 = vld [vmem:[#allocation5 + $0x2c8] sm:$0xff]
    %v161 = vld [vmem:[#allocation5 + $0x2d0] sm:$0xff]
    %v162 = vld [vmem:[#allocation5 + $0x2d8] sm:$0xff]
    %v163 = vld [vmem:[#allocation5 + $0x2e0] sm:$0xff]
    %v164 = vld [vmem:[#allocation5 + $0x2e8] sm:$0xff]
    %v165 = vld [vmem:[#allocation5 + $0x2f0] sm:$0xff]
    %v166 = vld [vmem:[#allocation5 + $0x2f8] sm:$0xff]
    %v167 = vld [vmem:[#allocation5 + $0x300] sm:$0xff]
    %v168 = vld [vmem:[#allocation5 + $0x308] sm:$0xff]
    %v169 = vld [vmem:[#allocation5 + $0x310] sm:$0xff]
    %v170 = vld [vmem:[#allocation5 + $0x318] sm:$0xff]
    %v171 = vld [vmem:[#allocation5 + $0x320] sm:$0xff]
    %v172 = vld [vmem:[#allocation5 + $0x328] sm:$0xff]
    %v173 = vld [vmem:[#allocation5 + $0x330] sm:$0xff]
    %v174 = vld [vmem:[#allocation5 + $0x338] sm:$0xff]
    %v175 = vld [vmem:[#allocation5 + $0x340] sm:$0xff]
    %v176 = vld [vmem:[#allocation5 + $0x348] sm:$0xff]
    %v177 = vld [vmem:[#allocation5 + $0x350] sm:$0xff]
    %v178 = vld [vmem:[#allocation5 + $0x358] sm:$0xff]
    %v179 = vld [vmem:[#allocation5 + $0x360] sm:$0xff]
    %v180 = vld [vmem:[#allocation5 + $0x368] sm:$0xff]
    %v181 = vld [vmem:[#allocation5 + $0x370] sm:$0xff]
    %v182 = vld [vmem:[#allocation5 + $0x378] sm:$0xff]
    %v183 = vld [vmem:[#allocation5 + $0x380] sm:$0xff]
    %v184 = vld [vmem:[#allocation5 + $0x388] sm:$0xff]
    %v185 = vld [vmem:[#allocation5 + $0x390] sm:$0xff]
    %v186 = vld [vmem:[#allocation5 + $0x398] sm:$0xff]
    %v187 = vld [vmem:[#allocation5 + $0x3a0] sm:$0xff]
    %v188 = vld [vmem:[#allocation5 + $0x3a8] sm:$0xff]
    %v189 = vld [vmem:[#allocation5 + $0x3b0] sm:$0xff]
    %v190 = vld [vmem:[#allocation5 + $0x3b8] sm:$0xff]
    %v191 = vld [vmem:[#allocation5 + $0x3c0] sm:$0xff]
    %v192 = vld [vmem:[#allocation5 + $0x3c8] sm:$0xff]
    %v193 = vld [vmem:[#allocation5 + $0x3d0] sm:$0xff]
    %v194 = vld [vmem:[#allocation5 + $0x3d8] sm:$0xff]
    %v195 = vld [vmem:[#allocation5 + $0x3e0] sm:$0xff]
    %v196 = vld [vmem:[#allocation5 + $0x3e8] sm:$0xff]
    %v197 = vld [vmem:[#allocation5 + $0x3f0] sm:$0xff]
    %v198 = vld [vmem:[#allocation5 + $0x3f8] sm:$0xff]
    %v199 = vld [vmem:[#allocation5 + $0x400] sm:$0xff]
    %v200 = vld [vmem:[#allocation5 + $0x408] sm:$0xff]
    %v201 = vld [vmem:[#allocation5 + $0x410] sm:$0xff]
    %v202 = vld [vmem:[#allocation5 + $0x418] sm:$0xff]
    %v203 = vld [vmem:[#allocation5 + $0x420] sm:$0xff]
    %v204 = vld [vmem:[#allocation5 + $0x428] sm:$0xff]
    %v205 = vld [vmem:[#allocation5 + $0x430] sm:$0xff]
    %v206 = vld [vmem:[#allocation5 + $0x438] sm:$0xff]
    %v207 = vld [vmem:[#allocation5 + $0x440] sm:$0xff]
    %v208 = vld [vmem:[#allocation5 + $0x448] sm:$0xff]
    %v209 = vld [vmem:[#allocation5 + $0x450] sm:$0xff]
    %v210 = vld [vmem:[#allocation5 + $0x458] sm:$0xff]
    %v211 = vld [vmem:[#allocation5 + $0x460] sm:$0xff]
    %v212 = vld [vmem:[#allocation5 + $0x468] sm:$0xff]
    %v213 = vld [vmem:[#allocation5 + $0x470] sm:$0xff]
    %v214 = vld [vmem:[#allocation5 + $0x478] sm:$0xff]
    %v215 = vld [vmem:[#allocation5 + $0x480] sm:$0xff]
    %v216 = vld [vmem:[#allocation5 + $0x488] sm:$0xff]
    %v217 = vld [vmem:[#allocation5 + $0x490] sm:$0xff]
    %v218 = vld [vmem:[#allocation5 + $0x498] sm:$0xff]
    %v219 = vld [vmem:[#allocation5 + $0x4a0] sm:$0xff]
    %v220 = vld [vmem:[#allocation5 + $0x4a8] sm:$0xff]
    %v221 = vld [vmem:[#allocation5 + $0x4b0] sm:$0xff]
    %v222 = vld [vmem:[#allocation5 + $0x4b8] sm:$0xff]
    %v223 = vld [vmem:[#allocation5 + $0x4c0] sm:$0xff]
    %v224 = vld [vmem:[#allocation5 + $0x4c8] sm:$0xff]
    %v225 = vld [vmem:[#allocation5 + $0x4d0] sm:$0xff]
    %v226 = vld [vmem:[#allocation5 + $0x4d8] sm:$0xff]
    %v227 = vld [vmem:[#allocation5 + $0x4e0] sm:$0xff]
    %v228 = vld [vmem:[#allocation5 + $0x4e8] sm:$0xff]
    %v229 = vld [vmem:[#allocation5 + $0x4f0] sm:$0xff]
    %v230 = vld [vmem:[#allocation5 + $0x4f8] sm:$0xff]
    %v231 = vld [vmem:[#allocation5 + $0x500] sm:$0xff]
    %v232 = vld [vmem:[#allocation5 + $0x508] sm:$0xff]
    %v233 = vld [vmem:[#allocation5 + $0x510] sm:$0xff]
    %v234 = vld [vmem:[#allocation5 + $0x518] sm:$0xff]
    %v235 = vld [vmem:[#allocation5 + $0x520] sm:$0xff]
    %v236 = vld [vmem:[#allocation5 + $0x528] sm:$0xff]
    %v237 = vld [vmem:[#allocation5 + $0x530] sm:$0xff]
    %v238 = vld [vmem:[#allocation5 + $0x538] sm:$0xff]
    %v239 = vld [vmem:[#allocation5 + $0x540] sm:$0xff]
    %v240 = vld [vmem:[#allocation5 + $0x548] sm:$0xff]
    %v241 = vld [vmem:[#allocation5 + $0x550] sm:$0xff]
    %v242 = vld [vmem:[#allocation5 + $0x558] sm:$0xff]
    %v243 = vld [vmem:[#allocation5 + $0x560] sm:$0xff]
    %v244 = vld [vmem:[#allocation5 + $0x568] sm:$0xff]
    %v245 = vld [vmem:[#allocation5 + $0x570] sm:$0xff]
    %v246 = vld [vmem:[#allocation5 + $0x578] sm:$0xff]
    %v247 = vld [vmem:[#allocation5 + $0x580] sm:$0xff]
    %v248 = vld [vmem:[#allocation5 + $0x588] sm:$0xff]
    %v249 = vld [vmem:[#allocation5 + $0x590] sm:$0xff]
    %v250 = vld [vmem:[#allocation5 + $0x598] sm:$0xff]
    %v251 = vld [vmem:[#allocation5 + $0x5a0] sm:$0xff]
    %v252 = vld [vmem:[#allocation5 + $0x5a8] sm:$0xff]
    %v253 = vld [vmem:[#allocation5 + $0x5b0] sm:$0xff]
    %v254 = vld [vmem:[#allocation5 + $0x5b8] sm:$0xff]
    %v255 = vld [vmem:[#allocation5 + $0x5c0] sm:$0xff]
    %v256 = vld [vmem:[#allocation5 + $0x5c8] sm:$0xff]
    %v257 = vld [vmem:[#allocation5 + $0x5d0] sm:$0xff]
    %v258 = vld [vmem:[#allocation5 + $0x5d8] sm:$0xff]
    %v259 = vld [vmem:[#allocation5 + $0x5e0] sm:$0xff]
    %v260 = vld [vmem:[#allocation5 + $0x5e8] sm:$0xff]
    %v261 = vld [vmem:[#allocation5 + $0x5f0] sm:$0xff]
    %v262 = vld [vmem:[#allocation5 + $0x5f8] sm:$0xff]
    %v263 = vld [vmem:[#allocation5 + $0x600] sm:$0xff]
    %v264 = vld [vmem:[#allocation5 + $0x608] sm:$0xff]
    %v265 = vld [vmem:[#allocation5 + $0x610] sm:$0xff]
    %v266 = vld [vmem:[#allocation5 + $0x618] sm:$0xff]
    %v267 = vld [vmem:[#allocation5 + $0x620] sm:$0xff]
    %v268 = vld [vmem:[#allocation5 + $0x628] sm:$0xff]
    %v269 = vld [vmem:[#allocation5 + $0x630] sm:$0xff]
    %v270 = vld [vmem:[#allocation5 + $0x638] sm:$0xff]
    %v271 = vld [vmem:[#allocation5 + $0x640] sm:$0xff]
    %v272 = vld [vmem:[#allocation5 + $0x648] sm:$0xff]
    %v273 = vld [vmem:[#allocation5 + $0x650] sm:$0xff]
    %v274 = vld [vmem:[#allocation5 + $0x658] sm:$0xff]
    %v275 = vld [vmem:[#allocation5 + $0x660] sm:$0xff]
    %v276 = vld [vmem:[#allocation5 + $0x668] sm:$0xff]
    %v277 = vld [vmem:[#allocation5 + $0x670] sm:$0xff]
    %v278 = vld [vmem:[#allocation5 + $0x678] sm:$0xff]
    %v279 = vand.u32 %v72, 4294901760
    %280 = vmatprep.subr.mxu0 %v279
    %v281 = vand.u32 %v71, 4294901760
    %282 = vmatpush1.msra.mxu0 %v281
    %v283 = vand.u32 %v85, 4294901760
    %284 = vmatprep.subr.mxu0 %v283
    %v285 = vand.u32 %v84, 4294901760
    %286 = vmatpush1.msra.mxu0 %v285
    %v287 = vand.u32 %v98, 4294901760
    %288 = vmatprep.subr.mxu0 %v287
    %v289 = vand.u32 %v97, 4294901760
    %290 = vmatpush1.msra.mxu0 %v289
    %v291 = vand.u32 %v111, 4294901760
    %292 = vmatprep.subr.mxu0 %v291
    %v293 = vand.u32 %v110, 4294901760
    %294 = vmatpush1.msra.mxu0 %v293
    %v295 = vand.u32 %v124, 4294901760
    %296 = vmatprep.subr.mxu0 %v295
    %v297 = vand.u32 %v123, 4294901760
    %298 = vmatpush1.msra.mxu0 %v297
    %v299 = vand.u32 %v137, 4294901760
    %300 = vmatprep.subr.mxu0 %v299
    %v301 = vand.u32 %v136, 4294901760
    %302 = vmatpush1.msra.mxu0 %v301
    %v303 = vand.u32 %v150, 4294901760
    %304 = vmatprep.subr.mxu0 %v303
    %v305 = vand.u32 %v149, 4294901760
    %306 = vmatpush1.msra.mxu0 %v305
    %v307 = vand.u32 %v163, 4294901760
    %308 = vmatprep.subr.mxu0 %v307
    %v309 = vand.u32 %v162, 4294901760
    %310 = vmatpush1.msra.mxu0 %v309
    %v311 = vand.u32 %v176, 4294901760
    %312 = vmatprep.subr.mxu0 %v311
    %v313 = vand.u32 %v175, 4294901760
    %314 = vmatpush1.msra.mxu0 %v313
    %v315 = vand.u32 %v189, 4294901760
    %316 = vmatprep.subr.mxu0 %v315
    %v317 = vand.u32 %v188, 4294901760
    %318 = vmatpush1.msra.mxu0 %v317
    %v319 = vand.u32 %v202, 4294901760
    %320 = vmatprep.subr.mxu0 %v319
    %v321 = vand.u32 %v201, 4294901760
    %322 = vmatpush1.msra.mxu0 %v321
    %v323 = vand.u32 %v215, 4294901760
    %324 = vmatprep.subr.mxu0 %v323
    %v325 = vand.u32 %v214, 4294901760
    %326 = vmatpush1.msra.mxu0 %v325
    %v327 = vand.u32 %v228, 4294901760
    %328 = vmatprep.subr.mxu0 %v327
    %v329 = vand.u32 %v227, 4294901760
    %330 = vmatpush1.msra.mxu0 %v329
    %v331 = vand.u32 %v241, 4294901760
    %332 = vmatprep.subr.mxu0 %v331
    %v333 = vand.u32 %v240, 4294901760
    %334 = vmatpush1.msra.mxu0 %v333
    %v335 = vand.u32 %v254, 4294901760
    %336 = vmatprep.subr.mxu0 %v335
    %v337 = vand.u32 %v253, 4294901760
    %338 = vmatpush1.msra.mxu0 %v337
    %v339 = vand.u32 %v267, 4294901760
    %340 = vmatprep.subr.mxu0 %v339
    %v341 = vand.u32 %v266, 4294901760
    %342 = vmatpush1.msra.mxu0 %v341
    %343 = vmatprep.subr.mxu0 0.0
    %344 = vmatpush1.msra.mxu0 0.0
    %345 = vmatprep.subr.mxu0 0.0
    %346 = vmatpush1.msra.mxu0 0.0
    %347 = vmatprep.subr.mxu0 0.0
    %348 = vmatpush1.msra.mxu0 0.0
    %349 = vmatprep.subr.mxu0 0.0
    %350 = vmatpush1.msra.mxu0 0.0
    %351 = vmatprep.subr.mxu0 0.0
    %352 = vmatpush1.msra.mxu0 0.0
    %353 = vmatprep.subr.mxu0 0.0
    %354 = vmatpush1.msra.mxu0 0.0
    %355 = vmatprep.subr.mxu0 0.0
    %356 = vmatpush1.msra.mxu0 0.0
    %357 = vmatprep.subr.mxu0 0.0
    %358 = vmatpush1.msra.mxu0 0.0
    %359 = vmatprep.subr.mxu0 0.0
    %360 = vmatpush1.msra.mxu0 0.0
    %361 = vmatprep.subr.mxu0 0.0
    %362 = vmatpush1.msra.mxu0 0.0
    %363 = vmatprep.subr.mxu0 0.0
    %364 = vmatpush1.msra.mxu0 0.0
    %365 = vmatprep.subr.mxu0 0.0
    %366 = vmatpush1.msra.mxu0 0.0
    %367 = vmatprep.subr.mxu0 0.0
    %368 = vmatpush1.msra.mxu0 0.0
    %369 = vmatprep.subr.mxu0 0.0
    %370 = vmatpush1.msra.mxu0 0.0
    %371 = vmatprep.subr.mxu0 0.0
    %372 = vmatpush1.msra.mxu0 0.0
    %373 = vmatprep.subr.mxu0 0.0
    %374 = vmatpush1.msra.mxu0 0.0
    %375 = vmatprep.mubr.f32.mxu0 0.0
    %v376 = vand.u32 %v70, 4294901760
    %v377 = vsub.f32 %v70, %v376
    %v378 = vand.u32 %v377, 4294901760
    %v379 = vsub.f32 %v377, %v378
    %v380 = vand.u32 %v379, 4294901760
    %381 = vmatmul.mubr.f32.gmra.mrb[0].mxu0 %v380
    %v382 = vpop.f32.mrb[0].mxu0
    %v383 = vadd.f32 0.0, %v382
    %v384 = vpop.f32.mrb[0].mxu0
    %v385 = vadd.f32 0.0, %v384
    %386 = vdwg.mxu0
    %v387 = vand.u32 %v72, 4294901760
    %v388 = vsub.f32 %v72, %v387
    %v389 = vand.u32 %v388, 4294901760
    %v390 = vsub.f32 %v388, %v389
    %v391 = vand.u32 %v390, 4294901760
    %392 = vmatprep.subr.mxu0 %v391
    %v393 = vand.u32 %v71, 4294901760
    %v394 = vsub.f32 %v71, %v393
    %v395 = vand.u32 %v394, 4294901760
    %v396 = vsub.f32 %v394, %v395
    %v397 = vand.u32 %v396, 4294901760
    %398 = vmatpush1.msra.mxu0 %v397
    %v399 = vand.u32 %v85, 4294901760
    %v400 = vsub.f32 %v85, %v399
    %v401 = vand.u32 %v400, 4294901760
    %v402 = vsub.f32 %v400, %v401
    %v403 = vand.u32 %v402, 4294901760
    %404 = vmatprep.subr.mxu0 %v403
    %v405 = vand.u32 %v84, 4294901760
    %v406 = vsub.f32 %v84, %v405
    %v407 = vand.u32 %v406, 4294901760
    %v408 = vsub.f32 %v406, %v407
    %v409 = vand.u32 %v408, 4294901760
    %410 = vmatpush1.msra.mxu0 %v409
    %v411 = vand.u32 %v98, 4294901760
    %v412 = vsub.f32 %v98, %v411
    %v413 = vand.u32 %v412, 4294901760
    %v414 = vsub.f32 %v412, %v413
    %v415 = vand.u32 %v414, 4294901760
    %416 = vmatprep.subr.mxu0 %v415
    %v417 = vand.u32 %v97, 4294901760
    %v418 = vsub.f32 %v97, %v417
    %v419 = vand.u32 %v418, 4294901760
    %v420 = vsub.f32 %v418, %v419
    %v421 = vand.u32 %v420, 4294901760
    %422 = vmatpush1.msra.mxu0 %v421
    %v423 = vand.u32 %v111, 4294901760
    %v424 = vsub.f32 %v111, %v423
    %v425 = vand.u32 %v424, 4294901760
    %v426 = vsub.f32 %v424, %v425
    %v427 = vand.u32 %v426, 4294901760
    %428 = vmatprep.subr.mxu0 %v427
    %v429 = vand.u32 %v110, 4294901760
    %v430 = vsub.f32 %v110, %v429
    %v431 = vand.u32 %v430, 4294901760
    %v432 = vsub.f32 %v430, %v431
    %v433 = vand.u32 %v432, 4294901760
    %434 = vmatpush1.msra.mxu0 %v433
    %v435 = vand.u32 %v124, 4294901760
    %v436 = vsub.f32 %v124, %v435
    %v437 = vand.u32 %v436, 4294901760
    %v438 = vsub.f32 %v436, %v437
    %v439 = vand.u32 %v438, 4294901760
    %440 = vmatprep.subr.mxu0 %v439
    %v441 = vand.u32 %v123, 4294901760
    %v442 = vsub.f32 %v123, %v441
    %v443 = vand.u32 %v442, 4294901760
    %v444 = vsub.f32 %v442, %v443
    %v445 = vand.u32 %v444, 4294901760
    %446 = vmatpush1.msra.mxu0 %v445
    %v447 = vand.u32 %v137, 4294901760
    %v448 = vsub.f32 %v137, %v447
    %v449 = vand.u32 %v448, 4294901760
    %v450 = vsub.f32 %v448, %v449
    %v451 = vand.u32 %v450, 4294901760
    %452 = vmatprep.subr.mxu0 %v451
    %v453 = vand.u32 %v136, 4294901760
    %v454 = vsub.f32 %v136, %v453
    %v455 = vand.u32 %v454, 4294901760
    %v456 = vsub.f32 %v454, %v455
    %v457 = vand.u32 %v456, 4294901760
    %458 = vmatpush1.msra.mxu0 %v457
    %v459 = vand.u32 %v150, 4294901760
    %v460 = vsub.f32 %v150, %v459
    %v461 = vand.u32 %v460, 4294901760
    %v462 = vsub.f32 %v460, %v461
    %v463 = vand.u32 %v462, 4294901760
    %464 = vmatprep.subr.mxu0 %v463
    %v465 = vand.u32 %v149, 4294901760
    %v466 = vsub.f32 %v149, %v465
    %v467 = vand.u32 %v466, 4294901760
    %v468 = vsub.f32 %v466, %v467
    %v469 = vand.u32 %v468, 4294901760
    %470 = vmatpush1.msra.mxu0 %v469
    %v471 = vand.u32 %v163, 4294901760
    %v472 = vsub.f32 %v163, %v471
    %v473 = vand.u32 %v472, 4294901760
    %v474 = vsub.f32 %v472, %v473
    %v475 = vand.u32 %v474, 4294901760
    %476 = vmatprep.subr.mxu0 %v475
    %v477 = vand.u32 %v162, 4294901760
    %v478 = vsub.f32 %v162, %v477
    %v479 = vand.u32 %v478, 4294901760
    %v480 = vsub.f32 %v478, %v479
    %v481 = vand.u32 %v480, 4294901760
    %482 = vmatpush1.msra.mxu0 %v481
    %v483 = vand.u32 %v176, 4294901760
    %v484 = vsub.f32 %v176, %v483
    %v485 = vand.u32 %v484, 4294901760
    %v486 = vsub.f32 %v484, %v485
    %v487 = vand.u32 %v486, 4294901760
    %488 = vmatprep.subr.mxu0 %v487
    %v489 = vand.u32 %v175, 4294901760
    %v490 = vsub.f32 %v175, %v489
    %v491 = vand.u32 %v490, 4294901760
    %v492 = vsub.f32 %v490, %v491
    %v493 = vand.u32 %v492, 4294901760
    %494 = vmatpush1.msra.mxu0 %v493
    %v495 = vand.u32 %v189, 4294901760
    %v496 = vsub.f32 %v189, %v495
    %v497 = vand.u32 %v496, 4294901760
    %v498 = vsub.f32 %v496, %v497
    %v499 = vand.u32 %v498, 4294901760
    %500 = vmatprep.subr.mxu0 %v499
    %v501 = vand.u32 %v188, 4294901760
    %v502 = vsub.f32 %v188, %v501
    %v503 = vand.u32 %v502, 4294901760
    %v504 = vsub.f32 %v502, %v503
    %v505 = vand.u32 %v504, 4294901760
    %506 = vmatpush1.msra.mxu0 %v505
    %v507 = vand.u32 %v202, 4294901760
    %v508 = vsub.f32 %v202, %v507
    %v509 = vand.u32 %v508, 4294901760
    %v510 = vsub.f32 %v508, %v509
    %v511 = vand.u32 %v510, 4294901760
    %512 = vmatprep.subr.mxu0 %v511
    %v513 = vand.u32 %v201, 4294901760
    %v514 = vsub.f32 %v201, %v513
    %v515 = vand.u32 %v514, 4294901760
    %v516 = vsub.f32 %v514, %v515
    %v517 = vand.u32 %v516, 4294901760
    %518 = vmatpush1.msra.mxu0 %v517
    %v519 = vand.u32 %v215, 4294901760
    %v520 = vsub.f32 %v215, %v519
    %v521 = vand.u32 %v520, 4294901760
    %v522 = vsub.f32 %v520, %v521
    %v523 = vand.u32 %v522, 4294901760
    %524 = vmatprep.subr.mxu0 %v523
    %v525 = vand.u32 %v214, 4294901760
    %v526 = vsub.f32 %v214, %v525
    %v527 = vand.u32 %v526, 4294901760
    %v528 = vsub.f32 %v526, %v527
    %v529 = vand.u32 %v528, 4294901760
    %530 = vmatpush1.msra.mxu0 %v529
    %v531 = vand.u32 %v228, 4294901760
    %v532 = vsub.f32 %v228, %v531
    %v533 = vand.u32 %v532, 4294901760
    %v534 = vsub.f32 %v532, %v533
    %v535 = vand.u32 %v534, 4294901760
    %536 = vmatprep.subr.mxu0 %v535
    %v537 = vand.u32 %v227, 4294901760
    %v538 = vsub.f32 %v227, %v537
    %v539 = vand.u32 %v538, 4294901760
    %v540 = vsub.f32 %v538, %v539
    %v541 = vand.u32 %v540, 4294901760
    %542 = vmatpush1.msra.mxu0 %v541
    %v543 = vand.u32 %v241, 4294901760
    %v544 = vsub.f32 %v241, %v543
    %v545 = vand.u32 %v544, 4294901760
    %v546 = vsub.f32 %v544, %v545
    %v547 = vand.u32 %v546, 4294901760
    %548 = vmatprep.subr.mxu0 %v547
    %v549 = vand.u32 %v240, 4294901760
    %v550 = vsub.f32 %v240, %v549
    %v551 = vand.u32 %v550, 4294901760
    %v552 = vsub.f32 %v550, %v551
    %v553 = vand.u32 %v552, 4294901760
    %554 = vmatpush1.msra.mxu0 %v553
    %v555 = vand.u32 %v254, 4294901760
    %v556 = vsub.f32 %v254, %v555
    %v557 = vand.u32 %v556, 4294901760
    %v558 = vsub.f32 %v556, %v557
    %v559 = vand.u32 %v558, 4294901760
    %560 = vmatprep.subr.mxu0 %v559
    %v561 = vand.u32 %v253, 4294901760
    %v562 = vsub.f32 %v253, %v561
    %v563 = vand.u32 %v562, 4294901760
    %v564 = vsub.f32 %v562, %v563
    %v565 = vand.u32 %v564, 4294901760
    %566 = vmatpush1.msra.mxu0 %v565
    %v567 = vand.u32 %v267, 4294901760
    %v568 = vsub.f32 %v267, %v567
    %v569 = vand.u32 %v568, 4294901760
    %v570 = vsub.f32 %v568, %v569
    %v571 = vand.u32 %v570, 4294901760
    %572 = vmatprep.subr.mxu0 %v571
    %v573 = vand.u32 %v266, 4294901760
    %v574 = vsub.f32 %v266, %v573
    %v575 = vand.u32 %v574, 4294901760
    %v576 = vsub.f32 %v574, %v575
    %v577 = vand.u32 %v576, 4294901760
    %578 = vmatpush1.msra.mxu0 %v577
    %579 = vmatprep.subr.mxu0 0.0
    %580 = vmatpush1.msra.mxu0 0.0
    %581 = vmatprep.subr.mxu0 0.0
    %582 = vmatpush1.msra.mxu0 0.0
    %583 = vmatprep.subr.mxu0 0.0
    %584 = vmatpush1.msra.mxu0 0.0
    %585 = vmatprep.subr.mxu0 0.0
    %586 = vmatpush1.msra.mxu0 0.0
    %587 = vmatprep.subr.mxu0 0.0
    %588 = vmatpush1.msra.mxu0 0.0
    %589 = vmatprep.subr.mxu0 0.0
    %590 = vmatpush1.msra.mxu0 0.0
    %591 = vmatprep.subr.mxu0 0.0
    %592 = vmatpush1.msra.mxu0 0.0
    %593 = vmatprep.subr.mxu0 0.0
    %594 = vmatpush1.msra.mxu0 0.0
    %595 = vmatprep.subr.mxu0 0.0
    %596 = vmatpush1.msra.mxu0 0.0
    %597 = vmatprep.subr.mxu0 0.0
    %598 = vmatpush1.msra.mxu0 0.0
    %599 = vmatprep.subr.mxu0 0.0
    %600 = vmatpush1.msra.mxu0 0.0
    %601 = vmatprep.subr.mxu0 0.0
    %602 = vmatpush1.msra.mxu0 0.0
    %603 = vmatprep.subr.mxu0 0.0
    %604 = vmatpush1.msra.mxu0 0.0
    %605 = vmatprep.subr.mxu0 0.0
    %606 = vmatpush1.msra.mxu0 0.0
    %607 = vmatprep.subr.mxu0 0.0
    %608 = vmatpush1.msra.mxu0 0.0
    %609 = vmatprep.subr.mxu0 0.0
    %610 = vmatpush1.msra.mxu0 0.0
    %611 = vmatprep.mubr.f32.mxu0 0.0
    %v612 = vand.u32 %v70, 4294901760
    %613 = vmatmul.mubr.f32.gmra.mrb[0].mxu0 %v612
    %v614 = vpop.f32.mrb[0].mxu0
    %v615 = vadd.f32 %v383, %v614
    %v616 = vpop.f32.mrb[0].mxu0
    %v617 = vadd.f32 %v385, %v616
    %618 = vdwg.mxu0
    %v619 = vand.u32 %v72, 4294901760
    %v620 = vsub.f32 %v72, %v619
    %621 = vmatprep.subr.mxu0 %v620
    %v622 = vand.u32 %v71, 4294901760
    %v623 = vsub.f32 %v71, %v622
    %624 = vmatpush1.msra.mxu0 %v623
    %v625 = vand.u32 %v85, 4294901760
    %v626 = vsub.f32 %v85, %v625
    %627 = vmatprep.subr.mxu0 %v626
    %v628 = vand.u32 %v84, 4294901760
    %v629 = vsub.f32 %v84, %v628
    %630 = vmatpush1.msra.mxu0 %v629
    %v631 = vand.u32 %v98, 4294901760
    %v632 = vsub.f32 %v98, %v631
    %633 = vmatprep.subr.mxu0 %v632
    %v634 = vand.u32 %v97, 4294901760
    %v635 = vsub.f32 %v97, %v634
    %636 = vmatpush1.msra.mxu0 %v635
    %v637 = vand.u32 %v111, 4294901760
    %v638 = vsub.f32 %v111, %v637
    %639 = vmatprep.subr.mxu0 %v638
    %v640 = vand.u32 %v110, 4294901760
    %v641 = vsub.f32 %v110, %v640
    %642 = vmatpush1.msra.mxu0 %v641
    %v643 = vand.u32 %v124, 4294901760
    %v644 = vsub.f32 %v124, %v643
    %645 = vmatprep.subr.mxu0 %v644
    %v646 = vand.u32 %v123, 4294901760
    %v647 = vsub.f32 %v123, %v646
    %648 = vmatpush1.msra.mxu0 %v647
    %v649 = vand.u32 %v137, 4294901760
    %v650 = vsub.f32 %v137, %v649
    %651 = vmatprep.subr.mxu0 %v650
    %v652 = vand.u32 %v136, 4294901760
    %v653 = vsub.f32 %v136, %v652
    %654 = vmatpush1.msra.mxu0 %v653
    %v655 = vand.u32 %v150, 4294901760
    %v656 = vsub.f32 %v150, %v655
    %657 = vmatprep.subr.mxu0 %v656
    %v658 = vand.u32 %v149, 4294901760
    %v659 = vsub.f32 %v149, %v658
    %660 = vmatpush1.msra.mxu0 %v659
    %v661 = vand.u32 %v163, 4294901760
    %v662 = vsub.f32 %v163, %v661
    %663 = vmatprep.subr.mxu0 %v662
    %v664 = vand.u32 %v162, 4294901760
    %v665 = vsub.f32 %v162, %v664
    %666 = vmatpush1.msra.mxu0 %v665
    %v667 = vand.u32 %v176, 4294901760
    %v668 = vsub.f32 %v176, %v667
    %669 = vmatprep.subr.mxu0 %v668
    %v670 = vand.u32 %v175, 4294901760
    %v671 = vsub.f32 %v175, %v670
    %672 = vmatpush1.msra.mxu0 %v671
    %v673 = vand.u32 %v189, 4294901760
    %v674 = vsub.f32 %v189, %v673
    %675 = vmatprep.subr.mxu0 %v674
    %v676 = vand.u32 %v188, 4294901760
    %v677 = vsub.f32 %v188, %v676
    %678 = vmatpush1.msra.mxu0 %v677
    %v679 = vand.u32 %v202, 4294901760
    %v680 = vsub.f32 %v202, %v679
    %681 = vmatprep.subr.mxu0 %v680
    %v682 = vand.u32 %v201, 4294901760
    %v683 = vsub.f32 %v201, %v682
    %684 = vmatpush1.msra.mxu0 %v683
    %v685 = vand.u32 %v215, 4294901760
    %v686 = vsub.f32 %v215, %v685
    %687 = vmatprep.subr.mxu0 %v686
    %v688 = vand.u32 %v214, 4294901760
    %v689 = vsub.f32 %v214, %v688
    %690 = vmatpush1.msra.mxu0 %v689
    %v691 = vand.u32 %v228, 4294901760
    %v692 = vsub.f32 %v228, %v691
    %693 = vmatprep.subr.mxu0 %v692
    %v694 = vand.u32 %v227, 4294901760
    %v695 = vsub.f32 %v227, %v694
    %696 = vmatpush1.msra.mxu0 %v695
    %v697 = vand.u32 %v241, 4294901760
    %v698 = vsub.f32 %v241, %v697
    %699 = vmatprep.subr.mxu0 %v698
    %v700 = vand.u32 %v240, 4294901760
    %v701 = vsub.f32 %v240, %v700
    %702 = vmatpush1.msra.mxu0 %v701
    %v703 = vand.u32 %v254, 4294901760
    %v704 = vsub.f32 %v254, %v703
    %705 = vmatprep.subr.mxu0 %v704
    %v706 = vand.u32 %v253, 4294901760
    %v707 = vsub.f32 %v253, %v706
    %708 = vmatpush1.msra.mxu0 %v707
    %v709 = vand.u32 %v267, 4294901760
    %v710 = vsub.f32 %v267, %v709
    %711 = vmatprep.subr.mxu0 %v710
    %v712 = vand.u32 %v266, 4294901760
    %v713 = vsub.f32 %v266, %v712
    %714 = vmatpush1.msra.mxu0 %v713
    %715 = vmatprep.subr.mxu0 0.0
    %716 = vmatpush1.msra.mxu0 0.0
    %717 = vmatprep.subr.mxu0 0.0
    %718 = vmatpush1.msra.mxu0 0.0
    %719 = vmatprep.subr.mxu0 0.0
    %720 = vmatpush1.msra.mxu0 0.0
    %721 = vmatprep.subr.mxu0 0.0
    %722 = vmatpush1.msra.mxu0 0.0
    %723 = vmatprep.subr.mxu0 0.0
    %724 = vmatpush1.msra.mxu0 0.0
    %725 = vmatprep.subr.mxu0 0.0
    %726 = vmatpush1.msra.mxu0 0.0
    %727 = vmatprep.subr.mxu0 0.0
    %728 = vmatpush1.msra.mxu0 0.0
    %729 = vmatprep.subr.mxu0 0.0
    %730 = vmatpush1.msra.mxu0 0.0
    %731 = vmatprep.subr.mxu0 0.0
    %732 = vmatpush1.msra.mxu0 0.0
    %733 = vmatprep.subr.mxu0 0.0
    %734 = vmatpush1.msra.mxu0 0.0
    %735 = vmatprep.subr.mxu0 0.0
    %736 = vmatpush1.msra.mxu0 0.0
    %737 = vmatprep.subr.mxu0 0.0
    %738 = vmatpush1.msra.mxu0 0.0
    %739 = vmatprep.subr.mxu0 0.0
    %740 = vmatpush1.msra.mxu0 0.0
    %741 = vmatprep.subr.mxu0 0.0
    %742 = vmatpush1.msra.mxu0 0.0
    %743 = vmatprep.subr.mxu0 0.0
    %744 = vmatpush1.msra.mxu0 0.0
    %745 = vmatprep.subr.mxu0 0.0
    %746 = vmatpush1.msra.mxu0 0.0
    %747 = vmatprep.mubr.f32.mxu0 0.0
    %v748 = vand.u32 %v70, 4294901760
    %v749 = vsub.f32 %v70, %v748
    %750 = vmatmul.mubr.f32.gmra.mrb[0].mxu0 %v749
    %v751 = vpop.f32.mrb[0].mxu0
    %v752 = vadd.f32 %v615, %v751
    %v753 = vpop.f32.mrb[0].mxu0
    %v754 = vadd.f32 %v617, %v753
    %755 = vdwg.mxu0
    %v756 = vand.u32 %v72, 4294901760
    %757 = vmatprep.subr.mxu0 %v756
    %v758 = vand.u32 %v71, 4294901760
    %759 = vmatpush1.msra.mxu0 %v758
    %v760 = vand.u32 %v85, 4294901760
    %761 = vmatprep.subr.mxu0 %v760
    %v762 = vand.u32 %v84, 4294901760
    %763 = vmatpush1.msra.mxu0 %v762
    %v764 = vand.u32 %v98, 4294901760
    %765 = vmatprep.subr.mxu0 %v764
    %v766 = vand.u32 %v97, 4294901760
    %767 = vmatpush1.msra.mxu0 %v766
    %v768 = vand.u32 %v111, 4294901760
    %769 = vmatprep.subr.mxu0 %v768
    %v770 = vand.u32 %v110, 4294901760
    %771 = vmatpush1.msra.mxu0 %v770
    %v772 = vand.u32 %v124, 4294901760
    %773 = vmatprep.subr.mxu0 %v772
    %v774 = vand.u32 %v123, 4294901760
    %775 = vmatpush1.msra.mxu0 %v774
    %v776 = vand.u32 %v137, 4294901760
    %777 = vmatprep.subr.mxu0 %v776
    %v778 = vand.u32 %v136, 4294901760
    %779 = vmatpush1.msra.mxu0 %v778
    %v780 = vand.u32 %v150, 4294901760
    %781 = vmatprep.subr.mxu0 %v780
    %v782 = vand.u32 %v149, 4294901760
    %783 = vmatpush1.msra.mxu0 %v782
    %v784 = vand.u32 %v163, 4294901760
    %785 = vmatprep.subr.mxu0 %v784
    %v786 = vand.u32 %v162, 4294901760
    %787 = vmatpush1.msra.mxu0 %v786
    %v788 = vand.u32 %v176, 4294901760
    %789 = vmatprep.subr.mxu0 %v788
    %v790 = vand.u32 %v175, 4294901760
    %791 = vmatpush1.msra.mxu0 %v790
    %v792 = vand.u32 %v189, 4294901760
    %793 = vmatprep.subr.mxu0 %v792
    %v794 = vand.u32 %v188, 4294901760
    %795 = vmatpush1.msra.mxu0 %v794
    %v796 = vand.u32 %v202, 4294901760
    %797 = vmatprep.subr.mxu0 %v796
    %v798 = vand.u32 %v201, 4294901760
    %799 = vmatpush1.msra.mxu0 %v798
    %v800 = vand.u32 %v215, 4294901760
    %801 = vmatprep.subr.mxu0 %v800
    %v802 = vand.u32 %v214, 4294901760
    %803 = vmatpush1.msra.mxu0 %v802
    %v804 = vand.u32 %v228, 4294901760
    %805 = vmatprep.subr.mxu0 %v804
    %v806 = vand.u32 %v227, 4294901760
    %807 = vmatpush1.msra.mxu0 %v806
    %v808 = vand.u32 %v241, 4294901760
    %809 = vmatprep.subr.mxu0 %v808
    %v810 = vand.u32 %v240, 4294901760
    %811 = vmatpush1.msra.mxu0 %v810
    %v812 = vand.u32 %v254, 4294901760
    %813 = vmatprep.subr.mxu0 %v812
    %v814 = vand.u32 %v253, 4294901760
    %815 = vmatpush1.msra.mxu0 %v814
    %v816 = vand.u32 %v267, 4294901760
    %817 = vmatprep.subr.mxu0 %v816
    %v818 = vand.u32 %v266, 4294901760
    %819 = vmatpush1.msra.mxu0 %v818
    %820 = vmatprep.subr.mxu0 0.0
    %821 = vmatpush1.msra.mxu0 0.0
    %822 = vmatprep.subr.mxu0 0.0
    %823 = vmatpush1.msra.mxu0 0.0
    %824 = vmatprep.subr.mxu0 0.0
    %825 = vmatpush1.msra.mxu0 0.0
    %826 = vmatprep.subr.mxu0 0.0
    %827 = vmatpush1.msra.mxu0 0.0
    %828 = vmatprep.subr.mxu0 0.0
    %829 = vmatpush1.msra.mxu0 0.0
    %830 = vmatprep.subr.mxu0 0.0
    %831 = vmatpush1.msra.mxu0 0.0
    %832 = vmatprep.subr.mxu0 0.0
    %833 = vmatpush1.msra.mxu0 0.0
    %834 = vmatprep.subr.mxu0 0.0
    %835 = vmatpush1.msra.mxu0 0.0
    %836 = vmatprep.subr.mxu0 0.0
    %837 = vmatpush1.msra.mxu0 0.0
    %838 = vmatprep.subr.mxu0 0.0
    %839 = vmatpush1.msra.mxu0 0.0
    %840 = vmatprep.subr.mxu0 0.0
    %841 = vmatpush1.msra.mxu0 0.0
    %842 = vmatprep.subr.mxu0 0.0
    %843 = vmatpush1.msra.mxu0 0.0
    %844 = vmatprep.subr.mxu0 0.0
    %845 = vmatpush1.msra.mxu0 0.0
    %846 = vmatprep.subr.mxu0 0.0
    %847 = vmatpush1.msra.mxu0 0.0
    %848 = vmatprep.subr.mxu0 0.0
    %849 = vmatpush1.msra.mxu0 0.0
    %850 = vmatprep.subr.mxu0 0.0
    %851 = vmatpush1.msra.mxu0 0.0
    %852 = vmatprep.mubr.f32.mxu0 0.0
    %v853 = vand.u32 %v70, 4294901760
    %v854 = vsub.f32 %v70, %v853
    %v855 = vand.u32 %v854, 4294901760
    %856 = vmatmul.mubr.f32.gmra.mrb[0].mxu0 %v855
    %v857 = vpop.f32.mrb[0].mxu0
    %v858 = vadd.f32 %v752, %v857
    %v859 = vpop.f32.mrb[0].mxu0
    %v860 = vadd.f32 %v754, %v859
    %861 = vdwg.mxu0
    %v862 = vand.u32 %v72, 4294901760
    %v863 = vsub.f32 %v72, %v862
    %v864 = vand.u32 %v863, 4294901760
    %865 = vmatprep.subr.mxu0 %v864
    %v866 = vand.u32 %v71, 4294901760
    %v867 = vsub.f32 %v71, %v866
    %v868 = vand.u32 %v867, 4294901760
    %869 = vmatpush1.msra.mxu0 %v868
    %v870 = vand.u32 %v85, 4294901760
    %v871 = vsub.f32 %v85, %v870
    %v872 = vand.u32 %v871, 4294901760
    %873 = vmatprep.subr.mxu0 %v872
    %v874 = vand.u32 %v84, 4294901760
    %v875 = vsub.f32 %v84, %v874
    %v876 = vand.u32 %v875, 4294901760
    %877 = vmatpush1.msra.mxu0 %v876
    %v878 = vand.u32 %v98, 4294901760
    %v879 = vsub.f32 %v98, %v878
    %v880 = vand.u32 %v879, 4294901760
    %881 = vmatprep.subr.mxu0 %v880
    %v882 = vand.u32 %v97, 4294901760
    %v883 = vsub.f32 %v97, %v882
    %v884 = vand.u32 %v883, 4294901760
    %885 = vmatpush1.msra.mxu0 %v884
    %v886 = vand.u32 %v111, 4294901760
    %v887 = vsub.f32 %v111, %v886
    %v888 = vand.u32 %v887, 4294901760
    %889 = vmatprep.subr.mxu0 %v888
    %v890 = vand.u32 %v110, 4294901760
    %v891 = vsub.f32 %v110, %v890
    %v892 = vand.u32 %v891, 4294901760
    %893 = vmatpush1.msra.mxu0 %v892
    %v894 = vand.u32 %v124, 4294901760
    %v895 = vsub.f32 %v124, %v894
    %v896 = vand.u32 %v895, 4294901760
    %897 = vmatprep.subr.mxu0 %v896
    %v898 = vand.u32 %v123, 4294901760
    %v899 = vsub.f32 %v123, %v898
    %v900 = vand.u32 %v899, 4294901760
    %901 = vmatpush1.msra.mxu0 %v900
    %v902 = vand.u32 %v137, 4294901760
    %v903 = vsub.f32 %v137, %v902
    %v904 = vand.u32 %v903, 4294901760
    %905 = vmatprep.subr.mxu0 %v904
    %v906 = vand.u32 %v136, 4294901760
    %v907 = vsub.f32 %v136, %v906
    %v908 = vand.u32 %v907, 4294901760
    %909 = vmatpush1.msra.mxu0 %v908
    %v910 = vand.u32 %v150, 4294901760
    %v911 = vsub.f32 %v150, %v910
    %v912 = vand.u32 %v911, 4294901760
    %913 = vmatprep.subr.mxu0 %v912
    %v914 = vand.u32 %v149, 4294901760
    %v915 = vsub.f32 %v149, %v914
    %v916 = vand.u32 %v915, 4294901760
    %917 = vmatpush1.msra.mxu0 %v916
    %v918 = vand.u32 %v163, 4294901760
    %v919 = vsub.f32 %v163, %v918
    %v920 = vand.u32 %v919, 4294901760
    %921 = vmatprep.subr.mxu0 %v920
    %v922 = vand.u32 %v162, 4294901760
    %v923 = vsub.f32 %v162, %v922
    %v924 = vand.u32 %v923, 4294901760
    %925 = vmatpush1.msra.mxu0 %v924
    %v926 = vand.u32 %v176, 4294901760
    %v927 = vsub.f32 %v176, %v926
    %v928 = vand.u32 %v927, 4294901760
    %929 = vmatprep.subr.mxu0 %v928
    %v930 = vand.u32 %v175, 4294901760
    %v931 = vsub.f32 %v175, %v930
    %v932 = vand.u32 %v931, 4294901760
    %933 = vmatpush1.msra.mxu0 %v932
    %v934 = vand.u32 %v189, 4294901760
    %v935 = vsub.f32 %v189, %v934
    %v936 = vand.u32 %v935, 4294901760
    %937 = vmatprep.subr.mxu0 %v936
    %v938 = vand.u32 %v188, 4294901760
    %v939 = vsub.f32 %v188, %v938
    %v940 = vand.u32 %v939, 4294901760
    %941 = vmatpush1.msra.mxu0 %v940
    %v942 = vand.u32 %v202, 4294901760
    %v943 = vsub.f32 %v202, %v942
    %v944 = vand.u32 %v943, 4294901760
    %945 = vmatprep.subr.mxu0 %v944
    %v946 = vand.u32 %v201, 4294901760
    %v947 = vsub.f32 %v201, %v946
    %v948 = vand.u32 %v947, 4294901760
    %949 = vmatpush1.msra.mxu0 %v948
    %v950 = vand.u32 %v215, 4294901760
    %v951 = vsub.f32 %v215, %v950
    %v952 = vand.u32 %v951, 4294901760
    %953 = vmatprep.subr.mxu0 %v952
    %v954 = vand.u32 %v214, 4294901760
    %v955 = vsub.f32 %v214, %v954
    %v956 = vand.u32 %v955, 4294901760
    %957 = vmatpush1.msra.mxu0 %v956
    %v958 = vand.u32 %v228, 4294901760
    %v959 = vsub.f32 %v228, %v958
    %v960 = vand.u32 %v959, 4294901760
    %961 = vmatprep.subr.mxu0 %v960
    %v962 = vand.u32 %v227, 4294901760
    %v963 = vsub.f32 %v227, %v962
    %v964 = vand.u32 %v963, 4294901760
    %965 = vmatpush1.msra.mxu0 %v964
    %v966 = vand.u32 %v241, 4294901760
    %v967 = vsub.f32 %v241, %v966
    %v968 = vand.u32 %v967, 4294901760
    %969 = vmatprep.subr.mxu0 %v968
    %v970 = vand.u32 %v240, 4294901760
    %v971 = vsub.f32 %v240, %v970
    %v972 = vand.u32 %v971, 4294901760
    %973 = vmatpush1.msra.mxu0 %v972
    %v974 = vand.u32 %v254, 4294901760
    %v975 = vsub.f32 %v254, %v974
    %v976 = vand.u32 %v975, 4294901760
    %977 = vmatprep.subr.mxu0 %v976
    %v978 = vand.u32 %v253, 4294901760
    %v979 = vsub.f32 %v253, %v978
    %v980 = vand.u32 %v979, 4294901760
    %981 = vmatpush1.msra.mxu0 %v980
    %v982 = vand.u32 %v267, 4294901760
    %v983 = vsub.f32 %v267, %v982
    %v984 = vand.u32 %v983, 4294901760
    %985 = vmatprep.subr.mxu0 %v984
    %v986 = vand.u32 %v266, 4294901760
    %v987 = vsub.f32 %v266, %v986
    %v988 = vand.u32 %v987, 4294901760
    %989 = vmatpush1.msra.mxu0 %v988
    %990 = vmatprep.subr.mxu0 0.0
    %991 = vmatpush1.msra.mxu0 0.0
    %992 = vmatprep.subr.mxu0 0.0
    %993 = vmatpush1.msra.mxu0 0.0
    %994 = vmatprep.subr.mxu0 0.0
    %995 = vmatpush1.msra.mxu0 0.0
    %996 = vmatprep.subr.mxu0 0.0
    %997 = vmatpush1.msra.mxu0 0.0
    %998 = vmatprep.subr.mxu0 0.0
    %999 = vmatpush1.msra.mxu0 0.0
    %1000 = vmatprep.subr.mxu0 0.0
    %1001 = vmatpush1.msra.mxu0 0.0
    %1002 = vmatprep.subr.mxu0 0.0
    %1003 = vmatpush1.msra.mxu0 0.0
    %1004 = vmatprep.subr.mxu0 0.0
    %1005 = vmatpush1.msra.mxu0 0.0
    %1006 = vmatprep.subr.mxu0 0.0
    %1007 = vmatpush1.msra.mxu0 0.0
    %1008 = vmatprep.subr.mxu0 0.0
    %1009 = vmatpush1.msra.mxu0 0.0
    %1010 = vmatprep.subr.mxu0 0.0
    %1011 = vmatpush1.msra.mxu0 0.0
    %1012 = vmatprep.subr.mxu0 0.0
    %1013 = vmatpush1.msra.mxu0 0.0
    %1014 = vmatprep.subr.mxu0 0.0
    %1015 = vmatpush1.msra.mxu0 0.0
    %1016 = vmatprep.subr.mxu0 0.0
    %1017 = vmatpush1.msra.mxu0 0.0
    %1018 = vmatprep.subr.mxu0 0.0
    %1019 = vmatpush1.msra.mxu0 0.0
    %1020 = vmatprep.subr.mxu0 0.0
    %1021 = vmatpush1.msra.mxu0 0.0
    %1022 = vmatprep.mubr.f32.mxu0 0.0
    %v1023 = vand.u32 %v70, 4294901760
    %1024 = vmatmul.mubr.f32.gmra.mrb[0].mxu0 %v1023
    %v1025 = vpop.f32.mrb[0].mxu0
    %v1026 = vadd.f32 %v858, %v1025
    %v1027 = vpop.f32.mrb[0].mxu0
    %v1028 = vadd.f32 %v860, %v1027
    %1029 = vdwg.mxu0
    %v1030 = vand.u32 %v72, 4294901760
    %1031 = vmatprep.subr.mxu0 %v1030
    %v1032 = vand.u32 %v71, 4294901760
    %1033 = vmatpush1.msra.mxu0 %v1032
    %v1034 = vand.u32 %v85, 4294901760
    %1035 = vmatprep.subr.mxu0 %v1034
    %v1036 = vand.u32 %v84, 4294901760
    %1037 = vmatpush1.msra.mxu0 %v1036
    %v1038 = vand.u32 %v98, 4294901760
    %1039 = vmatprep.subr.mxu0 %v1038
    %v1040 = vand.u32 %v97, 4294901760
    %1041 = vmatpush1.msra.mxu0 %v1040
    %v1042 = vand.u32 %v111, 4294901760
    %1043 = vmatprep.subr.mxu0 %v1042
    %v1044 = vand.u32 %v110, 4294901760
    %1045 = vmatpush1.msra.mxu0 %v1044
    %v1046 = vand.u32 %v124, 4294901760
    %1047 = vmatprep.subr.mxu0 %v1046
    %v1048 = vand.u32 %v123, 4294901760
    %1049 = vmatpush1.msra.mxu0 %v1048
    %v1050 = vand.u32 %v137, 4294901760
    %1051 = vmatprep.subr.mxu0 %v1050
    %v1052 = vand.u32 %v136, 4294901760
    %1053 = vmatpush1.msra.mxu0 %v1052
    %v1054 = vand.u32 %v150, 4294901760
    %1055 = vmatprep.subr.mxu0 %v1054
    %v1056 = vand.u32 %v149, 4294901760
    %1057 = vmatpush1.msra.mxu0 %v1056
    %v1058 = vand.u32 %v163, 4294901760
    %1059 = vmatprep.subr.mxu0 %v1058
    %v1060 = vand.u32 %v162, 4294901760
    %1061 = vmatpush1.msra.mxu0 %v1060
    %v1062 = vand.u32 %v176, 4294901760
    %1063 = vmatprep.subr.mxu0 %v1062
    %v1064 = vand.u32 %v175, 4294901760
    %1065 = vmatpush1.msra.mxu0 %v1064
    %v1066 = vand.u32 %v189, 4294901760
    %1067 = vmatprep.subr.mxu0 %v1066
    %v1068 = vand.u32 %v188, 4294901760
    %1069 = vmatpush1.msra.mxu0 %v1068
    %v1070 = vand.u32 %v202, 4294901760
    %1071 = vmatprep.subr.mxu0 %v1070
    %v1072 = vand.u32 %v201, 4294901760
    %1073 = vmatpush1.msra.mxu0 %v1072
    %v1074 = vand.u32 %v215, 4294901760
    %1075 = vmatprep.subr.mxu0 %v1074
    %v1076 = vand.u32 %v214, 4294901760
    %1077 = vmatpush1.msra.mxu0 %v1076
    %v1078 = vand.u32 %v228, 4294901760
    %1079 = vmatprep.subr.mxu0 %v1078
    %v1080 = vand.u32 %v227, 4294901760
    %1081 = vmatpush1.msra.mxu0 %v1080
    %v1082 = vand.u32 %v241, 4294901760
    %1083 = vmatprep.subr.mxu0 %v1082
    %v1084 = vand.u32 %v240, 4294901760
    %1085 = vmatpush1.msra.mxu0 %v1084
    %v1086 = vand.u32 %v254, 4294901760
    %1087 = vmatprep.subr.mxu0 %v1086
    %v1088 = vand.u32 %v253, 4294901760
    %1089 = vmatpush1.msra.mxu0 %v1088
    %v1090 = vand.u32 %v267, 4294901760
    %1091 = vmatprep.subr.mxu0 %v1090
    %v1092 = vand.u32 %v266, 4294901760
    %1093 = vmatpush1.msra.mxu0 %v1092
    %1094 = vmatprep.subr.mxu0 0.0
    %1095 = vmatpush1.msra.mxu0 0.0
    %1096 = vmatprep.subr.mxu0 0.0
    %1097 = vmatpush1.msra.mxu0 0.0
    %1098 = vmatprep.subr.mxu0 0.0
    %1099 = vmatpush1.msra.mxu0 0.0
    %1100 = vmatprep.subr.mxu0 0.0
    %1101 = vmatpush1.msra.mxu0 0.0
    %1102 = vmatprep.subr.mxu0 0.0
    %1103 = vmatpush1.msra.mxu0 0.0
    %1104 = vmatprep.subr.mxu0 0.0
    %1105 = vmatpush1.msra.mxu0 0.0
    %1106 = vmatprep.subr.mxu0 0.0
    %1107 = vmatpush1.msra.mxu0 0.0
    %1108 = vmatprep.subr.mxu0 0.0
    %1109 = vmatpush1.msra.mxu0 0.0
    %1110 = vmatprep.subr.mxu0 0.0
    %1111 = vmatpush1.msra.mxu0 0.0
    %1112 = vmatprep.subr.mxu0 0.0
    %1113 = vmatpush1.msra.mxu0 0.0
    %1114 = vmatprep.subr.mxu0 0.0
    %1115 = vmatpush1.msra.mxu0 0.0
    %1116 = vmatprep.subr.mxu0 0.0
    %1117 = vmatpush1.msra.mxu0 0.0
    %1118 = vmatprep.subr.mxu0 0.0
    %1119 = vmatpush1.msra.mxu0 0.0
    %1120 = vmatprep.subr.mxu0 0.0
    %1121 = vmatpush1.msra.mxu0 0.0
    %1122 = vmatprep.subr.mxu0 0.0
    %1123 = vmatpush1.msra.mxu0 0.0
    %1124 = vmatprep.subr.mxu0 0.0
    %1125 = vmatpush1.msra.mxu0 0.0
    %1126 = vmatprep.mubr.f32.mxu0 0.0
    %v1127 = vand.u32 %v70, 4294901760
    %1128 = vmatmul.mubr.f32.gmra.mrb[0].mxu0 %v1127
    %v1129 = vpop.f32.mrb[0].mxu0
    %v1130 = vadd.f32 %v1026, %v1129
    %v1131 = vpop.f32.mrb[0].mxu0
    %v1132 = vadd.f32 %v1028, %v1131
    %1133 = vdwg.mxu0
    %v1134 = vand.u32 %v74, 4294901760
    %1135 = vmatprep.subr.mxu0 %v1134
    %v1136 = vand.u32 %v73, 4294901760
    %1137 = vmatpush1.msra.mxu0 %v1136
    %v1138 = vand.u32 %v87, 4294901760
    %1139 = vmatprep.subr.mxu0 %v1138
    %v1140 = vand.u32 %v86, 4294901760
    %1141 = vmatpush1.msra.mxu0 %v1140
    %v1142 = vand.u32 %v100, 4294901760
    %1143 = vmatprep.subr.mxu0 %v1142
    %v1144 = vand.u32 %v99, 4294901760
    %1145 = vmatpush1.msra.mxu0 %v1144
    %v1146 = vand.u32 %v113, 4294901760
    %1147 = vmatprep.subr.mxu0 %v1146
    %v1148 = vand.u32 %v112, 4294901760
    %1149 = vmatpush1.msra.mxu0 %v1148
    %v1150 = vand.u32 %v126, 4294901760
    %1151 = vmatprep.subr.mxu0 %v1150
    %v1152 = vand.u32 %v125, 4294901760
    %1153 = vmatpush1.msra.mxu0 %v1152
    %v1154 = vand.u32 %v139, 4294901760
    %1155 = vmatprep.subr.mxu0 %v1154
    %v1156 = vand.u32 %v138, 4294901760
    %1157 = vmatpush1.msra.mxu0 %v1156
    %v1158 = vand.u32 %v152, 4294901760
    %1159 = vmatprep.subr.mxu0 %v1158
    %v1160 = vand.u32 %v151, 4294901760
    %1161 = vmatpush1.msra.mxu0 %v1160
    %v1162 = vand.u32 %v165, 4294901760
    %1163 = vmatprep.subr.mxu0 %v1162
    %v1164 = vand.u32 %v164, 4294901760
    %1165 = vmatpush1.msra.mxu0 %v1164
    %v1166 = vand.u32 %v178, 4294901760
    %1167 = vmatprep.subr.mxu0 %v1166
    %v1168 = vand.u32 %v177, 4294901760
    %1169 = vmatpush1.msra.mxu0 %v1168
    %v1170 = vand.u32 %v191, 4294901760
    %1171 = vmatprep.subr.mxu0 %v1170
    %v1172 = vand.u32 %v190, 4294901760
    %1173 = vmatpush1.msra.mxu0 %v1172
    %v1174 = vand.u32 %v204, 4294901760
    %1175 = vmatprep.subr.mxu0 %v1174
    %v1176 = vand.u32 %v203, 4294901760
    %1177 = vmatpush1.msra.mxu0 %v1176
    %v1178 = vand.u32 %v217, 4294901760
    %1179 = vmatprep.subr.mxu0 %v1178
    %v1180 = vand.u32 %v216, 4294901760
    %1181 = vmatpush1.msra.mxu0 %v1180
    %v1182 = vand.u32 %v230, 4294901760
    %1183 = vmatprep.subr.mxu0 %v1182
    %v1184 = vand.u32 %v229, 4294901760
    %1185 = vmatpush1.msra.mxu0 %v1184
    %v1186 = vand.u32 %v243, 4294901760
    %1187 = vmatprep.subr.mxu0 %v1186
    %v1188 = vand.u32 %v242, 4294901760
    %1189 = vmatpush1.msra.mxu0 %v1188
    %v1190 = vand.u32 %v256, 4294901760
    %1191 = vmatprep.subr.mxu0 %v1190
    %v1192 = vand.u32 %v255, 4294901760
    %1193 = vmatpush1.msra.mxu0 %v1192
    %v1194 = vand.u32 %v269, 4294901760
    %1195 = vmatprep.subr.mxu0 %v1194
    %v1196 = vand.u32 %v268, 4294901760
    %1197 = vmatpush1.msra.mxu0 %v1196
    %1198 = vmatprep.subr.mxu0 0.0
    %1199 = vmatpush1.msra.mxu0 0.0
    %1200 = vmatprep.subr.mxu0 0.0
    %1201 = vmatpush1.msra.mxu0 0.0
    %1202 = vmatprep.subr.mxu0 0.0
    %1203 = vmatpush1.msra.mxu0 0.0
    %1204 = vmatprep.subr.mxu0 0.0
    %1205 = vmatpush1.msra.mxu0 0.0
    %1206 = vmatprep.subr.mxu0 0.0
    %1207 = vmatpush1.msra.mxu0 0.0
    %1208 = vmatprep.subr.mxu0 0.0
    %1209 = vmatpush1.msra.mxu0 0.0
    %1210 = vmatprep.subr.mxu0 0.0
    %1211 = vmatpush1.msra.mxu0 0.0
    %1212 = vmatprep.subr.mxu0 0.0
    %1213 = vmatpush1.msra.mxu0 0.0
    %1214 = vmatprep.subr.mxu0 0.0
    %1215 = vmatpush1.msra.mxu0 0.0
    %1216 = vmatprep.subr.mxu0 0.0
    %1217 = vmatpush1.msra.mxu0 0.0
    %1218 = vmatprep.subr.mxu0 0.0
    %1219 = vmatpush1.msra.mxu0 0.0
    %1220 = vmatprep.subr.mxu0 0.0
    %1221 = vmatpush1.msra.mxu0 0.0
    %1222 = vmatprep.subr.mxu0 0.0
    %1223 = vmatpush1.msra.mxu0 0.0
    %1224 = vmatprep.subr.mxu0 0.0
    %1225 = vmatpush1.msra.mxu0 0.0
    %1226 = vmatprep.subr.mxu0 0.0
    %1227 = vmatpush1.msra.mxu0 0.0
    %1228 = vmatprep.subr.mxu0 0.0
    %1229 = vmatpush1.msra.mxu0 0.0
    %1230 = vmatprep.mubr.f32.mxu0 0.0
    %v1231 = vand.u32 %v70, 4294901760
    %v1232 = vsub.f32 %v70, %v1231
    %v1233 = vand.u32 %v1232, 4294901760
    %v1234 = vsub.f32 %v1232, %v1233
    %v1235 = vand.u32 %v1234, 4294901760
    %1236 = vmatmul.mubr.f32.gmra.mrb[0].mxu0 %v1235
    %v1237 = vpop.f32.mrb[0].mxu0
    %v1238 = vadd.f32 0.0, %v1237
    %v1239 = vpop.f32.mrb[0].mxu0
    %v1240 = vadd.f32 0.0, %v1239
    %1241 = vdwg.mxu0
    %v1242 = vand.u32 %v74, 4294901760
    %v1243 = vsub.f32 %v74, %v1242
    %v1244 = vand.u32 %v1243, 4294901760
    %v1245 = vsub.f32 %v1243, %v1244
    %v1246 = vand.u32 %v1245, 4294901760
    %1247 = vmatprep.subr.mxu0 %v1246
    %v1248 = vand.u32 %v73, 4294901760
    %v1249 = vsub.f32 %v73, %v1248
    %v1250 = vand.u32 %v1249, 4294901760
    %v1251 = vsub.f32 %v1249, %v1250
    %v1252 = vand.u32 %v1251, 4294901760
    %1253 = vmatpush1.msra.mxu0 %v1252
    %v1254 = vand.u32 %v87, 4294901760
    %v1255 = vsub.f32 %v87, %v1254
    %v1256 = vand.u32 %v1255, 4294901760
    %v1257 = vsub.f32 %v1255, %v1256
    %v1258 = vand.u32 %v1257, 4294901760
    %1259 = vmatprep.subr.mxu0 %v1258
    %v1260 = vand.u32 %v86, 4294901760
    %v1261 = vsub.f32 %v86, %v1260
    %v1262 = vand.u32 %v1261, 4294901760
    %v1263 = vsub.f32 %v1261, %v1262
    %v1264 = vand.u32 %v1263, 4294901760
    %1265 = vmatpush1.msra.mxu0 %v1264
    %v1266 = vand.u32 %v100, 4294901760
    %v1267 = vsub.f32 %v100, %v1266
    %v1268 = vand.u32 %v1267, 4294901760
    %v1269 = vsub.f32 %v1267, %v1268
    %v1270 = vand.u32 %v1269, 4294901760
    %1271 = vmatprep.subr.mxu0 %v1270
    %v1272 = vand.u32 %v99, 4294901760
    %v1273 = vsub.f32 %v99, %v1272
    %v1274 = vand.u32 %v1273, 4294901760
    %v1275 = vsub.f32 %v1273, %v1274
    %v1276 = vand.u32 %v1275, 4294901760
    %1277 = vmatpush1.msra.mxu0 %v1276
    %v1278 = vand.u32 %v113, 4294901760
    %v1279 = vsub.f32 %v113, %v1278
    %v1280 = vand.u32 %v1279, 4294901760
    %v1281 = vsub.f32 %v1279, %v1280
    %v1282 = vand.u32 %v1281, 4294901760
    %1283 = vmatprep.subr.mxu0 %v1282
    %v1284 = vand.u32 %v112, 4294901760
    %v1285 = vsub.f32 %v112, %v1284
    %v1286 = vand.u32 %v1285, 4294901760
    %v1287 = vsub.f32 %v1285, %v1286
    %v1288 = vand.u32 %v1287, 4294901760
    %1289 = vmatpush1.msra.mxu0 %v1288
    %v1290 = vand.u32 %v126, 4294901760
    %v1291 = vsub.f32 %v126, %v1290
    %v1292 = vand.u32 %v1291, 4294901760
    %v1293 = vsub.f32 %v1291, %v1292
    %v1294 = vand.u32 %v1293, 4294901760
    %1295 = vmatprep.subr.mxu0 %v1294
    %v1296 = vand.u32 %v125, 4294901760
    %v1297 = vsub.f32 %v125, %v1296
    %v1298 = vand.u32 %v1297, 4294901760
    %v1299 = vsub.f32 %v1297, %v1298
    %v1300 = vand.u32 %v1299, 4294901760
    %1301 = vmatpush1.msra.mxu0 %v1300
    %v1302 = vand.u32 %v139, 4294901760
    %v1303 = vsub.f32 %v139, %v1302
    %v1304 = vand.u32 %v1303, 4294901760
    %v1305 = vsub.f32 %v1303, %v1304
    %v1306 = vand.u32 %v1305, 4294901760
    %1307 = vmatprep.subr.mxu0 %v1306
    %v1308 = vand.u32 %v138, 4294901760
    %v1309 = vsub.f32 %v138, %v1308
    %v1310 = vand.u32 %v1309, 4294901760
    %v1311 = vsub.f32 %v1309, %v1310
    %v1312 = vand.u32 %v1311, 4294901760
    %1313 = vmatpush1.msra.mxu0 %v1312
    %v1314 = vand.u32 %v152, 4294901760
    %v1315 = vsub.f32 %v152, %v1314
    %v1316 = vand.u32 %v1315, 4294901760
    %v1317 = vsub.f32 %v1315, %v1316
    %v1318 = vand.u32 %v1317, 4294901760
    %1319 = vmatprep.subr.mxu0 %v1318
    %v1320 = vand.u32 %v151, 4294901760
    %v1321 = vsub.f32 %v151, %v1320
    %v1322 = vand.u32 %v1321, 4294901760
    %v1323 = vsub.f32 %v1321, %v1322
    %v1324 = vand.u32 %v1323, 4294901760
    %1325 = vmatpush1.msra.mxu0 %v1324
    %v1326 = vand.u32 %v165, 4294901760
    %v1327 = vsub.f32 %v165, %v1326
    %v1328 = vand.u32 %v1327, 4294901760
    %v1329 = vsub.f32 %v1327, %v1328
    %v1330 = vand.u32 %v1329, 4294901760
    %1331 = vmatprep.subr.mxu0 %v1330
    %v1332 = vand.u32 %v164, 4294901760
    %v1333 = vsub.f32 %v164, %v1332
    %v1334 = vand.u32 %v1333, 4294901760
    %v1335 = vsub.f32 %v1333, %v1334
    %v1336 = vand.u32 %v1335, 4294901760
    %1337 = vmatpush1.msra.mxu0 %v1336
    %v1338 = vand.u32 %v178, 4294901760
    %v1339 = vsub.f32 %v178, %v1338
    %v1340 = vand.u32 %v1339, 4294901760
    %v1341 = vsub.f32 %v1339, %v1340
    %v1342 = vand.u32 %v1341, 4294901760
    %1343 = vmatprep.subr.mxu0 %v1342
    %v1344 = vand.u32 %v177, 4294901760
    %v1345 = vsub.f32 %v177, %v1344
    %v1346 = vand.u32 %v1345, 4294901760
    %v1347 = vsub.f32 %v1345, %v1346
    %v1348 = vand.u32 %v1347, 4294901760
    %1349 = vmatpush1.msra.mxu0 %v1348
    %v1350 = vand.u32 %v191, 4294901760
    %v1351 = vsub.f32 %v191, %v1350
    %v1352 = vand.u32 %v1351, 4294901760
    %v1353 = vsub.f32 %v1351, %v1352
    %v1354 = vand.u32 %v1353, 4294901760
    %1355 = vmatprep.subr.mxu0 %v1354
    %v1356 = vand.u32 %v190, 4294901760
    %v1357 = vsub.f32 %v190, %v1356
    %v1358 = vand.u32 %v1357, 4294901760
    %v1359 = vsub.f32 %v1357, %v1358
    %v1360 = vand.u32 %v1359, 4294901760
    %1361 = vmatpush1.msra.mxu0 %v1360
    %v1362 = vand.u32 %v204, 4294901760
    %v1363 = vsub.f32 %v204, %v1362
    %v1364 = vand.u32 %v1363, 4294901760
    %v1365 = vsub.f32 %v1363, %v1364
    %v1366 = vand.u32 %v1365, 4294901760
    %1367 = vmatprep.subr.mxu0 %v1366
    %v1368 = vand.u32 %v203, 4294901760
    %v1369 = vsub.f32 %v203, %v1368
    %v1370 = vand.u32 %v1369, 4294901760
    %v1371 = vsub.f32 %v1369, %v1370
    %v1372 = vand.u32 %v1371, 4294901760
    %1373 = vmatpush1.msra.mxu0 %v1372
    %v1374 = vand.u32 %v217, 4294901760
    %v1375 = vsub.f32 %v217, %v1374
    %v1376 = vand.u32 %v1375, 4294901760
    %v1377 = vsub.f32 %v1375, %v1376
    %v1378 = vand.u32 %v1377, 4294901760
    %1379 = vmatprep.subr.mxu0 %v1378
    %v1380 = vand.u32 %v216, 4294901760
    %v1381 = vsub.f32 %v216, %v1380
    %v1382 = vand.u32 %v1381, 4294901760
    %v1383 = vsub.f32 %v1381, %v1382
    %v1384 = vand.u32 %v1383, 4294901760
    %1385 = vmatpush1.msra.mxu0 %v1384
    %v1386 = vand.u32 %v230, 4294901760
    %v1387 = vsub.f32 %v230, %v1386
    %v1388 = vand.u32 %v1387, 4294901760
    %v1389 = vsub.f32 %v1387, %v1388
    %v1390 = vand.u32 %v1389, 4294901760
    %1391 = vmatprep.subr.mxu0 %v1390
    %v1392 = vand.u32 %v229, 4294901760
    %v1393 = vsub.f32 %v229, %v1392
    %v1394 = vand.u32 %v1393, 4294901760
    %v1395 = vsub.f32 %v1393, %v1394
    %v1396 = vand.u32 %v1395, 4294901760
    %1397 = vmatpush1.msra.mxu0 %v1396
    %v1398 = vand.u32 %v243, 4294901760
    %v1399 = vsub.f32 %v243, %v1398
    %v1400 = vand.u32 %v1399, 4294901760
    %v1401 = vsub.f32 %v1399, %v1400
    %v1402 = vand.u32 %v1401, 4294901760
    %1403 = vmatprep.subr.mxu0 %v1402
    %v1404 = vand.u32 %v242, 4294901760
    %v1405 = vsub.f32 %v242, %v1404
    %v1406 = vand.u32 %v1405, 4294901760
    %v1407 = vsub.f32 %v1405, %v1406
    %v1408 = vand.u32 %v1407, 4294901760
    %1409 = vmatpush1.msra.mxu0 %v1408
    %v1410 = vand.u32 %v256, 4294901760
    %v1411 = vsub.f32 %v256, %v1410
    %v1412 = vand.u32 %v1411, 4294901760
    %v1413 = vsub.f32 %v1411, %v1412
    %v1414 = vand.u32 %v1413, 4294901760
    %1415 = vmatprep.subr.mxu0 %v1414
    %v1416 = vand.u32 %v255, 4294901760
    %v1417 = vsub.f32 %v255, %v1416
    %v1418 = vand.u32 %v1417, 4294901760
    %v1419 = vsub.f32 %v1417, %v1418
    %v1420 = vand.u32 %v1419, 4294901760
    %1421 = vmatpush1.msra.mxu0 %v1420
    %v1422 = vand.u32 %v269, 4294901760
    %v1423 = vsub.f32 %v269, %v1422
    %v1424 = vand.u32 %v1423, 4294901760
    %v1425 = vsub.f32 %v1423, %v1424
    %v1426 = vand.u32 %v1425, 4294901760
    %1427 = vmatprep.subr.mxu0 %v1426
    %v1428 = vand.u32 %v268, 4294901760
    %v1429 = vsub.f32 %v268, %v1428
    %v1430 = vand.u32 %v1429, 4294901760
    %v1431 = vsub.f32 %v1429, %v1430
    %v1432 = vand.u32 %v1431, 4294901760
    %1433 = vmatpush1.msra.mxu0 %v1432
    %1434 = vmatprep.subr.mxu0 0.0
    %1435 = vmatpush1.msra.mxu0 0.0
    %1436 = vmatprep.subr.mxu0 0.0
    %1437 = vmatpush1.msra.mxu0 0.0
    %1438 = vmatprep.subr.mxu0 0.0
    %1439 = vmatpush1.msra.mxu0 0.0
    %1440 = vmatprep.subr.mxu0 0.0
    %1441 = vmatpush1.msra.mxu0 0.0
    %1442 = vmatprep.subr.mxu0 0.0
    %1443 = vmatpush1.msra.mxu0 0.0
    %1444 = vmatprep.subr.mxu0 0.0
    %1445 = vmatpush1.msra.mxu0 0.0
    %1446 = vmatprep.subr.mxu0 0.0
    %1447 = vmatpush1.msra.mxu0 0.0
    %1448 = vmatprep.subr.mxu0 0.0
    %1449 = vmatpush1.msra.mxu0 0.0
    %1450 = vmatprep.subr.mxu0 0.0
    %1451 = vmatpush1.msra.mxu0 0.0
    %1452 = vmatprep.subr.mxu0 0.0
    %1453 = vmatpush1.msra.mxu0 0.0
    %1454 = vmatprep.subr.mxu0 0.0
    %1455 = vmatpush1.msra.mxu0 0.0
    %1456 = vmatprep.subr.mxu0 0.0
    %1457 = vmatpush1.msra.mxu0 0.0
    %1458 = vmatprep.subr.mxu0 0.0
    %1459 = vmatpush1.msra.mxu0 0.0
    %1460 = vmatprep.subr.mxu0 0.0
    %1461 = vmatpush1.msra.mxu0 0.0
    %1462 = vmatprep.subr.mxu0 0.0
    %1463 = vmatpush1.msra.mxu0 0.0
    %1464 = vmatprep.subr.mxu0 0.0
    %1465 = vmatpush1.msra.mxu0 0.0
    %1466 = vmatprep.mubr.f32.mxu0 0.0
    %v1467 = vand.u32 %v70, 4294901760
    %1468 = vmatmul.mubr.f32.gmra.mrb[0].mxu0 %v1467
    %v1469 = vpop.f32.mrb[0].mxu0
    %v1470 = vadd.f32 %v1238, %v1469
    %v1471 = vpop.f32.mrb[0].mxu0
    %v1472 = vadd.f32 %v1240, %v1471
    %1473 = vdwg.mxu0
    %v1474 = vand.u32 %v74, 4294901760
    %v1475 = vsub.f32 %v74, %v1474
    %1476 = vmatprep.subr.mxu0 %v1475
    %v1477 = vand.u32 %v73, 4294901760
    %v1478 = vsub.f32 %v73, %v1477
    %1479 = vmatpush1.msra.mxu0 %v1478
    %v1480 = vand.u32 %v87, 4294901760
    %v1481 = vsub.f32 %v87, %v1480
    %1482 = vmatprep.subr.mxu0 %v1481
    %v1483 = vand.u32 %v86, 4294901760
    %v1484 = vsub.f32 %v86, %v1483
    %1485 = vmatpush1.msra.mxu0 %v1484
    %v1486 = vand.u32 %v100, 4294901760
    %v1487 = vsub.f32 %v100, %v1486
    %1488 = vmatprep.subr.mxu0 %v1487
    %v1489 = vand.u32 %v99, 4294901760
    %v1490 = vsub.f32 %v99, %v1489
    %1491 = vmatpush1.msra.mxu0 %v1490
    %v1492 = vand.u32 %v113, 4294901760
    %v1493 = vsub.f32 %v113, %v1492
    %1494 = vmatprep.subr.mxu0 %v1493
    %v1495 = vand.u32 %v112, 4294901760
    %v1496 = vsub.f32 %v112, %v1495
    %1497 = vmatpush1.msra.mxu0 %v1496
    %v1498 = vand.u32 %v126, 4294901760
    %v1499 = vsub.f32 %v126, %v1498
    %1500 = vmatprep.subr.mxu0 %v1499
    %v1501 = vand.u32 %v125, 4294901760
    %v1502 = vsub.f32 %v125, %v1501
    %1503 = vmatpush1.msra.mxu0 %v1502
    %v1504 = vand.u32 %v139, 4294901760
    %v1505 = vsub.f32 %v139, %v1504
    %1506 = vmatprep.subr.mxu0 %v1505
    %v1507 = vand.u32 %v138, 4294901760
    %v1508 = vsub.f32 %v138, %v1507
    %1509 = vmatpush1.msra.mxu0 %v1508
    %v1510 = vand.u32 %v152, 4294901760
    %v1511 = vsub.f32 %v152, %v1510
    %1512 = vmatprep.subr.mxu0 %v1511
    %v1513 = vand.u32 %v151, 4294901760
    %v1514 = vsub.f32 %v151, %v1513
    %1515 = vmatpush1.msra.mxu0 %v1514
    %v1516 = vand.u32 %v165, 4294901760
    %v1517 = vsub.f32 %v165, %v1516
    %1518 = vmatprep.subr.mxu0 %v1517
    %v1519 = vand.u32 %v164, 4294901760
    %v1520 = vsub.f32 %v164, %v1519
    %1521 = vmatpush1.msra.mxu0 %v1520
    %v1522 = vand.u32 %v178, 4294901760
    %v1523 = vsub.f32 %v178, %v1522
    %1524 = vmatprep.subr.mxu0 %v1523
    %v1525 = vand.u32 %v177, 4294901760
    %v1526 = vsub.f32 %v177, %v1525
    %1527 = vmatpush1.msra.mxu0 %v1526
    %v1528 = vand.u32 %v191, 4294901760
    %v1529 = vsub.f32 %v191, %v1528
    %1530 = vmatprep.subr.mxu0 %v1529
    %v1531 = vand.u32 %v190, 4294901760
    %v1532 = vsub.f32 %v190, %v1531
    %1533 = vmatpush1.msra.mxu0 %v1532
    %v1534 = vand.u32 %v204, 4294901760
    %v1535 = vsub.f32 %v204, %v1534
    %1536 = vmatprep.subr.mxu0 %v1535
    %v1537 = vand.u32 %v203, 4294901760
    %v1538 = vsub.f32 %v203, %v1537
    %1539 = vmatpush1.msra.mxu0 %v1538
    %v1540 = vand.u32 %v217, 4294901760
    %v1541 = vsub.f32 %v217, %v1540
    %1542 = vmatprep.subr.mxu0 %v1541
    %v1543 = vand.u32 %v216, 4294901760
    %v1544 = vsub.f32 %v216, %v1543
    %1545 = vmatpush1.msra.mxu0 %v1544
    %v1546 = vand.u32 %v230, 4294901760
    %v1547 = vsub.f32 %v230, %v1546
    %1548 = vmatprep.subr.mxu0 %v1547
    %v1549 = vand.u32 %v229, 4294901760
    %v1550 = vsub.f32 %v229, %v1549
    %1551 = vmatpush1.msra.mxu0 %v1550
    %v1552 = vand.u32 %v243, 4294901760
    %v1553 = vsub.f32 %v243, %v1552
    %1554 = vmatprep.subr.mxu0 %v1553
    %v1555 = vand.u32 %v242, 4294901760
    %v1556 = vsub.f32 %v242, %v1555
    %1557 = vmatpush1.msra.mxu0 %v1556
    %v1558 = vand.u32 %v256, 4294901760
    %v1559 = vsub.f32 %v256, %v1558
    %1560 = vmatprep.subr.mxu0 %v1559
    %v1561 = vand.u32 %v255, 4294901760
    %v1562 = vsub.f32 %v255, %v1561
    %1563 = vmatpush1.msra.mxu0 %v1562
    %v1564 = vand.u32 %v269, 4294901760
    %v1565 = vsub.f32 %v269, %v1564
    %1566 = vmatprep.subr.mxu0 %v1565
    %v1567 = vand.u32 %v268, 4294901760
    %v1568 = vsub.f32 %v268, %v1567
    %1569 = vmatpush1.msra.mxu0 %v1568
    %1570 = vmatprep.subr.mxu0 0.0
    %1571 = vmatpush1.msra.mxu0 0.0
    %1572 = vmatprep.subr.mxu0 0.0
    %1573 = vmatpush1.msra.mxu0 0.0
    %1574 = vmatprep.subr.mxu0 0.0
    %1575 = vmatpush1.msra.mxu0 0.0
    %1576 = vmatprep.subr.mxu0 0.0
    %1577 = vmatpush1.msra.mxu0 0.0
    %1578 = vmatprep.subr.mxu0 0.0
    %1579 = vmatpush1.msra.mxu0 0.0
    %1580 = vmatprep.subr.mxu0 0.0
    %1581 = vmatpush1.msra.mxu0 0.0
    %1582 = vmatprep.subr.mxu0 0.0
    %1583 = vmatpush1.msra.mxu0 0.0
    %1584 = vmatprep.subr.mxu0 0.0
    %1585 = vmatpush1.msra.mxu0 0.0
    %1586 = vmatprep.subr.mxu0 0.0
    %1587 = vmatpush1.msra.mxu0 0.0
    %1588 = vmatprep.subr.mxu0 0.0
    %1589 = vmatpush1.msra.mxu0 0.0
    %1590 = vmatprep.subr.mxu0 0.0
    %1591 = vmatpush1.msra.mxu0 0.0
    %1592 = vmatprep.subr.mxu0 0.0
    %1593 = vmatpush1.msra.mxu0 0.0
    %1594 = vmatprep.subr.mxu0 0.0
    %1595 = vmatpush1.msra.mxu0 0.0
    %1596 = vmatprep.subr.mxu0 0.0
    %1597 = vmatpush1.msra.mxu0 0.0
    %1598 = vmatprep.subr.mxu0 0.0
    %1599 = vmatpush1.msra.mxu0 0.0
    %1600 = vmatprep.subr.mxu0 0.0
    %1601 = vmatpush1.msra.mxu0 0.0
    %1602 = vmatprep.mubr.f32.mxu0 0.0
    %v1603 = vand.u32 %v70, 4294901760
    %v1604 = vsub.f32 %v70, %v1603
    %1605 = vmatmul.mubr.f32.gmra.mrb[0].mxu0 %v1604
    %v1606 = vpop.f32.mrb[0].mxu0
    %v1607 = vadd.f32 %v1470, %v1606
    %v1608 = vpop.f32.mrb[0].mxu0
    %v1609 = vadd.f32 %v1472, %v1608
    %1610 = vdwg.mxu0
    %v1611 = vand.u32 %v74, 4294901760
    %1612 = vmatprep.subr.mxu0 %v1611
    %v1613 = vand.u32 %v73, 4294901760
    %1614 = vmatpush1.msra.mxu0 %v1613
    %v1615 = vand.u32 %v87, 4294901760
    %1616 = vmatprep.subr.mxu0 %v1615
    %v1617 = vand.u32 %v86, 4294901760
    %1618 = vmatpush1.msra.mxu0 %v1617
    %v1619 = vand.u32 %v100, 4294901760
    %1620 = vmatprep.subr.mxu0 %v1619
    %v1621 = vand.u32 %v99, 4294901760
    %1622 = vmatpush1.msra.mxu0 %v1621
    %v1623 = vand.u32 %v113, 4294901760
    %1624 = vmatprep.subr.mxu0 %v1623
    %v1625 = vand.u32 %v112, 4294901760
    %1626 = vmatpush1.msra.mxu0 %v1625
    %v1627 = vand.u32 %v126, 4294901760
    %1628 = vmatprep.subr.mxu0 %v1627
    %v1629 = vand.u32 %v125, 4294901760
    %1630 = vmatpush1.msra.mxu0 %v1629
    %v1631 = vand.u32 %v139, 4294901760
    %1632 = vmatprep.subr.mxu0 %v1631
    %v1633 = vand.u32 %v138, 4294901760
    %1634 = vmatpush1.msra.mxu0 %v1633
    %v1635 = vand.u32 %v152, 4294901760
    %1636 = vmatprep.subr.mxu0 %v1635
    %v1637 = vand.u32 %v151, 4294901760
    %1638 = vmatpush1.msra.mxu0 %v1637
    %v1639 = vand.u32 %v165, 4294901760
    %1640 = vmatprep.subr.mxu0 %v1639
    %v1641 = vand.u32 %v164, 4294901760
    %1642 = vmatpush1.msra.mxu0 %v1641
    %v1643 = vand.u32 %v178, 4294901760
    %1644 = vmatprep.subr.mxu0 %v1643
    %v1645 = vand.u32 %v177, 4294901760
    %1646 = vmatpush1.msra.mxu0 %v1645
    %v1647 = vand.u32 %v191, 4294901760
    %1648 = vmatprep.subr.mxu0 %v1647
    %v1649 = vand.u32 %v190, 4294901760
    %1650 = vmatpush1.msra.mxu0 %v1649
    %v1651 = vand.u32 %v204, 4294901760
    %1652 = vmatprep.subr.mxu0 %v1651
    %v1653 = vand.u32 %v203, 4294901760
    %1654 = vmatpush1.msra.mxu0 %v1653
    %v1655 = vand.u32 %v217, 4294901760
    %1656 = vmatprep.subr.mxu0 %v1655
    %v1657 = vand.u32 %v216, 4294901760
    %1658 = vmatpush1.msra.mxu0 %v1657
    %v1659 = vand.u32 %v230, 4294901760
    %1660 = vmatprep.subr.mxu0 %v1659
    %v1661 = vand.u32 %v229, 4294901760
    %1662 = vmatpush1.msra.mxu0 %v1661
    %v1663 = vand.u32 %v243, 4294901760
    %1664 = vmatprep.subr.mxu0 %v1663
    %v1665 = vand.u32 %v242, 4294901760
    %1666 = vmatpush1.msra.mxu0 %v1665
    %v1667 = vand.u32 %v256, 4294901760
    %1668 = vmatprep.subr.mxu0 %v1667
    %v1669 = vand.u32 %v255, 4294901760
    %1670 = vmatpush1.msra.mxu0 %v1669
    %v1671 = vand.u32 %v269, 4294901760
    %1672 = vmatprep.subr.mxu0 %v1671
    %v1673 = vand.u32 %v268, 4294901760
    %1674 = vmatpush1.msra.mxu0 %v1673
    %1675 = vmatprep.subr.mxu0 0.0
    %1676 = vmatpush1.msra.mxu0 0.0
    %1677 = vmatprep.subr.mxu0 0.0
    %1678 = vmatpush1.msra.mxu0 0.0
    %1679 = vmatprep.subr.mxu0 0.0
    %1680 = vmatpush1.msra.mxu0 0.0
    %1681 = vmatprep.subr.mxu0 0.0
    %1682 = vmatpush1.msra.mxu0 0.0
    %1683 = vmatprep.subr.mxu0 0.0
    %1684 = vmatpush1.msra.mxu0 0.0
    %1685 = vmatprep.subr.mxu0 0.0
    %1686 = vmatpush1.msra.mxu0 0.0
    %1687 = vmatprep.subr.mxu0 0.0
    %1688 = vmatpush1.msra.mxu0 0.0
    %1689 = vmatprep.subr.mxu0 0.0
    %1690 = vmatpush1.msra.mxu0 0.0
    %1691 = vmatprep.subr.mxu0 0.0
    %1692 = vmatpush1.msra.mxu0 0.0
    %1693 = vmatprep.subr.mxu0 0.0
    %1694 = vmatpush1.msra.mxu0 0.0
    %1695 = vmatprep.subr.mxu0 0.0
    %1696 = vmatpush1.msra.mxu0 0.0
    %1697 = vmatprep.subr.mxu0 0.0
    %1698 = vmatpush1.msra.mxu0 0.0
    %1699 = vmatprep.subr.mxu0 0.0
    %1700 = vmatpush1.msra.mxu0 0.0
    %1701 = vmatprep.subr.mxu0 0.0
    %1702 = vmatpush1.msra.mxu0 0.0
    %1703 = vmatprep.subr.mxu0 0.0
    %1704 = vmatpush1.msra.mxu0 0.0
    %1705 = vmatprep.subr.mxu0 0.0
    %1706 = vmatpush1.msra.mxu0 0.0
    %1707 = vmatprep.mubr.f32.mxu0 0.0
    %v1708 = vand.u32 %v70, 4294901760
    %v1709 = vsub.f32 %v70, %v1708
    %v1710 = vand.u32 %v1709, 4294901760
    %1711 = vmatmul.mubr.f32.gmra.mrb[0].mxu0 %v1710
    %v1712 = vpop.f32.mrb[0].mxu0
    %v1713 = vadd.f32 %v1607, %v1712
    %v1714 = vpop.f32.mrb[0].mxu0
    %v1715 = vadd.f32 %v1609, %v1714
    %1716 = vdwg.mxu0
    %v1717 = vand.u32 %v74, 4294901760
    %v1718 = vsub.f32 %v74, %v1717
    %v1719 = vand.u32 %v1718, 4294901760
    %1720 = vmatprep.subr.mxu0 %v1719
    %v1721 = vand.u32 %v73, 4294901760
    %v1722 = vsub.f32 %v73, %v1721
    %v1723 = vand.u32 %v1722, 4294901760
    %1724 = vmatpush1.msra.mxu0 %v1723
    %v1725 = vand.u32 %v87, 4294901760
    %v1726 = vsub.f32 %v87, %v1725
    %v1727 = vand.u32 %v1726, 4294901760
    %1728 = vmatprep.subr.mxu0 %v1727
    %v1729 = vand.u32 %v86, 4294901760
    %v1730 = vsub.f32 %v86, %v1729
    %v1731 = vand.u32 %v1730, 4294901760
    %1732 = vmatpush1.msra.mxu0 %v1731
    %v1733 = vand.u32 %v100, 4294901760
    %v1734 = vsub.f32 %v100, %v1733
    %v1735 = vand.u32 %v1734, 4294901760
    %1736 = vmatprep.subr.mxu0 %v1735
    %v1737 = vand.u32 %v99, 4294901760
    %v1738 = vsub.f32 %v99, %v1737
    %v1739 = vand.u32 %v1738, 4294901760
    %1740 = vmatpush1.msra.mxu0 %v1739
    %v1741 = vand.u32 %v113, 4294901760
    %v1742 = vsub.f32 %v113, %v1741
    %v1743 = vand.u32 %v1742, 4294901760
    %1744 = vmatprep.subr.mxu0 %v1743
    %v1745 = vand.u32 %v112, 4294901760
    %v1746 = vsub.f32 %v112, %v1745
    %v1747 = vand.u32 %v1746, 4294901760
    %1748 = vmatpush1.msra.mxu0 %v1747
    %v1749 = vand.u32 %v126, 4294901760
    %v1750 = vsub.f32 %v126, %v1749
    %v1751 = vand.u32 %v1750, 4294901760
    %1752 = vmatprep.subr.mxu0 %v1751
    %v1753 = vand.u32 %v125, 4294901760
    %v1754 = vsub.f32 %v125, %v1753
    %v1755 = vand.u32 %v1754, 4294901760
    %1756 = vmatpush1.msra.mxu0 %v1755
    %v1757 = vand.u32 %v139, 4294901760
    %v1758 = vsub.f32 %v139, %v1757
    %v1759 = vand.u32 %v1758, 4294901760
    %1760 = vmatprep.subr.mxu0 %v1759
    %v1761 = vand.u32 %v138, 4294901760
    %v1762 = vsub.f32 %v138, %v1761
    %v1763 = vand.u32 %v1762, 4294901760
    %1764 = vmatpush1.msra.mxu0 %v1763
    %v1765 = vand.u32 %v152, 4294901760
    %v1766 = vsub.f32 %v152, %v1765
    %v1767 = vand.u32 %v1766, 4294901760
    %1768 = vmatprep.subr.mxu0 %v1767
    %v1769 = vand.u32 %v151, 4294901760
    %v1770 = vsub.f32 %v151, %v1769
    %v1771 = vand.u32 %v1770, 4294901760
    %1772 = vmatpush1.msra.mxu0 %v1771
    %v1773 = vand.u32 %v165, 4294901760
    %v1774 = vsub.f32 %v165, %v1773
    %v1775 = vand.u32 %v1774, 4294901760
    %1776 = vmatprep.subr.mxu0 %v1775
    %v1777 = vand.u32 %v164, 4294901760
    %v1778 = vsub.f32 %v164, %v1777
    %v1779 = vand.u32 %v1778, 4294901760
    %1780 = vmatpush1.msra.mxu0 %v1779
    %v1781 = vand.u32 %v178, 4294901760
    %v1782 = vsub.f32 %v178, %v1781
    %v1783 = vand.u32 %v1782, 4294901760
    %1784 = vmatprep.subr.mxu0 %v1783
    %v1785 = vand.u32 %v177, 4294901760
    %v1786 = vsub.f32 %v177, %v1785
    %v1787 = vand.u32 %v1786, 4294901760
    %1788 = vmatpush1.msra.mxu0 %v1787
    %v1789 = vand.u32 %v191, 4294901760
    %v1790 = vsub.f32 %v191, %v1789
    %v1791 = vand.u32 %v1790, 4294901760
    %1792 = vmatprep.subr.mxu0 %v1791
    %v1793 = vand.u32 %v190, 4294901760
    %v1794 = vsub.f32 %v190, %v1793
    %v1795 = vand.u32 %v1794, 4294901760
    %1796 = vmatpush1.msra.mxu0 %v1795
    %v1797 = vand.u32 %v204, 4294901760
    %v1798 = vsub.f32 %v204, %v1797
    %v1799 = vand.u32 %v1798, 4294901760
    %1800 = vmatprep.subr.mxu0 %v1799
    %v1801 = vand.u32 %v203, 4294901760
    %v1802 = vsub.f32 %v203, %v1801
    %v1803 = vand.u32 %v1802, 4294901760
    %1804 = vmatpush1.msra.mxu0 %v1803
    %v1805 = vand.u32 %v217, 4294901760
    %v1806 = vsub.f32 %v217, %v1805
    %v1807 = vand.u32 %v1806, 4294901760
    %1808 = vmatprep.subr.mxu0 %v1807
    %v1809 = vand.u32 %v216, 4294901760
    %v1810 = vsub.f32 %v216, %v1809
    %v1811 = vand.u32 %v1810, 4294901760
    %1812 = vmatpush1.msra.mxu0 %v1811
    %v1813 = vand.u32 %v230, 4294901760
    %v1814 = vsub.f32 %v230, %v1813
    %v1815 = vand.u32 %v1814, 4294901760
    %1816 = vmatprep.subr.mxu0 %v1815
    %v1817 = vand.u32 %v229, 4294901760
    %v1818 = vsub.f32 %v229, %v1817
    %v1819 = vand.u32 %v1818, 4294901760
    %1820 = vmatpush1.msra.mxu0 %v1819
    %v1821 = vand.u32 %v243, 4294901760
    %v1822 = vsub.f32 %v243, %v1821
    %v1823 = vand.u32 %v1822, 4294901760
    %1824 = vmatprep.subr.mxu0 %v1823
    %v1825 = vand.u32 %v242, 4294901760
    %v1826 = vsub.f32 %v242, %v1825
    %v1827 = vand.u32 %v1826, 4294901760
    %1828 = vmatpush1.msra.mxu0 %v1827
    %v1829 = vand.u32 %v256, 4294901760
    %v1830 = vsub.f32 %v256, %v1829
    %v1831 = vand.u32 %v1830, 4294901760
    %1832 = vmatprep.subr.mxu0 %v1831
    %v1833 = vand.u32 %v255, 4294901760
    %v1834 = vsub.f32 %v255, %v1833
    %v1835 = vand.u32 %v1834, 4294901760
    %1836 = vmatpush1.msra.mxu0 %v1835
    %v1837 = vand.u32 %v269, 4294901760
    %v1838 = vsub.f32 %v269, %v1837
    %v1839 = vand.u32 %v1838, 4294901760
    %1840 = vmatprep.subr.mxu0 %v1839
    %v1841 = vand.u32 %v268, 4294901760
    %v1842 = vsub.f32 %v268, %v1841
    %v1843 = vand.u32 %v1842, 4294901760
    %1844 = vmatpush1.msra.mxu0 %v1843
    %1845 = vmatprep.subr.mxu0 0.0
    %1846 = vmatpush1.msra.mxu0 0.0
    %1847 = vmatprep.subr.mxu0 0.0
    %1848 = vmatpush1.msra.mxu0 0.0
    %1849 = vmatprep.subr.mxu0 0.0
    %1850 = vmatpush1.msra.mxu0 0.0
    %1851 = vmatprep.subr.mxu0 0.0
    %1852 = vmatpush1.msra.mxu0 0.0
    %1853 = vmatprep.subr.mxu0 0.0
    %1854 = vmatpush1.msra.mxu0 0.0
    %1855 = vmatprep.subr.mxu0 0.0
    %1856 = vmatpush1.msra.mxu0 0.0
    %1857 = vmatprep.subr.mxu0 0.0
    %1858 = vmatpush1.msra.mxu0 0.0
    %1859 = vmatprep.subr.mxu0 0.0
    %1860 = vmatpush1.msra.mxu0 0.0
    %1861 = vmatprep.subr.mxu0 0.0
    %1862 = vmatpush1.msra.mxu0 0.0
    %1863 = vmatprep.subr.mxu0 0.0
    %1864 = vmatpush1.msra.mxu0 0.0
    %1865 = vmatprep.subr.mxu0 0.0
    %1866 = vmatpush1.msra.mxu0 0.0
    %1867 = vmatprep.subr.mxu0 0.0
    %1868 = vmatpush1.msra.mxu0 0.0
    %1869 = vmatprep.subr.mxu0 0.0
    %1870 = vmatpush1.msra.mxu0 0.0
    %1871 = vmatprep.subr.mxu0 0.0
    %1872 = vmatpush1.msra.mxu0 0.0
    %1873 = vmatprep.subr.mxu0 0.0
    %1874 = vmatpush1.msra.mxu0 0.0
    %1875 = vmatprep.subr.mxu0 0.0
    %1876 = vmatpush1.msra.mxu0 0.0
    %1877 = vmatprep.mubr.f32.mxu0 0.0
    %v1878 = vand.u32 %v70, 4294901760
    %1879 = vmatmul.mubr.f32.gmra.mrb[0].mxu0 %v1878
    %v1880 = vpop.f32.mrb[0].mxu0
    %v1881 = vadd.f32 %v1713, %v1880
    %v1882 = vpop.f32.mrb[0].mxu0
    %v1883 = vadd.f32 %v1715, %v1882
    %1884 = vdwg.mxu0
    %v1885 = vand.u32 %v74, 4294901760
    %1886 = vmatprep.subr.mxu0 %v1885
    %v1887 = vand.u32 %v73, 4294901760
    %1888 = vmatpush1.msra.mxu0 %v1887
    %v1889 = vand.u32 %v87, 4294901760
    %1890 = vmatprep.subr.mxu0 %v1889
    %v1891 = vand.u32 %v86, 4294901760
    %1892 = vmatpush1.msra.mxu0 %v1891
    %v1893 = vand.u32 %v100, 4294901760
    %1894 = vmatprep.subr.mxu0 %v1893
    %v1895 = vand.u32 %v99, 4294901760
    %1896 = vmatpush1.msra.mxu0 %v1895
    %v1897 = vand.u32 %v113, 4294901760
    %1898 = vmatprep.subr.mxu0 %v1897
    %v1899 = vand.u32 %v112, 4294901760
    %1900 = vmatpush1.msra.mxu0 %v1899
    %v1901 = vand.u32 %v126, 4294901760
    %1902 = vmatprep.subr.mxu0 %v1901
    %v1903 = vand.u32 %v125, 4294901760
    %1904 = vmatpush1.msra.mxu0 %v1903
    %v1905 = vand.u32 %v139, 4294901760
    %1906 = vmatprep.subr.mxu0 %v1905
    %v1907 = vand.u32 %v138, 4294901760
    %1908 = vmatpush1.msra.mxu0 %v1907
    %v1909 = vand.u32 %v152, 4294901760
    %1910 = vmatprep.subr.mxu0 %v1909
    %v1911 = vand.u32 %v151, 4294901760
    %1912 = vmatpush1.msra.mxu0 %v1911
    %v1913 = vand.u32 %v165, 4294901760
    %1914 = vmatprep.subr.mxu0 %v1913
    %v1915 = vand.u32 %v164, 4294901760
    %1916 = vmatpush1.msra.mxu0 %v1915
    %v1917 = vand.u32 %v178, 4294901760
    %1918 = vmatprep.subr.mxu0 %v1917
    %v1919 = vand.u32 %v177, 4294901760
    %1920 = vmatpush1.msra.mxu0 %v1919
    %v1921 = vand.u32 %v191, 4294901760
    %1922 = vmatprep.subr.mxu0 %v1921
    %v1923 = vand.u32 %v190, 4294901760
    %1924 = vmatpush1.msra.mxu0 %v1923
    %v1925 = vand.u32 %v204, 4294901760
    %1926 = vmatprep.subr.mxu0 %v1925
    %v1927 = vand.u32 %v203, 4294901760
    %1928 = vmatpush1.msra.mxu0 %v1927
    %v1929 = vand.u32 %v217, 4294901760
    %1930 = vmatprep.subr.mxu0 %v1929
    %v1931 = vand.u32 %v216, 4294901760
    %1932 = vmatpush1.msra.mxu0 %v1931
    %v1933 = vand.u32 %v230, 4294901760
    %1934 = vmatprep.subr.mxu0 %v1933
    %v1935 = vand.u32 %v229, 4294901760
    %1936 = vmatpush1.msra.mxu0 %v1935
    %v1937 = vand.u32 %v243, 4294901760
    %1938 = vmatprep.subr.mxu0 %v1937
    %v1939 = vand.u32 %v242, 4294901760
    %1940 = vmatpush1.msra.mxu0 %v1939
    %v1941 = vand.u32 %v256, 4294901760
    %1942 = vmatprep.subr.mxu0 %v1941
    %v1943 = vand.u32 %v255, 4294901760
    %1944 = vmatpush1.msra.mxu0 %v1943
    %v1945 = vand.u32 %v269, 4294901760
    %1946 = vmatprep.subr.mxu0 %v1945
    %v1947 = vand.u32 %v268, 4294901760
    %1948 = vmatpush1.msra.mxu0 %v1947
    %1949 = vmatprep.subr.mxu0 0.0
    %1950 = vmatpush1.msra.mxu0 0.0
    %1951 = vmatprep.subr.mxu0 0.0
    %1952 = vmatpush1.msra.mxu0 0.0
    %1953 = vmatprep.subr.mxu0 0.0
    %1954 = vmatpush1.msra.mxu0 0.0
    %1955 = vmatprep.subr.mxu0 0.0
    %1956 = vmatpush1.msra.mxu0 0.0
    %1957 = vmatprep.subr.mxu0 0.0
    %1958 = vmatpush1.msra.mxu0 0.0
    %1959 = vmatprep.subr.mxu0 0.0
    %1960 = vmatpush1.msra.mxu0 0.0
    %1961 = vmatprep.subr.mxu0 0.0
    %1962 = vmatpush1.msra.mxu0 0.0
    %1963 = vmatprep.subr.mxu0 0.0
    %1964 = vmatpush1.msra.mxu0 0.0
    %1965 = vmatprep.subr.mxu0 0.0
    %1966 = vmatpush1.msra.mxu0 0.0
    %1967 = vmatprep.subr.mxu0 0.0
    %1968 = vmatpush1.msra.mxu0 0.0
    %1969 = vmatprep.subr.mxu0 0.0
    %1970 = vmatpush1.msra.mxu0 0.0
    %1971 = vmatprep.subr.mxu0 0.0
    %1972 = vmatpush1.msra.mxu0 0.0
    %1973 = vmatprep.subr.mxu0 0.0
    %1974 = vmatpush1.msra.mxu0 0.0
    %1975 = vmatprep.subr.mxu0 0.0
    %1976 = vmatpush1.msra.mxu0 0.0
    %1977 = vmatprep.subr.mxu0 0.0
    %1978 = vmatpush1.msra.mxu0 0.0
    %1979 = vmatprep.subr.mxu0 0.0
    %1980 = vmatpush1.msra.mxu0 0.0
    %1981 = vmatprep.mubr.f32.mxu0 0.0
    %v1982 = vand.u32 %v70, 4294901760
    %1983 = vmatmul.mubr.f32.gmra.mrb[0].mxu0 %v1982
    %v1984 = vpop.f32.mrb[0].mxu0
    %v1985 = vadd.f32 %v1881, %v1984
    %v1986 = vpop.f32.mrb[0].mxu0
    %v1987 = vadd.f32 %v1883, %v1986
    %1988 = vdwg.mxu0
    %v1989 = vand.u32 %v76, 4294901760
    %1990 = vmatprep.subr.mxu0 %v1989
    %v1991 = vand.u32 %v75, 4294901760
    %1992 = vmatpush1.msra.mxu0 %v1991
    %v1993 = vand.u32 %v89, 4294901760
    %1994 = vmatprep.subr.mxu0 %v1993
    %v1995 = vand.u32 %v88, 4294901760
    %1996 = vmatpush1.msra.mxu0 %v1995
    %v1997 = vand.u32 %v102, 4294901760
    %1998 = vmatprep.subr.mxu0 %v1997
    %v1999 = vand.u32 %v101, 4294901760
    %2000 = vmatpush1.msra.mxu0 %v1999
    %v2001 = vand.u32 %v115, 4294901760
    %2002 = vmatprep.subr.mxu0 %v2001
    %v2003 = vand.u32 %v114, 4294901760
    %2004 = vmatpush1.msra.mxu0 %v2003
    %v2005 = vand.u32 %v128, 4294901760
    %2006 = vmatprep.subr.mxu0 %v2005
    %v2007 = vand.u32 %v127, 4294901760
    %2008 = vmatpush1.msra.mxu0 %v2007
    %v2009 = vand.u32 %v141, 4294901760
    %2010 = vmatprep.subr.mxu0 %v2009
    %v2011 = vand.u32 %v140, 4294901760
    %2012 = vmatpush1.msra.mxu0 %v2011
    %v2013 = vand.u32 %v154, 4294901760
    %2014 = vmatprep.subr.mxu0 %v2013
    %v2015 = vand.u32 %v153, 4294901760
    %2016 = vmatpush1.msra.mxu0 %v2015
    %v2017 = vand.u32 %v167, 4294901760
    %2018 = vmatprep.subr.mxu0 %v2017
    %v2019 = vand.u32 %v166, 4294901760
    %2020 = vmatpush1.msra.mxu0 %v2019
    %v2021 = vand.u32 %v180, 4294901760
    %2022 = vmatprep.subr.mxu0 %v2021
    %v2023 = vand.u32 %v179, 4294901760
    %2024 = vmatpush1.msra.mxu0 %v2023
    %v2025 = vand.u32 %v193, 4294901760
    %2026 = vmatprep.subr.mxu0 %v2025
    %v2027 = vand.u32 %v192, 4294901760
    %2028 = vmatpush1.msra.mxu0 %v2027
    %v2029 = vand.u32 %v206, 4294901760
    %2030 = vmatprep.subr.mxu0 %v2029
    %v2031 = vand.u32 %v205, 4294901760
    %2032 = vmatpush1.msra.mxu0 %v2031
    %v2033 = vand.u32 %v219, 4294901760
    %2034 = vmatprep.subr.mxu0 %v2033
    %v2035 = vand.u32 %v218, 4294901760
    %2036 = vmatpush1.msra.mxu0 %v2035
    %v2037 = vand.u32 %v232, 4294901760
    %2038 = vmatprep.subr.mxu0 %v2037
    %v2039 = vand.u32 %v231, 4294901760
    %2040 = vmatpush1.msra.mxu0 %v2039
    %v2041 = vand.u32 %v245, 4294901760
    %2042 = vmatprep.subr.mxu0 %v2041
    %v2043 = vand.u32 %v244, 4294901760
    %2044 = vmatpush1.msra.mxu0 %v2043
    %v2045 = vand.u32 %v258, 4294901760
    %2046 = vmatprep.subr.mxu0 %v2045
    %v2047 = vand.u32 %v257, 4294901760
    %2048 = vmatpush1.msra.mxu0 %v2047
    %v2049 = vand.u32 %v271, 4294901760
    %2050 = vmatprep.subr.mxu0 %v2049
    %v2051 = vand.u32 %v270, 4294901760
    %2052 = vmatpush1.msra.mxu0 %v2051
    %2053 = vmatprep.subr.mxu0 0.0
    %2054 = vmatpush1.msra.mxu0 0.0
    %2055 = vmatprep.subr.mxu0 0.0
    %2056 = vmatpush1.msra.mxu0 0.0
    %2057 = vmatprep.subr.mxu0 0.0
    %2058 = vmatpush1.msra.mxu0 0.0
    %2059 = vmatprep.subr.mxu0 0.0
    %2060 = vmatpush1.msra.mxu0 0.0
    %2061 = vmatprep.subr.mxu0 0.0
    %2062 = vmatpush1.msra.mxu0 0.0
    %2063 = vmatprep.subr.mxu0 0.0
    %2064 = vmatpush1.msra.mxu0 0.0
    %2065 = vmatprep.subr.mxu0 0.0
    %2066 = vmatpush1.msra.mxu0 0.0
    %2067 = vmatprep.subr.mxu0 0.0
    %2068 = vmatpush1.msra.mxu0 0.0
    %2069 = vmatprep.subr.mxu0 0.0
    %2070 = vmatpush1.msra.mxu0 0.0
    %2071 = vmatprep.subr.mxu0 0.0
    %2072 = vmatpush1.msra.mxu0 0.0
    %2073 = vmatprep.subr.mxu0 0.0
    %2074 = vmatpush1.msra.mxu0 0.0
    %2075 = vmatprep.subr.mxu0 0.0
    %2076 = vmatpush1.msra.mxu0 0.0
    %2077 = vmatprep.subr.mxu0 0.0
    %2078 = vmatpush1.msra.mxu0 0.0
    %2079 = vmatprep.subr.mxu0 0.0
    %2080 = vmatpush1.msra.mxu0 0.0
    %2081 = vmatprep.subr.mxu0 0.0
    %2082 = vmatpush1.msra.mxu0 0.0
    %2083 = vmatprep.subr.mxu0 0.0
    %2084 = vmatpush1.msra.mxu0 0.0
    %2085 = vmatprep.mubr.f32.mxu0 0.0
    %v2086 = vand.u32 %v70, 4294901760
    %v2087 = vsub.f32 %v70, %v2086
    %v2088 = vand.u32 %v2087, 4294901760
    %v2089 = vsub.f32 %v2087, %v2088
    %v2090 = vand.u32 %v2089, 4294901760
    %2091 = vmatmul.mubr.f32.gmra.mrb[0].mxu0 %v2090
    %v2092 = vpop.f32.mrb[0].mxu0
    %v2093 = vadd.f32 0.0, %v2092
    %v2094 = vpop.f32.mrb[0].mxu0
    %v2095 = vadd.f32 0.0, %v2094
    %2096 = vdwg.mxu0
    %v2097 = vand.u32 %v76, 4294901760
    %v2098 = vsub.f32 %v76, %v2097
    %v2099 = vand.u32 %v2098, 4294901760
    %v2100 = vsub.f32 %v2098, %v2099
    %v2101 = vand.u32 %v2100, 4294901760
    %2102 = vmatprep.subr.mxu0 %v2101
    %v2103 = vand.u32 %v75, 4294901760
    %v2104 = vsub.f32 %v75, %v2103
    %v2105 = vand.u32 %v2104, 4294901760
    %v2106 = vsub.f32 %v2104, %v2105
    %v2107 = vand.u32 %v2106, 4294901760
    %2108 = vmatpush1.msra.mxu0 %v2107
    %v2109 = vand.u32 %v89, 4294901760
    %v2110 = vsub.f32 %v89, %v2109
    %v2111 = vand.u32 %v2110, 4294901760
    %v2112 = vsub.f32 %v2110, %v2111
    %v2113 = vand.u32 %v2112, 4294901760
    %2114 = vmatprep.subr.mxu0 %v2113
    %v2115 = vand.u32 %v88, 4294901760
    %v2116 = vsub.f32 %v88, %v2115
    %v2117 = vand.u32 %v2116, 4294901760
    %v2118 = vsub.f32 %v2116, %v2117
    %v2119 = vand.u32 %v2118, 4294901760
    %2120 = vmatpush1.msra.mxu0 %v2119
    %v2121 = vand.u32 %v102, 4294901760
    %v2122 = vsub.f32 %v102, %v2121
    %v2123 = vand.u32 %v2122, 4294901760
    %v2124 = vsub.f32 %v2122, %v2123
    %v2125 = vand.u32 %v2124, 4294901760
    %2126 = vmatprep.subr.mxu0 %v2125
    %v2127 = vand.u32 %v101, 4294901760
    %v2128 = vsub.f32 %v101, %v2127
    %v2129 = vand.u32 %v2128, 4294901760
    %v2130 = vsub.f32 %v2128, %v2129
    %v2131 = vand.u32 %v2130, 4294901760
    %2132 = vmatpush1.msra.mxu0 %v2131
    %v2133 = vand.u32 %v115, 4294901760
    %v2134 = vsub.f32 %v115, %v2133
    %v2135 = vand.u32 %v2134, 4294901760
    %v2136 = vsub.f32 %v2134, %v2135
    %v2137 = vand.u32 %v2136, 4294901760
    %2138 = vmatprep.subr.mxu0 %v2137
    %v2139 = vand.u32 %v114, 4294901760
    %v2140 = vsub.f32 %v114, %v2139
    %v2141 = vand.u32 %v2140, 4294901760
    %v2142 = vsub.f32 %v2140, %v2141
    %v2143 = vand.u32 %v2142, 4294901760
    %2144 = vmatpush1.msra.mxu0 %v2143
    %v2145 = vand.u32 %v128, 4294901760
    %v2146 = vsub.f32 %v128, %v2145
    %v2147 = vand.u32 %v2146, 4294901760
    %v2148 = vsub.f32 %v2146, %v2147
    %v2149 = vand.u32 %v2148, 4294901760
    %2150 = vmatprep.subr.mxu0 %v2149
    %v2151 = vand.u32 %v127, 4294901760
    %v2152 = vsub.f32 %v127, %v2151
    %v2153 = vand.u32 %v2152, 4294901760
    %v2154 = vsub.f32 %v2152, %v2153
    %v2155 = vand.u32 %v2154, 4294901760
    %2156 = vmatpush1.msra.mxu0 %v2155
    %v2157 = vand.u32 %v141, 4294901760
    %v2158 = vsub.f32 %v141, %v2157
    %v2159 = vand.u32 %v2158, 4294901760
    %v2160 = vsub.f32 %v2158, %v2159
    %v2161 = vand.u32 %v2160, 4294901760
    %2162 = vmatprep.subr.mxu0 %v2161
    %v2163 = vand.u32 %v140, 4294901760
    %v2164 = vsub.f32 %v140, %v2163
    %v2165 = vand.u32 %v2164, 4294901760
    %v2166 = vsub.f32 %v2164, %v2165
    %v2167 = vand.u32 %v2166, 4294901760
    %2168 = vmatpush1.msra.mxu0 %v2167
    %v2169 = vand.u32 %v154, 4294901760
    %v2170 = vsub.f32 %v154, %v2169
    %v2171 = vand.u32 %v2170, 4294901760
    %v2172 = vsub.f32 %v2170, %v2171
    %v2173 = vand.u32 %v2172, 4294901760
    %2174 = vmatprep.subr.mxu0 %v2173
    %v2175 = vand.u32 %v153, 4294901760
    %v2176 = vsub.f32 %v153, %v2175
    %v2177 = vand.u32 %v2176, 4294901760
    %v2178 = vsub.f32 %v2176, %v2177
    %v2179 = vand.u32 %v2178, 4294901760
    %2180 = vmatpush1.msra.mxu0 %v2179
    %v2181 = vand.u32 %v167, 4294901760
    %v2182 = vsub.f32 %v167, %v2181
    %v2183 = vand.u32 %v2182, 4294901760
    %v2184 = vsub.f32 %v2182, %v2183
    %v2185 = vand.u32 %v2184, 4294901760
    %2186 = vmatprep.subr.mxu0 %v2185
    %v2187 = vand.u32 %v166, 4294901760
    %v2188 = vsub.f32 %v166, %v2187
    %v2189 = vand.u32 %v2188, 4294901760
    %v2190 = vsub.f32 %v2188, %v2189
    %v2191 = vand.u32 %v2190, 4294901760
    %2192 = vmatpush1.msra.mxu0 %v2191
    %v2193 = vand.u32 %v180, 4294901760
    %v2194 = vsub.f32 %v180, %v2193
    %v2195 = vand.u32 %v2194, 4294901760
    %v2196 = vsub.f32 %v2194, %v2195
    %v2197 = vand.u32 %v2196, 4294901760
    %2198 = vmatprep.subr.mxu0 %v2197
    %v2199 = vand.u32 %v179, 4294901760
    %v2200 = vsub.f32 %v179, %v2199
    %v2201 = vand.u32 %v2200, 4294901760
    %v2202 = vsub.f32 %v2200, %v2201
    %v2203 = vand.u32 %v2202, 4294901760
    %2204 = vmatpush1.msra.mxu0 %v2203
    %v2205 = vand.u32 %v193, 4294901760
    %v2206 = vsub.f32 %v193, %v2205
    %v2207 = vand.u32 %v2206, 4294901760
    %v2208 = vsub.f32 %v2206, %v2207
    %v2209 = vand.u32 %v2208, 4294901760
    %2210 = vmatprep.subr.mxu0 %v2209
    %v2211 = vand.u32 %v192, 4294901760
    %v2212 = vsub.f32 %v192, %v2211
    %v2213 = vand.u32 %v2212, 4294901760
    %v2214 = vsub.f32 %v2212, %v2213
    %v2215 = vand.u32 %v2214, 4294901760
    %2216 = vmatpush1.msra.mxu0 %v2215
    %v2217 = vand.u32 %v206, 4294901760
    %v2218 = vsub.f32 %v206, %v2217
    %v2219 = vand.u32 %v2218, 4294901760
    %v2220 = vsub.f32 %v2218, %v2219
    %v2221 = vand.u32 %v2220, 4294901760
    %2222 = vmatprep.subr.mxu0 %v2221
    %v2223 = vand.u32 %v205, 4294901760
    %v2224 = vsub.f32 %v205, %v2223
    %v2225 = vand.u32 %v2224, 4294901760
    %v2226 = vsub.f32 %v2224, %v2225
    %v2227 = vand.u32 %v2226, 4294901760
    %2228 = vmatpush1.msra.mxu0 %v2227
    %v2229 = vand.u32 %v219, 4294901760
    %v2230 = vsub.f32 %v219, %v2229
    %v2231 = vand.u32 %v2230, 4294901760
    %v2232 = vsub.f32 %v2230, %v2231
    %v2233 = vand.u32 %v2232, 4294901760
    %2234 = vmatprep.subr.mxu0 %v2233
    %v2235 = vand.u32 %v218, 4294901760
    %v2236 = vsub.f32 %v218, %v2235
    %v2237 = vand.u32 %v2236, 4294901760
    %v2238 = vsub.f32 %v2236, %v2237
    %v2239 = vand.u32 %v2238, 4294901760
    %2240 = vmatpush1.msra.mxu0 %v2239
    %v2241 = vand.u32 %v232, 4294901760
    %v2242 = vsub.f32 %v232, %v2241
    %v2243 = vand.u32 %v2242, 4294901760
    %v2244 = vsub.f32 %v2242, %v2243
    %v2245 = vand.u32 %v2244, 4294901760
    %2246 = vmatprep.subr.mxu0 %v2245
    %v2247 = vand.u32 %v231, 4294901760
    %v2248 = vsub.f32 %v231, %v2247
    %v2249 = vand.u32 %v2248, 4294901760
    %v2250 = vsub.f32 %v2248, %v2249
    %v2251 = vand.u32 %v2250, 4294901760
    %2252 = vmatpush1.msra.mxu0 %v2251
    %v2253 = vand.u32 %v245, 4294901760
    %v2254 = vsub.f32 %v245, %v2253
    %v2255 = vand.u32 %v2254, 4294901760
    %v2256 = vsub.f32 %v2254, %v2255
    %v2257 = vand.u32 %v2256, 4294901760
    %2258 = vmatprep.subr.mxu0 %v2257
    %v2259 = vand.u32 %v244, 4294901760
    %v2260 = vsub.f32 %v244, %v2259
    %v2261 = vand.u32 %v2260, 4294901760
    %v2262 = vsub.f32 %v2260, %v2261
    %v2263 = vand.u32 %v2262, 4294901760
    %2264 = vmatpush1.msra.mxu0 %v2263
    %v2265 = vand.u32 %v258, 4294901760
    %v2266 = vsub.f32 %v258, %v2265
    %v2267 = vand.u32 %v2266, 4294901760
    %v2268 = vsub.f32 %v2266, %v2267
    %v2269 = vand.u32 %v2268, 4294901760
    %2270 = vmatprep.subr.mxu0 %v2269
    %v2271 = vand.u32 %v257, 4294901760
    %v2272 = vsub.f32 %v257, %v2271
    %v2273 = vand.u32 %v2272, 4294901760
    %v2274 = vsub.f32 %v2272, %v2273
    %v2275 = vand.u32 %v2274, 4294901760
    %2276 = vmatpush1.msra.mxu0 %v2275
    %v2277 = vand.u32 %v271, 4294901760
    %v2278 = vsub.f32 %v271, %v2277
    %v2279 = vand.u32 %v2278, 4294901760
    %v2280 = vsub.f32 %v2278, %v2279
    %v2281 = vand.u32 %v2280, 4294901760
    %2282 = vmatprep.subr.mxu0 %v2281
    %v2283 = vand.u32 %v270, 4294901760
    %v2284 = vsub.f32 %v270, %v2283
    %v2285 = vand.u32 %v2284, 4294901760
    %v2286 = vsub.f32 %v2284, %v2285
    %v2287 = vand.u32 %v2286, 4294901760
    %2288 = vmatpush1.msra.mxu0 %v2287
    %2289 = vmatprep.subr.mxu0 0.0
    %2290 = vmatpush1.msra.mxu0 0.0
    %2291 = vmatprep.subr.mxu0 0.0
    %2292 = vmatpush1.msra.mxu0 0.0
    %2293 = vmatprep.subr.mxu0 0.0
    %2294 = vmatpush1.msra.mxu0 0.0
    %2295 = vmatprep.subr.mxu0 0.0
    %2296 = vmatpush1.msra.mxu0 0.0
    %2297 = vmatprep.subr.mxu0 0.0
    %2298 = vmatpush1.msra.mxu0 0.0
    %2299 = vmatprep.subr.mxu0 0.0
    %2300 = vmatpush1.msra.mxu0 0.0
    %2301 = vmatprep.subr.mxu0 0.0
    %2302 = vmatpush1.msra.mxu0 0.0
    %2303 = vmatprep.subr.mxu0 0.0
    %2304 = vmatpush1.msra.mxu0 0.0
    %2305 = vmatprep.subr.mxu0 0.0
    %2306 = vmatpush1.msra.mxu0 0.0
    %2307 = vmatprep.subr.mxu0 0.0
    %2308 = vmatpush1.msra.mxu0 0.0
    %2309 = vmatprep.subr.mxu0 0.0
    %2310 = vmatpush1.msra.mxu0 0.0
    %2311 = vmatprep.subr.mxu0 0.0
    %2312 = vmatpush1.msra.mxu0 0.0
    %2313 = vmatprep.subr.mxu0 0.0
    %2314 = vmatpush1.msra.mxu0 0.0
    %2315 = vmatprep.subr.mxu0 0.0
    %2316 = vmatpush1.msra.mxu0 0.0
    %2317 = vmatprep.subr.mxu0 0.0
    %2318 = vmatpush1.msra.mxu0 0.0
    %2319 = vmatprep.subr.mxu0 0.0
    %2320 = vmatpush1.msra.mxu0 0.0
    %2321 = vmatprep.mubr.f32.mxu0 0.0
    %v2322 = vand.u32 %v70, 4294901760
    %2323 = vmatmul.mubr.f32.gmra.mrb[0].mxu0 %v2322
    %v2324 = vpop.f32.mrb[0].mxu0
    %v2325 = vadd.f32 %v2093, %v2324
    %v2326 = vpop.f32.mrb[0].mxu0
    %v2327 = vadd.f32 %v2095, %v2326
    %2328 = vdwg.mxu0
    %v2329 = vand.u32 %v76, 4294901760
    %v2330 = vsub.f32 %v76, %v2329
    %2331 = vmatprep.subr.mxu0 %v2330
    %v2332 = vand.u32 %v75, 4294901760
    %v2333 = vsub.f32 %v75, %v2332
    %2334 = vmatpush1.msra.mxu0 %v2333
    %v2335 = vand.u32 %v89, 4294901760
    %v2336 = vsub.f32 %v89, %v2335
    %2337 = vmatprep.subr.mxu0 %v2336
    %v2338 = vand.u32 %v88, 4294901760
    %v2339 = vsub.f32 %v88, %v2338
    %2340 = vmatpush1.msra.mxu0 %v2339
    %v2341 = vand.u32 %v102, 4294901760
    %v2342 = vsub.f32 %v102, %v2341
    %2343 = vmatprep.subr.mxu0 %v2342
    %v2344 = vand.u32 %v101, 4294901760
    %v2345 = vsub.f32 %v101, %v2344
    %2346 = vmatpush1.msra.mxu0 %v2345
    %v2347 = vand.u32 %v115, 4294901760
    %v2348 = vsub.f32 %v115, %v2347
    %2349 = vmatprep.subr.mxu0 %v2348
    %v2350 = vand.u32 %v114, 4294901760
    %v2351 = vsub.f32 %v114, %v2350
    %2352 = vmatpush1.msra.mxu0 %v2351
    %v2353 = vand.u32 %v128, 4294901760
    %v2354 = vsub.f32 %v128, %v2353
    %2355 = vmatprep.subr.mxu0 %v2354
    %v2356 = vand.u32 %v127, 4294901760
    %v2357 = vsub.f32 %v127, %v2356
    %2358 = vmatpush1.msra.mxu0 %v2357
    %v2359 = vand.u32 %v141, 4294901760
    %v2360 = vsub.f32 %v141, %v2359
    %2361 = vmatprep.subr.mxu0 %v2360
    %v2362 = vand.u32 %v140, 4294901760
    %v2363 = vsub.f32 %v140, %v2362
    %2364 = vmatpush1.msra.mxu0 %v2363
    %v2365 = vand.u32 %v154, 4294901760
    %v2366 = vsub.f32 %v154, %v2365
    %2367 = vmatprep.subr.mxu0 %v2366
    %v2368 = vand.u32 %v153, 4294901760
    %v2369 = vsub.f32 %v153, %v2368
    %2370 = vmatpush1.msra.mxu0 %v2369
    %v2371 = vand.u32 %v167, 4294901760
    %v2372 = vsub.f32 %v167, %v2371
    %2373 = vmatprep.subr.mxu0 %v2372
    %v2374 = vand.u32 %v166, 4294901760
    %v2375 = vsub.f32 %v166, %v2374
    %2376 = vmatpush1.msra.mxu0 %v2375
    %v2377 = vand.u32 %v180, 4294901760
    %v2378 = vsub.f32 %v180, %v2377
    %2379 = vmatprep.subr.mxu0 %v2378
    %v2380 = vand.u32 %v179, 4294901760
    %v2381 = vsub.f32 %v179, %v2380
    %2382 = vmatpush1.msra.mxu0 %v2381
    %v2383 = vand.u32 %v193, 4294901760
    %v2384 = vsub.f32 %v193, %v2383
    %2385 = vmatprep.subr.mxu0 %v2384
    %v2386 = vand.u32 %v192, 4294901760
    %v2387 = vsub.f32 %v192, %v2386
    %2388 = vmatpush1.msra.mxu0 %v2387
    %v2389 = vand.u32 %v206, 4294901760
    %v2390 = vsub.f32 %v206, %v2389
    %2391 = vmatprep.subr.mxu0 %v2390
    %v2392 = vand.u32 %v205, 4294901760
    %v2393 = vsub.f32 %v205, %v2392
    %2394 = vmatpush1.msra.mxu0 %v2393
    %v2395 = vand.u32 %v219, 4294901760
    %v2396 = vsub.f32 %v219, %v2395
    %2397 = vmatprep.subr.mxu0 %v2396
    %v2398 = vand.u32 %v218, 4294901760
    %v2399 = vsub.f32 %v218, %v2398
    %2400 = vmatpush1.msra.mxu0 %v2399
    %v2401 = vand.u32 %v232, 4294901760
    %v2402 = vsub.f32 %v232, %v2401
    %2403 = vmatprep.subr.mxu0 %v2402
    %v2404 = vand.u32 %v231, 4294901760
    %v2405 = vsub.f32 %v231, %v2404
    %2406 = vmatpush1.msra.mxu0 %v2405
    %v2407 = vand.u32 %v245, 4294901760
    %v2408 = vsub.f32 %v245, %v2407
    %2409 = vmatprep.subr.mxu0 %v2408
    %v2410 = vand.u32 %v244, 4294901760
    %v2411 = vsub.f32 %v244, %v2410
    %2412 = vmatpush1.msra.mxu0 %v2411
    %v2413 = vand.u32 %v258, 4294901760
    %v2414 = vsub.f32 %v258, %v2413
    %2415 = vmatprep.subr.mxu0 %v2414
    %v2416 = vand.u32 %v257, 4294901760
    %v2417 = vsub.f32 %v257, %v2416
    %2418 = vmatpush1.msra.mxu0 %v2417
    %v2419 = vand.u32 %v271, 4294901760
    %v2420 = vsub.f32 %v271, %v2419
    %2421 = vmatprep.subr.mxu0 %v2420
    %v2422 = vand.u32 %v270, 4294901760
    %v2423 = vsub.f32 %v270, %v2422
    %2424 = vmatpush1.msra.mxu0 %v2423
    %2425 = vmatprep.subr.mxu0 0.0
    %2426 = vmatpush1.msra.mxu0 0.0
    %2427 = vmatprep.subr.mxu0 0.0
    %2428 = vmatpush1.msra.mxu0 0.0
    %2429 = vmatprep.subr.mxu0 0.0
    %2430 = vmatpush1.msra.mxu0 0.0
    %2431 = vmatprep.subr.mxu0 0.0
    %2432 = vmatpush1.msra.mxu0 0.0
    %2433 = vmatprep.subr.mxu0 0.0
    %2434 = vmatpush1.msra.mxu0 0.0
    %2435 = vmatprep.subr.mxu0 0.0
    %2436 = vmatpush1.msra.mxu0 0.0
    %2437 = vmatprep.subr.mxu0 0.0
    %2438 = vmatpush1.msra.mxu0 0.0
    %2439 = vmatprep.subr.mxu0 0.0
    %2440 = vmatpush1.msra.mxu0 0.0
    %2441 = vmatprep.subr.mxu0 0.0
    %2442 = vmatpush1.msra.mxu0 0.0
    %2443 = vmatprep.subr.mxu0 0.0
    %2444 = vmatpush1.msra.mxu0 0.0
    %2445 = vmatprep.subr.mxu0 0.0
    %2446 = vmatpush1.msra.mxu0 0.0
    %2447 = vmatprep.subr.mxu0 0.0
    %2448 = vmatpush1.msra.mxu0 0.0
    %2449 = vmatprep.subr.mxu0 0.0
    %2450 = vmatpush1.msra.mxu0 0.0
    %2451 = vmatprep.subr.mxu0 0.0
    %2452 = vmatpush1.msra.mxu0 0.0
    %2453 = vmatprep.subr.mxu0 0.0
    %2454 = vmatpush1.msra.mxu0 0.0
    %2455 = vmatprep.subr.mxu0 0.0
    %2456 = vmatpush1.msra.mxu0 0.0
    %2457 = vmatprep.mubr.f32.mxu0 0.0
    %v2458 = vand.u32 %v70, 4294901760
    %v2459 = vsub.f32 %v70, %v2458
    %2460 = vmatmul.mubr.f32.gmra.mrb[0].mxu0 %v2459
    %v2461 = vpop.f32.mrb[0].mxu0
    %v2462 = vadd.f32 %v2325, %v2461
    %v2463 = vpop.f32.mrb[0].mxu0
    %v2464 = vadd.f32 %v2327, %v2463
    %2465 = vdwg.mxu0
    %v2466 = vand.u32 %v76, 4294901760
    %2467 = vmatprep.subr.mxu0 %v2466
    %v2468 = vand.u32 %v75, 4294901760
    %2469 = vmatpush1.msra.mxu0 %v2468
    %v2470 = vand.u32 %v89, 4294901760
    %2471 = vmatprep.subr.mxu0 %v2470
    %v2472 = vand.u32 %v88, 4294901760
    %2473 = vmatpush1.msra.mxu0 %v2472
    %v2474 = vand.u32 %v102, 4294901760
    %2475 = vmatprep.subr.mxu0 %v2474
    %v2476 = vand.u32 %v101, 4294901760
    %2477 = vmatpush1.msra.mxu0 %v2476
    %v2478 = vand.u32 %v115, 4294901760
    %2479 = vmatprep.subr.mxu0 %v2478
    %v2480 = vand.u32 %v114, 4294901760
    %2481 = vmatpush1.msra.mxu0 %v2480
    %v2482 = vand.u32 %v128, 4294901760
    %2483 = vmatprep.subr.mxu0 %v2482
    %v2484 = vand.u32 %v127, 4294901760
    %2485 = vmatpush1.msra.mxu0 %v2484
    %v2486 = vand.u32 %v141, 4294901760
    %2487 = vmatprep.subr.mxu0 %v2486
    %v2488 = vand.u32 %v140, 4294901760
    %2489 = vmatpush1.msra.mxu0 %v2488
    %v2490 = vand.u32 %v154, 4294901760
    %2491 = vmatprep.subr.mxu0 %v2490
    %v2492 = vand.u32 %v153, 4294901760
    %2493 = vmatpush1.msra.mxu0 %v2492
    %v2494 = vand.u32 %v167, 4294901760
    %2495 = vmatprep.subr.mxu0 %v2494
    %v2496 = vand.u32 %v166, 4294901760
    %2497 = vmatpush1.msra.mxu0 %v2496
    %v2498 = vand.u32 %v180, 4294901760
    %2499 = vmatprep.subr.mxu0 %v2498
    %v2500 = vand.u32 %v179, 4294901760
    %2501 = vmatpush1.msra.mxu0 %v2500
    %v2502 = vand.u32 %v193, 4294901760
    %2503 = vmatprep.subr.mxu0 %v2502
    %v2504 = vand.u32 %v192, 4294901760
    %2505 = vmatpush1.msra.mxu0 %v2504
    %v2506 = vand.u32 %v206, 4294901760
    %2507 = vmatprep.subr.mxu0 %v2506
    %v2508 = vand.u32 %v205, 4294901760
    %2509 = vmatpush1.msra.mxu0 %v2508
    %v2510 = vand.u32 %v219, 4294901760
    %2511 = vmatprep.subr.mxu0 %v2510
    %v2512 = vand.u32 %v218, 4294901760
    %2513 = vmatpush1.msra.mxu0 %v2512
    %v2514 = vand.u32 %v232, 4294901760
    %2515 = vmatprep.subr.mxu0 %v2514
    %v2516 = vand.u32 %v231, 4294901760
    %2517 = vmatpush1.msra.mxu0 %v2516
    %v2518 = vand.u32 %v245, 4294901760
    %2519 = vmatprep.subr.mxu0 %v2518
    %v2520 = vand.u32 %v244, 4294901760
    %2521 = vmatpush1.msra.mxu0 %v2520
    %v2522 = vand.u32 %v258, 4294901760
    %2523 = vmatprep.subr.mxu0 %v2522
    %v2524 = vand.u32 %v257, 4294901760
    %2525 = vmatpush1.msra.mxu0 %v2524
    %v2526 = vand.u32 %v271, 4294901760
    %2527 = vmatprep.subr.mxu0 %v2526
    %v2528 = vand.u32 %v270, 4294901760
    %2529 = vmatpush1.msra.mxu0 %v2528
    %2530 = vmatprep.subr.mxu0 0.0
    %2531 = vmatpush1.msra.mxu0 0.0
    %2532 = vmatprep.subr.mxu0 0.0
    %2533 = vmatpush1.msra.mxu0 0.0
    %2534 = vmatprep.subr.mxu0 0.0
    %2535 = vmatpush1.msra.mxu0 0.0
    %2536 = vmatprep.subr.mxu0 0.0
    %2537 = vmatpush1.msra.mxu0 0.0
    %2538 = vmatprep.subr.mxu0 0.0
    %2539 = vmatpush1.msra.mxu0 0.0
    %2540 = vmatprep.subr.mxu0 0.0
    %2541 = vmatpush1.msra.mxu0 0.0
    %2542 = vmatprep.subr.mxu0 0.0
    %2543 = vmatpush1.msra.mxu0 0.0
    %2544 = vmatprep.subr.mxu0 0.0
    %2545 = vmatpush1.msra.mxu0 0.0
    %2546 = vmatprep.subr.mxu0 0.0
    %2547 = vmatpush1.msra.mxu0 0.0
    %2548 = vmatprep.subr.mxu0 0.0
    %2549 = vmatpush1.msra.mxu0 0.0
    %2550 = vmatprep.subr.mxu0 0.0
    %2551 = vmatpush1.msra.mxu0 0.0
    %2552 = vmatprep.subr.mxu0 0.0
    %2553 = vmatpush1.msra.mxu0 0.0
    %2554 = vmatprep.subr.mxu0 0.0
    %2555 = vmatpush1.msra.mxu0 0.0
    %2556 = vmatprep.subr.mxu0 0.0
    %2557 = vmatpush1.msra.mxu0 0.0
    %2558 = vmatprep.subr.mxu0 0.0
    %2559 = vmatpush1.msra.mxu0 0.0
    %2560 = vmatprep.subr.mxu0 0.0
    %2561 = vmatpush1.msra.mxu0 0.0
    %2562 = vmatprep.mubr.f32.mxu0 0.0
    %v2563 = vand.u32 %v70, 4294901760
    %v2564 = vsub.f32 %v70, %v2563
    %v2565 = vand.u32 %v2564, 4294901760
    %2566 = vmatmul.mubr.f32.gmra.mrb[0].mxu0 %v2565
    %v2567 = vpop.f32.mrb[0].mxu0
    %v2568 = vadd.f32 %v2462, %v2567
    %v2569 = vpop.f32.mrb[0].mxu0
    %v2570 = vadd.f32 %v2464, %v2569
    %2571 = vdwg.mxu0
    %v2572 = vand.u32 %v76, 4294901760
    %v2573 = vsub.f32 %v76, %v2572
    %v2574 = vand.u32 %v2573, 4294901760
    %2575 = vmatprep.subr.mxu0 %v2574
    %v2576 = vand.u32 %v75, 4294901760
    %v2577 = vsub.f32 %v75, %v2576
    %v2578 = vand.u32 %v2577, 4294901760
    %2579 = vmatpush1.msra.mxu0 %v2578
    %v2580 = vand.u32 %v89, 4294901760
    %v2581 = vsub.f32 %v89, %v2580
    %v2582 = vand.u32 %v2581, 4294901760
    %2583 = vmatprep.subr.mxu0 %v2582
    %v2584 = vand.u32 %v88, 4294901760
    %v2585 = vsub.f32 %v88, %v2584
    %v2586 = vand.u32 %v2585, 4294901760
    %2587 = vmatpush1.msra.mxu0 %v2586
    %v2588 = vand.u32 %v102, 4294901760
    %v2589 = vsub.f32 %v102, %v2588
    %v2590 = vand.u32 %v2589, 4294901760
    %2591 = vmatprep.subr.mxu0 %v2590
    %v2592 = vand.u32 %v101, 4294901760
    %v2593 = vsub.f32 %v101, %v2592
    %v2594 = vand.u32 %v2593, 4294901760
    %2595 = vmatpush1.msra.mxu0 %v2594
    %v2596 = vand.u32 %v115, 4294901760
    %v2597 = vsub.f32 %v115, %v2596
    %v2598 = vand.u32 %v2597, 4294901760
    %2599 = vmatprep.subr.mxu0 %v2598
    %v2600 = vand.u32 %v114, 4294901760
    %v2601 = vsub.f32 %v114, %v2600
    %v2602 = vand.u32 %v2601, 4294901760
    %2603 = vmatpush1.msra.mxu0 %v2602
    %v2604 = vand.u32 %v128, 4294901760
    %v2605 = vsub.f32 %v128, %v2604
    %v2606 = vand.u32 %v2605, 4294901760
    %2607 = vmatprep.subr.mxu0 %v2606
    %v2608 = vand.u32 %v127, 4294901760
    %v2609 = vsub.f32 %v127, %v2608
    %v2610 = vand.u32 %v2609, 4294901760
    %2611 = vmatpush1.msra.mxu0 %v2610
    %v2612 = vand.u32 %v141, 4294901760
    %v2613 = vsub.f32 %v141, %v2612
    %v2614 = vand.u32 %v2613, 4294901760
    %2615 = vmatprep.subr.mxu0 %v2614
    %v2616 = vand.u32 %v140, 4294901760
    %v2617 = vsub.f32 %v140, %v2616
    %v2618 = vand.u32 %v2617, 4294901760
    %2619 = vmatpush1.msra.mxu0 %v2618
    %v2620 = vand.u32 %v154, 4294901760
    %v2621 = vsub.f32 %v154, %v2620
    %v2622 = vand.u32 %v2621, 4294901760
    %2623 = vmatprep.subr.mxu0 %v2622
    %v2624 = vand.u32 %v153, 4294901760
    %v2625 = vsub.f32 %v153, %v2624
    %v2626 = vand.u32 %v2625, 4294901760
    %2627 = vmatpush1.msra.mxu0 %v2626
    %v2628 = vand.u32 %v167, 4294901760
    %v2629 = vsub.f32 %v167, %v2628
    %v2630 = vand.u32 %v2629, 4294901760
    %2631 = vmatprep.subr.mxu0 %v2630
    %v2632 = vand.u32 %v166, 4294901760
    %v2633 = vsub.f32 %v166, %v2632
    %v2634 = vand.u32 %v2633, 4294901760
    %2635 = vmatpush1.msra.mxu0 %v2634
    %v2636 = vand.u32 %v180, 4294901760
    %v2637 = vsub.f32 %v180, %v2636
    %v2638 = vand.u32 %v2637, 4294901760
    %2639 = vmatprep.subr.mxu0 %v2638
    %v2640 = vand.u32 %v179, 4294901760
    %v2641 = vsub.f32 %v179, %v2640
    %v2642 = vand.u32 %v2641, 4294901760
    %2643 = vmatpush1.msra.mxu0 %v2642
    %v2644 = vand.u32 %v193, 4294901760
    %v2645 = vsub.f32 %v193, %v2644
    %v2646 = vand.u32 %v2645, 4294901760
    %2647 = vmatprep.subr.mxu0 %v2646
    %v2648 = vand.u32 %v192, 4294901760
    %v2649 = vsub.f32 %v192, %v2648
    %v2650 = vand.u32 %v2649, 4294901760
    %2651 = vmatpush1.msra.mxu0 %v2650
    %v2652 = vand.u32 %v206, 4294901760
    %v2653 = vsub.f32 %v206, %v2652
    %v2654 = vand.u32 %v2653, 4294901760
    %2655 = vmatprep.subr.mxu0 %v2654
    %v2656 = vand.u32 %v205, 4294901760
    %v2657 = vsub.f32 %v205, %v2656
    %v2658 = vand.u32 %v2657, 4294901760
    %2659 = vmatpush1.msra.mxu0 %v2658
    %v2660 = vand.u32 %v219, 4294901760
    %v2661 = vsub.f32 %v219, %v2660
    %v2662 = vand.u32 %v2661, 4294901760
    %2663 = vmatprep.subr.mxu0 %v2662
    %v2664 = vand.u32 %v218, 4294901760
    %v2665 = vsub.f32 %v218, %v2664
    %v2666 = vand.u32 %v2665, 4294901760
    %2667 = vmatpush1.msra.mxu0 %v2666
    %v2668 = vand.u32 %v232, 4294901760
    %v2669 = vsub.f32 %v232, %v2668
    %v2670 = vand.u32 %v2669, 4294901760
    %2671 = vmatprep.subr.mxu0 %v2670
    %v2672 = vand.u32 %v231, 4294901760
    %v2673 = vsub.f32 %v231, %v2672
    %v2674 = vand.u32 %v2673, 4294901760
    %2675 = vmatpush1.msra.mxu0 %v2674
    %v2676 = vand.u32 %v245, 4294901760
    %v2677 = vsub.f32 %v245, %v2676
    %v2678 = vand.u32 %v2677, 4294901760
    %2679 = vmatprep.subr.mxu0 %v2678
    %v2680 = vand.u32 %v244, 4294901760
    %v2681 = vsub.f32 %v244, %v2680
    %v2682 = vand.u32 %v2681, 4294901760
    %2683 = vmatpush1.msra.mxu0 %v2682
    %v2684 = vand.u32 %v258, 4294901760
    %v2685 = vsub.f32 %v258, %v2684
    %v2686 = vand.u32 %v2685, 4294901760
    %2687 = vmatprep.subr.mxu0 %v2686
    %v2688 = vand.u32 %v257, 4294901760
    %v2689 = vsub.f32 %v257, %v2688
    %v2690 = vand.u32 %v2689, 4294901760
    %2691 = vmatpush1.msra.mxu0 %v2690
    %v2692 = vand.u32 %v271, 4294901760
    %v2693 = vsub.f32 %v271, %v2692
    %v2694 = vand.u32 %v2693, 4294901760
    %2695 = vmatprep.subr.mxu0 %v2694
    %v2696 = vand.u32 %v270, 4294901760
    %v2697 = vsub.f32 %v270, %v2696
    %v2698 = vand.u32 %v2697, 4294901760
    %2699 = vmatpush1.msra.mxu0 %v2698
    %2700 = vmatprep.subr.mxu0 0.0
    %2701 = vmatpush1.msra.mxu0 0.0
    %2702 = vmatprep.subr.mxu0 0.0
    %2703 = vmatpush1.msra.mxu0 0.0
    %2704 = vmatprep.subr.mxu0 0.0
    %2705 = vmatpush1.msra.mxu0 0.0
    %2706 = vmatprep.subr.mxu0 0.0
    %2707 = vmatpush1.msra.mxu0 0.0
    %2708 = vmatprep.subr.mxu0 0.0
    %2709 = vmatpush1.msra.mxu0 0.0
    %2710 = vmatprep.subr.mxu0 0.0
    %2711 = vmatpush1.msra.mxu0 0.0
    %2712 = vmatprep.subr.mxu0 0.0
    %2713 = vmatpush1.msra.mxu0 0.0
    %2714 = vmatprep.subr.mxu0 0.0
    %2715 = vmatpush1.msra.mxu0 0.0
    %2716 = vmatprep.subr.mxu0 0.0
    %2717 = vmatpush1.msra.mxu0 0.0
    %2718 = vmatprep.subr.mxu0 0.0
    %2719 = vmatpush1.msra.mxu0 0.0
    %2720 = vmatprep.subr.mxu0 0.0
    %2721 = vmatpush1.msra.mxu0 0.0
    %2722 = vmatprep.subr.mxu0 0.0
    %2723 = vmatpush1.msra.mxu0 0.0
    %2724 = vmatprep.subr.mxu0 0.0
    %2725 = vmatpush1.msra.mxu0 0.0
    %2726 = vmatprep.subr.mxu0 0.0
    %2727 = vmatpush1.msra.mxu0 0.0
    %2728 = vmatprep.subr.mxu0 0.0
    %2729 = vmatpush1.msra.mxu0 0.0
    %2730 = vmatprep.subr.mxu0 0.0
    %2731 = vmatpush1.msra.mxu0 0.0
    %2732 = vmatprep.mubr.f32.mxu0 0.0
    %v2733 = vand.u32 %v70, 4294901760
    %2734 = vmatmul.mubr.f32.gmra.mrb[0].mxu0 %v2733
    %v2735 = vpop.f32.mrb[0].mxu0
    %v2736 = vadd.f32 %v2568, %v2735
    %v2737 = vpop.f32.mrb[0].mxu0
    %v2738 = vadd.f32 %v2570, %v2737
    %2739 = vdwg.mxu0
    %v2740 = vand.u32 %v76, 4294901760
    %2741 = vmatprep.subr.mxu0 %v2740
    %v2742 = vand.u32 %v75, 4294901760
    %2743 = vmatpush1.msra.mxu0 %v2742
    %v2744 = vand.u32 %v89, 4294901760
    %2745 = vmatprep.subr.mxu0 %v2744
    %v2746 = vand.u32 %v88, 4294901760
    %2747 = vmatpush1.msra.mxu0 %v2746
    %v2748 = vand.u32 %v102, 4294901760
    %2749 = vmatprep.subr.mxu0 %v2748
    %v2750 = vand.u32 %v101, 4294901760
    %2751 = vmatpush1.msra.mxu0 %v2750
    %v2752 = vand.u32 %v115, 4294901760
    %2753 = vmatprep.subr.mxu0 %v2752
    %v2754 = vand.u32 %v114, 4294901760
    %2755 = vmatpush1.msra.mxu0 %v2754
    %v2756 = vand.u32 %v128, 4294901760
    %2757 = vmatprep.subr.mxu0 %v2756
    %v2758 = vand.u32 %v127, 4294901760
    %2759 = vmatpush1.msra.mxu0 %v2758
    %v2760 = vand.u32 %v141, 4294901760
    %2761 = vmatprep.subr.mxu0 %v2760
    %v2762 = vand.u32 %v140, 4294901760
    %2763 = vmatpush1.msra.mxu0 %v2762
    %v2764 = vand.u32 %v154, 4294901760
    %2765 = vmatprep.subr.mxu0 %v2764
    %v2766 = vand.u32 %v153, 4294901760
    %2767 = vmatpush1.msra.mxu0 %v2766
    %v2768 = vand.u32 %v167, 4294901760
    %2769 = vmatprep.subr.mxu0 %v2768
    %v2770 = vand.u32 %v166, 4294901760
    %2771 = vmatpush1.msra.mxu0 %v2770
    %v2772 = vand.u32 %v180, 4294901760
    %2773 = vmatprep.subr.mxu0 %v2772
    %v2774 = vand.u32 %v179, 4294901760
    %2775 = vmatpush1.msra.mxu0 %v2774
    %v2776 = vand.u32 %v193, 4294901760
    %2777 = vmatprep.subr.mxu0 %v2776
    %v2778 = vand.u32 %v192, 4294901760
    %2779 = vmatpush1.msra.mxu0 %v2778
    %v2780 = vand.u32 %v206, 4294901760
    %2781 = vmatprep.subr.mxu0 %v2780
    %v2782 = vand.u32 %v205, 4294901760
    %2783 = vmatpush1.msra.mxu0 %v2782
    %v2784 = vand.u32 %v219, 4294901760
    %2785 = vmatprep.subr.mxu0 %v2784
    %v2786 = vand.u32 %v218, 4294901760
    %2787 = vmatpush1.msra.mxu0 %v2786
    %v2788 = vand.u32 %v232, 4294901760
    %2789 = vmatprep.subr.mxu0 %v2788
    %v2790 = vand.u32 %v231, 4294901760
    %2791 = vmatpush1.msra.mxu0 %v2790
    %v2792 = vand.u32 %v245, 4294901760
    %2793 = vmatprep.subr.mxu0 %v2792
    %v2794 = vand.u32 %v244, 4294901760
    %2795 = vmatpush1.msra.mxu0 %v2794
    %v2796 = vand.u32 %v258, 4294901760
    %2797 = vmatprep.subr.mxu0 %v2796
    %v2798 = vand.u32 %v257, 4294901760
    %2799 = vmatpush1.msra.mxu0 %v2798
    %v2800 = vand.u32 %v271, 4294901760
    %2801 = vmatprep.subr.mxu0 %v2800
    %v2802 = vand.u32 %v270, 4294901760
    %2803 = vmatpush1.msra.mxu0 %v2802
    %2804 = vmatprep.subr.mxu0 0.0
    %2805 = vmatpush1.msra.mxu0 0.0
    %2806 = vmatprep.subr.mxu0 0.0
    %2807 = vmatpush1.msra.mxu0 0.0
    %2808 = vmatprep.subr.mxu0 0.0
    %2809 = vmatpush1.msra.mxu0 0.0
    %2810 = vmatprep.subr.mxu0 0.0
    %2811 = vmatpush1.msra.mxu0 0.0
    %2812 = vmatprep.subr.mxu0 0.0
    %2813 = vmatpush1.msra.mxu0 0.0
    %2814 = vmatprep.subr.mxu0 0.0
    %2815 = vmatpush1.msra.mxu0 0.0
    %2816 = vmatprep.subr.mxu0 0.0
    %2817 = vmatpush1.msra.mxu0 0.0
    %2818 = vmatprep.subr.mxu0 0.0
    %2819 = vmatpush1.msra.mxu0 0.0
    %2820 = vmatprep.subr.mxu0 0.0
    %2821 = vmatpush1.msra.mxu0 0.0
    %2822 = vmatprep.subr.mxu0 0.0
    %2823 = vmatpush1.msra.mxu0 0.0
    %2824 = vmatprep.subr.mxu0 0.0
    %2825 = vmatpush1.msra.mxu0 0.0
    %2826 = vmatprep.subr.mxu0 0.0
    %2827 = vmatpush1.msra.mxu0 0.0
    %2828 = vmatprep.subr.mxu0 0.0
    %2829 = vmatpush1.msra.mxu0 0.0
    %2830 = vmatprep.subr.mxu0 0.0
    %2831 = vmatpush1.msra.mxu0 0.0
    %2832 = vmatprep.subr.mxu0 0.0
    %2833 = vmatpush1.msra.mxu0 0.0
    %2834 = vmatprep.subr.mxu0 0.0
    %2835 = vmatpush1.msra.mxu0 0.0
    %2836 = vmatprep.mubr.f32.mxu0 0.0
    %v2837 = vand.u32 %v70, 4294901760
    %2838 = vmatmul.mubr.f32.gmra.mrb[0].mxu0 %v2837
    %v2839 = vpop.f32.mrb[0].mxu0
    %v2840 = vadd.f32 %v2736, %v2839
    %v2841 = vpop.f32.mrb[0].mxu0
    %v2842 = vadd.f32 %v2738, %v2841
    %2843 = vdwg.mxu0
    %v2844 = vand.u32 %v78, 4294901760
    %2845 = vmatprep.subr.mxu0 %v2844
    %v2846 = vand.u32 %v77, 4294901760
    %2847 = vmatpush1.msra.mxu0 %v2846
    %v2848 = vand.u32 %v91, 4294901760
    %2849 = vmatprep.subr.mxu0 %v2848
    %v2850 = vand.u32 %v90, 4294901760
    %2851 = vmatpush1.msra.mxu0 %v2850
    %v2852 = vand.u32 %v104, 4294901760
    %2853 = vmatprep.subr.mxu0 %v2852
    %v2854 = vand.u32 %v103, 4294901760
    %2855 = vmatpush1.msra.mxu0 %v2854
    %v2856 = vand.u32 %v117, 4294901760
    %2857 = vmatprep.subr.mxu0 %v2856
    %v2858 = vand.u32 %v116, 4294901760
    %2859 = vmatpush1.msra.mxu0 %v2858
    %v2860 = vand.u32 %v130, 4294901760
    %2861 = vmatprep.subr.mxu0 %v2860
    %v2862 = vand.u32 %v129, 4294901760
    %2863 = vmatpush1.msra.mxu0 %v2862
    %v2864 = vand.u32 %v143, 4294901760
    %2865 = vmatprep.subr.mxu0 %v2864
    %v2866 = vand.u32 %v142, 4294901760
    %2867 = vmatpush1.msra.mxu0 %v2866
    %v2868 = vand.u32 %v156, 4294901760
    %2869 = vmatprep.subr.mxu0 %v2868
    %v2870 = vand.u32 %v155, 4294901760
    %2871 = vmatpush1.msra.mxu0 %v2870
    %v2872 = vand.u32 %v169, 4294901760
    %2873 = vmatprep.subr.mxu0 %v2872
    %v2874 = vand.u32 %v168, 4294901760
    %2875 = vmatpush1.msra.mxu0 %v2874
    %v2876 = vand.u32 %v182, 4294901760
    %2877 = vmatprep.subr.mxu0 %v2876
    %v2878 = vand.u32 %v181, 4294901760
    %2879 = vmatpush1.msra.mxu0 %v2878
    %v2880 = vand.u32 %v195, 4294901760
    %2881 = vmatprep.subr.mxu0 %v2880
    %v2882 = vand.u32 %v194, 4294901760
    %2883 = vmatpush1.msra.mxu0 %v2882
    %v2884 = vand.u32 %v208, 4294901760
    %2885 = vmatprep.subr.mxu0 %v2884
    %v2886 = vand.u32 %v207, 4294901760
    %2887 = vmatpush1.msra.mxu0 %v2886
    %v2888 = vand.u32 %v221, 4294901760
    %2889 = vmatprep.subr.mxu0 %v2888
    %v2890 = vand.u32 %v220, 4294901760
    %2891 = vmatpush1.msra.mxu0 %v2890
    %v2892 = vand.u32 %v234, 4294901760
    %2893 = vmatprep.subr.mxu0 %v2892
    %v2894 = vand.u32 %v233, 4294901760
    %2895 = vmatpush1.msra.mxu0 %v2894
    %v2896 = vand.u32 %v247, 4294901760
    %2897 = vmatprep.subr.mxu0 %v2896
    %v2898 = vand.u32 %v246, 4294901760
    %2899 = vmatpush1.msra.mxu0 %v2898
    %v2900 = vand.u32 %v260, 4294901760
    %2901 = vmatprep.subr.mxu0 %v2900
    %v2902 = vand.u32 %v259, 4294901760
    %2903 = vmatpush1.msra.mxu0 %v2902
    %v2904 = vand.u32 %v273, 4294901760
    %2905 = vmatprep.subr.mxu0 %v2904
    %v2906 = vand.u32 %v272, 4294901760
    %2907 = vmatpush1.msra.mxu0 %v2906
    %2908 = vmatprep.subr.mxu0 0.0
    %2909 = vmatpush1.msra.mxu0 0.0
    %2910 = vmatprep.subr.mxu0 0.0
    %2911 = vmatpush1.msra.mxu0 0.0
    %2912 = vmatprep.subr.mxu0 0.0
    %2913 = vmatpush1.msra.mxu0 0.0
    %2914 = vmatprep.subr.mxu0 0.0
    %2915 = vmatpush1.msra.mxu0 0.0
    %2916 = vmatprep.subr.mxu0 0.0
    %2917 = vmatpush1.msra.mxu0 0.0
    %2918 = vmatprep.subr.mxu0 0.0
    %2919 = vmatpush1.msra.mxu0 0.0
    %2920 = vmatprep.subr.mxu0 0.0
    %2921 = vmatpush1.msra.mxu0 0.0
    %2922 = vmatprep.subr.mxu0 0.0
    %2923 = vmatpush1.msra.mxu0 0.0
    %2924 = vmatprep.subr.mxu0 0.0
    %2925 = vmatpush1.msra.mxu0 0.0
    %2926 = vmatprep.subr.mxu0 0.0
    %2927 = vmatpush1.msra.mxu0 0.0
    %2928 = vmatprep.subr.mxu0 0.0
    %2929 = vmatpush1.msra.mxu0 0.0
    %2930 = vmatprep.subr.mxu0 0.0
    %2931 = vmatpush1.msra.mxu0 0.0
    %2932 = vmatprep.subr.mxu0 0.0
    %2933 = vmatpush1.msra.mxu0 0.0
    %2934 = vmatprep.subr.mxu0 0.0
    %2935 = vmatpush1.msra.mxu0 0.0
    %2936 = vmatprep.subr.mxu0 0.0
    %2937 = vmatpush1.msra.mxu0 0.0
    %2938 = vmatprep.subr.mxu0 0.0
    %2939 = vmatpush1.msra.mxu0 0.0
    %2940 = vmatprep.mubr.f32.mxu0 0.0
    %v2941 = vand.u32 %v70, 4294901760
    %v2942 = vsub.f32 %v70, %v2941
    %v2943 = vand.u32 %v2942, 4294901760
    %v2944 = vsub.f32 %v2942, %v2943
    %v2945 = vand.u32 %v2944, 4294901760
    %2946 = vmatmul.mubr.f32.gmra.mrb[0].mxu0 %v2945
    %v2947 = vpop.f32.mrb[0].mxu0
    %v2948 = vadd.f32 0.0, %v2947
    %v2949 = vpop.f32.mrb[0].mxu0
    %v2950 = vadd.f32 0.0, %v2949
    %2951 = vdwg.mxu0
    %v2952 = vand.u32 %v78, 4294901760
    %v2953 = vsub.f32 %v78, %v2952
    %v2954 = vand.u32 %v2953, 4294901760
    %v2955 = vsub.f32 %v2953, %v2954
    %v2956 = vand.u32 %v2955, 4294901760
    %2957 = vmatprep.subr.mxu0 %v2956
    %v2958 = vand.u32 %v77, 4294901760
    %v2959 = vsub.f32 %v77, %v2958
    %v2960 = vand.u32 %v2959, 4294901760
    %v2961 = vsub.f32 %v2959, %v2960
    %v2962 = vand.u32 %v2961, 4294901760
    %2963 = vmatpush1.msra.mxu0 %v2962
    %v2964 = vand.u32 %v91, 4294901760
    %v2965 = vsub.f32 %v91, %v2964
    %v2966 = vand.u32 %v2965, 4294901760
    %v2967 = vsub.f32 %v2965, %v2966
    %v2968 = vand.u32 %v2967, 4294901760
    %2969 = vmatprep.subr.mxu0 %v2968
    %v2970 = vand.u32 %v90, 4294901760
    %v2971 = vsub.f32 %v90, %v2970
    %v2972 = vand.u32 %v2971, 4294901760
    %v2973 = vsub.f32 %v2971, %v2972
    %v2974 = vand.u32 %v2973, 4294901760
    %2975 = vmatpush1.msra.mxu0 %v2974
    %v2976 = vand.u32 %v104, 4294901760
    %v2977 = vsub.f32 %v104, %v2976
    %v2978 = vand.u32 %v2977, 4294901760
    %v2979 = vsub.f32 %v2977, %v2978
    %v2980 = vand.u32 %v2979, 4294901760
    %2981 = vmatprep.subr.mxu0 %v2980
    %v2982 = vand.u32 %v103, 4294901760
    %v2983 = vsub.f32 %v103, %v2982
    %v2984 = vand.u32 %v2983, 4294901760
    %v2985 = vsub.f32 %v2983, %v2984
    %v2986 = vand.u32 %v2985, 4294901760
    %2987 = vmatpush1.msra.mxu0 %v2986
    %v2988 = vand.u32 %v117, 4294901760
    %v2989 = vsub.f32 %v117, %v2988
    %v2990 = vand.u32 %v2989, 4294901760
    %v2991 = vsub.f32 %v2989, %v2990
    %v2992 = vand.u32 %v2991, 4294901760
    %2993 = vmatprep.subr.mxu0 %v2992
    %v2994 = vand.u32 %v116, 4294901760
    %v2995 = vsub.f32 %v116, %v2994
    %v2996 = vand.u32 %v2995, 4294901760
    %v2997 = vsub.f32 %v2995, %v2996
    %v2998 = vand.u32 %v2997, 4294901760
    %2999 = vmatpush1.msra.mxu0 %v2998
    %v3000 = vand.u32 %v130, 4294901760
    %v3001 = vsub.f32 %v130, %v3000
    %v3002 = vand.u32 %v3001, 4294901760
    %v3003 = vsub.f32 %v3001, %v3002
    %v3004 = vand.u32 %v3003, 4294901760
    %3005 = vmatprep.subr.mxu0 %v3004
    %v3006 = vand.u32 %v129, 4294901760
    %v3007 = vsub.f32 %v129, %v3006
    %v3008 = vand.u32 %v3007, 4294901760
    %v3009 = vsub.f32 %v3007, %v3008
    %v3010 = vand.u32 %v3009, 4294901760
    %3011 = vmatpush1.msra.mxu0 %v3010
    %v3012 = vand.u32 %v143, 4294901760
    %v3013 = vsub.f32 %v143, %v3012
    %v3014 = vand.u32 %v3013, 4294901760
    %v3015 = vsub.f32 %v3013, %v3014
    %v3016 = vand.u32 %v3015, 4294901760
    %3017 = vmatprep.subr.mxu0 %v3016
    %v3018 = vand.u32 %v142, 4294901760
    %v3019 = vsub.f32 %v142, %v3018
    %v3020 = vand.u32 %v3019, 4294901760
    %v3021 = vsub.f32 %v3019, %v3020
    %v3022 = vand.u32 %v3021, 4294901760
    %3023 = vmatpush1.msra.mxu0 %v3022
    %v3024 = vand.u32 %v156, 4294901760
    %v3025 = vsub.f32 %v156, %v3024
    %v3026 = vand.u32 %v3025, 4294901760
    %v3027 = vsub.f32 %v3025, %v3026
    %v3028 = vand.u32 %v3027, 4294901760
    %3029 = vmatprep.subr.mxu0 %v3028
    %v3030 = vand.u32 %v155, 4294901760
    %v3031 = vsub.f32 %v155, %v3030
    %v3032 = vand.u32 %v3031, 4294901760
    %v3033 = vsub.f32 %v3031, %v3032
    %v3034 = vand.u32 %v3033, 4294901760
    %3035 = vmatpush1.msra.mxu0 %v3034
    %v3036 = vand.u32 %v169, 4294901760
    %v3037 = vsub.f32 %v169, %v3036
    %v3038 = vand.u32 %v3037, 4294901760
    %v3039 = vsub.f32 %v3037, %v3038
    %v3040 = vand.u32 %v3039, 4294901760
    %3041 = vmatprep.subr.mxu0 %v3040
    %v3042 = vand.u32 %v168, 4294901760
    %v3043 = vsub.f32 %v168, %v3042
    %v3044 = vand.u32 %v3043, 4294901760
    %v3045 = vsub.f32 %v3043, %v3044
    %v3046 = vand.u32 %v3045, 4294901760
    %3047 = vmatpush1.msra.mxu0 %v3046
    %v3048 = vand.u32 %v182, 4294901760
    %v3049 = vsub.f32 %v182, %v3048
    %v3050 = vand.u32 %v3049, 4294901760
    %v3051 = vsub.f32 %v3049, %v3050
    %v3052 = vand.u32 %v3051, 4294901760
    %3053 = vmatprep.subr.mxu0 %v3052
    %v3054 = vand.u32 %v181, 4294901760
    %v3055 = vsub.f32 %v181, %v3054
    %v3056 = vand.u32 %v3055, 4294901760
    %v3057 = vsub.f32 %v3055, %v3056
    %v3058 = vand.u32 %v3057, 4294901760
    %3059 = vmatpush1.msra.mxu0 %v3058
    %v3060 = vand.u32 %v195, 4294901760
    %v3061 = vsub.f32 %v195, %v3060
    %v3062 = vand.u32 %v3061, 4294901760
    %v3063 = vsub.f32 %v3061, %v3062
    %v3064 = vand.u32 %v3063, 4294901760
    %3065 = vmatprep.subr.mxu0 %v3064
    %v3066 = vand.u32 %v194, 4294901760
    %v3067 = vsub.f32 %v194, %v3066
    %v3068 = vand.u32 %v3067, 4294901760
    %v3069 = vsub.f32 %v3067, %v3068
    %v3070 = vand.u32 %v3069, 4294901760
    %3071 = vmatpush1.msra.mxu0 %v3070
    %v3072 = vand.u32 %v208, 4294901760
    %v3073 = vsub.f32 %v208, %v3072
    %v3074 = vand.u32 %v3073, 4294901760
    %v3075 = vsub.f32 %v3073, %v3074
    %v3076 = vand.u32 %v3075, 4294901760
    %3077 = vmatprep.subr.mxu0 %v3076
    %v3078 = vand.u32 %v207, 4294901760
    %v3079 = vsub.f32 %v207, %v3078
    %v3080 = vand.u32 %v3079, 4294901760
    %v3081 = vsub.f32 %v3079, %v3080
    %v3082 = vand.u32 %v3081, 4294901760
    %3083 = vmatpush1.msra.mxu0 %v3082
    %v3084 = vand.u32 %v221, 4294901760
    %v3085 = vsub.f32 %v221, %v3084
    %v3086 = vand.u32 %v3085, 4294901760
    %v3087 = vsub.f32 %v3085, %v3086
    %v3088 = vand.u32 %v3087, 4294901760
    %3089 = vmatprep.subr.mxu0 %v3088
    %v3090 = vand.u32 %v220, 4294901760
    %v3091 = vsub.f32 %v220, %v3090
    %v3092 = vand.u32 %v3091, 4294901760
    %v3093 = vsub.f32 %v3091, %v3092
    %v3094 = vand.u32 %v3093, 4294901760
    %3095 = vmatpush1.msra.mxu0 %v3094
    %v3096 = vand.u32 %v234, 4294901760
    %v3097 = vsub.f32 %v234, %v3096
    %v3098 = vand.u32 %v3097, 4294901760
    %v3099 = vsub.f32 %v3097, %v3098
    %v3100 = vand.u32 %v3099, 4294901760
    %3101 = vmatprep.subr.mxu0 %v3100
    %v3102 = vand.u32 %v233, 4294901760
    %v3103 = vsub.f32 %v233, %v3102
    %v3104 = vand.u32 %v3103, 4294901760
    %v3105 = vsub.f32 %v3103, %v3104
    %v3106 = vand.u32 %v3105, 4294901760
    %3107 = vmatpush1.msra.mxu0 %v3106
    %v3108 = vand.u32 %v247, 4294901760
    %v3109 = vsub.f32 %v247, %v3108
    %v3110 = vand.u32 %v3109, 4294901760
    %v3111 = vsub.f32 %v3109, %v3110
    %v3112 = vand.u32 %v3111, 4294901760
    %3113 = vmatprep.subr.mxu0 %v3112
    %v3114 = vand.u32 %v246, 4294901760
    %v3115 = vsub.f32 %v246, %v3114
    %v3116 = vand.u32 %v3115, 4294901760
    %v3117 = vsub.f32 %v3115, %v3116
    %v3118 = vand.u32 %v3117, 4294901760
    %3119 = vmatpush1.msra.mxu0 %v3118
    %v3120 = vand.u32 %v260, 4294901760
    %v3121 = vsub.f32 %v260, %v3120
    %v3122 = vand.u32 %v3121, 4294901760
    %v3123 = vsub.f32 %v3121, %v3122
    %v3124 = vand.u32 %v3123, 4294901760
    %3125 = vmatprep.subr.mxu0 %v3124
    %v3126 = vand.u32 %v259, 4294901760
    %v3127 = vsub.f32 %v259, %v3126
    %v3128 = vand.u32 %v3127, 4294901760
    %v3129 = vsub.f32 %v3127, %v3128
    %v3130 = vand.u32 %v3129, 4294901760
    %3131 = vmatpush1.msra.mxu0 %v3130
    %v3132 = vand.u32 %v273, 4294901760
    %v3133 = vsub.f32 %v273, %v3132
    %v3134 = vand.u32 %v3133, 4294901760
    %v3135 = vsub.f32 %v3133, %v3134
    %v3136 = vand.u32 %v3135, 4294901760
    %3137 = vmatprep.subr.mxu0 %v3136
    %v3138 = vand.u32 %v272, 4294901760
    %v3139 = vsub.f32 %v272, %v3138
    %v3140 = vand.u32 %v3139, 4294901760
    %v3141 = vsub.f32 %v3139, %v3140
    %v3142 = vand.u32 %v3141, 4294901760
    %3143 = vmatpush1.msra.mxu0 %v3142
    %3144 = vmatprep.subr.mxu0 0.0
    %3145 = vmatpush1.msra.mxu0 0.0
    %3146 = vmatprep.subr.mxu0 0.0
    %3147 = vmatpush1.msra.mxu0 0.0
    %3148 = vmatprep.subr.mxu0 0.0
    %3149 = vmatpush1.msra.mxu0 0.0
    %3150 = vmatprep.subr.mxu0 0.0
    %3151 = vmatpush1.msra.mxu0 0.0
    %3152 = vmatprep.subr.mxu0 0.0
    %3153 = vmatpush1.msra.mxu0 0.0
    %3154 = vmatprep.subr.mxu0 0.0
    %3155 = vmatpush1.msra.mxu0 0.0
    %3156 = vmatprep.subr.mxu0 0.0
    %3157 = vmatpush1.msra.mxu0 0.0
    %3158 = vmatprep.subr.mxu0 0.0
    %3159 = vmatpush1.msra.mxu0 0.0
    %3160 = vmatprep.subr.mxu0 0.0
    %3161 = vmatpush1.msra.mxu0 0.0
    %3162 = vmatprep.subr.mxu0 0.0
    %3163 = vmatpush1.msra.mxu0 0.0
    %3164 = vmatprep.subr.mxu0 0.0
    %3165 = vmatpush1.msra.mxu0 0.0
    %3166 = vmatprep.subr.mxu0 0.0
    %3167 = vmatpush1.msra.mxu0 0.0
    %3168 = vmatprep.subr.mxu0 0.0
    %3169 = vmatpush1.msra.mxu0 0.0
    %3170 = vmatprep.subr.mxu0 0.0
    %3171 = vmatpush1.msra.mxu0 0.0
    %3172 = vmatprep.subr.mxu0 0.0
    %3173 = vmatpush1.msra.mxu0 0.0
    %3174 = vmatprep.subr.mxu0 0.0
    %3175 = vmatpush1.msra.mxu0 0.0
    %3176 = vmatprep.mubr.f32.mxu0 0.0
    %v3177 = vand.u32 %v70, 4294901760
    %3178 = vmatmul.mubr.f32.gmra.mrb[0].mxu0 %v3177
    %v3179 = vpop.f32.mrb[0].mxu0
    %v3180 = vadd.f32 %v2948, %v3179
    %v3181 = vpop.f32.mrb[0].mxu0
    %v3182 = vadd.f32 %v2950, %v3181
    %3183 = vdwg.mxu0
    %v3184 = vand.u32 %v78, 4294901760
    %v3185 = vsub.f32 %v78, %v3184
    %3186 = vmatprep.subr.mxu0 %v3185
    %v3187 = vand.u32 %v77, 4294901760
    %v3188 = vsub.f32 %v77, %v3187
    %3189 = vmatpush1.msra.mxu0 %v3188
    %v3190 = vand.u32 %v91, 4294901760
    %v3191 = vsub.f32 %v91, %v3190
    %3192 = vmatprep.subr.mxu0 %v3191
    %v3193 = vand.u32 %v90, 4294901760
    %v3194 = vsub.f32 %v90, %v3193
    %3195 = vmatpush1.msra.mxu0 %v3194
    %v3196 = vand.u32 %v104, 4294901760
    %v3197 = vsub.f32 %v104, %v3196
    %3198 = vmatprep.subr.mxu0 %v3197
    %v3199 = vand.u32 %v103, 4294901760
    %v3200 = vsub.f32 %v103, %v3199
    %3201 = vmatpush1.msra.mxu0 %v3200
    %v3202 = vand.u32 %v117, 4294901760
    %v3203 = vsub.f32 %v117, %v3202
    %3204 = vmatprep.subr.mxu0 %v3203
    %v3205 = vand.u32 %v116, 4294901760
    %v3206 = vsub.f32 %v116, %v3205
    %3207 = vmatpush1.msra.mxu0 %v3206
    %v3208 = vand.u32 %v130, 4294901760
    %v3209 = vsub.f32 %v130, %v3208
    %3210 = vmatprep.subr.mxu0 %v3209
    %v3211 = vand.u32 %v129, 4294901760
    %v3212 = vsub.f32 %v129, %v3211
    %3213 = vmatpush1.msra.mxu0 %v3212
    %v3214 = vand.u32 %v143, 4294901760
    %v3215 = vsub.f32 %v143, %v3214
    %3216 = vmatprep.subr.mxu0 %v3215
    %v3217 = vand.u32 %v142, 4294901760
    %v3218 = vsub.f32 %v142, %v3217
    %3219 = vmatpush1.msra.mxu0 %v3218
    %v3220 = vand.u32 %v156, 4294901760
    %v3221 = vsub.f32 %v156, %v3220
    %3222 = vmatprep.subr.mxu0 %v3221
    %v3223 = vand.u32 %v155, 4294901760
    %v3224 = vsub.f32 %v155, %v3223
    %3225 = vmatpush1.msra.mxu0 %v3224
    %v3226 = vand.u32 %v169, 4294901760
    %v3227 = vsub.f32 %v169, %v3226
    %3228 = vmatprep.subr.mxu0 %v3227
    %v3229 = vand.u32 %v168, 4294901760
    %v3230 = vsub.f32 %v168, %v3229
    %3231 = vmatpush1.msra.mxu0 %v3230
    %v3232 = vand.u32 %v182, 4294901760
    %v3233 = vsub.f32 %v182, %v3232
    %3234 = vmatprep.subr.mxu0 %v3233
    %v3235 = vand.u32 %v181, 4294901760
    %v3236 = vsub.f32 %v181, %v3235
    %3237 = vmatpush1.msra.mxu0 %v3236
    %v3238 = vand.u32 %v195, 4294901760
    %v3239 = vsub.f32 %v195, %v3238
    %3240 = vmatprep.subr.mxu0 %v3239
    %v3241 = vand.u32 %v194, 4294901760
    %v3242 = vsub.f32 %v194, %v3241
    %3243 = vmatpush1.msra.mxu0 %v3242
    %v3244 = vand.u32 %v208, 4294901760
    %v3245 = vsub.f32 %v208, %v3244
    %3246 = vmatprep.subr.mxu0 %v3245
    %v3247 = vand.u32 %v207, 4294901760
    %v3248 = vsub.f32 %v207, %v3247
    %3249 = vmatpush1.msra.mxu0 %v3248
    %v3250 = vand.u32 %v221, 4294901760
    %v3251 = vsub.f32 %v221, %v3250
    %3252 = vmatprep.subr.mxu0 %v3251
    %v3253 = vand.u32 %v220, 4294901760
    %v3254 = vsub.f32 %v220, %v3253
    %3255 = vmatpush1.msra.mxu0 %v3254
    %v3256 = vand.u32 %v234, 4294901760
    %v3257 = vsub.f32 %v234, %v3256
    %3258 = vmatprep.subr.mxu0 %v3257
    %v3259 = vand.u32 %v233, 4294901760
    %v3260 = vsub.f32 %v233, %v3259
    %3261 = vmatpush1.msra.mxu0 %v3260
    %v3262 = vand.u32 %v247, 4294901760
    %v3263 = vsub.f32 %v247, %v3262
    %3264 = vmatprep.subr.mxu0 %v3263
    %v3265 = vand.u32 %v246, 4294901760
    %v3266 = vsub.f32 %v246, %v3265
    %3267 = vmatpush1.msra.mxu0 %v3266
    %v3268 = vand.u32 %v260, 4294901760
    %v3269 = vsub.f32 %v260, %v3268
    %3270 = vmatprep.subr.mxu0 %v3269
    %v3271 = vand.u32 %v259, 4294901760
    %v3272 = vsub.f32 %v259, %v3271
    %3273 = vmatpush1.msra.mxu0 %v3272
    %v3274 = vand.u32 %v273, 4294901760
    %v3275 = vsub.f32 %v273, %v3274
    %3276 = vmatprep.subr.mxu0 %v3275
    %v3277 = vand.u32 %v272, 4294901760
    %v3278 = vsub.f32 %v272, %v3277
    %3279 = vmatpush1.msra.mxu0 %v3278
    %3280 = vmatprep.subr.mxu0 0.0
    %3281 = vmatpush1.msra.mxu0 0.0
    %3282 = vmatprep.subr.mxu0 0.0
    %3283 = vmatpush1.msra.mxu0 0.0
    %3284 = vmatprep.subr.mxu0 0.0
    %3285 = vmatpush1.msra.mxu0 0.0
    %3286 = vmatprep.subr.mxu0 0.0
    %3287 = vmatpush1.msra.mxu0 0.0
    %3288 = vmatprep.subr.mxu0 0.0
    %3289 = vmatpush1.msra.mxu0 0.0
    %3290 = vmatprep.subr.mxu0 0.0
    %3291 = vmatpush1.msra.mxu0 0.0
    %3292 = vmatprep.subr.mxu0 0.0
    %3293 = vmatpush1.msra.mxu0 0.0
    %3294 = vmatprep.subr.mxu0 0.0
    %3295 = vmatpush1.msra.mxu0 0.0
    %3296 = vmatprep.subr.mxu0 0.0
    %3297 = vmatpush1.msra.mxu0 0.0
    %3298 = vmatprep.subr.mxu0 0.0
    %3299 = vmatpush1.msra.mxu0 0.0
    %3300 = vmatprep.subr.mxu0 0.0
    %3301 = vmatpush1.msra.mxu0 0.0
    %3302 = vmatprep.subr.mxu0 0.0
    %3303 = vmatpush1.msra.mxu0 0.0
    %3304 = vmatprep.subr.mxu0 0.0
    %3305 = vmatpush1.msra.mxu0 0.0
    %3306 = vmatprep.subr.mxu0 0.0
    %3307 = vmatpush1.msra.mxu0 0.0
    %3308 = vmatprep.subr.mxu0 0.0
    %3309 = vmatpush1.msra.mxu0 0.0
    %3310 = vmatprep.subr.mxu0 0.0
    %3311 = vmatpush1.msra.mxu0 0.0
    %3312 = vmatprep.mubr.f32.mxu0 0.0
    %v3313 = vand.u32 %v70, 4294901760
    %v3314 = vsub.f32 %v70, %v3313
    %3315 = vmatmul.mubr.f32.gmra.mrb[0].mxu0 %v3314
    %v3316 = vpop.f32.mrb[0].mxu0
    %v3317 = vadd.f32 %v3180, %v3316
    %v3318 = vpop.f32.mrb[0].mxu0
    %v3319 = vadd.f32 %v3182, %v3318
    %3320 = vdwg.mxu0
    %v3321 = vand.u32 %v78, 4294901760
    %3322 = vmatprep.subr.mxu0 %v3321
    %v3323 = vand.u32 %v77, 4294901760
    %3324 = vmatpush1.msra.mxu0 %v3323
    %v3325 = vand.u32 %v91, 4294901760
    %3326 = vmatprep.subr.mxu0 %v3325
    %v3327 = vand.u32 %v90, 4294901760
    %3328 = vmatpush1.msra.mxu0 %v3327
    %v3329 = vand.u32 %v104, 4294901760
    %3330 = vmatprep.subr.mxu0 %v3329
    %v3331 = vand.u32 %v103, 4294901760
    %3332 = vmatpush1.msra.mxu0 %v3331
    %v3333 = vand.u32 %v117, 4294901760
    %3334 = vmatprep.subr.mxu0 %v3333
    %v3335 = vand.u32 %v116, 4294901760
    %3336 = vmatpush1.msra.mxu0 %v3335
    %v3337 = vand.u32 %v130, 4294901760
    %3338 = vmatprep.subr.mxu0 %v3337
    %v3339 = vand.u32 %v129, 4294901760
    %3340 = vmatpush1.msra.mxu0 %v3339
    %v3341 = vand.u32 %v143, 4294901760
    %3342 = vmatprep.subr.mxu0 %v3341
    %v3343 = vand.u32 %v142, 4294901760
    %3344 = vmatpush1.msra.mxu0 %v3343
    %v3345 = vand.u32 %v156, 4294901760
    %3346 = vmatprep.subr.mxu0 %v3345
    %v3347 = vand.u32 %v155, 4294901760
    %3348 = vmatpush1.msra.mxu0 %v3347
    %v3349 = vand.u32 %v169, 4294901760
    %3350 = vmatprep.subr.mxu0 %v3349
    %v3351 = vand.u32 %v168, 4294901760
    %3352 = vmatpush1.msra.mxu0 %v3351
    %v3353 = vand.u32 %v182, 4294901760
    %3354 = vmatprep.subr.mxu0 %v3353
    %v3355 = vand.u32 %v181, 4294901760
    %3356 = vmatpush1.msra.mxu0 %v3355
    %v3357 = vand.u32 %v195, 4294901760
    %3358 = vmatprep.subr.mxu0 %v3357
    %v3359 = vand.u32 %v194, 4294901760
    %3360 = vmatpush1.msra.mxu0 %v3359
    %v3361 = vand.u32 %v208, 4294901760
    %3362 = vmatprep.subr.mxu0 %v3361
    %v3363 = vand.u32 %v207, 4294901760
    %3364 = vmatpush1.msra.mxu0 %v3363
    %v3365 = vand.u32 %v221, 4294901760
    %3366 = vmatprep.subr.mxu0 %v3365
    %v3367 = vand.u32 %v220, 4294901760
    %3368 = vmatpush1.msra.mxu0 %v3367
    %v3369 = vand.u32 %v234, 4294901760
    %3370 = vmatprep.subr.mxu0 %v3369
    %v3371 = vand.u32 %v233, 4294901760
    %3372 = vmatpush1.msra.mxu0 %v3371
    %v3373 = vand.u32 %v247, 4294901760
    %3374 = vmatprep.subr.mxu0 %v3373
    %v3375 = vand.u32 %v246, 4294901760
    %3376 = vmatpush1.msra.mxu0 %v3375
    %v3377 = vand.u32 %v260, 4294901760
    %3378 = vmatprep.subr.mxu0 %v3377
    %v3379 = vand.u32 %v259, 4294901760
    %3380 = vmatpush1.msra.mxu0 %v3379
    %v3381 = vand.u32 %v273, 4294901760
    %3382 = vmatprep.subr.mxu0 %v3381
    %v3383 = vand.u32 %v272, 4294901760
    %3384 = vmatpush1.msra.mxu0 %v3383
    %3385 = vmatprep.subr.mxu0 0.0
    %3386 = vmatpush1.msra.mxu0 0.0
    %3387 = vmatprep.subr.mxu0 0.0
    %3388 = vmatpush1.msra.mxu0 0.0
    %3389 = vmatprep.subr.mxu0 0.0
    %3390 = vmatpush1.msra.mxu0 0.0
    %3391 = vmatprep.subr.mxu0 0.0
    %3392 = vmatpush1.msra.mxu0 0.0
    %3393 = vmatprep.subr.mxu0 0.0
    %3394 = vmatpush1.msra.mxu0 0.0
    %3395 = vmatprep.subr.mxu0 0.0
    %3396 = vmatpush1.msra.mxu0 0.0
    %3397 = vmatprep.subr.mxu0 0.0
    %3398 = vmatpush1.msra.mxu0 0.0
    %3399 = vmatprep.subr.mxu0 0.0
    %3400 = vmatpush1.msra.mxu0 0.0
    %3401 = vmatprep.subr.mxu0 0.0
    %3402 = vmatpush1.msra.mxu0 0.0
    %3403 = vmatprep.subr.mxu0 0.0
    %3404 = vmatpush1.msra.mxu0 0.0
    %3405 = vmatprep.subr.mxu0 0.0
    %3406 = vmatpush1.msra.mxu0 0.0
    %3407 = vmatprep.subr.mxu0 0.0
    %3408 = vmatpush1.msra.mxu0 0.0
    %3409 = vmatprep.subr.mxu0 0.0
    %3410 = vmatpush1.msra.mxu0 0.0
    %3411 = vmatprep.subr.mxu0 0.0
    %3412 = vmatpush1.msra.mxu0 0.0
    %3413 = vmatprep.subr.mxu0 0.0
    %3414 = vmatpush1.msra.mxu0 0.0
    %3415 = vmatprep.subr.mxu0 0.0
    %3416 = vmatpush1.msra.mxu0 0.0
    %3417 = vmatprep.mubr.f32.mxu0 0.0
    %v3418 = vand.u32 %v70, 4294901760
    %v3419 = vsub.f32 %v70, %v3418
    %v3420 = vand.u32 %v3419, 4294901760
    %3421 = vmatmul.mubr.f32.gmra.mrb[0].mxu0 %v3420
    %v3422 = vpop.f32.mrb[0].mxu0
    %v3423 = vadd.f32 %v3317, %v3422
    %v3424 = vpop.f32.mrb[0].mxu0
    %v3425 = vadd.f32 %v3319, %v3424
    %3426 = vdwg.mxu0
    %v3427 = vand.u32 %v78, 4294901760
    %v3428 = vsub.f32 %v78, %v3427
    %v3429 = vand.u32 %v3428, 4294901760
    %3430 = vmatprep.subr.mxu0 %v3429
    %v3431 = vand.u32 %v77, 4294901760
    %v3432 = vsub.f32 %v77, %v3431
    %v3433 = vand.u32 %v3432, 4294901760
    %3434 = vmatpush1.msra.mxu0 %v3433
    %v3435 = vand.u32 %v91, 4294901760
    %v3436 = vsub.f32 %v91, %v3435
    %v3437 = vand.u32 %v3436, 4294901760
    %3438 = vmatprep.subr.mxu0 %v3437
    %v3439 = vand.u32 %v90, 4294901760
    %v3440 = vsub.f32 %v90, %v3439
    %v3441 = vand.u32 %v3440, 4294901760
    %3442 = vmatpush1.msra.mxu0 %v3441
    %v3443 = vand.u32 %v104, 4294901760
    %v3444 = vsub.f32 %v104, %v3443
    %v3445 = vand.u32 %v3444, 4294901760
    %3446 = vmatprep.subr.mxu0 %v3445
    %v3447 = vand.u32 %v103, 4294901760
    %v3448 = vsub.f32 %v103, %v3447
    %v3449 = vand.u32 %v3448, 4294901760
    %3450 = vmatpush1.msra.mxu0 %v3449
    %v3451 = vand.u32 %v117, 4294901760
    %v3452 = vsub.f32 %v117, %v3451
    %v3453 = vand.u32 %v3452, 4294901760
    %3454 = vmatprep.subr.mxu0 %v3453
    %v3455 = vand.u32 %v116, 4294901760
    %v3456 = vsub.f32 %v116, %v3455
    %v3457 = vand.u32 %v3456, 4294901760
    %3458 = vmatpush1.msra.mxu0 %v3457
    %v3459 = vand.u32 %v130, 4294901760
    %v3460 = vsub.f32 %v130, %v3459
    %v3461 = vand.u32 %v3460, 4294901760
    %3462 = vmatprep.subr.mxu0 %v3461
    %v3463 = vand.u32 %v129, 4294901760
    %v3464 = vsub.f32 %v129, %v3463
    %v3465 = vand.u32 %v3464, 4294901760
    %3466 = vmatpush1.msra.mxu0 %v3465
    %v3467 = vand.u32 %v143, 4294901760
    %v3468 = vsub.f32 %v143, %v3467
    %v3469 = vand.u32 %v3468, 4294901760
    %3470 = vmatprep.subr.mxu0 %v3469
    %v3471 = vand.u32 %v142, 4294901760
    %v3472 = vsub.f32 %v142, %v3471
    %v3473 = vand.u32 %v3472, 4294901760
    %3474 = vmatpush1.msra.mxu0 %v3473
    %v3475 = vand.u32 %v156, 4294901760
    %v3476 = vsub.f32 %v156, %v3475
    %v3477 = vand.u32 %v3476, 4294901760
    %3478 = vmatprep.subr.mxu0 %v3477
    %v3479 = vand.u32 %v155, 4294901760
    %v3480 = vsub.f32 %v155, %v3479
    %v3481 = vand.u32 %v3480, 4294901760
    %3482 = vmatpush1.msra.mxu0 %v3481
    %v3483 = vand.u32 %v169, 4294901760
    %v3484 = vsub.f32 %v169, %v3483
    %v3485 = vand.u32 %v3484, 4294901760
    %3486 = vmatprep.subr.mxu0 %v3485
    %v3487 = vand.u32 %v168, 4294901760
    %v3488 = vsub.f32 %v168, %v3487
    %v3489 = vand.u32 %v3488, 4294901760
    %3490 = vmatpush1.msra.mxu0 %v3489
    %v3491 = vand.u32 %v182, 4294901760
    %v3492 = vsub.f32 %v182, %v3491
    %v3493 = vand.u32 %v3492, 4294901760
    %3494 = vmatprep.subr.mxu0 %v3493
    %v3495 = vand.u32 %v181, 4294901760
    %v3496 = vsub.f32 %v181, %v3495
    %v3497 = vand.u32 %v3496, 4294901760
    %3498 = vmatpush1.msra.mxu0 %v3497
    %v3499 = vand.u32 %v195, 4294901760
    %v3500 = vsub.f32 %v195, %v3499
    %v3501 = vand.u32 %v3500, 4294901760
    %3502 = vmatprep.subr.mxu0 %v3501
    %v3503 = vand.u32 %v194, 4294901760
    %v3504 = vsub.f32 %v194, %v3503
    %v3505 = vand.u32 %v3504, 4294901760
    %3506 = vmatpush1.msra.mxu0 %v3505
    %v3507 = vand.u32 %v208, 4294901760
    %v3508 = vsub.f32 %v208, %v3507
    %v3509 = vand.u32 %v3508, 4294901760
    %3510 = vmatprep.subr.mxu0 %v3509
    %v3511 = vand.u32 %v207, 4294901760
    %v3512 = vsub.f32 %v207, %v3511
    %v3513 = vand.u32 %v3512, 4294901760
    %3514 = vmatpush1.msra.mxu0 %v3513
    %v3515 = vand.u32 %v221, 4294901760
    %v3516 = vsub.f32 %v221, %v3515
    %v3517 = vand.u32 %v3516, 4294901760
    %3518 = vmatprep.subr.mxu0 %v3517
    %v3519 = vand.u32 %v220, 4294901760
    %v3520 = vsub.f32 %v220, %v3519
    %v3521 = vand.u32 %v3520, 4294901760
    %3522 = vmatpush1.msra.mxu0 %v3521
    %v3523 = vand.u32 %v234, 4294901760
    %v3524 = vsub.f32 %v234, %v3523
    %v3525 = vand.u32 %v3524, 4294901760
    %3526 = vmatprep.subr.mxu0 %v3525
    %v3527 = vand.u32 %v233, 4294901760
    %v3528 = vsub.f32 %v233, %v3527
    %v3529 = vand.u32 %v3528, 4294901760
    %3530 = vmatpush1.msra.mxu0 %v3529
    %v3531 = vand.u32 %v247, 4294901760
    %v3532 = vsub.f32 %v247, %v3531
    %v3533 = vand.u32 %v3532, 4294901760
    %3534 = vmatprep.subr.mxu0 %v3533
    %v3535 = vand.u32 %v246, 4294901760
    %v3536 = vsub.f32 %v246, %v3535
    %v3537 = vand.u32 %v3536, 4294901760
    %3538 = vmatpush1.msra.mxu0 %v3537
    %v3539 = vand.u32 %v260, 4294901760
    %v3540 = vsub.f32 %v260, %v3539
    %v3541 = vand.u32 %v3540, 4294901760
    %3542 = vmatprep.subr.mxu0 %v3541
    %v3543 = vand.u32 %v259, 4294901760
    %v3544 = vsub.f32 %v259, %v3543
    %v3545 = vand.u32 %v3544, 4294901760
    %3546 = vmatpush1.msra.mxu0 %v3545
    %v3547 = vand.u32 %v273, 4294901760
    %v3548 = vsub.f32 %v273, %v3547
    %v3549 = vand.u32 %v3548, 4294901760
    %3550 = vmatprep.subr.mxu0 %v3549
    %v3551 = vand.u32 %v272, 4294901760
    %v3552 = vsub.f32 %v272, %v3551
    %v3553 = vand.u32 %v3552, 4294901760
    %3554 = vmatpush1.msra.mxu0 %v3553
    %3555 = vmatprep.subr.mxu0 0.0
    %3556 = vmatpush1.msra.mxu0 0.0
    %3557 = vmatprep.subr.mxu0 0.0
    %3558 = vmatpush1.msra.mxu0 0.0
    %3559 = vmatprep.subr.mxu0 0.0
    %3560 = vmatpush1.msra.mxu0 0.0
    %3561 = vmatprep.subr.mxu0 0.0
    %3562 = vmatpush1.msra.mxu0 0.0
    %3563 = vmatprep.subr.mxu0 0.0
    %3564 = vmatpush1.msra.mxu0 0.0
    %3565 = vmatprep.subr.mxu0 0.0
    %3566 = vmatpush1.msra.mxu0 0.0
    %3567 = vmatprep.subr.mxu0 0.0
    %3568 = vmatpush1.msra.mxu0 0.0
    %3569 = vmatprep.subr.mxu0 0.0
    %3570 = vmatpush1.msra.mxu0 0.0
    %3571 = vmatprep.subr.mxu0 0.0
    %3572 = vmatpush1.msra.mxu0 0.0
    %3573 = vmatprep.subr.mxu0 0.0
    %3574 = vmatpush1.msra.mxu0 0.0
    %3575 = vmatprep.subr.mxu0 0.0
    %3576 = vmatpush1.msra.mxu0 0.0
    %3577 = vmatprep.subr.mxu0 0.0
    %3578 = vmatpush1.msra.mxu0 0.0
    %3579 = vmatprep.subr.mxu0 0.0
    %3580 = vmatpush1.msra.mxu0 0.0
    %3581 = vmatprep.subr.mxu0 0.0
    %3582 = vmatpush1.msra.mxu0 0.0
    %3583 = vmatprep.subr.mxu0 0.0
    %3584 = vmatpush1.msra.mxu0 0.0
    %3585 = vmatprep.subr.mxu0 0.0
    %3586 = vmatpush1.msra.mxu0 0.0
    %3587 = vmatprep.mubr.f32.mxu0 0.0
    %v3588 = vand.u32 %v70, 4294901760
    %3589 = vmatmul.mubr.f32.gmra.mrb[0].mxu0 %v3588
    %v3590 = vpop.f32.mrb[0].mxu0
    %v3591 = vadd.f32 %v3423, %v3590
    %v3592 = vpop.f32.mrb[0].mxu0
    %v3593 = vadd.f32 %v3425, %v3592
    %3594 = vdwg.mxu0
    %v3595 = vand.u32 %v78, 4294901760
    %3596 = vmatprep.subr.mxu0 %v3595
    %v3597 = vand.u32 %v77, 4294901760
    %3598 = vmatpush1.msra.mxu0 %v3597
    %v3599 = vand.u32 %v91, 4294901760
    %3600 = vmatprep.subr.mxu0 %v3599
    %v3601 = vand.u32 %v90, 4294901760
    %3602 = vmatpush1.msra.mxu0 %v3601
    %v3603 = vand.u32 %v104, 4294901760
    %3604 = vmatprep.subr.mxu0 %v3603
    %v3605 = vand.u32 %v103, 4294901760
    %3606 = vmatpush1.msra.mxu0 %v3605
    %v3607 = vand.u32 %v117, 4294901760
    %3608 = vmatprep.subr.mxu0 %v3607
    %v3609 = vand.u32 %v116, 4294901760
    %3610 = vmatpush1.msra.mxu0 %v3609
    %v3611 = vand.u32 %v130, 4294901760
    %3612 = vmatprep.subr.mxu0 %v3611
    %v3613 = vand.u32 %v129, 4294901760
    %3614 = vmatpush1.msra.mxu0 %v3613
    %v3615 = vand.u32 %v143, 4294901760
    %3616 = vmatprep.subr.mxu0 %v3615
    %v3617 = vand.u32 %v142, 4294901760
    %3618 = vmatpush1.msra.mxu0 %v3617
    %v3619 = vand.u32 %v156, 4294901760
    %3620 = vmatprep.subr.mxu0 %v3619
    %v3621 = vand.u32 %v155, 4294901760
    %3622 = vmatpush1.msra.mxu0 %v3621
    %v3623 = vand.u32 %v169, 4294901760
    %3624 = vmatprep.subr.mxu0 %v3623
    %v3625 = vand.u32 %v168, 4294901760
    %3626 = vmatpush1.msra.mxu0 %v3625
    %v3627 = vand.u32 %v182, 4294901760
    %3628 = vmatprep.subr.mxu0 %v3627
    %v3629 = vand.u32 %v181, 4294901760
    %3630 = vmatpush1.msra.mxu0 %v3629
    %v3631 = vand.u32 %v195, 4294901760
    %3632 = vmatprep.subr.mxu0 %v3631
    %v3633 = vand.u32 %v194, 4294901760
    %3634 = vmatpush1.msra.mxu0 %v3633
    %v3635 = vand.u32 %v208, 4294901760
    %3636 = vmatprep.subr.mxu0 %v3635
    %v3637 = vand.u32 %v207, 4294901760
    %3638 = vmatpush1.msra.mxu0 %v3637
    %v3639 = vand.u32 %v221, 4294901760
    %3640 = vmatprep.subr.mxu0 %v3639
    %v3641 = vand.u32 %v220, 4294901760
    %3642 = vmatpush1.msra.mxu0 %v3641
    %v3643 = vand.u32 %v234, 4294901760
    %3644 = vmatprep.subr.mxu0 %v3643
    %v3645 = vand.u32 %v233, 4294901760
    %3646 = vmatpush1.msra.mxu0 %v3645
    %v3647 = vand.u32 %v247, 4294901760
    %3648 = vmatprep.subr.mxu0 %v3647
    %v3649 = vand.u32 %v246, 4294901760
    %3650 = vmatpush1.msra.mxu0 %v3649
    %v3651 = vand.u32 %v260, 4294901760
    %3652 = vmatprep.subr.mxu0 %v3651
    %v3653 = vand.u32 %v259, 4294901760
    %3654 = vmatpush1.msra.mxu0 %v3653
    %v3655 = vand.u32 %v273, 4294901760
    %3656 = vmatprep.subr.mxu0 %v3655
    %v3657 = vand.u32 %v272, 4294901760
    %3658 = vmatpush1.msra.mxu0 %v3657
    %3659 = vmatprep.subr.mxu0 0.0
    %3660 = vmatpush1.msra.mxu0 0.0
    %3661 = vmatprep.subr.mxu0 0.0
    %3662 = vmatpush1.msra.mxu0 0.0
    %3663 = vmatprep.subr.mxu0 0.0
    %3664 = vmatpush1.msra.mxu0 0.0
    %3665 = vmatprep.subr.mxu0 0.0
    %3666 = vmatpush1.msra.mxu0 0.0
    %3667 = vmatprep.subr.mxu0 0.0
    %3668 = vmatpush1.msra.mxu0 0.0
    %3669 = vmatprep.subr.mxu0 0.0
    %3670 = vmatpush1.msra.mxu0 0.0
    %3671 = vmatprep.subr.mxu0 0.0
    %3672 = vmatpush1.msra.mxu0 0.0
    %3673 = vmatprep.subr.mxu0 0.0
    %3674 = vmatpush1.msra.mxu0 0.0
    %3675 = vmatprep.subr.mxu0 0.0
    %3676 = vmatpush1.msra.mxu0 0.0
    %3677 = vmatprep.subr.mxu0 0.0
    %3678 = vmatpush1.msra.mxu0 0.0
    %3679 = vmatprep.subr.mxu0 0.0
    %3680 = vmatpush1.msra.mxu0 0.0
    %3681 = vmatprep.subr.mxu0 0.0
    %3682 = vmatpush1.msra.mxu0 0.0
    %3683 = vmatprep.subr.mxu0 0.0
    %3684 = vmatpush1.msra.mxu0 0.0
    %3685 = vmatprep.subr.mxu0 0.0
    %3686 = vmatpush1.msra.mxu0 0.0
    %3687 = vmatprep.subr.mxu0 0.0
    %3688 = vmatpush1.msra.mxu0 0.0
    %3689 = vmatprep.subr.mxu0 0.0
    %3690 = vmatpush1.msra.mxu0 0.0
    %3691 = vmatprep.mubr.f32.mxu0 0.0
    %v3692 = vand.u32 %v70, 4294901760
    %3693 = vmatmul.mubr.f32.gmra.mrb[0].mxu0 %v3692
    %v3694 = vpop.f32.mrb[0].mxu0
    %v3695 = vadd.f32 %v3591, %v3694
    %v3696 = vpop.f32.mrb[0].mxu0
    %v3697 = vadd.f32 %v3593, %v3696
    %3698 = vdwg.mxu0
    %v3699 = vand.u32 %v80, 4294901760
    %3700 = vmatprep.subr.mxu0 %v3699
    %v3701 = vand.u32 %v79, 4294901760
    %3702 = vmatpush1.msra.mxu0 %v3701
    %v3703 = vand.u32 %v93, 4294901760
    %3704 = vmatprep.subr.mxu0 %v3703
    %v3705 = vand.u32 %v92, 4294901760
    %3706 = vmatpush1.msra.mxu0 %v3705
    %v3707 = vand.u32 %v106, 4294901760
    %3708 = vmatprep.subr.mxu0 %v3707
    %v3709 = vand.u32 %v105, 4294901760
    %3710 = vmatpush1.msra.mxu0 %v3709
    %v3711 = vand.u32 %v119, 4294901760
    %3712 = vmatprep.subr.mxu0 %v3711
    %v3713 = vand.u32 %v118, 4294901760
    %3714 = vmatpush1.msra.mxu0 %v3713
    %v3715 = vand.u32 %v132, 4294901760
    %3716 = vmatprep.subr.mxu0 %v3715
    %v3717 = vand.u32 %v131, 4294901760
    %3718 = vmatpush1.msra.mxu0 %v3717
    %v3719 = vand.u32 %v145, 4294901760
    %3720 = vmatprep.subr.mxu0 %v3719
    %v3721 = vand.u32 %v144, 4294901760
    %3722 = vmatpush1.msra.mxu0 %v3721
    %v3723 = vand.u32 %v158, 4294901760
    %3724 = vmatprep.subr.mxu0 %v3723
    %v3725 = vand.u32 %v157, 4294901760
    %3726 = vmatpush1.msra.mxu0 %v3725
    %v3727 = vand.u32 %v171, 4294901760
    %3728 = vmatprep.subr.mxu0 %v3727
    %v3729 = vand.u32 %v170, 4294901760
    %3730 = vmatpush1.msra.mxu0 %v3729
    %v3731 = vand.u32 %v184, 4294901760
    %3732 = vmatprep.subr.mxu0 %v3731
    %v3733 = vand.u32 %v183, 4294901760
    %3734 = vmatpush1.msra.mxu0 %v3733
    %v3735 = vand.u32 %v197, 4294901760
    %3736 = vmatprep.subr.mxu0 %v3735
    %v3737 = vand.u32 %v196, 4294901760
    %3738 = vmatpush1.msra.mxu0 %v3737
    %v3739 = vand.u32 %v210, 4294901760
    %3740 = vmatprep.subr.mxu0 %v3739
    %v3741 = vand.u32 %v209, 4294901760
    %3742 = vmatpush1.msra.mxu0 %v3741
    %v3743 = vand.u32 %v223, 4294901760
    %3744 = vmatprep.subr.mxu0 %v3743
    %v3745 = vand.u32 %v222, 4294901760
    %3746 = vmatpush1.msra.mxu0 %v3745
    %v3747 = vand.u32 %v236, 4294901760
    %3748 = vmatprep.subr.mxu0 %v3747
    %v3749 = vand.u32 %v235, 4294901760
    %3750 = vmatpush1.msra.mxu0 %v3749
    %v3751 = vand.u32 %v249, 4294901760
    %3752 = vmatprep.subr.mxu0 %v3751
    %v3753 = vand.u32 %v248, 4294901760
    %3754 = vmatpush1.msra.mxu0 %v3753
    %v3755 = vand.u32 %v262, 4294901760
    %3756 = vmatprep.subr.mxu0 %v3755
    %v3757 = vand.u32 %v261, 4294901760
    %3758 = vmatpush1.msra.mxu0 %v3757
    %v3759 = vand.u32 %v275, 4294901760
    %3760 = vmatprep.subr.mxu0 %v3759
    %v3761 = vand.u32 %v274, 4294901760
    %3762 = vmatpush1.msra.mxu0 %v3761
    %3763 = vmatprep.subr.mxu0 0.0
    %3764 = vmatpush1.msra.mxu0 0.0
    %3765 = vmatprep.subr.mxu0 0.0
    %3766 = vmatpush1.msra.mxu0 0.0
    %3767 = vmatprep.subr.mxu0 0.0
    %3768 = vmatpush1.msra.mxu0 0.0
    %3769 = vmatprep.subr.mxu0 0.0
    %3770 = vmatpush1.msra.mxu0 0.0
    %3771 = vmatprep.subr.mxu0 0.0
    %3772 = vmatpush1.msra.mxu0 0.0
    %3773 = vmatprep.subr.mxu0 0.0
    %3774 = vmatpush1.msra.mxu0 0.0
    %3775 = vmatprep.subr.mxu0 0.0
    %3776 = vmatpush1.msra.mxu0 0.0
    %3777 = vmatprep.subr.mxu0 0.0
    %3778 = vmatpush1.msra.mxu0 0.0
    %3779 = vmatprep.subr.mxu0 0.0
    %3780 = vmatpush1.msra.mxu0 0.0
    %3781 = vmatprep.subr.mxu0 0.0
    %3782 = vmatpush1.msra.mxu0 0.0
    %3783 = vmatprep.subr.mxu0 0.0
    %3784 = vmatpush1.msra.mxu0 0.0
    %3785 = vmatprep.subr.mxu0 0.0
    %3786 = vmatpush1.msra.mxu0 0.0
    %3787 = vmatprep.subr.mxu0 0.0
    %3788 = vmatpush1.msra.mxu0 0.0
    %3789 = vmatprep.subr.mxu0 0.0
    %3790 = vmatpush1.msra.mxu0 0.0
    %3791 = vmatprep.subr.mxu0 0.0
    %3792 = vmatpush1.msra.mxu0 0.0
    %3793 = vmatprep.subr.mxu0 0.0
    %3794 = vmatpush1.msra.mxu0 0.0
    %3795 = vmatprep.mubr.f32.mxu0 0.0
    %v3796 = vand.u32 %v70, 4294901760
    %v3797 = vsub.f32 %v70, %v3796
    %v3798 = vand.u32 %v3797, 4294901760
    %v3799 = vsub.f32 %v3797, %v3798
    %v3800 = vand.u32 %v3799, 4294901760
    %3801 = vmatmul.mubr.f32.gmra.mrb[0].mxu0 %v3800
    %v3802 = vpop.f32.mrb[0].mxu0
    %v3803 = vadd.f32 0.0, %v3802
    %v3804 = vpop.f32.mrb[0].mxu0
    %v3805 = vadd.f32 0.0, %v3804
    %3806 = vdwg.mxu0
    %v3807 = vand.u32 %v80, 4294901760
    %v3808 = vsub.f32 %v80, %v3807
    %v3809 = vand.u32 %v3808, 4294901760
    %v3810 = vsub.f32 %v3808, %v3809
    %v3811 = vand.u32 %v3810, 4294901760
    %3812 = vmatprep.subr.mxu0 %v3811
    %v3813 = vand.u32 %v79, 4294901760
    %v3814 = vsub.f32 %v79, %v3813
    %v3815 = vand.u32 %v3814, 4294901760
    %v3816 = vsub.f32 %v3814, %v3815
    %v3817 = vand.u32 %v3816, 4294901760
    %3818 = vmatpush1.msra.mxu0 %v3817
    %v3819 = vand.u32 %v93, 4294901760
    %v3820 = vsub.f32 %v93, %v3819
    %v3821 = vand.u32 %v3820, 4294901760
    %v3822 = vsub.f32 %v3820, %v3821
    %v3823 = vand.u32 %v3822, 4294901760
    %3824 = vmatprep.subr.mxu0 %v3823
    %v3825 = vand.u32 %v92, 4294901760
    %v3826 = vsub.f32 %v92, %v3825
    %v3827 = vand.u32 %v3826, 4294901760
    %v3828 = vsub.f32 %v3826, %v3827
    %v3829 = vand.u32 %v3828, 4294901760
    %3830 = vmatpush1.msra.mxu0 %v3829
    %v3831 = vand.u32 %v106, 4294901760
    %v3832 = vsub.f32 %v106, %v3831
    %v3833 = vand.u32 %v3832, 4294901760
    %v3834 = vsub.f32 %v3832, %v3833
    %v3835 = vand.u32 %v3834, 4294901760
    %3836 = vmatprep.subr.mxu0 %v3835
    %v3837 = vand.u32 %v105, 4294901760
    %v3838 = vsub.f32 %v105, %v3837
    %v3839 = vand.u32 %v3838, 4294901760
    %v3840 = vsub.f32 %v3838, %v3839
    %v3841 = vand.u32 %v3840, 4294901760
    %3842 = vmatpush1.msra.mxu0 %v3841
    %v3843 = vand.u32 %v119, 4294901760
    %v3844 = vsub.f32 %v119, %v3843
    %v3845 = vand.u32 %v3844, 4294901760
    %v3846 = vsub.f32 %v3844, %v3845
    %v3847 = vand.u32 %v3846, 4294901760
    %3848 = vmatprep.subr.mxu0 %v3847
    %v3849 = vand.u32 %v118, 4294901760
    %v3850 = vsub.f32 %v118, %v3849
    %v3851 = vand.u32 %v3850, 4294901760
    %v3852 = vsub.f32 %v3850, %v3851
    %v3853 = vand.u32 %v3852, 4294901760
    %3854 = vmatpush1.msra.mxu0 %v3853
    %v3855 = vand.u32 %v132, 4294901760
    %v3856 = vsub.f32 %v132, %v3855
    %v3857 = vand.u32 %v3856, 4294901760
    %v3858 = vsub.f32 %v3856, %v3857
    %v3859 = vand.u32 %v3858, 4294901760
    %3860 = vmatprep.subr.mxu0 %v3859
    %v3861 = vand.u32 %v131, 4294901760
    %v3862 = vsub.f32 %v131, %v3861
    %v3863 = vand.u32 %v3862, 4294901760
    %v3864 = vsub.f32 %v3862, %v3863
    %v3865 = vand.u32 %v3864, 4294901760
    %3866 = vmatpush1.msra.mxu0 %v3865
    %v3867 = vand.u32 %v145, 4294901760
    %v3868 = vsub.f32 %v145, %v3867
    %v3869 = vand.u32 %v3868, 4294901760
    %v3870 = vsub.f32 %v3868, %v3869
    %v3871 = vand.u32 %v3870, 4294901760
    %3872 = vmatprep.subr.mxu0 %v3871
    %v3873 = vand.u32 %v144, 4294901760
    %v3874 = vsub.f32 %v144, %v3873
    %v3875 = vand.u32 %v3874, 4294901760
    %v3876 = vsub.f32 %v3874, %v3875
    %v3877 = vand.u32 %v3876, 4294901760
    %3878 = vmatpush1.msra.mxu0 %v3877
    %v3879 = vand.u32 %v158, 4294901760
    %v3880 = vsub.f32 %v158, %v3879
    %v3881 = vand.u32 %v3880, 4294901760
    %v3882 = vsub.f32 %v3880, %v3881
    %v3883 = vand.u32 %v3882, 4294901760
    %3884 = vmatprep.subr.mxu0 %v3883
    %v3885 = vand.u32 %v157, 4294901760
    %v3886 = vsub.f32 %v157, %v3885
    %v3887 = vand.u32 %v3886, 4294901760
    %v3888 = vsub.f32 %v3886, %v3887
    %v3889 = vand.u32 %v3888, 4294901760
    %3890 = vmatpush1.msra.mxu0 %v3889
    %v3891 = vand.u32 %v171, 4294901760
    %v3892 = vsub.f32 %v171, %v3891
    %v3893 = vand.u32 %v3892, 4294901760
    %v3894 = vsub.f32 %v3892, %v3893
    %v3895 = vand.u32 %v3894, 4294901760
    %3896 = vmatprep.subr.mxu0 %v3895
    %v3897 = vand.u32 %v170, 4294901760
    %v3898 = vsub.f32 %v170, %v3897
    %v3899 = vand.u32 %v3898, 4294901760
    %v3900 = vsub.f32 %v3898, %v3899
    %v3901 = vand.u32 %v3900, 4294901760
    %3902 = vmatpush1.msra.mxu0 %v3901
    %v3903 = vand.u32 %v184, 4294901760
    %v3904 = vsub.f32 %v184, %v3903
    %v3905 = vand.u32 %v3904, 4294901760
    %v3906 = vsub.f32 %v3904, %v3905
    %v3907 = vand.u32 %v3906, 4294901760
    %3908 = vmatprep.subr.mxu0 %v3907
    %v3909 = vand.u32 %v183, 4294901760
    %v3910 = vsub.f32 %v183, %v3909
    %v3911 = vand.u32 %v3910, 4294901760
    %v3912 = vsub.f32 %v3910, %v3911
    %v3913 = vand.u32 %v3912, 4294901760
    %3914 = vmatpush1.msra.mxu0 %v3913
    %v3915 = vand.u32 %v197, 4294901760
    %v3916 = vsub.f32 %v197, %v3915
    %v3917 = vand.u32 %v3916, 4294901760
    %v3918 = vsub.f32 %v3916, %v3917
    %v3919 = vand.u32 %v3918, 4294901760
    %3920 = vmatprep.subr.mxu0 %v3919
    %v3921 = vand.u32 %v196, 4294901760
    %v3922 = vsub.f32 %v196, %v3921
    %v3923 = vand.u32 %v3922, 4294901760
    %v3924 = vsub.f32 %v3922, %v3923
    %v3925 = vand.u32 %v3924, 4294901760
    %3926 = vmatpush1.msra.mxu0 %v3925
    %v3927 = vand.u32 %v210, 4294901760
    %v3928 = vsub.f32 %v210, %v3927
    %v3929 = vand.u32 %v3928, 4294901760
    %v3930 = vsub.f32 %v3928, %v3929
    %v3931 = vand.u32 %v3930, 4294901760
    %3932 = vmatprep.subr.mxu0 %v3931
    %v3933 = vand.u32 %v209, 4294901760
    %v3934 = vsub.f32 %v209, %v3933
    %v3935 = vand.u32 %v3934, 4294901760
    %v3936 = vsub.f32 %v3934, %v3935
    %v3937 = vand.u32 %v3936, 4294901760
    %3938 = vmatpush1.msra.mxu0 %v3937
    %v3939 = vand.u32 %v223, 4294901760
    %v3940 = vsub.f32 %v223, %v3939
    %v3941 = vand.u32 %v3940, 4294901760
    %v3942 = vsub.f32 %v3940, %v3941
    %v3943 = vand.u32 %v3942, 4294901760
    %3944 = vmatprep.subr.mxu0 %v3943
    %v3945 = vand.u32 %v222, 4294901760
    %v3946 = vsub.f32 %v222, %v3945
    %v3947 = vand.u32 %v3946, 4294901760
    %v3948 = vsub.f32 %v3946, %v3947
    %v3949 = vand.u32 %v3948, 4294901760
    %3950 = vmatpush1.msra.mxu0 %v3949
    %v3951 = vand.u32 %v236, 4294901760
    %v3952 = vsub.f32 %v236, %v3951
    %v3953 = vand.u32 %v3952, 4294901760
    %v3954 = vsub.f32 %v3952, %v3953
    %v3955 = vand.u32 %v3954, 4294901760
    %3956 = vmatprep.subr.mxu0 %v3955
    %v3957 = vand.u32 %v235, 4294901760
    %v3958 = vsub.f32 %v235, %v3957
    %v3959 = vand.u32 %v3958, 4294901760
    %v3960 = vsub.f32 %v3958, %v3959
    %v3961 = vand.u32 %v3960, 4294901760
    %3962 = vmatpush1.msra.mxu0 %v3961
    %v3963 = vand.u32 %v249, 4294901760
    %v3964 = vsub.f32 %v249, %v3963
    %v3965 = vand.u32 %v3964, 4294901760
    %v3966 = vsub.f32 %v3964, %v3965
    %v3967 = vand.u32 %v3966, 4294901760
    %3968 = vmatprep.subr.mxu0 %v3967
    %v3969 = vand.u32 %v248, 4294901760
    %v3970 = vsub.f32 %v248, %v3969
    %v3971 = vand.u32 %v3970, 4294901760
    %v3972 = vsub.f32 %v3970, %v3971
    %v3973 = vand.u32 %v3972, 4294901760
    %3974 = vmatpush1.msra.mxu0 %v3973
    %v3975 = vand.u32 %v262, 4294901760
    %v3976 = vsub.f32 %v262, %v3975
    %v3977 = vand.u32 %v3976, 4294901760
    %v3978 = vsub.f32 %v3976, %v3977
    %v3979 = vand.u32 %v3978, 4294901760
    %3980 = vmatprep.subr.mxu0 %v3979
    %v3981 = vand.u32 %v261, 4294901760
    %v3982 = vsub.f32 %v261, %v3981
    %v3983 = vand.u32 %v3982, 4294901760
    %v3984 = vsub.f32 %v3982, %v3983
    %v3985 = vand.u32 %v3984, 4294901760
    %3986 = vmatpush1.msra.mxu0 %v3985
    %v3987 = vand.u32 %v275, 4294901760
    %v3988 = vsub.f32 %v275, %v3987
    %v3989 = vand.u32 %v3988, 4294901760
    %v3990 = vsub.f32 %v3988, %v3989
    %v3991 = vand.u32 %v3990, 4294901760
    %3992 = vmatprep.subr.mxu0 %v3991
    %v3993 = vand.u32 %v274, 4294901760
    %v3994 = vsub.f32 %v274, %v3993
    %v3995 = vand.u32 %v3994, 4294901760
    %v3996 = vsub.f32 %v3994, %v3995
    %v3997 = vand.u32 %v3996, 4294901760
    %3998 = vmatpush1.msra.mxu0 %v3997
    %3999 = vmatprep.subr.mxu0 0.0
    %4000 = vmatpush1.msra.mxu0 0.0
    %4001 = vmatprep.subr.mxu0 0.0
    %4002 = vmatpush1.msra.mxu0 0.0
    %4003 = vmatprep.subr.mxu0 0.0
    %4004 = vmatpush1.msra.mxu0 0.0
    %4005 = vmatprep.subr.mxu0 0.0
    %4006 = vmatpush1.msra.mxu0 0.0
    %4007 = vmatprep.subr.mxu0 0.0
    %4008 = vmatpush1.msra.mxu0 0.0
    %4009 = vmatprep.subr.mxu0 0.0
    %4010 = vmatpush1.msra.mxu0 0.0
    %4011 = vmatprep.subr.mxu0 0.0
    %4012 = vmatpush1.msra.mxu0 0.0
    %4013 = vmatprep.subr.mxu0 0.0
    %4014 = vmatpush1.msra.mxu0 0.0
    %4015 = vmatprep.subr.mxu0 0.0
    %4016 = vmatpush1.msra.mxu0 0.0
    %4017 = vmatprep.subr.mxu0 0.0
    %4018 = vmatpush1.msra.mxu0 0.0
    %4019 = vmatprep.subr.mxu0 0.0
    %4020 = vmatpush1.msra.mxu0 0.0
    %4021 = vmatprep.subr.mxu0 0.0
    %4022 = vmatpush1.msra.mxu0 0.0
    %4023 = vmatprep.subr.mxu0 0.0
    %4024 = vmatpush1.msra.mxu0 0.0
    %4025 = vmatprep.subr.mxu0 0.0
    %4026 = vmatpush1.msra.mxu0 0.0
    %4027 = vmatprep.subr.mxu0 0.0
    %4028 = vmatpush1.msra.mxu0 0.0
    %4029 = vmatprep.subr.mxu0 0.0
    %4030 = vmatpush1.msra.mxu0 0.0
    %4031 = vmatprep.mubr.f32.mxu0 0.0
    %v4032 = vand.u32 %v70, 4294901760
    %4033 = vmatmul.mubr.f32.gmra.mrb[0].mxu0 %v4032
    %v4034 = vpop.f32.mrb[0].mxu0
    %v4035 = vadd.f32 %v3803, %v4034
    %v4036 = vpop.f32.mrb[0].mxu0
    %v4037 = vadd.f32 %v3805, %v4036
    %4038 = vdwg.mxu0
    %v4039 = vand.u32 %v80, 4294901760
    %v4040 = vsub.f32 %v80, %v4039
    %4041 = vmatprep.subr.mxu0 %v4040
    %v4042 = vand.u32 %v79, 4294901760
    %v4043 = vsub.f32 %v79, %v4042
    %4044 = vmatpush1.msra.mxu0 %v4043
    %v4045 = vand.u32 %v93, 4294901760
    %v4046 = vsub.f32 %v93, %v4045
    %4047 = vmatprep.subr.mxu0 %v4046
    %v4048 = vand.u32 %v92, 4294901760
    %v4049 = vsub.f32 %v92, %v4048
    %4050 = vmatpush1.msra.mxu0 %v4049
    %v4051 = vand.u32 %v106, 4294901760
    %v4052 = vsub.f32 %v106, %v4051
    %4053 = vmatprep.subr.mxu0 %v4052
    %v4054 = vand.u32 %v105, 4294901760
    %v4055 = vsub.f32 %v105, %v4054
    %4056 = vmatpush1.msra.mxu0 %v4055
    %v4057 = vand.u32 %v119, 4294901760
    %v4058 = vsub.f32 %v119, %v4057
    %4059 = vmatprep.subr.mxu0 %v4058
    %v4060 = vand.u32 %v118, 4294901760
    %v4061 = vsub.f32 %v118, %v4060
    %4062 = vmatpush1.msra.mxu0 %v4061
    %v4063 = vand.u32 %v132, 4294901760
    %v4064 = vsub.f32 %v132, %v4063
    %4065 = vmatprep.subr.mxu0 %v4064
    %v4066 = vand.u32 %v131, 4294901760
    %v4067 = vsub.f32 %v131, %v4066
    %4068 = vmatpush1.msra.mxu0 %v4067
    %v4069 = vand.u32 %v145, 4294901760
    %v4070 = vsub.f32 %v145, %v4069
    %4071 = vmatprep.subr.mxu0 %v4070
    %v4072 = vand.u32 %v144, 4294901760
    %v4073 = vsub.f32 %v144, %v4072
    %4074 = vmatpush1.msra.mxu0 %v4073
    %v4075 = vand.u32 %v158, 4294901760
    %v4076 = vsub.f32 %v158, %v4075
    %4077 = vmatprep.subr.mxu0 %v4076
    %v4078 = vand.u32 %v157, 4294901760
    %v4079 = vsub.f32 %v157, %v4078
    %4080 = vmatpush1.msra.mxu0 %v4079
    %v4081 = vand.u32 %v171, 4294901760
    %v4082 = vsub.f32 %v171, %v4081
    %4083 = vmatprep.subr.mxu0 %v4082
    %v4084 = vand.u32 %v170, 4294901760
    %v4085 = vsub.f32 %v170, %v4084
    %4086 = vmatpush1.msra.mxu0 %v4085
    %v4087 = vand.u32 %v184, 4294901760
    %v4088 = vsub.f32 %v184, %v4087
    %4089 = vmatprep.subr.mxu0 %v4088
    %v4090 = vand.u32 %v183, 4294901760
    %v4091 = vsub.f32 %v183, %v4090
    %4092 = vmatpush1.msra.mxu0 %v4091
    %v4093 = vand.u32 %v197, 4294901760
    %v4094 = vsub.f32 %v197, %v4093
    %4095 = vmatprep.subr.mxu0 %v4094
    %v4096 = vand.u32 %v196, 4294901760
    %v4097 = vsub.f32 %v196, %v4096
    %4098 = vmatpush1.msra.mxu0 %v4097
    %v4099 = vand.u32 %v210, 4294901760
    %v4100 = vsub.f32 %v210, %v4099
    %4101 = vmatprep.subr.mxu0 %v4100
    %v4102 = vand.u32 %v209, 4294901760
    %v4103 = vsub.f32 %v209, %v4102
    %4104 = vmatpush1.msra.mxu0 %v4103
    %v4105 = vand.u32 %v223, 4294901760
    %v4106 = vsub.f32 %v223, %v4105
    %4107 = vmatprep.subr.mxu0 %v4106
    %v4108 = vand.u32 %v222, 4294901760
    %v4109 = vsub.f32 %v222, %v4108
    %4110 = vmatpush1.msra.mxu0 %v4109
    %v4111 = vand.u32 %v236, 4294901760
    %v4112 = vsub.f32 %v236, %v4111
    %4113 = vmatprep.subr.mxu0 %v4112
    %v4114 = vand.u32 %v235, 4294901760
    %v4115 = vsub.f32 %v235, %v4114
    %4116 = vmatpush1.msra.mxu0 %v4115
    %v4117 = vand.u32 %v249, 4294901760
    %v4118 = vsub.f32 %v249, %v4117
    %4119 = vmatprep.subr.mxu0 %v4118
    %v4120 = vand.u32 %v248, 4294901760
    %v4121 = vsub.f32 %v248, %v4120
    %4122 = vmatpush1.msra.mxu0 %v4121
    %v4123 = vand.u32 %v262, 4294901760
    %v4124 = vsub.f32 %v262, %v4123
    %4125 = vmatprep.subr.mxu0 %v4124
    %v4126 = vand.u32 %v261, 4294901760
    %v4127 = vsub.f32 %v261, %v4126
    %4128 = vmatpush1.msra.mxu0 %v4127
    %v4129 = vand.u32 %v275, 4294901760
    %v4130 = vsub.f32 %v275, %v4129
    %4131 = vmatprep.subr.mxu0 %v4130
    %v4132 = vand.u32 %v274, 4294901760
    %v4133 = vsub.f32 %v274, %v4132
    %4134 = vmatpush1.msra.mxu0 %v4133
    %4135 = vmatprep.subr.mxu0 0.0
    %4136 = vmatpush1.msra.mxu0 0.0
    %4137 = vmatprep.subr.mxu0 0.0
    %4138 = vmatpush1.msra.mxu0 0.0
    %4139 = vmatprep.subr.mxu0 0.0
    %4140 = vmatpush1.msra.mxu0 0.0
    %4141 = vmatprep.subr.mxu0 0.0
    %4142 = vmatpush1.msra.mxu0 0.0
    %4143 = vmatprep.subr.mxu0 0.0
    %4144 = vmatpush1.msra.mxu0 0.0
    %4145 = vmatprep.subr.mxu0 0.0
    %4146 = vmatpush1.msra.mxu0 0.0
    %4147 = vmatprep.subr.mxu0 0.0
    %4148 = vmatpush1.msra.mxu0 0.0
    %4149 = vmatprep.subr.mxu0 0.0
    %4150 = vmatpush1.msra.mxu0 0.0
    %4151 = vmatprep.subr.mxu0 0.0
    %4152 = vmatpush1.msra.mxu0 0.0
    %4153 = vmatprep.subr.mxu0 0.0
    %4154 = vmatpush1.msra.mxu0 0.0
    %4155 = vmatprep.subr.mxu0 0.0
    %4156 = vmatpush1.msra.mxu0 0.0
    %4157 = vmatprep.subr.mxu0 0.0
    %4158 = vmatpush1.msra.mxu0 0.0
    %4159 = vmatprep.subr.mxu0 0.0
    %4160 = vmatpush1.msra.mxu0 0.0
    %4161 = vmatprep.subr.mxu0 0.0
    %4162 = vmatpush1.msra.mxu0 0.0
    %4163 = vmatprep.subr.mxu0 0.0
    %4164 = vmatpush1.msra.mxu0 0.0
    %4165 = vmatprep.subr.mxu0 0.0
    %4166 = vmatpush1.msra.mxu0 0.0
    %4167 = vmatprep.mubr.f32.mxu0 0.0
    %v4168 = vand.u32 %v70, 4294901760
    %v4169 = vsub.f32 %v70, %v4168
    %4170 = vmatmul.mubr.f32.gmra.mrb[0].mxu0 %v4169
    %v4171 = vpop.f32.mrb[0].mxu0
    %v4172 = vadd.f32 %v4035, %v4171
    %v4173 = vpop.f32.mrb[0].mxu0
    %v4174 = vadd.f32 %v4037, %v4173
    %4175 = vdwg.mxu0
    %v4176 = vand.u32 %v80, 4294901760
    %4177 = vmatprep.subr.mxu0 %v4176
    %v4178 = vand.u32 %v79, 4294901760
    %4179 = vmatpush1.msra.mxu0 %v4178
    %v4180 = vand.u32 %v93, 4294901760
    %4181 = vmatprep.subr.mxu0 %v4180
    %v4182 = vand.u32 %v92, 4294901760
    %4183 = vmatpush1.msra.mxu0 %v4182
    %v4184 = vand.u32 %v106, 4294901760
    %4185 = vmatprep.subr.mxu0 %v4184
    %v4186 = vand.u32 %v105, 4294901760
    %4187 = vmatpush1.msra.mxu0 %v4186
    %v4188 = vand.u32 %v119, 4294901760
    %4189 = vmatprep.subr.mxu0 %v4188
    %v4190 = vand.u32 %v118, 4294901760
    %4191 = vmatpush1.msra.mxu0 %v4190
    %v4192 = vand.u32 %v132, 4294901760
    %4193 = vmatprep.subr.mxu0 %v4192
    %v4194 = vand.u32 %v131, 4294901760
    %4195 = vmatpush1.msra.mxu0 %v4194
    %v4196 = vand.u32 %v145, 4294901760
    %4197 = vmatprep.subr.mxu0 %v4196
    %v4198 = vand.u32 %v144, 4294901760
    %4199 = vmatpush1.msra.mxu0 %v4198
    %v4200 = vand.u32 %v158, 4294901760
    %4201 = vmatprep.subr.mxu0 %v4200
    %v4202 = vand.u32 %v157, 4294901760
    %4203 = vmatpush1.msra.mxu0 %v4202
    %v4204 = vand.u32 %v171, 4294901760
    %4205 = vmatprep.subr.mxu0 %v4204
    %v4206 = vand.u32 %v170, 4294901760
    %4207 = vmatpush1.msra.mxu0 %v4206
    %v4208 = vand.u32 %v184, 4294901760
    %4209 = vmatprep.subr.mxu0 %v4208
    %v4210 = vand.u32 %v183, 4294901760
    %4211 = vmatpush1.msra.mxu0 %v4210
    %v4212 = vand.u32 %v197, 4294901760
    %4213 = vmatprep.subr.mxu0 %v4212
    %v4214 = vand.u32 %v196, 4294901760
    %4215 = vmatpush1.msra.mxu0 %v4214
    %v4216 = vand.u32 %v210, 4294901760
    %4217 = vmatprep.subr.mxu0 %v4216
    %v4218 = vand.u32 %v209, 4294901760
    %4219 = vmatpush1.msra.mxu0 %v4218
    %v4220 = vand.u32 %v223, 4294901760
    %4221 = vmatprep.subr.mxu0 %v4220
    %v4222 = vand.u32 %v222, 4294901760
    %4223 = vmatpush1.msra.mxu0 %v4222
    %v4224 = vand.u32 %v236, 4294901760
    %4225 = vmatprep.subr.mxu0 %v4224
    %v4226 = vand.u32 %v235, 4294901760
    %4227 = vmatpush1.msra.mxu0 %v4226
    %v4228 = vand.u32 %v249, 4294901760
    %4229 = vmatprep.subr.mxu0 %v4228
    %v4230 = vand.u32 %v248, 4294901760
    %4231 = vmatpush1.msra.mxu0 %v4230
    %v4232 = vand.u32 %v262, 4294901760
    %4233 = vmatprep.subr.mxu0 %v4232
    %v4234 = vand.u32 %v261, 4294901760
    %4235 = vmatpush1.msra.mxu0 %v4234
    %v4236 = vand.u32 %v275, 4294901760
    %4237 = vmatprep.subr.mxu0 %v4236
    %v4238 = vand.u32 %v274, 4294901760
    %4239 = vmatpush1.msra.mxu0 %v4238
    %4240 = vmatprep.subr.mxu0 0.0
    %4241 = vmatpush1.msra.mxu0 0.0
    %4242 = vmatprep.subr.mxu0 0.0
    %4243 = vmatpush1.msra.mxu0 0.0
    %4244 = vmatprep.subr.mxu0 0.0
    %4245 = vmatpush1.msra.mxu0 0.0
    %4246 = vmatprep.subr.mxu0 0.0
    %4247 = vmatpush1.msra.mxu0 0.0
    %4248 = vmatprep.subr.mxu0 0.0
    %4249 = vmatpush1.msra.mxu0 0.0
    %4250 = vmatprep.subr.mxu0 0.0
    %4251 = vmatpush1.msra.mxu0 0.0
    %4252 = vmatprep.subr.mxu0 0.0
    %4253 = vmatpush1.msra.mxu0 0.0
    %4254 = vmatprep.subr.mxu0 0.0
    %4255 = vmatpush1.msra.mxu0 0.0
    %4256 = vmatprep.subr.mxu0 0.0
    %4257 = vmatpush1.msra.mxu0 0.0
    %4258 = vmatprep.subr.mxu0 0.0
    %4259 = vmatpush1.msra.mxu0 0.0
    %4260 = vmatprep.subr.mxu0 0.0
    %4261 = vmatpush1.msra.mxu0 0.0
    %4262 = vmatprep.subr.mxu0 0.0
    %4263 = vmatpush1.msra.mxu0 0.0
    %4264 = vmatprep.subr.mxu0 0.0
    %4265 = vmatpush1.msra.mxu0 0.0
    %4266 = vmatprep.subr.mxu0 0.0
    %4267 = vmatpush1.msra.mxu0 0.0
    %4268 = vmatprep.subr.mxu0 0.0
    %4269 = vmatpush1.msra.mxu0 0.0
    %4270 = vmatprep.subr.mxu0 0.0
    %4271 = vmatpush1.msra.mxu0 0.0
    %4272 = vmatprep.mubr.f32.mxu0 0.0
    %v4273 = vand.u32 %v70, 4294901760
    %v4274 = vsub.f32 %v70, %v4273
    %v4275 = vand.u32 %v4274, 4294901760
    %4276 = vmatmul.mubr.f32.gmra.mrb[0].mxu0 %v4275
    %v4277 = vpop.f32.mrb[0].mxu0
    %v4278 = vadd.f32 %v4172, %v4277
    %v4279 = vpop.f32.mrb[0].mxu0
    %v4280 = vadd.f32 %v4174, %v4279
    %4281 = vdwg.mxu0
    %v4282 = vand.u32 %v80, 4294901760
    %v4283 = vsub.f32 %v80, %v4282
    %v4284 = vand.u32 %v4283, 4294901760
    %4285 = vmatprep.subr.mxu0 %v4284
    %v4286 = vand.u32 %v79, 4294901760
    %v4287 = vsub.f32 %v79, %v4286
    %v4288 = vand.u32 %v4287, 4294901760
    %4289 = vmatpush1.msra.mxu0 %v4288
    %v4290 = vand.u32 %v93, 4294901760
    %v4291 = vsub.f32 %v93, %v4290
    %v4292 = vand.u32 %v4291, 4294901760
    %4293 = vmatprep.subr.mxu0 %v4292
    %v4294 = vand.u32 %v92, 4294901760
    %v4295 = vsub.f32 %v92, %v4294
    %v4296 = vand.u32 %v4295, 4294901760
    %4297 = vmatpush1.msra.mxu0 %v4296
    %v4298 = vand.u32 %v106, 4294901760
    %v4299 = vsub.f32 %v106, %v4298
    %v4300 = vand.u32 %v4299, 4294901760
    %4301 = vmatprep.subr.mxu0 %v4300
    %v4302 = vand.u32 %v105, 4294901760
    %v4303 = vsub.f32 %v105, %v4302
    %v4304 = vand.u32 %v4303, 4294901760
    %4305 = vmatpush1.msra.mxu0 %v4304
    %v4306 = vand.u32 %v119, 4294901760
    %v4307 = vsub.f32 %v119, %v4306
    %v4308 = vand.u32 %v4307, 4294901760
    %4309 = vmatprep.subr.mxu0 %v4308
    %v4310 = vand.u32 %v118, 4294901760
    %v4311 = vsub.f32 %v118, %v4310
    %v4312 = vand.u32 %v4311, 4294901760
    %4313 = vmatpush1.msra.mxu0 %v4312
    %v4314 = vand.u32 %v132, 4294901760
    %v4315 = vsub.f32 %v132, %v4314
    %v4316 = vand.u32 %v4315, 4294901760
    %4317 = vmatprep.subr.mxu0 %v4316
    %v4318 = vand.u32 %v131, 4294901760
    %v4319 = vsub.f32 %v131, %v4318
    %v4320 = vand.u32 %v4319, 4294901760
    %4321 = vmatpush1.msra.mxu0 %v4320
    %v4322 = vand.u32 %v145, 4294901760
    %v4323 = vsub.f32 %v145, %v4322
    %v4324 = vand.u32 %v4323, 4294901760
    %4325 = vmatprep.subr.mxu0 %v4324
    %v4326 = vand.u32 %v144, 4294901760
    %v4327 = vsub.f32 %v144, %v4326
    %v4328 = vand.u32 %v4327, 4294901760
    %4329 = vmatpush1.msra.mxu0 %v4328
    %v4330 = vand.u32 %v158, 4294901760
    %v4331 = vsub.f32 %v158, %v4330
    %v4332 = vand.u32 %v4331, 4294901760
    %4333 = vmatprep.subr.mxu0 %v4332
    %v4334 = vand.u32 %v157, 4294901760
    %v4335 = vsub.f32 %v157, %v4334
    %v4336 = vand.u32 %v4335, 4294901760
    %4337 = vmatpush1.msra.mxu0 %v4336
    %v4338 = vand.u32 %v171, 4294901760
    %v4339 = vsub.f32 %v171, %v4338
    %v4340 = vand.u32 %v4339, 4294901760
    %4341 = vmatprep.subr.mxu0 %v4340
    %v4342 = vand.u32 %v170, 4294901760
    %v4343 = vsub.f32 %v170, %v4342
    %v4344 = vand.u32 %v4343, 4294901760
    %4345 = vmatpush1.msra.mxu0 %v4344
    %v4346 = vand.u32 %v184, 4294901760
    %v4347 = vsub.f32 %v184, %v4346
    %v4348 = vand.u32 %v4347, 4294901760
    %4349 = vmatprep.subr.mxu0 %v4348
    %v4350 = vand.u32 %v183, 4294901760
    %v4351 = vsub.f32 %v183, %v4350
    %v4352 = vand.u32 %v4351, 4294901760
    %4353 = vmatpush1.msra.mxu0 %v4352
    %v4354 = vand.u32 %v197, 4294901760
    %v4355 = vsub.f32 %v197, %v4354
    %v4356 = vand.u32 %v4355, 4294901760
    %4357 = vmatprep.subr.mxu0 %v4356
    %v4358 = vand.u32 %v196, 4294901760
    %v4359 = vsub.f32 %v196, %v4358
    %v4360 = vand.u32 %v4359, 4294901760
    %4361 = vmatpush1.msra.mxu0 %v4360
    %v4362 = vand.u32 %v210, 4294901760
    %v4363 = vsub.f32 %v210, %v4362
    %v4364 = vand.u32 %v4363, 4294901760
    %4365 = vmatprep.subr.mxu0 %v4364
    %v4366 = vand.u32 %v209, 4294901760
    %v4367 = vsub.f32 %v209, %v4366
    %v4368 = vand.u32 %v4367, 4294901760
    %4369 = vmatpush1.msra.mxu0 %v4368
    %v4370 = vand.u32 %v223, 4294901760
    %v4371 = vsub.f32 %v223, %v4370
    %v4372 = vand.u32 %v4371, 4294901760
    %4373 = vmatprep.subr.mxu0 %v4372
    %v4374 = vand.u32 %v222, 4294901760
    %v4375 = vsub.f32 %v222, %v4374
    %v4376 = vand.u32 %v4375, 4294901760
    %4377 = vmatpush1.msra.mxu0 %v4376
    %v4378 = vand.u32 %v236, 4294901760
    %v4379 = vsub.f32 %v236, %v4378
    %v4380 = vand.u32 %v4379, 4294901760
    %4381 = vmatprep.subr.mxu0 %v4380
    %v4382 = vand.u32 %v235, 4294901760
    %v4383 = vsub.f32 %v235, %v4382
    %v4384 = vand.u32 %v4383, 4294901760
    %4385 = vmatpush1.msra.mxu0 %v4384
    %v4386 = vand.u32 %v249, 4294901760
    %v4387 = vsub.f32 %v249, %v4386
    %v4388 = vand.u32 %v4387, 4294901760
    %4389 = vmatprep.subr.mxu0 %v4388
    %v4390 = vand.u32 %v248, 4294901760
    %v4391 = vsub.f32 %v248, %v4390
    %v4392 = vand.u32 %v4391, 4294901760
    %4393 = vmatpush1.msra.mxu0 %v4392
    %v4394 = vand.u32 %v262, 4294901760
    %v4395 = vsub.f32 %v262, %v4394
    %v4396 = vand.u32 %v4395, 4294901760
    %4397 = vmatprep.subr.mxu0 %v4396
    %v4398 = vand.u32 %v261, 4294901760
    %v4399 = vsub.f32 %v261, %v4398
    %v4400 = vand.u32 %v4399, 4294901760
    %4401 = vmatpush1.msra.mxu0 %v4400
    %v4402 = vand.u32 %v275, 4294901760
    %v4403 = vsub.f32 %v275, %v4402
    %v4404 = vand.u32 %v4403, 4294901760
    %4405 = vmatprep.subr.mxu0 %v4404
    %v4406 = vand.u32 %v274, 4294901760
    %v4407 = vsub.f32 %v274, %v4406
    %v4408 = vand.u32 %v4407, 4294901760
    %4409 = vmatpush1.msra.mxu0 %v4408
    %4410 = vmatprep.subr.mxu0 0.0
    %4411 = vmatpush1.msra.mxu0 0.0
    %4412 = vmatprep.subr.mxu0 0.0
    %4413 = vmatpush1.msra.mxu0 0.0
    %4414 = vmatprep.subr.mxu0 0.0
    %4415 = vmatpush1.msra.mxu0 0.0
    %4416 = vmatprep.subr.mxu0 0.0
    %4417 = vmatpush1.msra.mxu0 0.0
    %4418 = vmatprep.subr.mxu0 0.0
    %4419 = vmatpush1.msra.mxu0 0.0
    %4420 = vmatprep.subr.mxu0 0.0
    %4421 = vmatpush1.msra.mxu0 0.0
    %4422 = vmatprep.subr.mxu0 0.0
    %4423 = vmatpush1.msra.mxu0 0.0
    %4424 = vmatprep.subr.mxu0 0.0
    %4425 = vmatpush1.msra.mxu0 0.0
    %4426 = vmatprep.subr.mxu0 0.0
    %4427 = vmatpush1.msra.mxu0 0.0
    %4428 = vmatprep.subr.mxu0 0.0
    %4429 = vmatpush1.msra.mxu0 0.0
    %4430 = vmatprep.subr.mxu0 0.0
    %4431 = vmatpush1.msra.mxu0 0.0
    %4432 = vmatprep.subr.mxu0 0.0
    %4433 = vmatpush1.msra.mxu0 0.0
    %4434 = vmatprep.subr.mxu0 0.0
    %4435 = vmatpush1.msra.mxu0 0.0
    %4436 = vmatprep.subr.mxu0 0.0
    %4437 = vmatpush1.msra.mxu0 0.0
    %4438 = vmatprep.subr.mxu0 0.0
    %4439 = vmatpush1.msra.mxu0 0.0
    %4440 = vmatprep.subr.mxu0 0.0
    %4441 = vmatpush1.msra.mxu0 0.0
    %4442 = vmatprep.mubr.f32.mxu0 0.0
    %v4443 = vand.u32 %v70, 4294901760
    %4444 = vmatmul.mubr.f32.gmra.mrb[0].mxu0 %v4443
    %v4445 = vpop.f32.mrb[0].mxu0
    %v4446 = vadd.f32 %v4278, %v4445
    %v4447 = vpop.f32.mrb[0].mxu0
    %v4448 = vadd.f32 %v4280, %v4447
    %4449 = vdwg.mxu0
    %v4450 = vand.u32 %v80, 4294901760
    %4451 = vmatprep.subr.mxu0 %v4450
    %v4452 = vand.u32 %v79, 4294901760
    %4453 = vmatpush1.msra.mxu0 %v4452
    %v4454 = vand.u32 %v93, 4294901760
    %4455 = vmatprep.subr.mxu0 %v4454
    %v4456 = vand.u32 %v92, 4294901760
    %4457 = vmatpush1.msra.mxu0 %v4456
    %v4458 = vand.u32 %v106, 4294901760
    %4459 = vmatprep.subr.mxu0 %v4458
    %v4460 = vand.u32 %v105, 4294901760
    %4461 = vmatpush1.msra.mxu0 %v4460
    %v4462 = vand.u32 %v119, 4294901760
    %4463 = vmatprep.subr.mxu0 %v4462
    %v4464 = vand.u32 %v118, 4294901760
    %4465 = vmatpush1.msra.mxu0 %v4464
    %v4466 = vand.u32 %v132, 4294901760
    %4467 = vmatprep.subr.mxu0 %v4466
    %v4468 = vand.u32 %v131, 4294901760
    %4469 = vmatpush1.msra.mxu0 %v4468
    %v4470 = vand.u32 %v145, 4294901760
    %4471 = vmatprep.subr.mxu0 %v4470
    %v4472 = vand.u32 %v144, 4294901760
    %4473 = vmatpush1.msra.mxu0 %v4472
    %v4474 = vand.u32 %v158, 4294901760
    %4475 = vmatprep.subr.mxu0 %v4474
    %v4476 = vand.u32 %v157, 4294901760
    %4477 = vmatpush1.msra.mxu0 %v4476
    %v4478 = vand.u32 %v171, 4294901760
    %4479 = vmatprep.subr.mxu0 %v4478
    %v4480 = vand.u32 %v170, 4294901760
    %4481 = vmatpush1.msra.mxu0 %v4480
    %v4482 = vand.u32 %v184, 4294901760
    %4483 = vmatprep.subr.mxu0 %v4482
    %v4484 = vand.u32 %v183, 4294901760
    %4485 = vmatpush1.msra.mxu0 %v4484
    %v4486 = vand.u32 %v197, 4294901760
    %4487 = vmatprep.subr.mxu0 %v4486
    %v4488 = vand.u32 %v196, 4294901760
    %4489 = vmatpush1.msra.mxu0 %v4488
    %v4490 = vand.u32 %v210, 4294901760
    %4491 = vmatprep.subr.mxu0 %v4490
    %v4492 = vand.u32 %v209, 4294901760
    %4493 = vmatpush1.msra.mxu0 %v4492
    %v4494 = vand.u32 %v223, 4294901760
    %4495 = vmatprep.subr.mxu0 %v4494
    %v4496 = vand.u32 %v222, 4294901760
    %4497 = vmatpush1.msra.mxu0 %v4496
    %v4498 = vand.u32 %v236, 4294901760
    %4499 = vmatprep.subr.mxu0 %v4498
    %v4500 = vand.u32 %v235, 4294901760
    %4501 = vmatpush1.msra.mxu0 %v4500
    %v4502 = vand.u32 %v249, 4294901760
    %4503 = vmatprep.subr.mxu0 %v4502
    %v4504 = vand.u32 %v248, 4294901760
    %4505 = vmatpush1.msra.mxu0 %v4504
    %v4506 = vand.u32 %v262, 4294901760
    %4507 = vmatprep.subr.mxu0 %v4506
    %v4508 = vand.u32 %v261, 4294901760
    %4509 = vmatpush1.msra.mxu0 %v4508
    %v4510 = vand.u32 %v275, 4294901760
    %4511 = vmatprep.subr.mxu0 %v4510
    %v4512 = vand.u32 %v274, 4294901760
    %4513 = vmatpush1.msra.mxu0 %v4512
    %4514 = vmatprep.subr.mxu0 0.0
    %4515 = vmatpush1.msra.mxu0 0.0
    %4516 = vmatprep.subr.mxu0 0.0
    %4517 = vmatpush1.msra.mxu0 0.0
    %4518 = vmatprep.subr.mxu0 0.0
    %4519 = vmatpush1.msra.mxu0 0.0
    %4520 = vmatprep.subr.mxu0 0.0
    %4521 = vmatpush1.msra.mxu0 0.0
    %4522 = vmatprep.subr.mxu0 0.0
    %4523 = vmatpush1.msra.mxu0 0.0
    %4524 = vmatprep.subr.mxu0 0.0
    %4525 = vmatpush1.msra.mxu0 0.0
    %4526 = vmatprep.subr.mxu0 0.0
    %4527 = vmatpush1.msra.mxu0 0.0
    %4528 = vmatprep.subr.mxu0 0.0
    %4529 = vmatpush1.msra.mxu0 0.0
    %4530 = vmatprep.subr.mxu0 0.0
    %4531 = vmatpush1.msra.mxu0 0.0
    %4532 = vmatprep.subr.mxu0 0.0
    %4533 = vmatpush1.msra.mxu0 0.0
    %4534 = vmatprep.subr.mxu0 0.0
    %4535 = vmatpush1.msra.mxu0 0.0
    %4536 = vmatprep.subr.mxu0 0.0
    %4537 = vmatpush1.msra.mxu0 0.0
    %4538 = vmatprep.subr.mxu0 0.0
    %4539 = vmatpush1.msra.mxu0 0.0
    %4540 = vmatprep.subr.mxu0 0.0
    %4541 = vmatpush1.msra.mxu0 0.0
    %4542 = vmatprep.subr.mxu0 0.0
    %4543 = vmatpush1.msra.mxu0 0.0
    %4544 = vmatprep.subr.mxu0 0.0
    %4545 = vmatpush1.msra.mxu0 0.0
    %4546 = vmatprep.mubr.f32.mxu0 0.0
    %v4547 = vand.u32 %v70, 4294901760
    %4548 = vmatmul.mubr.f32.gmra.mrb[0].mxu0 %v4547
    %v4549 = vpop.f32.mrb[0].mxu0
    %v4550 = vadd.f32 %v4446, %v4549
    %v4551 = vpop.f32.mrb[0].mxu0
    %v4552 = vadd.f32 %v4448, %v4551
    %4553 = vdwg.mxu0
    %v4554 = vand.u32 %v82, 4294901760
    %4555 = vmatprep.subr.mxu0 %v4554
    %v4556 = vand.u32 %v81, 4294901760
    %4557 = vmatpush1.msra.mxu0 %v4556
    %v4558 = vand.u32 %v95, 4294901760
    %4559 = vmatprep.subr.mxu0 %v4558
    %v4560 = vand.u32 %v94, 4294901760
    %4561 = vmatpush1.msra.mxu0 %v4560
    %v4562 = vand.u32 %v108, 4294901760
    %4563 = vmatprep.subr.mxu0 %v4562
    %v4564 = vand.u32 %v107, 4294901760
    %4565 = vmatpush1.msra.mxu0 %v4564
    %v4566 = vand.u32 %v121, 4294901760
    %4567 = vmatprep.subr.mxu0 %v4566
    %v4568 = vand.u32 %v120, 4294901760
    %4569 = vmatpush1.msra.mxu0 %v4568
    %v4570 = vand.u32 %v134, 4294901760
    %4571 = vmatprep.subr.mxu0 %v4570
    %v4572 = vand.u32 %v133, 4294901760
    %4573 = vmatpush1.msra.mxu0 %v4572
    %v4574 = vand.u32 %v147, 4294901760
    %4575 = vmatprep.subr.mxu0 %v4574
    %v4576 = vand.u32 %v146, 4294901760
    %4577 = vmatpush1.msra.mxu0 %v4576
    %v4578 = vand.u32 %v160, 4294901760
    %4579 = vmatprep.subr.mxu0 %v4578
    %v4580 = vand.u32 %v159, 4294901760
    %4581 = vmatpush1.msra.mxu0 %v4580
    %v4582 = vand.u32 %v173, 4294901760
    %4583 = vmatprep.subr.mxu0 %v4582
    %v4584 = vand.u32 %v172, 4294901760
    %4585 = vmatpush1.msra.mxu0 %v4584
    %v4586 = vand.u32 %v186, 4294901760
    %4587 = vmatprep.subr.mxu0 %v4586
    %v4588 = vand.u32 %v185, 4294901760
    %4589 = vmatpush1.msra.mxu0 %v4588
    %v4590 = vand.u32 %v199, 4294901760
    %4591 = vmatprep.subr.mxu0 %v4590
    %v4592 = vand.u32 %v198, 4294901760
    %4593 = vmatpush1.msra.mxu0 %v4592
    %v4594 = vand.u32 %v212, 4294901760
    %4595 = vmatprep.subr.mxu0 %v4594
    %v4596 = vand.u32 %v211, 4294901760
    %4597 = vmatpush1.msra.mxu0 %v4596
    %v4598 = vand.u32 %v225, 4294901760
    %4599 = vmatprep.subr.mxu0 %v4598
    %v4600 = vand.u32 %v224, 4294901760
    %4601 = vmatpush1.msra.mxu0 %v4600
    %v4602 = vand.u32 %v238, 4294901760
    %4603 = vmatprep.subr.mxu0 %v4602
    %v4604 = vand.u32 %v237, 4294901760
    %4605 = vmatpush1.msra.mxu0 %v4604
    %v4606 = vand.u32 %v251, 4294901760
    %4607 = vmatprep.subr.mxu0 %v4606
    %v4608 = vand.u32 %v250, 4294901760
    %4609 = vmatpush1.msra.mxu0 %v4608
    %v4610 = vand.u32 %v264, 4294901760
    %4611 = vmatprep.subr.mxu0 %v4610
    %v4612 = vand.u32 %v263, 4294901760
    %4613 = vmatpush1.msra.mxu0 %v4612
    %v4614 = vand.u32 %v277, 4294901760
    %4615 = vmatprep.subr.mxu0 %v4614
    %v4616 = vand.u32 %v276, 4294901760
    %4617 = vmatpush1.msra.mxu0 %v4616
    %4618 = vmatprep.subr.mxu0 0.0
    %4619 = vmatpush1.msra.mxu0 0.0
    %4620 = vmatprep.subr.mxu0 0.0
    %4621 = vmatpush1.msra.mxu0 0.0
    %4622 = vmatprep.subr.mxu0 0.0
    %4623 = vmatpush1.msra.mxu0 0.0
    %4624 = vmatprep.subr.mxu0 0.0
    %4625 = vmatpush1.msra.mxu0 0.0
    %4626 = vmatprep.subr.mxu0 0.0
    %4627 = vmatpush1.msra.mxu0 0.0
    %4628 = vmatprep.subr.mxu0 0.0
    %4629 = vmatpush1.msra.mxu0 0.0
    %4630 = vmatprep.subr.mxu0 0.0
    %4631 = vmatpush1.msra.mxu0 0.0
    %4632 = vmatprep.subr.mxu0 0.0
    %4633 = vmatpush1.msra.mxu0 0.0
    %4634 = vmatprep.subr.mxu0 0.0
    %4635 = vmatpush1.msra.mxu0 0.0
    %4636 = vmatprep.subr.mxu0 0.0
    %4637 = vmatpush1.msra.mxu0 0.0
    %4638 = vmatprep.subr.mxu0 0.0
    %4639 = vmatpush1.msra.mxu0 0.0
    %4640 = vmatprep.subr.mxu0 0.0
    %4641 = vmatpush1.msra.mxu0 0.0
    %4642 = vmatprep.subr.mxu0 0.0
    %4643 = vmatpush1.msra.mxu0 0.0
    %4644 = vmatprep.subr.mxu0 0.0
    %4645 = vmatpush1.msra.mxu0 0.0
    %4646 = vmatprep.subr.mxu0 0.0
    %4647 = vmatpush1.msra.mxu0 0.0
    %4648 = vmatprep.subr.mxu0 0.0
    %4649 = vmatpush1.msra.mxu0 0.0
    %4650 = vmatprep.mubr.f32.mxu0 0.0
    %v4651 = vand.u32 %v70, 4294901760
    %v4652 = vsub.f32 %v70, %v4651
    %v4653 = vand.u32 %v4652, 4294901760
    %v4654 = vsub.f32 %v4652, %v4653
    %v4655 = vand.u32 %v4654, 4294901760
    %4656 = vmatmul.mubr.f32.gmra.mrb[0].mxu0 %v4655
    %v4657 = vpop.f32.mrb[0].mxu0
    %v4658 = vadd.f32 0.0, %v4657
    %v4659 = vpop.f32.mrb[0].mxu0
    %v4660 = vadd.f32 0.0, %v4659
    %4661 = vdwg.mxu0
    %v4662 = vand.u32 %v82, 4294901760
    %v4663 = vsub.f32 %v82, %v4662
    %v4664 = vand.u32 %v4663, 4294901760
    %v4665 = vsub.f32 %v4663, %v4664
    %v4666 = vand.u32 %v4665, 4294901760
    %4667 = vmatprep.subr.mxu0 %v4666
    %v4668 = vand.u32 %v81, 4294901760
    %v4669 = vsub.f32 %v81, %v4668
    %v4670 = vand.u32 %v4669, 4294901760
    %v4671 = vsub.f32 %v4669, %v4670
    %v4672 = vand.u32 %v4671, 4294901760
    %4673 = vmatpush1.msra.mxu0 %v4672
    %v4674 = vand.u32 %v95, 4294901760
    %v4675 = vsub.f32 %v95, %v4674
    %v4676 = vand.u32 %v4675, 4294901760
    %v4677 = vsub.f32 %v4675, %v4676
    %v4678 = vand.u32 %v4677, 4294901760
    %4679 = vmatprep.subr.mxu0 %v4678
    %v4680 = vand.u32 %v94, 4294901760
    %v4681 = vsub.f32 %v94, %v4680
    %v4682 = vand.u32 %v4681, 4294901760
    %v4683 = vsub.f32 %v4681, %v4682
    %v4684 = vand.u32 %v4683, 4294901760
    %4685 = vmatpush1.msra.mxu0 %v4684
    %v4686 = vand.u32 %v108, 4294901760
    %v4687 = vsub.f32 %v108, %v4686
    %v4688 = vand.u32 %v4687, 4294901760
    %v4689 = vsub.f32 %v4687, %v4688
    %v4690 = vand.u32 %v4689, 4294901760
    %4691 = vmatprep.subr.mxu0 %v4690
    %v4692 = vand.u32 %v107, 4294901760
    %v4693 = vsub.f32 %v107, %v4692
    %v4694 = vand.u32 %v4693, 4294901760
    %v4695 = vsub.f32 %v4693, %v4694
    %v4696 = vand.u32 %v4695, 4294901760
    %4697 = vmatpush1.msra.mxu0 %v4696
    %v4698 = vand.u32 %v121, 4294901760
    %v4699 = vsub.f32 %v121, %v4698
    %v4700 = vand.u32 %v4699, 4294901760
    %v4701 = vsub.f32 %v4699, %v4700
    %v4702 = vand.u32 %v4701, 4294901760
    %4703 = vmatprep.subr.mxu0 %v4702
    %v4704 = vand.u32 %v120, 4294901760
    %v4705 = vsub.f32 %v120, %v4704
    %v4706 = vand.u32 %v4705, 4294901760
    %v4707 = vsub.f32 %v4705, %v4706
    %v4708 = vand.u32 %v4707, 4294901760
    %4709 = vmatpush1.msra.mxu0 %v4708
    %v4710 = vand.u32 %v134, 4294901760
    %v4711 = vsub.f32 %v134, %v4710
    %v4712 = vand.u32 %v4711, 4294901760
    %v4713 = vsub.f32 %v4711, %v4712
    %v4714 = vand.u32 %v4713, 4294901760
    %4715 = vmatprep.subr.mxu0 %v4714
    %v4716 = vand.u32 %v133, 4294901760
    %v4717 = vsub.f32 %v133, %v4716
    %v4718 = vand.u32 %v4717, 4294901760
    %v4719 = vsub.f32 %v4717, %v4718
    %v4720 = vand.u32 %v4719, 4294901760
    %4721 = vmatpush1.msra.mxu0 %v4720
    %v4722 = vand.u32 %v147, 4294901760
    %v4723 = vsub.f32 %v147, %v4722
    %v4724 = vand.u32 %v4723, 4294901760
    %v4725 = vsub.f32 %v4723, %v4724
    %v4726 = vand.u32 %v4725, 4294901760
    %4727 = vmatprep.subr.mxu0 %v4726
    %v4728 = vand.u32 %v146, 4294901760
    %v4729 = vsub.f32 %v146, %v4728
    %v4730 = vand.u32 %v4729, 4294901760
    %v4731 = vsub.f32 %v4729, %v4730
    %v4732 = vand.u32 %v4731, 4294901760
    %4733 = vmatpush1.msra.mxu0 %v4732
    %v4734 = vand.u32 %v160, 4294901760
    %v4735 = vsub.f32 %v160, %v4734
    %v4736 = vand.u32 %v4735, 4294901760
    %v4737 = vsub.f32 %v4735, %v4736
    %v4738 = vand.u32 %v4737, 4294901760
    %4739 = vmatprep.subr.mxu0 %v4738
    %v4740 = vand.u32 %v159, 4294901760
    %v4741 = vsub.f32 %v159, %v4740
    %v4742 = vand.u32 %v4741, 4294901760
    %v4743 = vsub.f32 %v4741, %v4742
    %v4744 = vand.u32 %v4743, 4294901760
    %4745 = vmatpush1.msra.mxu0 %v4744
    %v4746 = vand.u32 %v173, 4294901760
    %v4747 = vsub.f32 %v173, %v4746
    %v4748 = vand.u32 %v4747, 4294901760
    %v4749 = vsub.f32 %v4747, %v4748
    %v4750 = vand.u32 %v4749, 4294901760
    %4751 = vmatprep.subr.mxu0 %v4750
    %v4752 = vand.u32 %v172, 4294901760
    %v4753 = vsub.f32 %v172, %v4752
    %v4754 = vand.u32 %v4753, 4294901760
    %v4755 = vsub.f32 %v4753, %v4754
    %v4756 = vand.u32 %v4755, 4294901760
    %4757 = vmatpush1.msra.mxu0 %v4756
    %v4758 = vand.u32 %v186, 4294901760
    %v4759 = vsub.f32 %v186, %v4758
    %v4760 = vand.u32 %v4759, 4294901760
    %v4761 = vsub.f32 %v4759, %v4760
    %v4762 = vand.u32 %v4761, 4294901760
    %4763 = vmatprep.subr.mxu0 %v4762
    %v4764 = vand.u32 %v185, 4294901760
    %v4765 = vsub.f32 %v185, %v4764
    %v4766 = vand.u32 %v4765, 4294901760
    %v4767 = vsub.f32 %v4765, %v4766
    %v4768 = vand.u32 %v4767, 4294901760
    %4769 = vmatpush1.msra.mxu0 %v4768
    %v4770 = vand.u32 %v199, 4294901760
    %v4771 = vsub.f32 %v199, %v4770
    %v4772 = vand.u32 %v4771, 4294901760
    %v4773 = vsub.f32 %v4771, %v4772
    %v4774 = vand.u32 %v4773, 4294901760
    %4775 = vmatprep.subr.mxu0 %v4774
    %v4776 = vand.u32 %v198, 4294901760
    %v4777 = vsub.f32 %v198, %v4776
    %v4778 = vand.u32 %v4777, 4294901760
    %v4779 = vsub.f32 %v4777, %v4778
    %v4780 = vand.u32 %v4779, 4294901760
    %4781 = vmatpush1.msra.mxu0 %v4780
    %v4782 = vand.u32 %v212, 4294901760
    %v4783 = vsub.f32 %v212, %v4782
    %v4784 = vand.u32 %v4783, 4294901760
    %v4785 = vsub.f32 %v4783, %v4784
    %v4786 = vand.u32 %v4785, 4294901760
    %4787 = vmatprep.subr.mxu0 %v4786
    %v4788 = vand.u32 %v211, 4294901760
    %v4789 = vsub.f32 %v211, %v4788
    %v4790 = vand.u32 %v4789, 4294901760
    %v4791 = vsub.f32 %v4789, %v4790
    %v4792 = vand.u32 %v4791, 4294901760
    %4793 = vmatpush1.msra.mxu0 %v4792
    %v4794 = vand.u32 %v225, 4294901760
    %v4795 = vsub.f32 %v225, %v4794
    %v4796 = vand.u32 %v4795, 4294901760
    %v4797 = vsub.f32 %v4795, %v4796
    %v4798 = vand.u32 %v4797, 4294901760
    %4799 = vmatprep.subr.mxu0 %v4798
    %v4800 = vand.u32 %v224, 4294901760
    %v4801 = vsub.f32 %v224, %v4800
    %v4802 = vand.u32 %v4801, 4294901760
    %v4803 = vsub.f32 %v4801, %v4802
    %v4804 = vand.u32 %v4803, 4294901760
    %4805 = vmatpush1.msra.mxu0 %v4804
    %v4806 = vand.u32 %v238, 4294901760
    %v4807 = vsub.f32 %v238, %v4806
    %v4808 = vand.u32 %v4807, 4294901760
    %v4809 = vsub.f32 %v4807, %v4808
    %v4810 = vand.u32 %v4809, 4294901760
    %4811 = vmatprep.subr.mxu0 %v4810
    %v4812 = vand.u32 %v237, 4294901760
    %v4813 = vsub.f32 %v237, %v4812
    %v4814 = vand.u32 %v4813, 4294901760
    %v4815 = vsub.f32 %v4813, %v4814
    %v4816 = vand.u32 %v4815, 4294901760
    %4817 = vmatpush1.msra.mxu0 %v4816
    %v4818 = vand.u32 %v251, 4294901760
    %v4819 = vsub.f32 %v251, %v4818
    %v4820 = vand.u32 %v4819, 4294901760
    %v4821 = vsub.f32 %v4819, %v4820
    %v4822 = vand.u32 %v4821, 4294901760
    %4823 = vmatprep.subr.mxu0 %v4822
    %v4824 = vand.u32 %v250, 4294901760
    %v4825 = vsub.f32 %v250, %v4824
    %v4826 = vand.u32 %v4825, 4294901760
    %v4827 = vsub.f32 %v4825, %v4826
    %v4828 = vand.u32 %v4827, 4294901760
    %4829 = vmatpush1.msra.mxu0 %v4828
    %v4830 = vand.u32 %v264, 4294901760
    %v4831 = vsub.f32 %v264, %v4830
    %v4832 = vand.u32 %v4831, 4294901760
    %v4833 = vsub.f32 %v4831, %v4832
    %v4834 = vand.u32 %v4833, 4294901760
    %4835 = vmatprep.subr.mxu0 %v4834
    %v4836 = vand.u32 %v263, 4294901760
    %v4837 = vsub.f32 %v263, %v4836
    %v4838 = vand.u32 %v4837, 4294901760
    %v4839 = vsub.f32 %v4837, %v4838
    %v4840 = vand.u32 %v4839, 4294901760
    %4841 = vmatpush1.msra.mxu0 %v4840
    %v4842 = vand.u32 %v277, 4294901760
    %v4843 = vsub.f32 %v277, %v4842
    %v4844 = vand.u32 %v4843, 4294901760
    %v4845 = vsub.f32 %v4843, %v4844
    %v4846 = vand.u32 %v4845, 4294901760
    %4847 = vmatprep.subr.mxu0 %v4846
    %v4848 = vand.u32 %v276, 4294901760
    %v4849 = vsub.f32 %v276, %v4848
    %v4850 = vand.u32 %v4849, 4294901760
    %v4851 = vsub.f32 %v4849, %v4850
    %v4852 = vand.u32 %v4851, 4294901760
    %4853 = vmatpush1.msra.mxu0 %v4852
    %4854 = vmatprep.subr.mxu0 0.0
    %4855 = vmatpush1.msra.mxu0 0.0
    %4856 = vmatprep.subr.mxu0 0.0
    %4857 = vmatpush1.msra.mxu0 0.0
    %4858 = vmatprep.subr.mxu0 0.0
    %4859 = vmatpush1.msra.mxu0 0.0
    %4860 = vmatprep.subr.mxu0 0.0
    %4861 = vmatpush1.msra.mxu0 0.0
    %4862 = vmatprep.subr.mxu0 0.0
    %4863 = vmatpush1.msra.mxu0 0.0
    %4864 = vmatprep.subr.mxu0 0.0
    %4865 = vmatpush1.msra.mxu0 0.0
    %4866 = vmatprep.subr.mxu0 0.0
    %4867 = vmatpush1.msra.mxu0 0.0
    %4868 = vmatprep.subr.mxu0 0.0
    %4869 = vmatpush1.msra.mxu0 0.0
    %4870 = vmatprep.subr.mxu0 0.0
    %4871 = vmatpush1.msra.mxu0 0.0
    %4872 = vmatprep.subr.mxu0 0.0
    %4873 = vmatpush1.msra.mxu0 0.0
    %4874 = vmatprep.subr.mxu0 0.0
    %4875 = vmatpush1.msra.mxu0 0.0
    %4876 = vmatprep.subr.mxu0 0.0
    %4877 = vmatpush1.msra.mxu0 0.0
    %4878 = vmatprep.subr.mxu0 0.0
    %4879 = vmatpush1.msra.mxu0 0.0
    %4880 = vmatprep.subr.mxu0 0.0
    %4881 = vmatpush1.msra.mxu0 0.0
    %4882 = vmatprep.subr.mxu0 0.0
    %4883 = vmatpush1.msra.mxu0 0.0
    %4884 = vmatprep.subr.mxu0 0.0
    %4885 = vmatpush1.msra.mxu0 0.0
    %4886 = vmatprep.mubr.f32.mxu0 0.0
    %v4887 = vand.u32 %v70, 4294901760
    %4888 = vmatmul.mubr.f32.gmra.mrb[0].mxu0 %v4887
    %v4889 = vpop.f32.mrb[0].mxu0
    %v4890 = vadd.f32 %v4658, %v4889
    %v4891 = vpop.f32.mrb[0].mxu0
    %v4892 = vadd.f32 %v4660, %v4891
    %4893 = vdwg.mxu0
    %v4894 = vand.u32 %v82, 4294901760
    %v4895 = vsub.f32 %v82, %v4894
    %4896 = vmatprep.subr.mxu0 %v4895
    %v4897 = vand.u32 %v81, 4294901760
    %v4898 = vsub.f32 %v81, %v4897
    %4899 = vmatpush1.msra.mxu0 %v4898
    %v4900 = vand.u32 %v95, 4294901760
    %v4901 = vsub.f32 %v95, %v4900
    %4902 = vmatprep.subr.mxu0 %v4901
    %v4903 = vand.u32 %v94, 4294901760
    %v4904 = vsub.f32 %v94, %v4903
    %4905 = vmatpush1.msra.mxu0 %v4904
    %v4906 = vand.u32 %v108, 4294901760
    %v4907 = vsub.f32 %v108, %v4906
    %4908 = vmatprep.subr.mxu0 %v4907
    %v4909 = vand.u32 %v107, 4294901760
    %v4910 = vsub.f32 %v107, %v4909
    %4911 = vmatpush1.msra.mxu0 %v4910
    %v4912 = vand.u32 %v121, 4294901760
    %v4913 = vsub.f32 %v121, %v4912
    %4914 = vmatprep.subr.mxu0 %v4913
    %v4915 = vand.u32 %v120, 4294901760
    %v4916 = vsub.f32 %v120, %v4915
    %4917 = vmatpush1.msra.mxu0 %v4916
    %v4918 = vand.u32 %v134, 4294901760
    %v4919 = vsub.f32 %v134, %v4918
    %4920 = vmatprep.subr.mxu0 %v4919
    %v4921 = vand.u32 %v133, 4294901760
    %v4922 = vsub.f32 %v133, %v4921
    %4923 = vmatpush1.msra.mxu0 %v4922
    %v4924 = vand.u32 %v147, 4294901760
    %v4925 = vsub.f32 %v147, %v4924
    %4926 = vmatprep.subr.mxu0 %v4925
    %v4927 = vand.u32 %v146, 4294901760
    %v4928 = vsub.f32 %v146, %v4927
    %4929 = vmatpush1.msra.mxu0 %v4928
    %v4930 = vand.u32 %v160, 4294901760
    %v4931 = vsub.f32 %v160, %v4930
    %4932 = vmatprep.subr.mxu0 %v4931
    %v4933 = vand.u32 %v159, 4294901760
    %v4934 = vsub.f32 %v159, %v4933
    %4935 = vmatpush1.msra.mxu0 %v4934
    %v4936 = vand.u32 %v173, 4294901760
    %v4937 = vsub.f32 %v173, %v4936
    %4938 = vmatprep.subr.mxu0 %v4937
    %v4939 = vand.u32 %v172, 4294901760
    %v4940 = vsub.f32 %v172, %v4939
    %4941 = vmatpush1.msra.mxu0 %v4940
    %v4942 = vand.u32 %v186, 4294901760
    %v4943 = vsub.f32 %v186, %v4942
    %4944 = vmatprep.subr.mxu0 %v4943
    %v4945 = vand.u32 %v185, 4294901760
    %v4946 = vsub.f32 %v185, %v4945
    %4947 = vmatpush1.msra.mxu0 %v4946
    %v4948 = vand.u32 %v199, 4294901760
    %v4949 = vsub.f32 %v199, %v4948
    %4950 = vmatprep.subr.mxu0 %v4949
    %v4951 = vand.u32 %v198, 4294901760
    %v4952 = vsub.f32 %v198, %v4951
    %4953 = vmatpush1.msra.mxu0 %v4952
    %v4954 = vand.u32 %v212, 4294901760
    %v4955 = vsub.f32 %v212, %v4954
    %4956 = vmatprep.subr.mxu0 %v4955
    %v4957 = vand.u32 %v211, 4294901760
    %v4958 = vsub.f32 %v211, %v4957
    %4959 = vmatpush1.msra.mxu0 %v4958
    %v4960 = vand.u32 %v225, 4294901760
    %v4961 = vsub.f32 %v225, %v4960
    %4962 = vmatprep.subr.mxu0 %v4961
    %v4963 = vand.u32 %v224, 4294901760
    %v4964 = vsub.f32 %v224, %v4963
    %4965 = vmatpush1.msra.mxu0 %v4964
    %v4966 = vand.u32 %v238, 4294901760
    %v4967 = vsub.f32 %v238, %v4966
    %4968 = vmatprep.subr.mxu0 %v4967
    %v4969 = vand.u32 %v237, 4294901760
    %v4970 = vsub.f32 %v237, %v4969
    %4971 = vmatpush1.msra.mxu0 %v4970
    %v4972 = vand.u32 %v251, 4294901760
    %v4973 = vsub.f32 %v251, %v4972
    %4974 = vmatprep.subr.mxu0 %v4973
    %v4975 = vand.u32 %v250, 4294901760
    %v4976 = vsub.f32 %v250, %v4975
    %4977 = vmatpush1.msra.mxu0 %v4976
    %v4978 = vand.u32 %v264, 4294901760
    %v4979 = vsub.f32 %v264, %v4978
    %4980 = vmatprep.subr.mxu0 %v4979
    %v4981 = vand.u32 %v263, 4294901760
    %v4982 = vsub.f32 %v263, %v4981
    %4983 = vmatpush1.msra.mxu0 %v4982
    %v4984 = vand.u32 %v277, 4294901760
    %v4985 = vsub.f32 %v277, %v4984
    %4986 = vmatprep.subr.mxu0 %v4985
    %v4987 = vand.u32 %v276, 4294901760
    %v4988 = vsub.f32 %v276, %v4987
    %4989 = vmatpush1.msra.mxu0 %v4988
    %4990 = vmatprep.subr.mxu0 0.0
    %4991 = vmatpush1.msra.mxu0 0.0
    %4992 = vmatprep.subr.mxu0 0.0
    %4993 = vmatpush1.msra.mxu0 0.0
    %4994 = vmatprep.subr.mxu0 0.0
    %4995 = vmatpush1.msra.mxu0 0.0
    %4996 = vmatprep.subr.mxu0 0.0
    %4997 = vmatpush1.msra.mxu0 0.0
    %4998 = vmatprep.subr.mxu0 0.0
    %4999 = vmatpush1.msra.mxu0 0.0
    %5000 = vmatprep.subr.mxu0 0.0
    %5001 = vmatpush1.msra.mxu0 0.0
    %5002 = vmatprep.subr.mxu0 0.0
    %5003 = vmatpush1.msra.mxu0 0.0
    %5004 = vmatprep.subr.mxu0 0.0
    %5005 = vmatpush1.msra.mxu0 0.0
    %5006 = vmatprep.subr.mxu0 0.0
    %5007 = vmatpush1.msra.mxu0 0.0
    %5008 = vmatprep.subr.mxu0 0.0
    %5009 = vmatpush1.msra.mxu0 0.0
    %5010 = vmatprep.subr.mxu0 0.0
    %5011 = vmatpush1.msra.mxu0 0.0
    %5012 = vmatprep.subr.mxu0 0.0
    %5013 = vmatpush1.msra.mxu0 0.0
    %5014 = vmatprep.subr.mxu0 0.0
    %5015 = vmatpush1.msra.mxu0 0.0
    %5016 = vmatprep.subr.mxu0 0.0
    %5017 = vmatpush1.msra.mxu0 0.0
    %5018 = vmatprep.subr.mxu0 0.0
    %5019 = vmatpush1.msra.mxu0 0.0
    %5020 = vmatprep.subr.mxu0 0.0
    %5021 = vmatpush1.msra.mxu0 0.0
    %5022 = vmatprep.mubr.f32.mxu0 0.0
    %v5023 = vand.u32 %v70, 4294901760
    %v5024 = vsub.f32 %v70, %v5023
    %5025 = vmatmul.mubr.f32.gmra.mrb[0].mxu0 %v5024
    %v5026 = vpop.f32.mrb[0].mxu0
    %v5027 = vadd.f32 %v4890, %v5026
    %v5028 = vpop.f32.mrb[0].mxu0
    %v5029 = vadd.f32 %v4892, %v5028
    %5030 = vdwg.mxu0
    %v5031 = vand.u32 %v82, 4294901760
    %5032 = vmatprep.subr.mxu0 %v5031
    %v5033 = vand.u32 %v81, 4294901760
    %5034 = vmatpush1.msra.mxu0 %v5033
    %v5035 = vand.u32 %v95, 4294901760
    %5036 = vmatprep.subr.mxu0 %v5035
    %v5037 = vand.u32 %v94, 4294901760
    %5038 = vmatpush1.msra.mxu0 %v5037
    %v5039 = vand.u32 %v108, 4294901760
    %5040 = vmatprep.subr.mxu0 %v5039
    %v5041 = vand.u32 %v107, 4294901760
    %5042 = vmatpush1.msra.mxu0 %v5041
    %v5043 = vand.u32 %v121, 4294901760
    %5044 = vmatprep.subr.mxu0 %v5043
    %v5045 = vand.u32 %v120, 4294901760
    %5046 = vmatpush1.msra.mxu0 %v5045
    %v5047 = vand.u32 %v134, 4294901760
    %5048 = vmatprep.subr.mxu0 %v5047
    %v5049 = vand.u32 %v133, 4294901760
    %5050 = vmatpush1.msra.mxu0 %v5049
    %v5051 = vand.u32 %v147, 4294901760
    %5052 = vmatprep.subr.mxu0 %v5051
    %v5053 = vand.u32 %v146, 4294901760
    %5054 = vmatpush1.msra.mxu0 %v5053
    %v5055 = vand.u32 %v160, 4294901760
    %5056 = vmatprep.subr.mxu0 %v5055
    %v5057 = vand.u32 %v159, 4294901760
    %5058 = vmatpush1.msra.mxu0 %v5057
    %v5059 = vand.u32 %v173, 4294901760
    %5060 = vmatprep.subr.mxu0 %v5059
    %v5061 = vand.u32 %v172, 4294901760
    %5062 = vmatpush1.msra.mxu0 %v5061
    %v5063 = vand.u32 %v186, 4294901760
    %5064 = vmatprep.subr.mxu0 %v5063
    %v5065 = vand.u32 %v185, 4294901760
    %5066 = vmatpush1.msra.mxu0 %v5065
    %v5067 = vand.u32 %v199, 4294901760
    %5068 = vmatprep.subr.mxu0 %v5067
    %v5069 = vand.u32 %v198, 4294901760
    %5070 = vmatpush1.msra.mxu0 %v5069
    %v5071 = vand.u32 %v212, 4294901760
    %5072 = vmatprep.subr.mxu0 %v5071
    %v5073 = vand.u32 %v211, 4294901760
    %5074 = vmatpush1.msra.mxu0 %v5073
    %v5075 = vand.u32 %v225, 4294901760
    %5076 = vmatprep.subr.mxu0 %v5075
    %v5077 = vand.u32 %v224, 4294901760
    %5078 = vmatpush1.msra.mxu0 %v5077
    %v5079 = vand.u32 %v238, 4294901760
    %5080 = vmatprep.subr.mxu0 %v5079
    %v5081 = vand.u32 %v237, 4294901760
    %5082 = vmatpush1.msra.mxu0 %v5081
    %v5083 = vand.u32 %v251, 4294901760
    %5084 = vmatprep.subr.mxu0 %v5083
    %v5085 = vand.u32 %v250, 4294901760
    %5086 = vmatpush1.msra.mxu0 %v5085
    %v5087 = vand.u32 %v264, 4294901760
    %5088 = vmatprep.subr.mxu0 %v5087
    %v5089 = vand.u32 %v263, 4294901760
    %5090 = vmatpush1.msra.mxu0 %v5089
    %v5091 = vand.u32 %v277, 4294901760
    %5092 = vmatprep.subr.mxu0 %v5091
    %v5093 = vand.u32 %v276, 4294901760
    %5094 = vmatpush1.msra.mxu0 %v5093
    %5095 = vmatprep.subr.mxu0 0.0
    %5096 = vmatpush1.msra.mxu0 0.0
    %5097 = vmatprep.subr.mxu0 0.0
    %5098 = vmatpush1.msra.mxu0 0.0
    %5099 = vmatprep.subr.mxu0 0.0
    %5100 = vmatpush1.msra.mxu0 0.0
    %5101 = vmatprep.subr.mxu0 0.0
    %5102 = vmatpush1.msra.mxu0 0.0
    %5103 = vmatprep.subr.mxu0 0.0
    %5104 = vmatpush1.msra.mxu0 0.0
    %5105 = vmatprep.subr.mxu0 0.0
    %5106 = vmatpush1.msra.mxu0 0.0
    %5107 = vmatprep.subr.mxu0 0.0
    %5108 = vmatpush1.msra.mxu0 0.0
    %5109 = vmatprep.subr.mxu0 0.0
    %5110 = vmatpush1.msra.mxu0 0.0
    %5111 = vmatprep.subr.mxu0 0.0
    %5112 = vmatpush1.msra.mxu0 0.0
    %5113 = vmatprep.subr.mxu0 0.0
    %5114 = vmatpush1.msra.mxu0 0.0
    %5115 = vmatprep.subr.mxu0 0.0
    %5116 = vmatpush1.msra.mxu0 0.0
    %5117 = vmatprep.subr.mxu0 0.0
    %5118 = vmatpush1.msra.mxu0 0.0
    %5119 = vmatprep.subr.mxu0 0.0
    %5120 = vmatpush1.msra.mxu0 0.0
    %5121 = vmatprep.subr.mxu0 0.0
    %5122 = vmatpush1.msra.mxu0 0.0
    %5123 = vmatprep.subr.mxu0 0.0
    %5124 = vmatpush1.msra.mxu0 0.0
    %5125 = vmatprep.subr.mxu0 0.0
    %5126 = vmatpush1.msra.mxu0 0.0
    %5127 = vmatprep.mubr.f32.mxu0 0.0
    %v5128 = vand.u32 %v70, 4294901760
    %v5129 = vsub.f32 %v70, %v5128
    %v5130 = vand.u32 %v5129, 4294901760
    %5131 = vmatmul.mubr.f32.gmra.mrb[0].mxu0 %v5130
    %v5132 = vpop.f32.mrb[0].mxu0
    %v5133 = vadd.f32 %v5027, %v5132
    %v5134 = vpop.f32.mrb[0].mxu0
    %v5135 = vadd.f32 %v5029, %v5134
    %5136 = vdwg.mxu0
    %v5137 = vand.u32 %v82, 4294901760
    %v5138 = vsub.f32 %v82, %v5137
    %v5139 = vand.u32 %v5138, 4294901760
    %5140 = vmatprep.subr.mxu0 %v5139
    %v5141 = vand.u32 %v81, 4294901760
    %v5142 = vsub.f32 %v81, %v5141
    %v5143 = vand.u32 %v5142, 4294901760
    %5144 = vmatpush1.msra.mxu0 %v5143
    %v5145 = vand.u32 %v95, 4294901760
    %v5146 = vsub.f32 %v95, %v5145
    %v5147 = vand.u32 %v5146, 4294901760
    %5148 = vmatprep.subr.mxu0 %v5147
    %v5149 = vand.u32 %v94, 4294901760
    %v5150 = vsub.f32 %v94, %v5149
    %v5151 = vand.u32 %v5150, 4294901760
    %5152 = vmatpush1.msra.mxu0 %v5151
    %v5153 = vand.u32 %v108, 4294901760
    %v5154 = vsub.f32 %v108, %v5153
    %v5155 = vand.u32 %v5154, 4294901760
    %5156 = vmatprep.subr.mxu0 %v5155
    %v5157 = vand.u32 %v107, 4294901760
    %v5158 = vsub.f32 %v107, %v5157
    %v5159 = vand.u32 %v5158, 4294901760
    %5160 = vmatpush1.msra.mxu0 %v5159
    %v5161 = vand.u32 %v121, 4294901760
    %v5162 = vsub.f32 %v121, %v5161
    %v5163 = vand.u32 %v5162, 4294901760
    %5164 = vmatprep.subr.mxu0 %v5163
    %v5165 = vand.u32 %v120, 4294901760
    %v5166 = vsub.f32 %v120, %v5165
    %v5167 = vand.u32 %v5166, 4294901760
    %5168 = vmatpush1.msra.mxu0 %v5167
    %v5169 = vand.u32 %v134, 4294901760
    %v5170 = vsub.f32 %v134, %v5169
    %v5171 = vand.u32 %v5170, 4294901760
    %5172 = vmatprep.subr.mxu0 %v5171
    %v5173 = vand.u32 %v133, 4294901760
    %v5174 = vsub.f32 %v133, %v5173
    %v5175 = vand.u32 %v5174, 4294901760
    %5176 = vmatpush1.msra.mxu0 %v5175
    %v5177 = vand.u32 %v147, 4294901760
    %v5178 = vsub.f32 %v147, %v5177
    %v5179 = vand.u32 %v5178, 4294901760
    %5180 = vmatprep.subr.mxu0 %v5179
    %v5181 = vand.u32 %v146, 4294901760
    %v5182 = vsub.f32 %v146, %v5181
    %v5183 = vand.u32 %v5182, 4294901760
    %5184 = vmatpush1.msra.mxu0 %v5183
    %v5185 = vand.u32 %v160, 4294901760
    %v5186 = vsub.f32 %v160, %v5185
    %v5187 = vand.u32 %v5186, 4294901760
    %5188 = vmatprep.subr.mxu0 %v5187
    %v5189 = vand.u32 %v159, 4294901760
    %v5190 = vsub.f32 %v159, %v5189
    %v5191 = vand.u32 %v5190, 4294901760
    %5192 = vmatpush1.msra.mxu0 %v5191
    %v5193 = vand.u32 %v173, 4294901760
    %v5194 = vsub.f32 %v173, %v5193
    %v5195 = vand.u32 %v5194, 4294901760
    %5196 = vmatprep.subr.mxu0 %v5195
    %v5197 = vand.u32 %v172, 4294901760
    %v5198 = vsub.f32 %v172, %v5197
    %v5199 = vand.u32 %v5198, 4294901760
    %5200 = vmatpush1.msra.mxu0 %v5199
    %v5201 = vand.u32 %v186, 4294901760
    %v5202 = vsub.f32 %v186, %v5201
    %v5203 = vand.u32 %v5202, 4294901760
    %5204 = vmatprep.subr.mxu0 %v5203
    %v5205 = vand.u32 %v185, 4294901760
    %v5206 = vsub.f32 %v185, %v5205
    %v5207 = vand.u32 %v5206, 4294901760
    %5208 = vmatpush1.msra.mxu0 %v5207
    %v5209 = vand.u32 %v199, 4294901760
    %v5210 = vsub.f32 %v199, %v5209
    %v5211 = vand.u32 %v5210, 4294901760
    %5212 = vmatprep.subr.mxu0 %v5211
    %v5213 = vand.u32 %v198, 4294901760
    %v5214 = vsub.f32 %v198, %v5213
    %v5215 = vand.u32 %v5214, 4294901760
    %5216 = vmatpush1.msra.mxu0 %v5215
    %v5217 = vand.u32 %v212, 4294901760
    %v5218 = vsub.f32 %v212, %v5217
    %v5219 = vand.u32 %v5218, 4294901760
    %5220 = vmatprep.subr.mxu0 %v5219
    %v5221 = vand.u32 %v211, 4294901760
    %v5222 = vsub.f32 %v211, %v5221
    %v5223 = vand.u32 %v5222, 4294901760
    %5224 = vmatpush1.msra.mxu0 %v5223
    %v5225 = vand.u32 %v225, 4294901760
    %v5226 = vsub.f32 %v225, %v5225
    %v5227 = vand.u32 %v5226, 4294901760
    %5228 = vmatprep.subr.mxu0 %v5227
    %v5229 = vand.u32 %v224, 4294901760
    %v5230 = vsub.f32 %v224, %v5229
    %v5231 = vand.u32 %v5230, 4294901760
    %5232 = vmatpush1.msra.mxu0 %v5231
    %v5233 = vand.u32 %v238, 4294901760
    %v5234 = vsub.f32 %v238, %v5233
    %v5235 = vand.u32 %v5234, 4294901760
    %5236 = vmatprep.subr.mxu0 %v5235
    %v5237 = vand.u32 %v237, 4294901760
    %v5238 = vsub.f32 %v237, %v5237
    %v5239 = vand.u32 %v5238, 4294901760
    %5240 = vmatpush1.msra.mxu0 %v5239
    %v5241 = vand.u32 %v251, 4294901760
    %v5242 = vsub.f32 %v251, %v5241
    %v5243 = vand.u32 %v5242, 4294901760
    %5244 = vmatprep.subr.mxu0 %v5243
    %v5245 = vand.u32 %v250, 4294901760
    %v5246 = vsub.f32 %v250, %v5245
    %v5247 = vand.u32 %v5246, 4294901760
    %5248 = vmatpush1.msra.mxu0 %v5247
    %v5249 = vand.u32 %v264, 4294901760
    %v5250 = vsub.f32 %v264, %v5249
    %v5251 = vand.u32 %v5250, 4294901760
    %5252 = vmatprep.subr.mxu0 %v5251
    %v5253 = vand.u32 %v263, 4294901760
    %v5254 = vsub.f32 %v263, %v5253
    %v5255 = vand.u32 %v5254, 4294901760
    %5256 = vmatpush1.msra.mxu0 %v5255
    %v5257 = vand.u32 %v277, 4294901760
    %v5258 = vsub.f32 %v277, %v5257
    %v5259 = vand.u32 %v5258, 4294901760
    %5260 = vmatprep.subr.mxu0 %v5259
    %v5261 = vand.u32 %v276, 4294901760
    %v5262 = vsub.f32 %v276, %v5261
    %v5263 = vand.u32 %v5262, 4294901760
    %5264 = vmatpush1.msra.mxu0 %v5263
    %5265 = vmatprep.subr.mxu0 0.0
    %5266 = vmatpush1.msra.mxu0 0.0
    %5267 = vmatprep.subr.mxu0 0.0
    %5268 = vmatpush1.msra.mxu0 0.0
    %5269 = vmatprep.subr.mxu0 0.0
    %5270 = vmatpush1.msra.mxu0 0.0
    %5271 = vmatprep.subr.mxu0 0.0
    %5272 = vmatpush1.msra.mxu0 0.0
    %5273 = vmatprep.subr.mxu0 0.0
    %5274 = vmatpush1.msra.mxu0 0.0
    %5275 = vmatprep.subr.mxu0 0.0
    %5276 = vmatpush1.msra.mxu0 0.0
    %5277 = vmatprep.subr.mxu0 0.0
    %5278 = vmatpush1.msra.mxu0 0.0
    %5279 = vmatprep.subr.mxu0 0.0
    %5280 = vmatpush1.msra.mxu0 0.0
    %5281 = vmatprep.subr.mxu0 0.0
    %5282 = vmatpush1.msra.mxu0 0.0
    %5283 = vmatprep.subr.mxu0 0.0
    %5284 = vmatpush1.msra.mxu0 0.0
    %5285 = vmatprep.subr.mxu0 0.0
    %5286 = vmatpush1.msra.mxu0 0.0
    %5287 = vmatprep.subr.mxu0 0.0
    %5288 = vmatpush1.msra.mxu0 0.0
    %5289 = vmatprep.subr.mxu0 0.0
    %5290 = vmatpush1.msra.mxu0 0.0
    %5291 = vmatprep.subr.mxu0 0.0
    %5292 = vmatpush1.msra.mxu0 0.0
    %5293 = vmatprep.subr.mxu0 0.0
    %5294 = vmatpush1.msra.mxu0 0.0
    %5295 = vmatprep.subr.mxu0 0.0
    %5296 = vmatpush1.msra.mxu0 0.0
    %5297 = vmatprep.mubr.f32.mxu0 0.0
    %v5298 = vand.u32 %v70, 4294901760
    %5299 = vmatmul.mubr.f32.gmra.mrb[0].mxu0 %v5298
    %v5300 = vpop.f32.mrb[0].mxu0
    %v5301 = vadd.f32 %v5133, %v5300
    %v5302 = vpop.f32.mrb[0].mxu0
    %v5303 = vadd.f32 %v5135, %v5302
    %5304 = vdwg.mxu0
    %v5305 = vand.u32 %v82, 4294901760
    %5306 = vmatprep.subr.mxu0 %v5305
    %v5307 = vand.u32 %v81, 4294901760
    %5308 = vmatpush1.msra.mxu0 %v5307
    %v5309 = vand.u32 %v95, 4294901760
    %5310 = vmatprep.subr.mxu0 %v5309
    %v5311 = vand.u32 %v94, 4294901760
    %5312 = vmatpush1.msra.mxu0 %v5311
    %v5313 = vand.u32 %v108, 4294901760
    %5314 = vmatprep.subr.mxu0 %v5313
    %v5315 = vand.u32 %v107, 4294901760
    %5316 = vmatpush1.msra.mxu0 %v5315
    %v5317 = vand.u32 %v121, 4294901760
    %5318 = vmatprep.subr.mxu0 %v5317
    %v5319 = vand.u32 %v120, 4294901760
    %5320 = vmatpush1.msra.mxu0 %v5319
    %v5321 = vand.u32 %v134, 4294901760
    %5322 = vmatprep.subr.mxu0 %v5321
    %v5323 = vand.u32 %v133, 4294901760
    %5324 = vmatpush1.msra.mxu0 %v5323
    %v5325 = vand.u32 %v147, 4294901760
    %5326 = vmatprep.subr.mxu0 %v5325
    %v5327 = vand.u32 %v146, 4294901760
    %5328 = vmatpush1.msra.mxu0 %v5327
    %v5329 = vand.u32 %v160, 4294901760
    %5330 = vmatprep.subr.mxu0 %v5329
    %v5331 = vand.u32 %v159, 4294901760
    %5332 = vmatpush1.msra.mxu0 %v5331
    %v5333 = vand.u32 %v173, 4294901760
    %5334 = vmatprep.subr.mxu0 %v5333
    %v5335 = vand.u32 %v172, 4294901760
    %5336 = vmatpush1.msra.mxu0 %v5335
    %v5337 = vand.u32 %v186, 4294901760
    %5338 = vmatprep.subr.mxu0 %v5337
    %v5339 = vand.u32 %v185, 4294901760
    %5340 = vmatpush1.msra.mxu0 %v5339
    %v5341 = vand.u32 %v199, 4294901760
    %5342 = vmatprep.subr.mxu0 %v5341
    %v5343 = vand.u32 %v198, 4294901760
    %5344 = vmatpush1.msra.mxu0 %v5343
    %v5345 = vand.u32 %v212, 4294901760
    %5346 = vmatprep.subr.mxu0 %v5345
    %v5347 = vand.u32 %v211, 4294901760
    %5348 = vmatpush1.msra.mxu0 %v5347
    %v5349 = vand.u32 %v225, 4294901760
    %5350 = vmatprep.subr.mxu0 %v5349
    %v5351 = vand.u32 %v224, 4294901760
    %5352 = vmatpush1.msra.mxu0 %v5351
    %v5353 = vand.u32 %v238, 4294901760
    %5354 = vmatprep.subr.mxu0 %v5353
    %v5355 = vand.u32 %v237, 4294901760
    %5356 = vmatpush1.msra.mxu0 %v5355
    %v5357 = vand.u32 %v251, 4294901760
    %5358 = vmatprep.subr.mxu0 %v5357
    %v5359 = vand.u32 %v250, 4294901760
    %5360 = vmatpush1.msra.mxu0 %v5359
    %v5361 = vand.u32 %v264, 4294901760
    %5362 = vmatprep.subr.mxu0 %v5361
    %v5363 = vand.u32 %v263, 4294901760
    %5364 = vmatpush1.msra.mxu0 %v5363
    %v5365 = vand.u32 %v277, 4294901760
    %5366 = vmatprep.subr.mxu0 %v5365
    %v5367 = vand.u32 %v276, 4294901760
    %5368 = vmatpush1.msra.mxu0 %v5367
    %5369 = vmatprep.subr.mxu0 0.0
    %5370 = vmatpush1.msra.mxu0 0.0
    %5371 = vmatprep.subr.mxu0 0.0
    %5372 = vmatpush1.msra.mxu0 0.0
    %5373 = vmatprep.subr.mxu0 0.0
    %5374 = vmatpush1.msra.mxu0 0.0
    %5375 = vmatprep.subr.mxu0 0.0
    %5376 = vmatpush1.msra.mxu0 0.0
    %5377 = vmatprep.subr.mxu0 0.0
    %5378 = vmatpush1.msra.mxu0 0.0
    %5379 = vmatprep.subr.mxu0 0.0
    %5380 = vmatpush1.msra.mxu0 0.0
    %5381 = vmatprep.subr.mxu0 0.0
    %5382 = vmatpush1.msra.mxu0 0.0
    %5383 = vmatprep.subr.mxu0 0.0
    %5384 = vmatpush1.msra.mxu0 0.0
    %5385 = vmatprep.subr.mxu0 0.0
    %5386 = vmatpush1.msra.mxu0 0.0
    %5387 = vmatprep.subr.mxu0 0.0
    %5388 = vmatpush1.msra.mxu0 0.0
    %5389 = vmatprep.subr.mxu0 0.0
    %5390 = vmatpush1.msra.mxu0 0.0
    %5391 = vmatprep.subr.mxu0 0.0
    %5392 = vmatpush1.msra.mxu0 0.0
    %5393 = vmatprep.subr.mxu0 0.0
    %5394 = vmatpush1.msra.mxu0 0.0
    %5395 = vmatprep.subr.mxu0 0.0
    %5396 = vmatpush1.msra.mxu0 0.0
    %5397 = vmatprep.subr.mxu0 0.0
    %5398 = vmatpush1.msra.mxu0 0.0
    %5399 = vmatprep.subr.mxu0 0.0
    %5400 = vmatpush1.msra.mxu0 0.0
    %5401 = vmatprep.mubr.f32.mxu0 0.0
    %v5402 = vand.u32 %v70, 4294901760
    %5403 = vmatmul.mubr.f32.gmra.mrb[0].mxu0 %v5402
    %v5404 = vpop.f32.mrb[0].mxu0
    %v5405 = vadd.f32 %v5301, %v5404
    %v5406 = vpop.f32.mrb[0].mxu0
    %v5407 = vadd.f32 %v5303, %v5406
    %5408 = vdwg.mxu0
    %5409 = vmatprep.subr.mxu0 0.0
    %v5410 = vand.u32 %v83, 4294901760
    %5411 = vmatpush1.msra.mxu0 %v5410
    %5412 = vmatprep.subr.mxu0 0.0
    %v5413 = vand.u32 %v96, 4294901760
    %5414 = vmatpush1.msra.mxu0 %v5413
    %5415 = vmatprep.subr.mxu0 0.0
    %v5416 = vand.u32 %v109, 4294901760
    %5417 = vmatpush1.msra.mxu0 %v5416
    %5418 = vmatprep.subr.mxu0 0.0
    %v5419 = vand.u32 %v122, 4294901760
    %5420 = vmatpush1.msra.mxu0 %v5419
    %5421 = vmatprep.subr.mxu0 0.0
    %v5422 = vand.u32 %v135, 4294901760
    %5423 = vmatpush1.msra.mxu0 %v5422
    %5424 = vmatprep.subr.mxu0 0.0
    %v5425 = vand.u32 %v148, 4294901760
    %5426 = vmatpush1.msra.mxu0 %v5425
    %5427 = vmatprep.subr.mxu0 0.0
    %v5428 = vand.u32 %v161, 4294901760
    %5429 = vmatpush1.msra.mxu0 %v5428
    %5430 = vmatprep.subr.mxu0 0.0
    %v5431 = vand.u32 %v174, 4294901760
    %5432 = vmatpush1.msra.mxu0 %v5431
    %5433 = vmatprep.subr.mxu0 0.0
    %v5434 = vand.u32 %v187, 4294901760
    %5435 = vmatpush1.msra.mxu0 %v5434
    %5436 = vmatprep.subr.mxu0 0.0
    %v5437 = vand.u32 %v200, 4294901760
    %5438 = vmatpush1.msra.mxu0 %v5437
    %5439 = vmatprep.subr.mxu0 0.0
    %v5440 = vand.u32 %v213, 4294901760
    %5441 = vmatpush1.msra.mxu0 %v5440
    %5442 = vmatprep.subr.mxu0 0.0
    %v5443 = vand.u32 %v226, 4294901760
    %5444 = vmatpush1.msra.mxu0 %v5443
    %5445 = vmatprep.subr.mxu0 0.0
    %v5446 = vand.u32 %v239, 4294901760
    %5447 = vmatpush1.msra.mxu0 %v5446
    %5448 = vmatprep.subr.mxu0 0.0
    %v5449 = vand.u32 %v252, 4294901760
    %5450 = vmatpush1.msra.mxu0 %v5449
    %5451 = vmatprep.subr.mxu0 0.0
    %v5452 = vand.u32 %v265, 4294901760
    %5453 = vmatpush1.msra.mxu0 %v5452
    %5454 = vmatprep.subr.mxu0 0.0
    %v5455 = vand.u32 %v278, 4294901760
    %5456 = vmatpush1.msra.mxu0 %v5455
    %5457 = vmatprep.subr.mxu0 0.0
    %5458 = vmatpush1.msra.mxu0 0.0
    %5459 = vmatprep.subr.mxu0 0.0
    %5460 = vmatpush1.msra.mxu0 0.0
    %5461 = vmatprep.subr.mxu0 0.0
    %5462 = vmatpush1.msra.mxu0 0.0
    %5463 = vmatprep.subr.mxu0 0.0
    %5464 = vmatpush1.msra.mxu0 0.0
    %5465 = vmatprep.subr.mxu0 0.0
    %5466 = vmatpush1.msra.mxu0 0.0
    %5467 = vmatprep.subr.mxu0 0.0
    %5468 = vmatpush1.msra.mxu0 0.0
    %5469 = vmatprep.subr.mxu0 0.0
    %5470 = vmatpush1.msra.mxu0 0.0
    %5471 = vmatprep.subr.mxu0 0.0
    %5472 = vmatpush1.msra.mxu0 0.0
    %5473 = vmatprep.subr.mxu0 0.0
    %5474 = vmatpush1.msra.mxu0 0.0
    %5475 = vmatprep.subr.mxu0 0.0
    %5476 = vmatpush1.msra.mxu0 0.0
    %5477 = vmatprep.subr.mxu0 0.0
    %5478 = vmatpush1.msra.mxu0 0.0
    %5479 = vmatprep.subr.mxu0 0.0
    %5480 = vmatpush1.msra.mxu0 0.0
    %5481 = vmatprep.subr.mxu0 0.0
    %5482 = vmatpush1.msra.mxu0 0.0
    %5483 = vmatprep.subr.mxu0 0.0
    %5484 = vmatpush1.msra.mxu0 0.0
    %5485 = vmatprep.subr.mxu0 0.0
    %5486 = vmatpush1.msra.mxu0 0.0
    %5487 = vmatprep.subr.mxu0 0.0
    %5488 = vmatpush1.msra.mxu0 0.0
    %5489 = vmatprep.mubr.f32.mxu0 0.0
    %v5490 = vand.u32 %v70, 4294901760
    %v5491 = vsub.f32 %v70, %v5490
    %v5492 = vand.u32 %v5491, 4294901760
    %v5493 = vsub.f32 %v5491, %v5492
    %v5494 = vand.u32 %v5493, 4294901760
    %5495 = vmatmul.mubr.f32.gmra.mrb[0].mxu0 %v5494
    %v5496 = vpop.f32.mrb[0].mxu0
    %v5497 = vadd.f32 0.0, %v5496
    %v5498 = vpop.f32.mrb[0].mxu0
    %5499 = vdwg.mxu0
    %5500 = vmatprep.subr.mxu0 0.0
    %v5501 = vand.u32 %v83, 4294901760
    %v5502 = vsub.f32 %v83, %v5501
    %v5503 = vand.u32 %v5502, 4294901760
    %v5504 = vsub.f32 %v5502, %v5503
    %v5505 = vand.u32 %v5504, 4294901760
    %5506 = vmatpush1.msra.mxu0 %v5505
    %5507 = vmatprep.subr.mxu0 0.0
    %v5508 = vand.u32 %v96, 4294901760
    %v5509 = vsub.f32 %v96, %v5508
    %v5510 = vand.u32 %v5509, 4294901760
    %v5511 = vsub.f32 %v5509, %v5510
    %v5512 = vand.u32 %v5511, 4294901760
    %5513 = vmatpush1.msra.mxu0 %v5512
    %5514 = vmatprep.subr.mxu0 0.0
    %v5515 = vand.u32 %v109, 4294901760
    %v5516 = vsub.f32 %v109, %v5515
    %v5517 = vand.u32 %v5516, 4294901760
    %v5518 = vsub.f32 %v5516, %v5517
    %v5519 = vand.u32 %v5518, 4294901760
    %5520 = vmatpush1.msra.mxu0 %v5519
    %5521 = vmatprep.subr.mxu0 0.0
    %v5522 = vand.u32 %v122, 4294901760
    %v5523 = vsub.f32 %v122, %v5522
    %v5524 = vand.u32 %v5523, 4294901760
    %v5525 = vsub.f32 %v5523, %v5524
    %v5526 = vand.u32 %v5525, 4294901760
    %5527 = vmatpush1.msra.mxu0 %v5526
    %5528 = vmatprep.subr.mxu0 0.0
    %v5529 = vand.u32 %v135, 4294901760
    %v5530 = vsub.f32 %v135, %v5529
    %v5531 = vand.u32 %v5530, 4294901760
    %v5532 = vsub.f32 %v5530, %v5531
    %v5533 = vand.u32 %v5532, 4294901760
    %5534 = vmatpush1.msra.mxu0 %v5533
    %5535 = vmatprep.subr.mxu0 0.0
    %v5536 = vand.u32 %v148, 4294901760
    %v5537 = vsub.f32 %v148, %v5536
    %v5538 = vand.u32 %v5537, 4294901760
    %v5539 = vsub.f32 %v5537, %v5538
    %v5540 = vand.u32 %v5539, 4294901760
    %5541 = vmatpush1.msra.mxu0 %v5540
    %5542 = vmatprep.subr.mxu0 0.0
    %v5543 = vand.u32 %v161, 4294901760
    %v5544 = vsub.f32 %v161, %v5543
    %v5545 = vand.u32 %v5544, 4294901760
    %v5546 = vsub.f32 %v5544, %v5545
    %v5547 = vand.u32 %v5546, 4294901760
    %5548 = vmatpush1.msra.mxu0 %v5547
    %5549 = vmatprep.subr.mxu0 0.0
    %v5550 = vand.u32 %v174, 4294901760
    %v5551 = vsub.f32 %v174, %v5550
    %v5552 = vand.u32 %v5551, 4294901760
    %v5553 = vsub.f32 %v5551, %v5552
    %v5554 = vand.u32 %v5553, 4294901760
    %5555 = vmatpush1.msra.mxu0 %v5554
    %5556 = vmatprep.subr.mxu0 0.0
    %v5557 = vand.u32 %v187, 4294901760
    %v5558 = vsub.f32 %v187, %v5557
    %v5559 = vand.u32 %v5558, 4294901760
    %v5560 = vsub.f32 %v5558, %v5559
    %v5561 = vand.u32 %v5560, 4294901760
    %5562 = vmatpush1.msra.mxu0 %v5561
    %5563 = vmatprep.subr.mxu0 0.0
    %v5564 = vand.u32 %v200, 4294901760
    %v5565 = vsub.f32 %v200, %v5564
    %v5566 = vand.u32 %v5565, 4294901760
    %v5567 = vsub.f32 %v5565, %v5566
    %v5568 = vand.u32 %v5567, 4294901760
    %5569 = vmatpush1.msra.mxu0 %v5568
    %5570 = vmatprep.subr.mxu0 0.0
    %v5571 = vand.u32 %v213, 4294901760
    %v5572 = vsub.f32 %v213, %v5571
    %v5573 = vand.u32 %v5572, 4294901760
    %v5574 = vsub.f32 %v5572, %v5573
    %v5575 = vand.u32 %v5574, 4294901760
    %5576 = vmatpush1.msra.mxu0 %v5575
    %5577 = vmatprep.subr.mxu0 0.0
    %v5578 = vand.u32 %v226, 4294901760
    %v5579 = vsub.f32 %v226, %v5578
    %v5580 = vand.u32 %v5579, 4294901760
    %v5581 = vsub.f32 %v5579, %v5580
    %v5582 = vand.u32 %v5581, 4294901760
    %5583 = vmatpush1.msra.mxu0 %v5582
    %5584 = vmatprep.subr.mxu0 0.0
    %v5585 = vand.u32 %v239, 4294901760
    %v5586 = vsub.f32 %v239, %v5585
    %v5587 = vand.u32 %v5586, 4294901760
    %v5588 = vsub.f32 %v5586, %v5587
    %v5589 = vand.u32 %v5588, 4294901760
    %5590 = vmatpush1.msra.mxu0 %v5589
    %5591 = vmatprep.subr.mxu0 0.0
    %v5592 = vand.u32 %v252, 4294901760
    %v5593 = vsub.f32 %v252, %v5592
    %v5594 = vand.u32 %v5593, 4294901760
    %v5595 = vsub.f32 %v5593, %v5594
    %v5596 = vand.u32 %v5595, 4294901760
    %5597 = vmatpush1.msra.mxu0 %v5596
    %5598 = vmatprep.subr.mxu0 0.0
    %v5599 = vand.u32 %v265, 4294901760
    %v5600 = vsub.f32 %v265, %v5599
    %v5601 = vand.u32 %v5600, 4294901760
    %v5602 = vsub.f32 %v5600, %v5601
    %v5603 = vand.u32 %v5602, 4294901760
    %5604 = vmatpush1.msra.mxu0 %v5603
    %5605 = vmatprep.subr.mxu0 0.0
    %v5606 = vand.u32 %v278, 4294901760
    %v5607 = vsub.f32 %v278, %v5606
    %v5608 = vand.u32 %v5607, 4294901760
    %v5609 = vsub.f32 %v5607, %v5608
    %v5610 = vand.u32 %v5609, 4294901760
    %5611 = vmatpush1.msra.mxu0 %v5610
    %5612 = vmatprep.subr.mxu0 0.0
    %5613 = vmatpush1.msra.mxu0 0.0
    %5614 = vmatprep.subr.mxu0 0.0
    %5615 = vmatpush1.msra.mxu0 0.0
    %5616 = vmatprep.subr.mxu0 0.0
    %5617 = vmatpush1.msra.mxu0 0.0
    %5618 = vmatprep.subr.mxu0 0.0
    %5619 = vmatpush1.msra.mxu0 0.0
    %5620 = vmatprep.subr.mxu0 0.0
    %5621 = vmatpush1.msra.mxu0 0.0
    %5622 = vmatprep.subr.mxu0 0.0
    %5623 = vmatpush1.msra.mxu0 0.0
    %5624 = vmatprep.subr.mxu0 0.0
    %5625 = vmatpush1.msra.mxu0 0.0
    %5626 = vmatprep.subr.mxu0 0.0
    %5627 = vmatpush1.msra.mxu0 0.0
    %5628 = vmatprep.subr.mxu0 0.0
    %5629 = vmatpush1.msra.mxu0 0.0
    %5630 = vmatprep.subr.mxu0 0.0
    %5631 = vmatpush1.msra.mxu0 0.0
    %5632 = vmatprep.subr.mxu0 0.0
    %5633 = vmatpush1.msra.mxu0 0.0
    %5634 = vmatprep.subr.mxu0 0.0
    %5635 = vmatpush1.msra.mxu0 0.0
    %5636 = vmatprep.subr.mxu0 0.0
    %5637 = vmatpush1.msra.mxu0 0.0
    %5638 = vmatprep.subr.mxu0 0.0
    %5639 = vmatpush1.msra.mxu0 0.0
    %5640 = vmatprep.subr.mxu0 0.0
    %5641 = vmatpush1.msra.mxu0 0.0
    %5642 = vmatprep.subr.mxu0 0.0
    %5643 = vmatpush1.msra.mxu0 0.0
    %5644 = vmatprep.mubr.f32.mxu0 0.0
    %v5645 = vand.u32 %v70, 4294901760
    %5646 = vmatmul.mubr.f32.gmra.mrb[0].mxu0 %v5645
    %v5647 = vpop.f32.mrb[0].mxu0
    %v5648 = vadd.f32 %v5497, %v5647
    %v5649 = vpop.f32.mrb[0].mxu0
    %5650 = vdwg.mxu0
    %5651 = vmatprep.subr.mxu0 0.0
    %v5652 = vand.u32 %v83, 4294901760
    %v5653 = vsub.f32 %v83, %v5652
    %5654 = vmatpush1.msra.mxu0 %v5653
    %5655 = vmatprep.subr.mxu0 0.0
    %v5656 = vand.u32 %v96, 4294901760
    %v5657 = vsub.f32 %v96, %v5656
    %5658 = vmatpush1.msra.mxu0 %v5657
    %5659 = vmatprep.subr.mxu0 0.0
    %v5660 = vand.u32 %v109, 4294901760
    %v5661 = vsub.f32 %v109, %v5660
    %5662 = vmatpush1.msra.mxu0 %v5661
    %5663 = vmatprep.subr.mxu0 0.0
    %v5664 = vand.u32 %v122, 4294901760
    %v5665 = vsub.f32 %v122, %v5664
    %5666 = vmatpush1.msra.mxu0 %v5665
    %5667 = vmatprep.subr.mxu0 0.0
    %v5668 = vand.u32 %v135, 4294901760
    %v5669 = vsub.f32 %v135, %v5668
    %5670 = vmatpush1.msra.mxu0 %v5669
    %5671 = vmatprep.subr.mxu0 0.0
    %v5672 = vand.u32 %v148, 4294901760
    %v5673 = vsub.f32 %v148, %v5672
    %5674 = vmatpush1.msra.mxu0 %v5673
    %5675 = vmatprep.subr.mxu0 0.0
    %v5676 = vand.u32 %v161, 4294901760
    %v5677 = vsub.f32 %v161, %v5676
    %5678 = vmatpush1.msra.mxu0 %v5677
    %5679 = vmatprep.subr.mxu0 0.0
    %v5680 = vand.u32 %v174, 4294901760
    %v5681 = vsub.f32 %v174, %v5680
    %5682 = vmatpush1.msra.mxu0 %v5681
    %5683 = vmatprep.subr.mxu0 0.0
    %v5684 = vand.u32 %v187, 4294901760
    %v5685 = vsub.f32 %v187, %v5684
    %5686 = vmatpush1.msra.mxu0 %v5685
    %5687 = vmatprep.subr.mxu0 0.0
    %v5688 = vand.u32 %v200, 4294901760
    %v5689 = vsub.f32 %v200, %v5688
    %5690 = vmatpush1.msra.mxu0 %v5689
    %5691 = vmatprep.subr.mxu0 0.0
    %v5692 = vand.u32 %v213, 4294901760
    %v5693 = vsub.f32 %v213, %v5692
    %5694 = vmatpush1.msra.mxu0 %v5693
    %5695 = vmatprep.subr.mxu0 0.0
    %v5696 = vand.u32 %v226, 4294901760
    %v5697 = vsub.f32 %v226, %v5696
    %5698 = vmatpush1.msra.mxu0 %v5697
    %5699 = vmatprep.subr.mxu0 0.0
    %v5700 = vand.u32 %v239, 4294901760
    %v5701 = vsub.f32 %v239, %v5700
    %5702 = vmatpush1.msra.mxu0 %v5701
    %5703 = vmatprep.subr.mxu0 0.0
    %v5704 = vand.u32 %v252, 4294901760
    %v5705 = vsub.f32 %v252, %v5704
    %5706 = vmatpush1.msra.mxu0 %v5705
    %5707 = vmatprep.subr.mxu0 0.0
    %v5708 = vand.u32 %v265, 4294901760
    %v5709 = vsub.f32 %v265, %v5708
    %5710 = vmatpush1.msra.mxu0 %v5709
    %5711 = vmatprep.subr.mxu0 0.0
    %v5712 = vand.u32 %v278, 4294901760
    %v5713 = vsub.f32 %v278, %v5712
    %5714 = vmatpush1.msra.mxu0 %v5713
    %5715 = vmatprep.subr.mxu0 0.0
    %5716 = vmatpush1.msra.mxu0 0.0
    %5717 = vmatprep.subr.mxu0 0.0
    %5718 = vmatpush1.msra.mxu0 0.0
    %5719 = vmatprep.subr.mxu0 0.0
    %5720 = vmatpush1.msra.mxu0 0.0
    %5721 = vmatprep.subr.mxu0 0.0
    %5722 = vmatpush1.msra.mxu0 0.0
    %5723 = vmatprep.subr.mxu0 0.0
    %5724 = vmatpush1.msra.mxu0 0.0
    %5725 = vmatprep.subr.mxu0 0.0
    %5726 = vmatpush1.msra.mxu0 0.0
    %5727 = vmatprep.subr.mxu0 0.0
    %5728 = vmatpush1.msra.mxu0 0.0
    %5729 = vmatprep.subr.mxu0 0.0
    %5730 = vmatpush1.msra.mxu0 0.0
    %5731 = vmatprep.subr.mxu0 0.0
    %5732 = vmatpush1.msra.mxu0 0.0
    %5733 = vmatprep.subr.mxu0 0.0
    %5734 = vmatpush1.msra.mxu0 0.0
    %5735 = vmatprep.subr.mxu0 0.0
    %5736 = vmatpush1.msra.mxu0 0.0
    %5737 = vmatprep.subr.mxu0 0.0
    %5738 = vmatpush1.msra.mxu0 0.0
    %5739 = vmatprep.subr.mxu0 0.0
    %5740 = vmatpush1.msra.mxu0 0.0
    %5741 = vmatprep.subr.mxu0 0.0
    %5742 = vmatpush1.msra.mxu0 0.0
    %5743 = vmatprep.subr.mxu0 0.0
    %5744 = vmatpush1.msra.mxu0 0.0
    %5745 = vmatprep.subr.mxu0 0.0
    %5746 = vmatpush1.msra.mxu0 0.0
    %5747 = vmatprep.mubr.f32.mxu0 0.0
    %v5748 = vand.u32 %v70, 4294901760
    %v5749 = vsub.f32 %v70, %v5748
    %5750 = vmatmul.mubr.f32.gmra.mrb[0].mxu0 %v5749
    %v5751 = vpop.f32.mrb[0].mxu0
    %v5752 = vadd.f32 %v5648, %v5751
    %v5753 = vpop.f32.mrb[0].mxu0
    %5754 = vdwg.mxu0
    %5755 = vmatprep.subr.mxu0 0.0
    %v5756 = vand.u32 %v83, 4294901760
    %5757 = vmatpush1.msra.mxu0 %v5756
    %5758 = vmatprep.subr.mxu0 0.0
    %v5759 = vand.u32 %v96, 4294901760
    %5760 = vmatpush1.msra.mxu0 %v5759
    %5761 = vmatprep.subr.mxu0 0.0
    %v5762 = vand.u32 %v109, 4294901760
    %5763 = vmatpush1.msra.mxu0 %v5762
    %5764 = vmatprep.subr.mxu0 0.0
    %v5765 = vand.u32 %v122, 4294901760
    %5766 = vmatpush1.msra.mxu0 %v5765
    %5767 = vmatprep.subr.mxu0 0.0
    %v5768 = vand.u32 %v135, 4294901760
    %5769 = vmatpush1.msra.mxu0 %v5768
    %5770 = vmatprep.subr.mxu0 0.0
    %v5771 = vand.u32 %v148, 4294901760
    %5772 = vmatpush1.msra.mxu0 %v5771
    %5773 = vmatprep.subr.mxu0 0.0
    %v5774 = vand.u32 %v161, 4294901760
    %5775 = vmatpush1.msra.mxu0 %v5774
    %5776 = vmatprep.subr.mxu0 0.0
    %v5777 = vand.u32 %v174, 4294901760
    %5778 = vmatpush1.msra.mxu0 %v5777
    %5779 = vmatprep.subr.mxu0 0.0
    %v5780 = vand.u32 %v187, 4294901760
    %5781 = vmatpush1.msra.mxu0 %v5780
    %5782 = vmatprep.subr.mxu0 0.0
    %v5783 = vand.u32 %v200, 4294901760
    %5784 = vmatpush1.msra.mxu0 %v5783
    %5785 = vmatprep.subr.mxu0 0.0
    %v5786 = vand.u32 %v213, 4294901760
    %5787 = vmatpush1.msra.mxu0 %v5786
    %5788 = vmatprep.subr.mxu0 0.0
    %v5789 = vand.u32 %v226, 4294901760
    %5790 = vmatpush1.msra.mxu0 %v5789
    %5791 = vmatprep.subr.mxu0 0.0
    %v5792 = vand.u32 %v239, 4294901760
    %5793 = vmatpush1.msra.mxu0 %v5792
    %5794 = vmatprep.subr.mxu0 0.0
    %v5795 = vand.u32 %v252, 4294901760
    %5796 = vmatpush1.msra.mxu0 %v5795
    %5797 = vmatprep.subr.mxu0 0.0
    %v5798 = vand.u32 %v265, 4294901760
    %5799 = vmatpush1.msra.mxu0 %v5798
    %5800 = vmatprep.subr.mxu0 0.0
    %v5801 = vand.u32 %v278, 4294901760
    %5802 = vmatpush1.msra.mxu0 %v5801
    %5803 = vmatprep.subr.mxu0 0.0
    %5804 = vmatpush1.msra.mxu0 0.0
    %5805 = vmatprep.subr.mxu0 0.0
    %5806 = vmatpush1.msra.mxu0 0.0
    %5807 = vmatprep.subr.mxu0 0.0
    %5808 = vmatpush1.msra.mxu0 0.0
    %5809 = vmatprep.subr.mxu0 0.0
    %5810 = vmatpush1.msra.mxu0 0.0
    %5811 = vmatprep.subr.mxu0 0.0
    %5812 = vmatpush1.msra.mxu0 0.0
    %5813 = vmatprep.subr.mxu0 0.0
    %5814 = vmatpush1.msra.mxu0 0.0
    %5815 = vmatprep.subr.mxu0 0.0
    %5816 = vmatpush1.msra.mxu0 0.0
    %5817 = vmatprep.subr.mxu0 0.0
    %5818 = vmatpush1.msra.mxu0 0.0
    %5819 = vmatprep.subr.mxu0 0.0
    %5820 = vmatpush1.msra.mxu0 0.0
    %5821 = vmatprep.subr.mxu0 0.0
    %5822 = vmatpush1.msra.mxu0 0.0
    %5823 = vmatprep.subr.mxu0 0.0
    %5824 = vmatpush1.msra.mxu0 0.0
    %5825 = vmatprep.subr.mxu0 0.0
    %5826 = vmatpush1.msra.mxu0 0.0
    %5827 = vmatprep.subr.mxu0 0.0
    %5828 = vmatpush1.msra.mxu0 0.0
    %5829 = vmatprep.subr.mxu0 0.0
    %5830 = vmatpush1.msra.mxu0 0.0
    %5831 = vmatprep.subr.mxu0 0.0
    %5832 = vmatpush1.msra.mxu0 0.0
    %5833 = vmatprep.subr.mxu0 0.0
    %5834 = vmatpush1.msra.mxu0 0.0
    %5835 = vmatprep.mubr.f32.mxu0 0.0
    %v5836 = vand.u32 %v70, 4294901760
    %v5837 = vsub.f32 %v70, %v5836
    %v5838 = vand.u32 %v5837, 4294901760
    %5839 = vmatmul.mubr.f32.gmra.mrb[0].mxu0 %v5838
    %v5840 = vpop.f32.mrb[0].mxu0
    %v5841 = vadd.f32 %v5752, %v5840
    %v5842 = vpop.f32.mrb[0].mxu0
    %5843 = vdwg.mxu0
    %5844 = vmatprep.subr.mxu0 0.0
    %v5845 = vand.u32 %v83, 4294901760
    %v5846 = vsub.f32 %v83, %v5845
    %v5847 = vand.u32 %v5846, 4294901760
    %5848 = vmatpush1.msra.mxu0 %v5847
    %5849 = vmatprep.subr.mxu0 0.0
    %v5850 = vand.u32 %v96, 4294901760
    %v5851 = vsub.f32 %v96, %v5850
    %v5852 = vand.u32 %v5851, 4294901760
    %5853 = vmatpush1.msra.mxu0 %v5852
    %5854 = vmatprep.subr.mxu0 0.0
    %v5855 = vand.u32 %v109, 4294901760
    %v5856 = vsub.f32 %v109, %v5855
    %v5857 = vand.u32 %v5856, 4294901760
    %5858 = vmatpush1.msra.mxu0 %v5857
    %5859 = vmatprep.subr.mxu0 0.0
    %v5860 = vand.u32 %v122, 4294901760
    %v5861 = vsub.f32 %v122, %v5860
    %v5862 = vand.u32 %v5861, 4294901760
    %5863 = vmatpush1.msra.mxu0 %v5862
    %5864 = vmatprep.subr.mxu0 0.0
    %v5865 = vand.u32 %v135, 4294901760
    %v5866 = vsub.f32 %v135, %v5865
    %v5867 = vand.u32 %v5866, 4294901760
    %5868 = vmatpush1.msra.mxu0 %v5867
    %5869 = vmatprep.subr.mxu0 0.0
    %v5870 = vand.u32 %v148, 4294901760
    %v5871 = vsub.f32 %v148, %v5870
    %v5872 = vand.u32 %v5871, 4294901760
    %5873 = vmatpush1.msra.mxu0 %v5872
    %5874 = vmatprep.subr.mxu0 0.0
    %v5875 = vand.u32 %v161, 4294901760
    %v5876 = vsub.f32 %v161, %v5875
    %v5877 = vand.u32 %v5876, 4294901760
    %5878 = vmatpush1.msra.mxu0 %v5877
    %5879 = vmatprep.subr.mxu0 0.0
    %v5880 = vand.u32 %v174, 4294901760
    %v5881 = vsub.f32 %v174, %v5880
    %v5882 = vand.u32 %v5881, 4294901760
    %5883 = vmatpush1.msra.mxu0 %v5882
    %5884 = vmatprep.subr.mxu0 0.0
    %v5885 = vand.u32 %v187, 4294901760
    %v5886 = vsub.f32 %v187, %v5885
    %v5887 = vand.u32 %v5886, 4294901760
    %5888 = vmatpush1.msra.mxu0 %v5887
    %5889 = vmatprep.subr.mxu0 0.0
    %v5890 = vand.u32 %v200, 4294901760
    %v5891 = vsub.f32 %v200, %v5890
    %v5892 = vand.u32 %v5891, 4294901760
    %5893 = vmatpush1.msra.mxu0 %v5892
    %5894 = vmatprep.subr.mxu0 0.0
    %v5895 = vand.u32 %v213, 4294901760
    %v5896 = vsub.f32 %v213, %v5895
    %v5897 = vand.u32 %v5896, 4294901760
    %5898 = vmatpush1.msra.mxu0 %v5897
    %5899 = vmatprep.subr.mxu0 0.0
    %v5900 = vand.u32 %v226, 4294901760
    %v5901 = vsub.f32 %v226, %v5900
    %v5902 = vand.u32 %v5901, 4294901760
    %5903 = vmatpush1.msra.mxu0 %v5902
    %5904 = vmatprep.subr.mxu0 0.0
    %v5905 = vand.u32 %v239, 4294901760
    %v5906 = vsub.f32 %v239, %v5905
    %v5907 = vand.u32 %v5906, 4294901760
    %5908 = vmatpush1.msra.mxu0 %v5907
    %5909 = vmatprep.subr.mxu0 0.0
    %v5910 = vand.u32 %v252, 4294901760
    %v5911 = vsub.f32 %v252, %v5910
    %v5912 = vand.u32 %v5911, 4294901760
    %5913 = vmatpush1.msra.mxu0 %v5912
    %5914 = vmatprep.subr.mxu0 0.0
    %v5915 = vand.u32 %v265, 4294901760
    %v5916 = vsub.f32 %v265, %v5915
    %v5917 = vand.u32 %v5916, 4294901760
    %5918 = vmatpush1.msra.mxu0 %v5917
    %5919 = vmatprep.subr.mxu0 0.0
    %v5920 = vand.u32 %v278, 4294901760
    %v5921 = vsub.f32 %v278, %v5920
    %v5922 = vand.u32 %v5921, 4294901760
    %5923 = vmatpush1.msra.mxu0 %v5922
    %5924 = vmatprep.subr.mxu0 0.0
    %5925 = vmatpush1.msra.mxu0 0.0
    %5926 = vmatprep.subr.mxu0 0.0
    %5927 = vmatpush1.msra.mxu0 0.0
    %5928 = vmatprep.subr.mxu0 0.0
    %5929 = vmatpush1.msra.mxu0 0.0
    %5930 = vmatprep.subr.mxu0 0.0
    %5931 = vmatpush1.msra.mxu0 0.0
    %5932 = vmatprep.subr.mxu0 0.0
    %5933 = vmatpush1.msra.mxu0 0.0
    %5934 = vmatprep.subr.mxu0 0.0
    %5935 = vmatpush1.msra.mxu0 0.0
    %5936 = vmatprep.subr.mxu0 0.0
    %5937 = vmatpush1.msra.mxu0 0.0
    %5938 = vmatprep.subr.mxu0 0.0
    %5939 = vmatpush1.msra.mxu0 0.0
    %5940 = vmatprep.subr.mxu0 0.0
    %5941 = vmatpush1.msra.mxu0 0.0
    %5942 = vmatprep.subr.mxu0 0.0
    %5943 = vmatpush1.msra.mxu0 0.0
    %5944 = vmatprep.subr.mxu0 0.0
    %5945 = vmatpush1.msra.mxu0 0.0
    %5946 = vmatprep.subr.mxu0 0.0
    %5947 = vmatpush1.msra.mxu0 0.0
    %5948 = vmatprep.subr.mxu0 0.0
    %5949 = vmatpush1.msra.mxu0 0.0
    %5950 = vmatprep.subr.mxu0 0.0
    %5951 = vmatpush1.msra.mxu0 0.0
    %5952 = vmatprep.subr.mxu0 0.0
    %5953 = vmatpush1.msra.mxu0 0.0
    %5954 = vmatprep.subr.mxu0 0.0
    %5955 = vmatpush1.msra.mxu0 0.0
    %5956 = vmatprep.mubr.f32.mxu0 0.0
    %v5957 = vand.u32 %v70, 4294901760
    %5958 = vmatmul.mubr.f32.gmra.mrb[0].mxu0 %v5957
    %v5959 = vpop.f32.mrb[0].mxu0
    %v5960 = vadd.f32 %v5841, %v5959
    %v5961 = vpop.f32.mrb[0].mxu0
    %5962 = vdwg.mxu0
    %5963 = vmatprep.subr.mxu0 0.0
    %v5964 = vand.u32 %v83, 4294901760
    %5965 = vmatpush1.msra.mxu0 %v5964
    %5966 = vmatprep.subr.mxu0 0.0
    %v5967 = vand.u32 %v96, 4294901760
    %5968 = vmatpush1.msra.mxu0 %v5967
    %5969 = vmatprep.subr.mxu0 0.0
    %v5970 = vand.u32 %v109, 4294901760
    %5971 = vmatpush1.msra.mxu0 %v5970
    %5972 = vmatprep.subr.mxu0 0.0
    %v5973 = vand.u32 %v122, 4294901760
    %5974 = vmatpush1.msra.mxu0 %v5973
    %5975 = vmatprep.subr.mxu0 0.0
    %v5976 = vand.u32 %v135, 4294901760
    %5977 = vmatpush1.msra.mxu0 %v5976
    %5978 = vmatprep.subr.mxu0 0.0
    %v5979 = vand.u32 %v148, 4294901760
    %5980 = vmatpush1.msra.mxu0 %v5979
    %5981 = vmatprep.subr.mxu0 0.0
    %v5982 = vand.u32 %v161, 4294901760
    %5983 = vmatpush1.msra.mxu0 %v5982
    %5984 = vmatprep.subr.mxu0 0.0
    %v5985 = vand.u32 %v174, 4294901760
    %5986 = vmatpush1.msra.mxu0 %v5985
    %5987 = vmatprep.subr.mxu0 0.0
    %v5988 = vand.u32 %v187, 4294901760
    %5989 = vmatpush1.msra.mxu0 %v5988
    %5990 = vmatprep.subr.mxu0 0.0
    %v5991 = vand.u32 %v200, 4294901760
    %5992 = vmatpush1.msra.mxu0 %v5991
    %5993 = vmatprep.subr.mxu0 0.0
    %v5994 = vand.u32 %v213, 4294901760
    %5995 = vmatpush1.msra.mxu0 %v5994
    %5996 = vmatprep.subr.mxu0 0.0
    %v5997 = vand.u32 %v226, 4294901760
    %5998 = vmatpush1.msra.mxu0 %v5997
    %5999 = vmatprep.subr.mxu0 0.0
    %v6000 = vand.u32 %v239, 4294901760
    %6001 = vmatpush1.msra.mxu0 %v6000
    %6002 = vmatprep.subr.mxu0 0.0
    %v6003 = vand.u32 %v252, 4294901760
    %6004 = vmatpush1.msra.mxu0 %v6003
    %6005 = vmatprep.subr.mxu0 0.0
    %v6006 = vand.u32 %v265, 4294901760
    %6007 = vmatpush1.msra.mxu0 %v6006
    %6008 = vmatprep.subr.mxu0 0.0
    %v6009 = vand.u32 %v278, 4294901760
    %6010 = vmatpush1.msra.mxu0 %v6009
    %6011 = vmatprep.subr.mxu0 0.0
    %6012 = vmatpush1.msra.mxu0 0.0
    %6013 = vmatprep.subr.mxu0 0.0
    %6014 = vmatpush1.msra.mxu0 0.0
    %6015 = vmatprep.subr.mxu0 0.0
    %6016 = vmatpush1.msra.mxu0 0.0
    %6017 = vmatprep.subr.mxu0 0.0
    %6018 = vmatpush1.msra.mxu0 0.0
    %6019 = vmatprep.subr.mxu0 0.0
    %6020 = vmatpush1.msra.mxu0 0.0
    %6021 = vmatprep.subr.mxu0 0.0
    %6022 = vmatpush1.msra.mxu0 0.0
    %6023 = vmatprep.subr.mxu0 0.0
    %6024 = vmatpush1.msra.mxu0 0.0
    %6025 = vmatprep.subr.mxu0 0.0
    %6026 = vmatpush1.msra.mxu0 0.0
    %6027 = vmatprep.subr.mxu0 0.0
    %6028 = vmatpush1.msra.mxu0 0.0
    %6029 = vmatprep.subr.mxu0 0.0
    %6030 = vmatpush1.msra.mxu0 0.0
    %6031 = vmatprep.subr.mxu0 0.0
    %6032 = vmatpush1.msra.mxu0 0.0
    %6033 = vmatprep.subr.mxu0 0.0
    %6034 = vmatpush1.msra.mxu0 0.0
    %6035 = vmatprep.subr.mxu0 0.0
    %6036 = vmatpush1.msra.mxu0 0.0
    %6037 = vmatprep.subr.mxu0 0.0
    %6038 = vmatpush1.msra.mxu0 0.0
    %6039 = vmatprep.subr.mxu0 0.0
    %6040 = vmatpush1.msra.mxu0 0.0
    %6041 = vmatprep.subr.mxu0 0.0
    %6042 = vmatpush1.msra.mxu0 0.0
    %6043 = vmatprep.mubr.f32.mxu0 0.0
    %v6044 = vand.u32 %v70, 4294901760
    %6045 = vmatmul.mubr.f32.gmra.mrb[0].mxu0 %v6044
    %v6046 = vpop.f32.mrb[0].mxu0
    %v6047 = vadd.f32 %v5960, %v6046
    %v6048 = vpop.f32.mrb[0].mxu0
    %6049 = vdwg.mxu0
    %v6050 = vld [vmem:[#allocation8] sm:$0xff]
    %v6051 = vld [vmem:[#allocation8 + $0x8] sm:$0x1f]
    %v6054 = vlaneseq
    %v6055 = vshrl.u32 %v6054, 7
    %v6056 = vsub.s32 0, %v6055
    %v6057 = vrot.slane %v6050, %v6056
    %v6058 = vlaneseq
    %v6059 = vshrl.u32 %v6058, 7
    %v6060 = vsub.s32 1, %v6059
    %v6061 = vrot.slane %v6050, %v6060
    %v6062 = vlaneseq
    %v6063 = vshrl.u32 %v6062, 7
    %v6064 = vsub.s32 2, %v6063
    %v6065 = vrot.slane %v6050, %v6064
    %v6066 = vlaneseq
    %v6067 = vshrl.u32 %v6066, 7
    %v6068 = vsub.s32 3, %v6067
    %v6069 = vrot.slane %v6050, %v6068
    %v6070 = vlaneseq
    %v6071 = vshrl.u32 %v6070, 7
    %v6072 = vsub.s32 4, %v6071
    %v6073 = vrot.slane %v6050, %v6072
    %v6074 = vlaneseq
    %v6075 = vshrl.u32 %v6074, 7
    %v6076 = vsub.s32 5, %v6075
    %v6077 = vrot.slane %v6050, %v6076
    %v6078 = vlaneseq
    %v6079 = vshrl.u32 %v6078, 7
    %v6080 = vsub.s32 6, %v6079
    %v6081 = vrot.slane %v6050, %v6080
    %v6082 = vlaneseq
    %v6083 = vshrl.u32 %v6082, 7
    %v6084 = vsub.s32 7, %v6083
    %v6085 = vrot.slane %v6050, %v6084
    %v6086 = vlaneseq
    %v6087 = vshrl.u32 %v6086, 7
    %v6088 = vsub.s32 0, %v6087
    %v6089 = vrot.slane %v6051, %v6088
    %v6090 = vlaneseq
    %v6091 = vshrl.u32 %v6090, 7
    %v6092 = vsub.s32 1, %v6091
    %v6093 = vrot.slane %v6051, %v6092
    %v6094 = vlaneseq
    %v6095 = vshrl.u32 %v6094, 7
    %v6096 = vsub.s32 2, %v6095
    %v6097 = vrot.slane %v6051, %v6096
    %v6098 = vlaneseq
    %v6099 = vshrl.u32 %v6098, 7
    %v6100 = vsub.s32 3, %v6099
    %v6101 = vrot.slane %v6051, %v6100
    %v6102 = vlaneseq
    %v6103 = vshrl.u32 %v6102, 7
    %v6104 = vsub.s32 4, %v6103
    %v6105 = vrot.slane %v6051, %v6104
    %v6119 = vadd.f32 %v1130, %v6057
    %v6120 = vadd.f32 %v1132, %v6061
    %v6121 = vadd.f32 %v1985, %v6065
    %v6122 = vadd.f32 %v1987, %v6069
    %v6123 = vadd.f32 %v2840, %v6073
    %v6124 = vadd.f32 %v2842, %v6077
    %v6125 = vadd.f32 %v3695, %v6081
    %v6126 = vadd.f32 %v3697, %v6085
    %v6127 = vadd.f32 %v4550, %v6089
    %v6128 = vadd.f32 %v4552, %v6093
    %v6129 = vadd.f32 %v5405, %v6097
    %v6130 = vadd.f32 %v5407, %v6101
    %v6131 = vadd.f32 %v6047, %v6105
    %v6132 = vand.u32 2147483647, %v6119
    %vm6133 = vcmp.le.f32.partialorder %v6132, 0.7853982
    %vm6134 = vcmp.lt.s32.totalorder %v6119, 0
    %v6135 = vand.u32 %v6119, 2139095040
    %v6136 = vshrl.u32 %v6135, 23
    %v6137 = vsub.s32 %v6136, 127
    %v6138 = vand.u32 2147483647, %v6119
    %v6139 = vand.u32 %v6138, 8388607
    %v6140 = vor.u32 %v6139, 8388608
    %v6141 = vsub.s32 0, %v6140
    %v6142 = vadd.s32 %v6137, 1
    %vm6143 = vcmp.gt.s32.totalorder %v6142, 0
    %v6144 = vsel %vm6143, %v6142, 0
    %v6145 = vshrl.u32 %v6144, 5
    %v6146 = vand.u32 %v6144, 31
    %v6147 = vsub.s32 32, %v6146
    %v6148 = vshrl.u32 683565275, %v6147
    %v6149 = vshll.u32 683565275, %v6146
    %v6150 = vshrl.u32 2475754826, %v6147
    %v6151 = vor.u32 %v6149, %v6150
    %v6152 = vshll.u32 2475754826, %v6146
    %v6153 = vshrl.u32 2131351028, %v6147
    %v6154 = vor.u32 %v6152, %v6153
    %v6155 = vshll.u32 2131351028, %v6146
    %v6156 = vshrl.u32 2102212464, %v6147
    %v6157 = vor.u32 %v6155, %v6156
    %v6158 = vshll.u32 2102212464, %v6146
    %v6159 = vshrl.u32 920167782, %v6147
    %v6160 = vor.u32 %v6158, %v6159
    %v6161 = vshll.u32 920167782, %v6146
    %v6162 = vshrl.u32 1326507024, %v6147
    %v6163 = vor.u32 %v6161, %v6162
    %vm6164 = vcmp.lt.s32.totalorder %v6145, 1
    %vm6165 = vcmp.lt.s32.totalorder %v6145, 2
    %vm6166 = vcmp.lt.s32.totalorder %v6145, 3
    %vm6167 = vcmp.lt.s32.totalorder %v6145, 4
    %v6168 = vsel %vm6164, %v6148, %v6151
    %v6169 = vsel %vm6167, %v6157, 2102212464
    %v6170 = vsel %vm6166, %v6154, %v6169
    %v6171 = vsel %vm6165, %v6168, %v6170
    %v6172 = vsel %vm6164, %v6151, %v6154
    %v6173 = vsel %vm6167, %v6160, 920167782
    %v6174 = vsel %vm6166, %v6157, %v6173
    %v6175 = vsel %vm6165, %v6172, %v6174
    %v6176 = vsel %vm6164, %v6154, %v6157
    %v6177 = vsel %vm6167, %v6163, 1326507024
    %v6178 = vsel %vm6166, %v6160, %v6177
    %v6179 = vsel %vm6165, %v6176, %v6178
    %v6180 = vshll.u32 %v6140, 8
    %v6181 = vmul.u32.u64.compose %v6180, %v6179
    %v6182 = vextract.low.u32 %v6181
    %v6183 = vextract.high.u32 %v6181
    %v6184 = vmul.u32.u64.compose %v6180, %v6175
    %v6185 = vextract.low.u32 %v6184
    %v6186 = vextract.high.u32 %v6184
    %v6187 = vmul.u32 %v6180, %v6171
    %v6188 = vadd.s32 %v6183, %v6185
    %vm6189 = vc.u32 %v6183, %v6185
    %v6190 = vadd.s32 %v6186, 1
    %v6191 = vsel %vm6189, %v6190, %v6186
    %v6192 = vadd.s32 %v6187, %v6191
    %v6193 = vadd.s32 %v6192, 536870912
    %v6194 = vshrl.u32 %v6193, 30
    %v6195 = vshll.u32 %v6194, 30
    %v6196 = vsub.s32 %v6192, %v6195
    %vm6197 = vcmp.lt.s32.totalorder %v6196, 0
    %v6198 = vsub.s32 0, %v6196
    %v6199 = vsel %vm6197, %v6198, %v6196
    %v6200 = vclz %v6199
    %v6201 = vsub.s32 %v6200, 2
    %vm6202 = vcmp.gt.s32.totalorder 0, %v6201
    %v6203 = vsel %vm6202, 0, %v6201
    %v6204 = vsub.s32 32, %v6203
    %v6205 = vshll.u32 %v6196, %v6203
    %v6206 = vshrl.u32 %v6188, %v6204
    %v6207 = vor.u32 %v6205, %v6206
    %v6208 = vsub.s32 4294967266, %v6203
    %v6209 = vadd.s32 %v6208, 127
    %v6210 = vshll.u32 %v6209, 23
    %v6211 = vor.u32 4788187, %v6210
    %v6212 = vand.u32 2147483647, %v6211
    %v6214 = vcvt.s32.f32 %v6207
    %v6215 = vmul.f32 %v6214, %v6212
    %v6216 = vxor.u32 %v6215, 2147483648
    %v6217 = vsel %vm6134, %v6216, %v6215
    %v6218 = vsub.s32 4, %v6194
    %v6219 = vsel %vm6134, %v6218, %v6194
    %v6220 = vsel %vm6133, %v6119, %v6217
    %v6221 = vsel %vm6133, 0, %v6219
    %v6222 = vcosq.f32.pop %v6220
    %v6223 = vsinq.f32.pop %v6220
    %vm6224 = vweird.f32 %v6119
    %v6225 = vadd.s32 %v6221, 3
    %v6226 = vand.u32 %v6225, 3
    %vm6227 = vcmp.lt.s32.totalorder %v6226, 2
    %vm6228 = vcmp.eq.s32.totalorder %v6226, 0
    %v6229 = vxor.u32 %v6223, 2147483648
    %v6230 = vsel %vm6228, %v6222, %v6229
    %vm6231 = vcmp.eq.s32.totalorder %v6226, 2
    %v6232 = vxor.u32 %v6222, 2147483648
    %v6233 = vsel %vm6231, %v6232, %v6223
    %v6234 = vsel %vm6227, %v6230, %v6233
    %v6235 = vsel %vm6224, nan, %v6234
    %v6236 = vand.u32 2147483647, %v6120
    %vm6237 = vcmp.le.f32.partialorder %v6236, 0.7853982
    %vm6238 = vcmp.lt.s32.totalorder %v6120, 0
    %v6239 = vand.u32 %v6120, 2139095040
    %v6240 = vshrl.u32 %v6239, 23
    %v6241 = vsub.s32 %v6240, 127
    %v6242 = vand.u32 2147483647, %v6120
    %v6243 = vand.u32 %v6242, 8388607
    %v6244 = vor.u32 %v6243, 8388608
    %v6245 = vsub.s32 0, %v6244
    %v6246 = vadd.s32 %v6241, 1
    %vm6247 = vcmp.gt.s32.totalorder %v6246, 0
    %v6248 = vsel %vm6247, %v6246, 0
    %v6249 = vshrl.u32 %v6248, 5
    %v6250 = vand.u32 %v6248, 31
    %v6251 = vsub.s32 32, %v6250
    %v6252 = vshrl.u32 683565275, %v6251
    %v6253 = vshll.u32 683565275, %v6250
    %v6254 = vshrl.u32 2475754826, %v6251
    %v6255 = vor.u32 %v6253, %v6254
    %v6256 = vshll.u32 2475754826, %v6250
    %v6257 = vshrl.u32 2131351028, %v6251
    %v6258 = vor.u32 %v6256, %v6257
    %v6259 = vshll.u32 2131351028, %v6250
    %v6260 = vshrl.u32 2102212464, %v6251
    %v6261 = vor.u32 %v6259, %v6260
    %v6262 = vshll.u32 2102212464, %v6250
    %v6263 = vshrl.u32 920167782, %v6251
    %v6264 = vor.u32 %v6262, %v6263
    %v6265 = vshll.u32 920167782, %v6250
    %v6266 = vshrl.u32 1326507024, %v6251
    %v6267 = vor.u32 %v6265, %v6266
    %vm6268 = vcmp.lt.s32.totalorder %v6249, 1
    %vm6269 = vcmp.lt.s32.totalorder %v6249, 2
    %vm6270 = vcmp.lt.s32.totalorder %v6249, 3
    %vm6271 = vcmp.lt.s32.totalorder %v6249, 4
    %v6272 = vsel %vm6268, %v6252, %v6255
    %v6273 = vsel %vm6271, %v6261, 2102212464
    %v6274 = vsel %vm6270, %v6258, %v6273
    %v6275 = vsel %vm6269, %v6272, %v6274
    %v6276 = vsel %vm6268, %v6255, %v6258
    %v6277 = vsel %vm6271, %v6264, 920167782
    %v6278 = vsel %vm6270, %v6261, %v6277
    %v6279 = vsel %vm6269, %v6276, %v6278
    %v6280 = vsel %vm6268, %v6258, %v6261
    %v6281 = vsel %vm6271, %v6267, 1326507024
    %v6282 = vsel %vm6270, %v6264, %v6281
    %v6283 = vsel %vm6269, %v6280, %v6282
    %v6284 = vshll.u32 %v6244, 8
    %v6285 = vmul.u32.u64.compose %v6284, %v6283
    %v6286 = vextract.low.u32 %v6285
    %v6287 = vextract.high.u32 %v6285
    %v6288 = vmul.u32.u64.compose %v6284, %v6279
    %v6289 = vextract.low.u32 %v6288
    %v6290 = vextract.high.u32 %v6288
    %v6291 = vmul.u32 %v6284, %v6275
    %v6292 = vadd.s32 %v6287, %v6289
    %vm6293 = vc.u32 %v6287, %v6289
    %v6294 = vadd.s32 %v6290, 1
    %v6295 = vsel %vm6293, %v6294, %v6290
    %v6296 = vadd.s32 %v6291, %v6295
    %v6297 = vadd.s32 %v6296, 536870912
    %v6298 = vshrl.u32 %v6297, 30
    %v6299 = vshll.u32 %v6298, 30
    %v6300 = vsub.s32 %v6296, %v6299
    %vm6301 = vcmp.lt.s32.totalorder %v6300, 0
    %v6302 = vsub.s32 0, %v6300
    %v6303 = vsel %vm6301, %v6302, %v6300
    %v6304 = vclz %v6303
    %v6305 = vsub.s32 %v6304, 2
    %vm6306 = vcmp.gt.s32.totalorder 0, %v6305
    %v6307 = vsel %vm6306, 0, %v6305
    %v6308 = vsub.s32 32, %v6307
    %v6309 = vshll.u32 %v6300, %v6307
    %v6310 = vshrl.u32 %v6292, %v6308
    %v6311 = vor.u32 %v6309, %v6310
    %v6312 = vsub.s32 4294967266, %v6307
    %v6313 = vadd.s32 %v6312, 127
    %v6314 = vshll.u32 %v6313, 23
    %v6315 = vor.u32 4788187, %v6314
    %v6316 = vand.u32 2147483647, %v6315
    %v6318 = vcvt.s32.f32 %v6311
    %v6319 = vmul.f32 %v6318, %v6316
    %v6320 = vxor.u32 %v6319, 2147483648
    %v6321 = vsel %vm6238, %v6320, %v6319
    %v6322 = vsub.s32 4, %v6298
    %v6323 = vsel %vm6238, %v6322, %v6298
    %v6324 = vsel %vm6237, %v6120, %v6321
    %v6325 = vsel %vm6237, 0, %v6323
    %v6326 = vcosq.f32.pop %v6324
    %v6327 = vsinq.f32.pop %v6324
    %vm6328 = vweird.f32 %v6120
    %v6329 = vadd.s32 %v6325, 3
    %v6330 = vand.u32 %v6329, 3
    %vm6331 = vcmp.lt.s32.totalorder %v6330, 2
    %vm6332 = vcmp.eq.s32.totalorder %v6330, 0
    %v6333 = vxor.u32 %v6327, 2147483648
    %v6334 = vsel %vm6332, %v6326, %v6333
    %vm6335 = vcmp.eq.s32.totalorder %v6330, 2
    %v6336 = vxor.u32 %v6326, 2147483648
    %v6337 = vsel %vm6335, %v6336, %v6327
    %v6338 = vsel %vm6331, %v6334, %v6337
    %v6339 = vsel %vm6328, nan, %v6338
    %v6340 = vand.u32 2147483647, %v6121
    %vm6341 = vcmp.le.f32.partialorder %v6340, 0.7853982
    %vm6342 = vcmp.lt.s32.totalorder %v6121, 0
    %v6343 = vand.u32 %v6121, 2139095040
    %v6344 = vshrl.u32 %v6343, 23
    %v6345 = vsub.s32 %v6344, 127
    %v6346 = vand.u32 2147483647, %v6121
    %v6347 = vand.u32 %v6346, 8388607
    %v6348 = vor.u32 %v6347, 8388608
    %v6349 = vsub.s32 0, %v6348
    %v6350 = vadd.s32 %v6345, 1
    %vm6351 = vcmp.gt.s32.totalorder %v6350, 0
    %v6352 = vsel %vm6351, %v6350, 0
    %v6353 = vshrl.u32 %v6352, 5
    %v6354 = vand.u32 %v6352, 31
    %v6355 = vsub.s32 32, %v6354
    %v6356 = vshrl.u32 683565275, %v6355
    %v6357 = vshll.u32 683565275, %v6354
    %v6358 = vshrl.u32 2475754826, %v6355
    %v6359 = vor.u32 %v6357, %v6358
    %v6360 = vshll.u32 2475754826, %v6354
    %v6361 = vshrl.u32 2131351028, %v6355
    %v6362 = vor.u32 %v6360, %v6361
    %v6363 = vshll.u32 2131351028, %v6354
    %v6364 = vshrl.u32 2102212464, %v6355
    %v6365 = vor.u32 %v6363, %v6364
    %v6366 = vshll.u32 2102212464, %v6354
    %v6367 = vshrl.u32 920167782, %v6355
    %v6368 = vor.u32 %v6366, %v6367
    %v6369 = vshll.u32 920167782, %v6354
    %v6370 = vshrl.u32 1326507024, %v6355
    %v6371 = vor.u32 %v6369, %v6370
    %vm6372 = vcmp.lt.s32.totalorder %v6353, 1
    %vm6373 = vcmp.lt.s32.totalorder %v6353, 2
    %vm6374 = vcmp.lt.s32.totalorder %v6353, 3
    %vm6375 = vcmp.lt.s32.totalorder %v6353, 4
    %v6376 = vsel %vm6372, %v6356, %v6359
    %v6377 = vsel %vm6375, %v6365, 2102212464
    %v6378 = vsel %vm6374, %v6362, %v6377
    %v6379 = vsel %vm6373, %v6376, %v6378
    %v6380 = vsel %vm6372, %v6359, %v6362
    %v6381 = vsel %vm6375, %v6368, 920167782
    %v6382 = vsel %vm6374, %v6365, %v6381
    %v6383 = vsel %vm6373, %v6380, %v6382
    %v6384 = vsel %vm6372, %v6362, %v6365
    %v6385 = vsel %vm6375, %v6371, 1326507024
    %v6386 = vsel %vm6374, %v6368, %v6385
    %v6387 = vsel %vm6373, %v6384, %v6386
    %v6388 = vshll.u32 %v6348, 8
    %v6389 = vmul.u32.u64.compose %v6388, %v6387
    %v6390 = vextract.low.u32 %v6389
    %v6391 = vextract.high.u32 %v6389
    %v6392 = vmul.u32.u64.compose %v6388, %v6383
    %v6393 = vextract.low.u32 %v6392
    %v6394 = vextract.high.u32 %v6392
    %v6395 = vmul.u32 %v6388, %v6379
    %v6396 = vadd.s32 %v6391, %v6393
    %vm6397 = vc.u32 %v6391, %v6393
    %v6398 = vadd.s32 %v6394, 1
    %v6399 = vsel %vm6397, %v6398, %v6394
    %v6400 = vadd.s32 %v6395, %v6399
    %v6401 = vadd.s32 %v6400, 536870912
    %v6402 = vshrl.u32 %v6401, 30
    %v6403 = vshll.u32 %v6402, 30
    %v6404 = vsub.s32 %v6400, %v6403
    %vm6405 = vcmp.lt.s32.totalorder %v6404, 0
    %v6406 = vsub.s32 0, %v6404
    %v6407 = vsel %vm6405, %v6406, %v6404
    %v6408 = vclz %v6407
    %v6409 = vsub.s32 %v6408, 2
    %vm6410 = vcmp.gt.s32.totalorder 0, %v6409
    %v6411 = vsel %vm6410, 0, %v6409
    %v6412 = vsub.s32 32, %v6411
    %v6413 = vshll.u32 %v6404, %v6411
    %v6414 = vshrl.u32 %v6396, %v6412
    %v6415 = vor.u32 %v6413, %v6414
    %v6416 = vsub.s32 4294967266, %v6411
    %v6417 = vadd.s32 %v6416, 127
    %v6418 = vshll.u32 %v6417, 23
    %v6419 = vor.u32 4788187, %v6418
    %v6420 = vand.u32 2147483647, %v6419
    %v6422 = vcvt.s32.f32 %v6415
    %v6423 = vmul.f32 %v6422, %v6420
    %v6424 = vxor.u32 %v6423, 2147483648
    %v6425 = vsel %vm6342, %v6424, %v6423
    %v6426 = vsub.s32 4, %v6402
    %v6427 = vsel %vm6342, %v6426, %v6402
    %v6428 = vsel %vm6341, %v6121, %v6425
    %v6429 = vsel %vm6341, 0, %v6427
    %v6430 = vcosq.f32.pop %v6428
    %v6431 = vsinq.f32.pop %v6428
    %vm6432 = vweird.f32 %v6121
    %v6433 = vadd.s32 %v6429, 3
    %v6434 = vand.u32 %v6433, 3
    %vm6435 = vcmp.lt.s32.totalorder %v6434, 2
    %vm6436 = vcmp.eq.s32.totalorder %v6434, 0
    %v6437 = vxor.u32 %v6431, 2147483648
    %v6438 = vsel %vm6436, %v6430, %v6437
    %vm6439 = vcmp.eq.s32.totalorder %v6434, 2
    %v6440 = vxor.u32 %v6430, 2147483648
    %v6441 = vsel %vm6439, %v6440, %v6431
    %v6442 = vsel %vm6435, %v6438, %v6441
    %v6443 = vsel %vm6432, nan, %v6442
    %v6444 = vand.u32 2147483647, %v6122
    %vm6445 = vcmp.le.f32.partialorder %v6444, 0.7853982
    %vm6446 = vcmp.lt.s32.totalorder %v6122, 0
    %v6447 = vand.u32 %v6122, 2139095040
    %v6448 = vshrl.u32 %v6447, 23
    %v6449 = vsub.s32 %v6448, 127
    %v6450 = vand.u32 2147483647, %v6122
    %v6451 = vand.u32 %v6450, 8388607
    %v6452 = vor.u32 %v6451, 8388608
    %v6453 = vsub.s32 0, %v6452
    %v6454 = vadd.s32 %v6449, 1
    %vm6455 = vcmp.gt.s32.totalorder %v6454, 0
    %v6456 = vsel %vm6455, %v6454, 0
    %v6457 = vshrl.u32 %v6456, 5
    %v6458 = vand.u32 %v6456, 31
    %v6459 = vsub.s32 32, %v6458
    %v6460 = vshrl.u32 683565275, %v6459
    %v6461 = vshll.u32 683565275, %v6458
    %v6462 = vshrl.u32 2475754826, %v6459
    %v6463 = vor.u32 %v6461, %v6462
    %v6464 = vshll.u32 2475754826, %v6458
    %v6465 = vshrl.u32 2131351028, %v6459
    %v6466 = vor.u32 %v6464, %v6465
    %v6467 = vshll.u32 2131351028, %v6458
    %v6468 = vshrl.u32 2102212464, %v6459
    %v6469 = vor.u32 %v6467, %v6468
    %v6470 = vshll.u32 2102212464, %v6458
    %v6471 = vshrl.u32 920167782, %v6459
    %v6472 = vor.u32 %v6470, %v6471
    %v6473 = vshll.u32 920167782, %v6458
    %v6474 = vshrl.u32 1326507024, %v6459
    %v6475 = vor.u32 %v6473, %v6474
    %vm6476 = vcmp.lt.s32.totalorder %v6457, 1
    %vm6477 = vcmp.lt.s32.totalorder %v6457, 2
    %vm6478 = vcmp.lt.s32.totalorder %v6457, 3
    %vm6479 = vcmp.lt.s32.totalorder %v6457, 4
    %v6480 = vsel %vm6476, %v6460, %v6463
    %v6481 = vsel %vm6479, %v6469, 2102212464
    %v6482 = vsel %vm6478, %v6466, %v6481
    %v6483 = vsel %vm6477, %v6480, %v6482
    %v6484 = vsel %vm6476, %v6463, %v6466
    %v6485 = vsel %vm6479, %v6472, 920167782
    %v6486 = vsel %vm6478, %v6469, %v6485
    %v6487 = vsel %vm6477, %v6484, %v6486
    %v6488 = vsel %vm6476, %v6466, %v6469
    %v6489 = vsel %vm6479, %v6475, 1326507024
    %v6490 = vsel %vm6478, %v6472, %v6489
    %v6491 = vsel %vm6477, %v6488, %v6490
    %v6492 = vshll.u32 %v6452, 8
    %v6493 = vmul.u32.u64.compose %v6492, %v6491
    %v6494 = vextract.low.u32 %v6493
    %v6495 = vextract.high.u32 %v6493
    %v6496 = vmul.u32.u64.compose %v6492, %v6487
    %v6497 = vextract.low.u32 %v6496
    %v6498 = vextract.high.u32 %v6496
    %v6499 = vmul.u32 %v6492, %v6483
    %v6500 = vadd.s32 %v6495, %v6497
    %vm6501 = vc.u32 %v6495, %v6497
    %v6502 = vadd.s32 %v6498, 1
    %v6503 = vsel %vm6501, %v6502, %v6498
    %v6504 = vadd.s32 %v6499, %v6503
    %v6505 = vadd.s32 %v6504, 536870912
    %v6506 = vshrl.u32 %v6505, 30
    %v6507 = vshll.u32 %v6506, 30
    %v6508 = vsub.s32 %v6504, %v6507
    %vm6509 = vcmp.lt.s32.totalorder %v6508, 0
    %v6510 = vsub.s32 0, %v6508
    %v6511 = vsel %vm6509, %v6510, %v6508
    %v6512 = vclz %v6511
    %v6513 = vsub.s32 %v6512, 2
    %vm6514 = vcmp.gt.s32.totalorder 0, %v6513
    %v6515 = vsel %vm6514, 0, %v6513
    %v6516 = vsub.s32 32, %v6515
    %v6517 = vshll.u32 %v6508, %v6515
    %v6518 = vshrl.u32 %v6500, %v6516
    %v6519 = vor.u32 %v6517, %v6518
    %v6520 = vsub.s32 4294967266, %v6515
    %v6521 = vadd.s32 %v6520, 127
    %v6522 = vshll.u32 %v6521, 23
    %v6523 = vor.u32 4788187, %v6522
    %v6524 = vand.u32 2147483647, %v6523
    %v6526 = vcvt.s32.f32 %v6519
    %v6527 = vmul.f32 %v6526, %v6524
    %v6528 = vxor.u32 %v6527, 2147483648
    %v6529 = vsel %vm6446, %v6528, %v6527
    %v6530 = vsub.s32 4, %v6506
    %v6531 = vsel %vm6446, %v6530, %v6506
    %v6532 = vsel %vm6445, %v6122, %v6529
    %v6533 = vsel %vm6445, 0, %v6531
    %v6534 = vcosq.f32.pop %v6532
    %v6535 = vsinq.f32.pop %v6532
    %vm6536 = vweird.f32 %v6122
    %v6537 = vadd.s32 %v6533, 3
    %v6538 = vand.u32 %v6537, 3
    %vm6539 = vcmp.lt.s32.totalorder %v6538, 2
    %vm6540 = vcmp.eq.s32.totalorder %v6538, 0
    %v6541 = vxor.u32 %v6535, 2147483648
    %v6542 = vsel %vm6540, %v6534, %v6541
    %vm6543 = vcmp.eq.s32.totalorder %v6538, 2
    %v6544 = vxor.u32 %v6534, 2147483648
    %v6545 = vsel %vm6543, %v6544, %v6535
    %v6546 = vsel %vm6539, %v6542, %v6545
    %v6547 = vsel %vm6536, nan, %v6546
    %v6548 = vand.u32 2147483647, %v6123
    %vm6549 = vcmp.le.f32.partialorder %v6548, 0.7853982
    %vm6550 = vcmp.lt.s32.totalorder %v6123, 0
    %v6551 = vand.u32 %v6123, 2139095040
    %v6552 = vshrl.u32 %v6551, 23
    %v6553 = vsub.s32 %v6552, 127
    %v6554 = vand.u32 2147483647, %v6123
    %v6555 = vand.u32 %v6554, 8388607
    %v6556 = vor.u32 %v6555, 8388608
    %v6557 = vsub.s32 0, %v6556
    %v6558 = vadd.s32 %v6553, 1
    %vm6559 = vcmp.gt.s32.totalorder %v6558, 0
    %v6560 = vsel %vm6559, %v6558, 0
    %v6561 = vshrl.u32 %v6560, 5
    %v6562 = vand.u32 %v6560, 31
    %v6563 = vsub.s32 32, %v6562
    %v6564 = vshrl.u32 683565275, %v6563
    %v6565 = vshll.u32 683565275, %v6562
    %v6566 = vshrl.u32 2475754826, %v6563
    %v6567 = vor.u32 %v6565, %v6566
    %v6568 = vshll.u32 2475754826, %v6562
    %v6569 = vshrl.u32 2131351028, %v6563
    %v6570 = vor.u32 %v6568, %v6569
    %v6571 = vshll.u32 2131351028, %v6562
    %v6572 = vshrl.u32 2102212464, %v6563
    %v6573 = vor.u32 %v6571, %v6572
    %v6574 = vshll.u32 2102212464, %v6562
    %v6575 = vshrl.u32 920167782, %v6563
    %v6576 = vor.u32 %v6574, %v6575
    %v6577 = vshll.u32 920167782, %v6562
    %v6578 = vshrl.u32 1326507024, %v6563
    %v6579 = vor.u32 %v6577, %v6578
    %vm6580 = vcmp.lt.s32.totalorder %v6561, 1
    %vm6581 = vcmp.lt.s32.totalorder %v6561, 2
    %vm6582 = vcmp.lt.s32.totalorder %v6561, 3
    %vm6583 = vcmp.lt.s32.totalorder %v6561, 4
    %v6584 = vsel %vm6580, %v6564, %v6567
    %v6585 = vsel %vm6583, %v6573, 2102212464
    %v6586 = vsel %vm6582, %v6570, %v6585
    %v6587 = vsel %vm6581, %v6584, %v6586
    %v6588 = vsel %vm6580, %v6567, %v6570
    %v6589 = vsel %vm6583, %v6576, 920167782
    %v6590 = vsel %vm6582, %v6573, %v6589
    %v6591 = vsel %vm6581, %v6588, %v6590
    %v6592 = vsel %vm6580, %v6570, %v6573
    %v6593 = vsel %vm6583, %v6579, 1326507024
    %v6594 = vsel %vm6582, %v6576, %v6593
    %v6595 = vsel %vm6581, %v6592, %v6594
    %v6596 = vshll.u32 %v6556, 8
    %v6597 = vmul.u32.u64.compose %v6596, %v6595
    %v6598 = vextract.low.u32 %v6597
    %v6599 = vextract.high.u32 %v6597
    %v6600 = vmul.u32.u64.compose %v6596, %v6591
    %v6601 = vextract.low.u32 %v6600
    %v6602 = vextract.high.u32 %v6600
    %v6603 = vmul.u32 %v6596, %v6587
    %v6604 = vadd.s32 %v6599, %v6601
    %vm6605 = vc.u32 %v6599, %v6601
    %v6606 = vadd.s32 %v6602, 1
    %v6607 = vsel %vm6605, %v6606, %v6602
    %v6608 = vadd.s32 %v6603, %v6607
    %v6609 = vadd.s32 %v6608, 536870912
    %v6610 = vshrl.u32 %v6609, 30
    %v6611 = vshll.u32 %v6610, 30
    %v6612 = vsub.s32 %v6608, %v6611
    %vm6613 = vcmp.lt.s32.totalorder %v6612, 0
    %v6614 = vsub.s32 0, %v6612
    %v6615 = vsel %vm6613, %v6614, %v6612
    %v6616 = vclz %v6615
    %v6617 = vsub.s32 %v6616, 2
    %vm6618 = vcmp.gt.s32.totalorder 0, %v6617
    %v6619 = vsel %vm6618, 0, %v6617
    %v6620 = vsub.s32 32, %v6619
    %v6621 = vshll.u32 %v6612, %v6619
    %v6622 = vshrl.u32 %v6604, %v6620
    %v6623 = vor.u32 %v6621, %v6622
    %v6624 = vsub.s32 4294967266, %v6619
    %v6625 = vadd.s32 %v6624, 127
    %v6626 = vshll.u32 %v6625, 23
    %v6627 = vor.u32 4788187, %v6626
    %v6628 = vand.u32 2147483647, %v6627
    %v6630 = vcvt.s32.f32 %v6623
    %v6631 = vmul.f32 %v6630, %v6628
    %v6632 = vxor.u32 %v6631, 2147483648
    %v6633 = vsel %vm6550, %v6632, %v6631
    %v6634 = vsub.s32 4, %v6610
    %v6635 = vsel %vm6550, %v6634, %v6610
    %v6636 = vsel %vm6549, %v6123, %v6633
    %v6637 = vsel %vm6549, 0, %v6635
    %v6638 = vcosq.f32.pop %v6636
    %v6639 = vsinq.f32.pop %v6636
    %vm6640 = vweird.f32 %v6123
    %v6641 = vadd.s32 %v6637, 3
    %v6642 = vand.u32 %v6641, 3
    %vm6643 = vcmp.lt.s32.totalorder %v6642, 2
    %vm6644 = vcmp.eq.s32.totalorder %v6642, 0
    %v6645 = vxor.u32 %v6639, 2147483648
    %v6646 = vsel %vm6644, %v6638, %v6645
    %vm6647 = vcmp.eq.s32.totalorder %v6642, 2
    %v6648 = vxor.u32 %v6638, 2147483648
    %v6649 = vsel %vm6647, %v6648, %v6639
    %v6650 = vsel %vm6643, %v6646, %v6649
    %v6651 = vsel %vm6640, nan, %v6650
    %v6652 = vand.u32 2147483647, %v6124
    %vm6653 = vcmp.le.f32.partialorder %v6652, 0.7853982
    %vm6654 = vcmp.lt.s32.totalorder %v6124, 0
    %v6655 = vand.u32 %v6124, 2139095040
    %v6656 = vshrl.u32 %v6655, 23
    %v6657 = vsub.s32 %v6656, 127
    %v6658 = vand.u32 2147483647, %v6124
    %v6659 = vand.u32 %v6658, 8388607
    %v6660 = vor.u32 %v6659, 8388608
    %v6661 = vsub.s32 0, %v6660
    %v6662 = vadd.s32 %v6657, 1
    %vm6663 = vcmp.gt.s32.totalorder %v6662, 0
    %v6664 = vsel %vm6663, %v6662, 0
    %v6665 = vshrl.u32 %v6664, 5
    %v6666 = vand.u32 %v6664, 31
    %v6667 = vsub.s32 32, %v6666
    %v6668 = vshrl.u32 683565275, %v6667
    %v6669 = vshll.u32 683565275, %v6666
    %v6670 = vshrl.u32 2475754826, %v6667
    %v6671 = vor.u32 %v6669, %v6670
    %v6672 = vshll.u32 2475754826, %v6666
    %v6673 = vshrl.u32 2131351028, %v6667
    %v6674 = vor.u32 %v6672, %v6673
    %v6675 = vshll.u32 2131351028, %v6666
    %v6676 = vshrl.u32 2102212464, %v6667
    %v6677 = vor.u32 %v6675, %v6676
    %v6678 = vshll.u32 2102212464, %v6666
    %v6679 = vshrl.u32 920167782, %v6667
    %v6680 = vor.u32 %v6678, %v6679
    %v6681 = vshll.u32 920167782, %v6666
    %v6682 = vshrl.u32 1326507024, %v6667
    %v6683 = vor.u32 %v6681, %v6682
    %vm6684 = vcmp.lt.s32.totalorder %v6665, 1
    %vm6685 = vcmp.lt.s32.totalorder %v6665, 2
    %vm6686 = vcmp.lt.s32.totalorder %v6665, 3
    %vm6687 = vcmp.lt.s32.totalorder %v6665, 4
    %v6688 = vsel %vm6684, %v6668, %v6671
    %v6689 = vsel %vm6687, %v6677, 2102212464
    %v6690 = vsel %vm6686, %v6674, %v6689
    %v6691 = vsel %vm6685, %v6688, %v6690
    %v6692 = vsel %vm6684, %v6671, %v6674
    %v6693 = vsel %vm6687, %v6680, 920167782
    %v6694 = vsel %vm6686, %v6677, %v6693
    %v6695 = vsel %vm6685, %v6692, %v6694
    %v6696 = vsel %vm6684, %v6674, %v6677
    %v6697 = vsel %vm6687, %v6683, 1326507024
    %v6698 = vsel %vm6686, %v6680, %v6697
    %v6699 = vsel %vm6685, %v6696, %v6698
    %v6700 = vshll.u32 %v6660, 8
    %v6701 = vmul.u32.u64.compose %v6700, %v6699
    %v6702 = vextract.low.u32 %v6701
    %v6703 = vextract.high.u32 %v6701
    %v6704 = vmul.u32.u64.compose %v6700, %v6695
    %v6705 = vextract.low.u32 %v6704
    %v6706 = vextract.high.u32 %v6704
    %v6707 = vmul.u32 %v6700, %v6691
    %v6708 = vadd.s32 %v6703, %v6705
    %vm6709 = vc.u32 %v6703, %v6705
    %v6710 = vadd.s32 %v6706, 1
    %v6711 = vsel %vm6709, %v6710, %v6706
    %v6712 = vadd.s32 %v6707, %v6711
    %v6713 = vadd.s32 %v6712, 536870912
    %v6714 = vshrl.u32 %v6713, 30
    %v6715 = vshll.u32 %v6714, 30
    %v6716 = vsub.s32 %v6712, %v6715
    %vm6717 = vcmp.lt.s32.totalorder %v6716, 0
    %v6718 = vsub.s32 0, %v6716
    %v6719 = vsel %vm6717, %v6718, %v6716
    %v6720 = vclz %v6719
    %v6721 = vsub.s32 %v6720, 2
    %vm6722 = vcmp.gt.s32.totalorder 0, %v6721
    %v6723 = vsel %vm6722, 0, %v6721
    %v6724 = vsub.s32 32, %v6723
    %v6725 = vshll.u32 %v6716, %v6723
    %v6726 = vshrl.u32 %v6708, %v6724
    %v6727 = vor.u32 %v6725, %v6726
    %v6728 = vsub.s32 4294967266, %v6723
    %v6729 = vadd.s32 %v6728, 127
    %v6730 = vshll.u32 %v6729, 23
    %v6731 = vor.u32 4788187, %v6730
    %v6732 = vand.u32 2147483647, %v6731
    %v6734 = vcvt.s32.f32 %v6727
    %v6735 = vmul.f32 %v6734, %v6732
    %v6736 = vxor.u32 %v6735, 2147483648
    %v6737 = vsel %vm6654, %v6736, %v6735
    %v6738 = vsub.s32 4, %v6714
    %v6739 = vsel %vm6654, %v6738, %v6714
    %v6740 = vsel %vm6653, %v6124, %v6737
    %v6741 = vsel %vm6653, 0, %v6739
    %v6742 = vcosq.f32.pop %v6740
    %v6743 = vsinq.f32.pop %v6740
    %vm6744 = vweird.f32 %v6124
    %v6745 = vadd.s32 %v6741, 3
    %v6746 = vand.u32 %v6745, 3
    %vm6747 = vcmp.lt.s32.totalorder %v6746, 2
    %vm6748 = vcmp.eq.s32.totalorder %v6746, 0
    %v6749 = vxor.u32 %v6743, 2147483648
    %v6750 = vsel %vm6748, %v6742, %v6749
    %vm6751 = vcmp.eq.s32.totalorder %v6746, 2
    %v6752 = vxor.u32 %v6742, 2147483648
    %v6753 = vsel %vm6751, %v6752, %v6743
    %v6754 = vsel %vm6747, %v6750, %v6753
    %v6755 = vsel %vm6744, nan, %v6754
    %v6756 = vand.u32 2147483647, %v6125
    %vm6757 = vcmp.le.f32.partialorder %v6756, 0.7853982
    %vm6758 = vcmp.lt.s32.totalorder %v6125, 0
    %v6759 = vand.u32 %v6125, 2139095040
    %v6760 = vshrl.u32 %v6759, 23
    %v6761 = vsub.s32 %v6760, 127
    %v6762 = vand.u32 2147483647, %v6125
    %v6763 = vand.u32 %v6762, 8388607
    %v6764 = vor.u32 %v6763, 8388608
    %v6765 = vsub.s32 0, %v6764
    %v6766 = vadd.s32 %v6761, 1
    %vm6767 = vcmp.gt.s32.totalorder %v6766, 0
    %v6768 = vsel %vm6767, %v6766, 0
    %v6769 = vshrl.u32 %v6768, 5
    %v6770 = vand.u32 %v6768, 31
    %v6771 = vsub.s32 32, %v6770
    %v6772 = vshrl.u32 683565275, %v6771
    %v6773 = vshll.u32 683565275, %v6770
    %v6774 = vshrl.u32 2475754826, %v6771
    %v6775 = vor.u32 %v6773, %v6774
    %v6776 = vshll.u32 2475754826, %v6770
    %v6777 = vshrl.u32 2131351028, %v6771
    %v6778 = vor.u32 %v6776, %v6777
    %v6779 = vshll.u32 2131351028, %v6770
    %v6780 = vshrl.u32 2102212464, %v6771
    %v6781 = vor.u32 %v6779, %v6780
    %v6782 = vshll.u32 2102212464, %v6770
    %v6783 = vshrl.u32 920167782, %v6771
    %v6784 = vor.u32 %v6782, %v6783
    %v6785 = vshll.u32 920167782, %v6770
    %v6786 = vshrl.u32 1326507024, %v6771
    %v6787 = vor.u32 %v6785, %v6786
    %vm6788 = vcmp.lt.s32.totalorder %v6769, 1
    %vm6789 = vcmp.lt.s32.totalorder %v6769, 2
    %vm6790 = vcmp.lt.s32.totalorder %v6769, 3
    %vm6791 = vcmp.lt.s32.totalorder %v6769, 4
    %v6792 = vsel %vm6788, %v6772, %v6775
    %v6793 = vsel %vm6791, %v6781, 2102212464
    %v6794 = vsel %vm6790, %v6778, %v6793
    %v6795 = vsel %vm6789, %v6792, %v6794
    %v6796 = vsel %vm6788, %v6775, %v6778
    %v6797 = vsel %vm6791, %v6784, 920167782
    %v6798 = vsel %vm6790, %v6781, %v6797
    %v6799 = vsel %vm6789, %v6796, %v6798
    %v6800 = vsel %vm6788, %v6778, %v6781
    %v6801 = vsel %vm6791, %v6787, 1326507024
    %v6802 = vsel %vm6790, %v6784, %v6801
    %v6803 = vsel %vm6789, %v6800, %v6802
    %v6804 = vshll.u32 %v6764, 8
    %v6805 = vmul.u32.u64.compose %v6804, %v6803
    %v6806 = vextract.low.u32 %v6805
    %v6807 = vextract.high.u32 %v6805
    %v6808 = vmul.u32.u64.compose %v6804, %v6799
    %v6809 = vextract.low.u32 %v6808
    %v6810 = vextract.high.u32 %v6808
    %v6811 = vmul.u32 %v6804, %v6795
    %v6812 = vadd.s32 %v6807, %v6809
    %vm6813 = vc.u32 %v6807, %v6809
    %v6814 = vadd.s32 %v6810, 1
    %v6815 = vsel %vm6813, %v6814, %v6810
    %v6816 = vadd.s32 %v6811, %v6815
    %v6817 = vadd.s32 %v6816, 536870912
    %v6818 = vshrl.u32 %v6817, 30
    %v6819 = vshll.u32 %v6818, 30
    %v6820 = vsub.s32 %v6816, %v6819
    %vm6821 = vcmp.lt.s32.totalorder %v6820, 0
    %v6822 = vsub.s32 0, %v6820
    %v6823 = vsel %vm6821, %v6822, %v6820
    %v6824 = vclz %v6823
    %v6825 = vsub.s32 %v6824, 2
    %vm6826 = vcmp.gt.s32.totalorder 0, %v6825
    %v6827 = vsel %vm6826, 0, %v6825
    %v6828 = vsub.s32 32, %v6827
    %v6829 = vshll.u32 %v6820, %v6827
    %v6830 = vshrl.u32 %v6812, %v6828
    %v6831 = vor.u32 %v6829, %v6830
    %v6832 = vsub.s32 4294967266, %v6827
    %v6833 = vadd.s32 %v6832, 127
    %v6834 = vshll.u32 %v6833, 23
    %v6835 = vor.u32 4788187, %v6834
    %v6836 = vand.u32 2147483647, %v6835
    %v6838 = vcvt.s32.f32 %v6831
    %v6839 = vmul.f32 %v6838, %v6836
    %v6840 = vxor.u32 %v6839, 2147483648
    %v6841 = vsel %vm6758, %v6840, %v6839
    %v6842 = vsub.s32 4, %v6818
    %v6843 = vsel %vm6758, %v6842, %v6818
    %v6844 = vsel %vm6757, %v6125, %v6841
    %v6845 = vsel %vm6757, 0, %v6843
    %v6846 = vcosq.f32.pop %v6844
    %v6847 = vsinq.f32.pop %v6844
    %vm6848 = vweird.f32 %v6125
    %v6849 = vadd.s32 %v6845, 3
    %v6850 = vand.u32 %v6849, 3
    %vm6851 = vcmp.lt.s32.totalorder %v6850, 2
    %vm6852 = vcmp.eq.s32.totalorder %v6850, 0
    %v6853 = vxor.u32 %v6847, 2147483648
    %v6854 = vsel %vm6852, %v6846, %v6853
    %vm6855 = vcmp.eq.s32.totalorder %v6850, 2
    %v6856 = vxor.u32 %v6846, 2147483648
    %v6857 = vsel %vm6855, %v6856, %v6847
    %v6858 = vsel %vm6851, %v6854, %v6857
    %v6859 = vsel %vm6848, nan, %v6858
    %v6860 = vand.u32 2147483647, %v6126
    %vm6861 = vcmp.le.f32.partialorder %v6860, 0.7853982
    %vm6862 = vcmp.lt.s32.totalorder %v6126, 0
    %v6863 = vand.u32 %v6126, 2139095040
    %v6864 = vshrl.u32 %v6863, 23
    %v6865 = vsub.s32 %v6864, 127
    %v6866 = vand.u32 2147483647, %v6126
    %v6867 = vand.u32 %v6866, 8388607
    %v6868 = vor.u32 %v6867, 8388608
    %v6869 = vsub.s32 0, %v6868
    %v6870 = vadd.s32 %v6865, 1
    %vm6871 = vcmp.gt.s32.totalorder %v6870, 0
    %v6872 = vsel %vm6871, %v6870, 0
    %v6873 = vshrl.u32 %v6872, 5
    %v6874 = vand.u32 %v6872, 31
    %v6875 = vsub.s32 32, %v6874
    %v6876 = vshrl.u32 683565275, %v6875
    %v6877 = vshll.u32 683565275, %v6874
    %v6878 = vshrl.u32 2475754826, %v6875
    %v6879 = vor.u32 %v6877, %v6878
    %v6880 = vshll.u32 2475754826, %v6874
    %v6881 = vshrl.u32 2131351028, %v6875
    %v6882 = vor.u32 %v6880, %v6881
    %v6883 = vshll.u32 2131351028, %v6874
    %v6884 = vshrl.u32 2102212464, %v6875
    %v6885 = vor.u32 %v6883, %v6884
    %v6886 = vshll.u32 2102212464, %v6874
    %v6887 = vshrl.u32 920167782, %v6875
    %v6888 = vor.u32 %v6886, %v6887
    %v6889 = vshll.u32 920167782, %v6874
    %v6890 = vshrl.u32 1326507024, %v6875
    %v6891 = vor.u32 %v6889, %v6890
    %vm6892 = vcmp.lt.s32.totalorder %v6873, 1
    %vm6893 = vcmp.lt.s32.totalorder %v6873, 2
    %vm6894 = vcmp.lt.s32.totalorder %v6873, 3
    %vm6895 = vcmp.lt.s32.totalorder %v6873, 4
    %v6896 = vsel %vm6892, %v6876, %v6879
    %v6897 = vsel %vm6895, %v6885, 2102212464
    %v6898 = vsel %vm6894, %v6882, %v6897
    %v6899 = vsel %vm6893, %v6896, %v6898
    %v6900 = vsel %vm6892, %v6879, %v6882
    %v6901 = vsel %vm6895, %v6888, 920167782
    %v6902 = vsel %vm6894, %v6885, %v6901
    %v6903 = vsel %vm6893, %v6900, %v6902
    %v6904 = vsel %vm6892, %v6882, %v6885
    %v6905 = vsel %vm6895, %v6891, 1326507024
    %v6906 = vsel %vm6894, %v6888, %v6905
    %v6907 = vsel %vm6893, %v6904, %v6906
    %v6908 = vshll.u32 %v6868, 8
    %v6909 = vmul.u32.u64.compose %v6908, %v6907
    %v6910 = vextract.low.u32 %v6909
    %v6911 = vextract.high.u32 %v6909
    %v6912 = vmul.u32.u64.compose %v6908, %v6903
    %v6913 = vextract.low.u32 %v6912
    %v6914 = vextract.high.u32 %v6912
    %v6915 = vmul.u32 %v6908, %v6899
    %v6916 = vadd.s32 %v6911, %v6913
    %vm6917 = vc.u32 %v6911, %v6913
    %v6918 = vadd.s32 %v6914, 1
    %v6919 = vsel %vm6917, %v6918, %v6914
    %v6920 = vadd.s32 %v6915, %v6919
    %v6921 = vadd.s32 %v6920, 536870912
    %v6922 = vshrl.u32 %v6921, 30
    %v6923 = vshll.u32 %v6922, 30
    %v6924 = vsub.s32 %v6920, %v6923
    %vm6925 = vcmp.lt.s32.totalorder %v6924, 0
    %v6926 = vsub.s32 0, %v6924
    %v6927 = vsel %vm6925, %v6926, %v6924
    %v6928 = vclz %v6927
    %v6929 = vsub.s32 %v6928, 2
    %vm6930 = vcmp.gt.s32.totalorder 0, %v6929
    %v6931 = vsel %vm6930, 0, %v6929
    %v6932 = vsub.s32 32, %v6931
    %v6933 = vshll.u32 %v6924, %v6931
    %v6934 = vshrl.u32 %v6916, %v6932
    %v6935 = vor.u32 %v6933, %v6934
    %v6936 = vsub.s32 4294967266, %v6931
    %v6937 = vadd.s32 %v6936, 127
    %v6938 = vshll.u32 %v6937, 23
    %v6939 = vor.u32 4788187, %v6938
    %v6940 = vand.u32 2147483647, %v6939
    %v6942 = vcvt.s32.f32 %v6935
    %v6943 = vmul.f32 %v6942, %v6940
    %v6944 = vxor.u32 %v6943, 2147483648
    %v6945 = vsel %vm6862, %v6944, %v6943
    %v6946 = vsub.s32 4, %v6922
    %v6947 = vsel %vm6862, %v6946, %v6922
    %v6948 = vsel %vm6861, %v6126, %v6945
    %v6949 = vsel %vm6861, 0, %v6947
    %v6950 = vcosq.f32.pop %v6948
    %v6951 = vsinq.f32.pop %v6948
    %vm6952 = vweird.f32 %v6126
    %v6953 = vadd.s32 %v6949, 3
    %v6954 = vand.u32 %v6953, 3
    %vm6955 = vcmp.lt.s32.totalorder %v6954, 2
    %vm6956 = vcmp.eq.s32.totalorder %v6954, 0
    %v6957 = vxor.u32 %v6951, 2147483648
    %v6958 = vsel %vm6956, %v6950, %v6957
    %vm6959 = vcmp.eq.s32.totalorder %v6954, 2
    %v6960 = vxor.u32 %v6950, 2147483648
    %v6961 = vsel %vm6959, %v6960, %v6951
    %v6962 = vsel %vm6955, %v6958, %v6961
    %v6963 = vsel %vm6952, nan, %v6962
    %v6964 = vand.u32 2147483647, %v6127
    %vm6965 = vcmp.le.f32.partialorder %v6964, 0.7853982
    %vm6966 = vcmp.lt.s32.totalorder %v6127, 0
    %v6967 = vand.u32 %v6127, 2139095040
    %v6968 = vshrl.u32 %v6967, 23
    %v6969 = vsub.s32 %v6968, 127
    %v6970 = vand.u32 2147483647, %v6127
    %v6971 = vand.u32 %v6970, 8388607
    %v6972 = vor.u32 %v6971, 8388608
    %v6973 = vsub.s32 0, %v6972
    %v6974 = vadd.s32 %v6969, 1
    %vm6975 = vcmp.gt.s32.totalorder %v6974, 0
    %v6976 = vsel %vm6975, %v6974, 0
    %v6977 = vshrl.u32 %v6976, 5
    %v6978 = vand.u32 %v6976, 31
    %v6979 = vsub.s32 32, %v6978
    %v6980 = vshrl.u32 683565275, %v6979
    %v6981 = vshll.u32 683565275, %v6978
    %v6982 = vshrl.u32 2475754826, %v6979
    %v6983 = vor.u32 %v6981, %v6982
    %v6984 = vshll.u32 2475754826, %v6978
    %v6985 = vshrl.u32 2131351028, %v6979
    %v6986 = vor.u32 %v6984, %v6985
    %v6987 = vshll.u32 2131351028, %v6978
    %v6988 = vshrl.u32 2102212464, %v6979
    %v6989 = vor.u32 %v6987, %v6988
    %v6990 = vshll.u32 2102212464, %v6978
    %v6991 = vshrl.u32 920167782, %v6979
    %v6992 = vor.u32 %v6990, %v6991
    %v6993 = vshll.u32 920167782, %v6978
    %v6994 = vshrl.u32 1326507024, %v6979
    %v6995 = vor.u32 %v6993, %v6994
    %vm6996 = vcmp.lt.s32.totalorder %v6977, 1
    %vm6997 = vcmp.lt.s32.totalorder %v6977, 2
    %vm6998 = vcmp.lt.s32.totalorder %v6977, 3
    %vm6999 = vcmp.lt.s32.totalorder %v6977, 4
    %v7000 = vsel %vm6996, %v6980, %v6983
    %v7001 = vsel %vm6999, %v6989, 2102212464
    %v7002 = vsel %vm6998, %v6986, %v7001
    %v7003 = vsel %vm6997, %v7000, %v7002
    %v7004 = vsel %vm6996, %v6983, %v6986
    %v7005 = vsel %vm6999, %v6992, 920167782
    %v7006 = vsel %vm6998, %v6989, %v7005
    %v7007 = vsel %vm6997, %v7004, %v7006
    %v7008 = vsel %vm6996, %v6986, %v6989
    %v7009 = vsel %vm6999, %v6995, 1326507024
    %v7010 = vsel %vm6998, %v6992, %v7009
    %v7011 = vsel %vm6997, %v7008, %v7010
    %v7012 = vshll.u32 %v6972, 8
    %v7013 = vmul.u32.u64.compose %v7012, %v7011
    %v7014 = vextract.low.u32 %v7013
    %v7015 = vextract.high.u32 %v7013
    %v7016 = vmul.u32.u64.compose %v7012, %v7007
    %v7017 = vextract.low.u32 %v7016
    %v7018 = vextract.high.u32 %v7016
    %v7019 = vmul.u32 %v7012, %v7003
    %v7020 = vadd.s32 %v7015, %v7017
    %vm7021 = vc.u32 %v7015, %v7017
    %v7022 = vadd.s32 %v7018, 1
    %v7023 = vsel %vm7021, %v7022, %v7018
    %v7024 = vadd.s32 %v7019, %v7023
    %v7025 = vadd.s32 %v7024, 536870912
    %v7026 = vshrl.u32 %v7025, 30
    %v7027 = vshll.u32 %v7026, 30
    %v7028 = vsub.s32 %v7024, %v7027
    %vm7029 = vcmp.lt.s32.totalorder %v7028, 0
    %v7030 = vsub.s32 0, %v7028
    %v7031 = vsel %vm7029, %v7030, %v7028
    %v7032 = vclz %v7031
    %v7033 = vsub.s32 %v7032, 2
    %vm7034 = vcmp.gt.s32.totalorder 0, %v7033
    %v7035 = vsel %vm7034, 0, %v7033
    %v7036 = vsub.s32 32, %v7035
    %v7037 = vshll.u32 %v7028, %v7035
    %v7038 = vshrl.u32 %v7020, %v7036
    %v7039 = vor.u32 %v7037, %v7038
    %v7040 = vsub.s32 4294967266, %v7035
    %v7041 = vadd.s32 %v7040, 127
    %v7042 = vshll.u32 %v7041, 23
    %v7043 = vor.u32 4788187, %v7042
    %v7044 = vand.u32 2147483647, %v7043
    %v7046 = vcvt.s32.f32 %v7039
    %v7047 = vmul.f32 %v7046, %v7044
    %v7048 = vxor.u32 %v7047, 2147483648
    %v7049 = vsel %vm6966, %v7048, %v7047
    %v7050 = vsub.s32 4, %v7026
    %v7051 = vsel %vm6966, %v7050, %v7026
    %v7052 = vsel %vm6965, %v6127, %v7049
    %v7053 = vsel %vm6965, 0, %v7051
    %v7054 = vcosq.f32.pop %v7052
    %v7055 = vsinq.f32.pop %v7052
    %vm7056 = vweird.f32 %v6127
    %v7057 = vadd.s32 %v7053, 3
    %v7058 = vand.u32 %v7057, 3
    %vm7059 = vcmp.lt.s32.totalorder %v7058, 2
    %vm7060 = vcmp.eq.s32.totalorder %v7058, 0
    %v7061 = vxor.u32 %v7055, 2147483648
    %v7062 = vsel %vm7060, %v7054, %v7061
    %vm7063 = vcmp.eq.s32.totalorder %v7058, 2
    %v7064 = vxor.u32 %v7054, 2147483648
    %v7065 = vsel %vm7063, %v7064, %v7055
    %v7066 = vsel %vm7059, %v7062, %v7065
    %v7067 = vsel %vm7056, nan, %v7066
    %v7068 = vand.u32 2147483647, %v6128
    %vm7069 = vcmp.le.f32.partialorder %v7068, 0.7853982
    %vm7070 = vcmp.lt.s32.totalorder %v6128, 0
    %v7071 = vand.u32 %v6128, 2139095040
    %v7072 = vshrl.u32 %v7071, 23
    %v7073 = vsub.s32 %v7072, 127
    %v7074 = vand.u32 2147483647, %v6128
    %v7075 = vand.u32 %v7074, 8388607
    %v7076 = vor.u32 %v7075, 8388608
    %v7077 = vsub.s32 0, %v7076
    %v7078 = vadd.s32 %v7073, 1
    %vm7079 = vcmp.gt.s32.totalorder %v7078, 0
    %v7080 = vsel %vm7079, %v7078, 0
    %v7081 = vshrl.u32 %v7080, 5
    %v7082 = vand.u32 %v7080, 31
    %v7083 = vsub.s32 32, %v7082
    %v7084 = vshrl.u32 683565275, %v7083
    %v7085 = vshll.u32 683565275, %v7082
    %v7086 = vshrl.u32 2475754826, %v7083
    %v7087 = vor.u32 %v7085, %v7086
    %v7088 = vshll.u32 2475754826, %v7082
    %v7089 = vshrl.u32 2131351028, %v7083
    %v7090 = vor.u32 %v7088, %v7089
    %v7091 = vshll.u32 2131351028, %v7082
    %v7092 = vshrl.u32 2102212464, %v7083
    %v7093 = vor.u32 %v7091, %v7092
    %v7094 = vshll.u32 2102212464, %v7082
    %v7095 = vshrl.u32 920167782, %v7083
    %v7096 = vor.u32 %v7094, %v7095
    %v7097 = vshll.u32 920167782, %v7082
    %v7098 = vshrl.u32 1326507024, %v7083
    %v7099 = vor.u32 %v7097, %v7098
    %vm7100 = vcmp.lt.s32.totalorder %v7081, 1
    %vm7101 = vcmp.lt.s32.totalorder %v7081, 2
    %vm7102 = vcmp.lt.s32.totalorder %v7081, 3
    %vm7103 = vcmp.lt.s32.totalorder %v7081, 4
    %v7104 = vsel %vm7100, %v7084, %v7087
    %v7105 = vsel %vm7103, %v7093, 2102212464
    %v7106 = vsel %vm7102, %v7090, %v7105
    %v7107 = vsel %vm7101, %v7104, %v7106
    %v7108 = vsel %vm7100, %v7087, %v7090
    %v7109 = vsel %vm7103, %v7096, 920167782
    %v7110 = vsel %vm7102, %v7093, %v7109
    %v7111 = vsel %vm7101, %v7108, %v7110
    %v7112 = vsel %vm7100, %v7090, %v7093
    %v7113 = vsel %vm7103, %v7099, 1326507024
    %v7114 = vsel %vm7102, %v7096, %v7113
    %v7115 = vsel %vm7101, %v7112, %v7114
    %v7116 = vshll.u32 %v7076, 8
    %v7117 = vmul.u32.u64.compose %v7116, %v7115
    %v7118 = vextract.low.u32 %v7117
    %v7119 = vextract.high.u32 %v7117
    %v7120 = vmul.u32.u64.compose %v7116, %v7111
    %v7121 = vextract.low.u32 %v7120
    %v7122 = vextract.high.u32 %v7120
    %v7123 = vmul.u32 %v7116, %v7107
    %v7124 = vadd.s32 %v7119, %v7121
    %vm7125 = vc.u32 %v7119, %v7121
    %v7126 = vadd.s32 %v7122, 1
    %v7127 = vsel %vm7125, %v7126, %v7122
    %v7128 = vadd.s32 %v7123, %v7127
    %v7129 = vadd.s32 %v7128, 536870912
    %v7130 = vshrl.u32 %v7129, 30
    %v7131 = vshll.u32 %v7130, 30
    %v7132 = vsub.s32 %v7128, %v7131
    %vm7133 = vcmp.lt.s32.totalorder %v7132, 0
    %v7134 = vsub.s32 0, %v7132
    %v7135 = vsel %vm7133, %v7134, %v7132
    %v7136 = vclz %v7135
    %v7137 = vsub.s32 %v7136, 2
    %vm7138 = vcmp.gt.s32.totalorder 0, %v7137
    %v7139 = vsel %vm7138, 0, %v7137
    %v7140 = vsub.s32 32, %v7139
    %v7141 = vshll.u32 %v7132, %v7139
    %v7142 = vshrl.u32 %v7124, %v7140
    %v7143 = vor.u32 %v7141, %v7142
    %v7144 = vsub.s32 4294967266, %v7139
    %v7145 = vadd.s32 %v7144, 127
    %v7146 = vshll.u32 %v7145, 23
    %v7147 = vor.u32 4788187, %v7146
    %v7148 = vand.u32 2147483647, %v7147
    %v7150 = vcvt.s32.f32 %v7143
    %v7151 = vmul.f32 %v7150, %v7148
    %v7152 = vxor.u32 %v7151, 2147483648
    %v7153 = vsel %vm7070, %v7152, %v7151
    %v7154 = vsub.s32 4, %v7130
    %v7155 = vsel %vm7070, %v7154, %v7130
    %v7156 = vsel %vm7069, %v6128, %v7153
    %v7157 = vsel %vm7069, 0, %v7155
    %v7158 = vcosq.f32.pop %v7156
    %v7159 = vsinq.f32.pop %v7156
    %vm7160 = vweird.f32 %v6128
    %v7161 = vadd.s32 %v7157, 3
    %v7162 = vand.u32 %v7161, 3
    %vm7163 = vcmp.lt.s32.totalorder %v7162, 2
    %vm7164 = vcmp.eq.s32.totalorder %v7162, 0
    %v7165 = vxor.u32 %v7159, 2147483648
    %v7166 = vsel %vm7164, %v7158, %v7165
    %vm7167 = vcmp.eq.s32.totalorder %v7162, 2
    %v7168 = vxor.u32 %v7158, 2147483648
    %v7169 = vsel %vm7167, %v7168, %v7159
    %v7170 = vsel %vm7163, %v7166, %v7169
    %v7171 = vsel %vm7160, nan, %v7170
    %v7172 = vand.u32 2147483647, %v6129
    %vm7173 = vcmp.le.f32.partialorder %v7172, 0.7853982
    %vm7174 = vcmp.lt.s32.totalorder %v6129, 0
    %v7175 = vand.u32 %v6129, 2139095040
    %v7176 = vshrl.u32 %v7175, 23
    %v7177 = vsub.s32 %v7176, 127
    %v7178 = vand.u32 2147483647, %v6129
    %v7179 = vand.u32 %v7178, 8388607
    %v7180 = vor.u32 %v7179, 8388608
    %v7181 = vsub.s32 0, %v7180
    %v7182 = vadd.s32 %v7177, 1
    %vm7183 = vcmp.gt.s32.totalorder %v7182, 0
    %v7184 = vsel %vm7183, %v7182, 0
    %v7185 = vshrl.u32 %v7184, 5
    %v7186 = vand.u32 %v7184, 31
    %v7187 = vsub.s32 32, %v7186
    %v7188 = vshrl.u32 683565275, %v7187
    %v7189 = vshll.u32 683565275, %v7186
    %v7190 = vshrl.u32 2475754826, %v7187
    %v7191 = vor.u32 %v7189, %v7190
    %v7192 = vshll.u32 2475754826, %v7186
    %v7193 = vshrl.u32 2131351028, %v7187
    %v7194 = vor.u32 %v7192, %v7193
    %v7195 = vshll.u32 2131351028, %v7186
    %v7196 = vshrl.u32 2102212464, %v7187
    %v7197 = vor.u32 %v7195, %v7196
    %v7198 = vshll.u32 2102212464, %v7186
    %v7199 = vshrl.u32 920167782, %v7187
    %v7200 = vor.u32 %v7198, %v7199
    %v7201 = vshll.u32 920167782, %v7186
    %v7202 = vshrl.u32 1326507024, %v7187
    %v7203 = vor.u32 %v7201, %v7202
    %vm7204 = vcmp.lt.s32.totalorder %v7185, 1
    %vm7205 = vcmp.lt.s32.totalorder %v7185, 2
    %vm7206 = vcmp.lt.s32.totalorder %v7185, 3
    %vm7207 = vcmp.lt.s32.totalorder %v7185, 4
    %v7208 = vsel %vm7204, %v7188, %v7191
    %v7209 = vsel %vm7207, %v7197, 2102212464
    %v7210 = vsel %vm7206, %v7194, %v7209
    %v7211 = vsel %vm7205, %v7208, %v7210
    %v7212 = vsel %vm7204, %v7191, %v7194
    %v7213 = vsel %vm7207, %v7200, 920167782
    %v7214 = vsel %vm7206, %v7197, %v7213
    %v7215 = vsel %vm7205, %v7212, %v7214
    %v7216 = vsel %vm7204, %v7194, %v7197
    %v7217 = vsel %vm7207, %v7203, 1326507024
    %v7218 = vsel %vm7206, %v7200, %v7217
    %v7219 = vsel %vm7205, %v7216, %v7218
    %v7220 = vshll.u32 %v7180, 8
    %v7221 = vmul.u32.u64.compose %v7220, %v7219
    %v7222 = vextract.low.u32 %v7221
    %v7223 = vextract.high.u32 %v7221
    %v7224 = vmul.u32.u64.compose %v7220, %v7215
    %v7225 = vextract.low.u32 %v7224
    %v7226 = vextract.high.u32 %v7224
    %v7227 = vmul.u32 %v7220, %v7211
    %v7228 = vadd.s32 %v7223, %v7225
    %vm7229 = vc.u32 %v7223, %v7225
    %v7230 = vadd.s32 %v7226, 1
    %v7231 = vsel %vm7229, %v7230, %v7226
    %v7232 = vadd.s32 %v7227, %v7231
    %v7233 = vadd.s32 %v7232, 536870912
    %v7234 = vshrl.u32 %v7233, 30
    %v7235 = vshll.u32 %v7234, 30
    %v7236 = vsub.s32 %v7232, %v7235
    %vm7237 = vcmp.lt.s32.totalorder %v7236, 0
    %v7238 = vsub.s32 0, %v7236
    %v7239 = vsel %vm7237, %v7238, %v7236
    %v7240 = vclz %v7239
    %v7241 = vsub.s32 %v7240, 2
    %vm7242 = vcmp.gt.s32.totalorder 0, %v7241
    %v7243 = vsel %vm7242, 0, %v7241
    %v7244 = vsub.s32 32, %v7243
    %v7245 = vshll.u32 %v7236, %v7243
    %v7246 = vshrl.u32 %v7228, %v7244
    %v7247 = vor.u32 %v7245, %v7246
    %v7248 = vsub.s32 4294967266, %v7243
    %v7249 = vadd.s32 %v7248, 127
    %v7250 = vshll.u32 %v7249, 23
    %v7251 = vor.u32 4788187, %v7250
    %v7252 = vand.u32 2147483647, %v7251
    %v7254 = vcvt.s32.f32 %v7247
    %v7255 = vmul.f32 %v7254, %v7252
    %v7256 = vxor.u32 %v7255, 2147483648
    %v7257 = vsel %vm7174, %v7256, %v7255
    %v7258 = vsub.s32 4, %v7234
    %v7259 = vsel %vm7174, %v7258, %v7234
    %v7260 = vsel %vm7173, %v6129, %v7257
    %v7261 = vsel %vm7173, 0, %v7259
    %v7262 = vcosq.f32.pop %v7260
    %v7263 = vsinq.f32.pop %v7260
    %vm7264 = vweird.f32 %v6129
    %v7265 = vadd.s32 %v7261, 3
    %v7266 = vand.u32 %v7265, 3
    %vm7267 = vcmp.lt.s32.totalorder %v7266, 2
    %vm7268 = vcmp.eq.s32.totalorder %v7266, 0
    %v7269 = vxor.u32 %v7263, 2147483648
    %v7270 = vsel %vm7268, %v7262, %v7269
    %vm7271 = vcmp.eq.s32.totalorder %v7266, 2
    %v7272 = vxor.u32 %v7262, 2147483648
    %v7273 = vsel %vm7271, %v7272, %v7263
    %v7274 = vsel %vm7267, %v7270, %v7273
    %v7275 = vsel %vm7264, nan, %v7274
    %v7276 = vand.u32 2147483647, %v6130
    %vm7277 = vcmp.le.f32.partialorder %v7276, 0.7853982
    %vm7278 = vcmp.lt.s32.totalorder %v6130, 0
    %v7279 = vand.u32 %v6130, 2139095040
    %v7280 = vshrl.u32 %v7279, 23
    %v7281 = vsub.s32 %v7280, 127
    %v7282 = vand.u32 2147483647, %v6130
    %v7283 = vand.u32 %v7282, 8388607
    %v7284 = vor.u32 %v7283, 8388608
    %v7285 = vsub.s32 0, %v7284
    %v7286 = vadd.s32 %v7281, 1
    %vm7287 = vcmp.gt.s32.totalorder %v7286, 0
    %v7288 = vsel %vm7287, %v7286, 0
    %v7289 = vshrl.u32 %v7288, 5
    %v7290 = vand.u32 %v7288, 31
    %v7291 = vsub.s32 32, %v7290
    %v7292 = vshrl.u32 683565275, %v7291
    %v7293 = vshll.u32 683565275, %v7290
    %v7294 = vshrl.u32 2475754826, %v7291
    %v7295 = vor.u32 %v7293, %v7294
    %v7296 = vshll.u32 2475754826, %v7290
    %v7297 = vshrl.u32 2131351028, %v7291
    %v7298 = vor.u32 %v7296, %v7297
    %v7299 = vshll.u32 2131351028, %v7290
    %v7300 = vshrl.u32 2102212464, %v7291
    %v7301 = vor.u32 %v7299, %v7300
    %v7302 = vshll.u32 2102212464, %v7290
    %v7303 = vshrl.u32 920167782, %v7291
    %v7304 = vor.u32 %v7302, %v7303
    %v7305 = vshll.u32 920167782, %v7290
    %v7306 = vshrl.u32 1326507024, %v7291
    %v7307 = vor.u32 %v7305, %v7306
    %vm7308 = vcmp.lt.s32.totalorder %v7289, 1
    %vm7309 = vcmp.lt.s32.totalorder %v7289, 2
    %vm7310 = vcmp.lt.s32.totalorder %v7289, 3
    %vm7311 = vcmp.lt.s32.totalorder %v7289, 4
    %v7312 = vsel %vm7308, %v7292, %v7295
    %v7313 = vsel %vm7311, %v7301, 2102212464
    %v7314 = vsel %vm7310, %v7298, %v7313
    %v7315 = vsel %vm7309, %v7312, %v7314
    %v7316 = vsel %vm7308, %v7295, %v7298
    %v7317 = vsel %vm7311, %v7304, 920167782
    %v7318 = vsel %vm7310, %v7301, %v7317
    %v7319 = vsel %vm7309, %v7316, %v7318
    %v7320 = vsel %vm7308, %v7298, %v7301
    %v7321 = vsel %vm7311, %v7307, 1326507024
    %v7322 = vsel %vm7310, %v7304, %v7321
    %v7323 = vsel %vm7309, %v7320, %v7322
    %v7324 = vshll.u32 %v7284, 8
    %v7325 = vmul.u32.u64.compose %v7324, %v7323
    %v7326 = vextract.low.u32 %v7325
    %v7327 = vextract.high.u32 %v7325
    %v7328 = vmul.u32.u64.compose %v7324, %v7319
    %v7329 = vextract.low.u32 %v7328
    %v7330 = vextract.high.u32 %v7328
    %v7331 = vmul.u32 %v7324, %v7315
    %v7332 = vadd.s32 %v7327, %v7329
    %vm7333 = vc.u32 %v7327, %v7329
    %v7334 = vadd.s32 %v7330, 1
    %v7335 = vsel %vm7333, %v7334, %v7330
    %v7336 = vadd.s32 %v7331, %v7335
    %v7337 = vadd.s32 %v7336, 536870912
    %v7338 = vshrl.u32 %v7337, 30
    %v7339 = vshll.u32 %v7338, 30
    %v7340 = vsub.s32 %v7336, %v7339
    %vm7341 = vcmp.lt.s32.totalorder %v7340, 0
    %v7342 = vsub.s32 0, %v7340
    %v7343 = vsel %vm7341, %v7342, %v7340
    %v7344 = vclz %v7343
    %v7345 = vsub.s32 %v7344, 2
    %vm7346 = vcmp.gt.s32.totalorder 0, %v7345
    %v7347 = vsel %vm7346, 0, %v7345
    %v7348 = vsub.s32 32, %v7347
    %v7349 = vshll.u32 %v7340, %v7347
    %v7350 = vshrl.u32 %v7332, %v7348
    %v7351 = vor.u32 %v7349, %v7350
    %v7352 = vsub.s32 4294967266, %v7347
    %v7353 = vadd.s32 %v7352, 127
    %v7354 = vshll.u32 %v7353, 23
    %v7355 = vor.u32 4788187, %v7354
    %v7356 = vand.u32 2147483647, %v7355
    %v7358 = vcvt.s32.f32 %v7351
    %v7359 = vmul.f32 %v7358, %v7356
    %v7360 = vxor.u32 %v7359, 2147483648
    %v7361 = vsel %vm7278, %v7360, %v7359
    %v7362 = vsub.s32 4, %v7338
    %v7363 = vsel %vm7278, %v7362, %v7338
    %v7364 = vsel %vm7277, %v6130, %v7361
    %v7365 = vsel %vm7277, 0, %v7363
    %v7366 = vcosq.f32.pop %v7364
    %v7367 = vsinq.f32.pop %v7364
    %vm7368 = vweird.f32 %v6130
    %v7369 = vadd.s32 %v7365, 3
    %v7370 = vand.u32 %v7369, 3
    %vm7371 = vcmp.lt.s32.totalorder %v7370, 2
    %vm7372 = vcmp.eq.s32.totalorder %v7370, 0
    %v7373 = vxor.u32 %v7367, 2147483648
    %v7374 = vsel %vm7372, %v7366, %v7373
    %vm7375 = vcmp.eq.s32.totalorder %v7370, 2
    %v7376 = vxor.u32 %v7366, 2147483648
    %v7377 = vsel %vm7375, %v7376, %v7367
    %v7378 = vsel %vm7371, %v7374, %v7377
    %v7379 = vsel %vm7368, nan, %v7378
    %v7380 = vand.u32 2147483647, %v6131
    %vm7381 = vcmp.le.f32.partialorder %v7380, 0.7853982
    %vm7382 = vcmp.lt.s32.totalorder %v6131, 0
    %v7383 = vand.u32 %v6131, 2139095040
    %v7384 = vshrl.u32 %v7383, 23
    %v7385 = vsub.s32 %v7384, 127
    %v7386 = vand.u32 2147483647, %v6131
    %v7387 = vand.u32 %v7386, 8388607
    %v7388 = vor.u32 %v7387, 8388608
    %v7389 = vsub.s32 0, %v7388
    %v7390 = vadd.s32 %v7385, 1
    %vm7391 = vcmp.gt.s32.totalorder %v7390, 0
    %v7392 = vsel %vm7391, %v7390, 0
    %v7393 = vshrl.u32 %v7392, 5
    %v7394 = vand.u32 %v7392, 31
    %v7395 = vsub.s32 32, %v7394
    %v7396 = vshrl.u32 683565275, %v7395
    %v7397 = vshll.u32 683565275, %v7394
    %v7398 = vshrl.u32 2475754826, %v7395
    %v7399 = vor.u32 %v7397, %v7398
    %v7400 = vshll.u32 2475754826, %v7394
    %v7401 = vshrl.u32 2131351028, %v7395
    %v7402 = vor.u32 %v7400, %v7401
    %v7403 = vshll.u32 2131351028, %v7394
    %v7404 = vshrl.u32 2102212464, %v7395
    %v7405 = vor.u32 %v7403, %v7404
    %v7406 = vshll.u32 2102212464, %v7394
    %v7407 = vshrl.u32 920167782, %v7395
    %v7408 = vor.u32 %v7406, %v7407
    %v7409 = vshll.u32 920167782, %v7394
    %v7410 = vshrl.u32 1326507024, %v7395
    %v7411 = vor.u32 %v7409, %v7410
    %vm7412 = vcmp.lt.s32.totalorder %v7393, 1
    %vm7413 = vcmp.lt.s32.totalorder %v7393, 2
    %vm7414 = vcmp.lt.s32.totalorder %v7393, 3
    %vm7415 = vcmp.lt.s32.totalorder %v7393, 4
    %v7416 = vsel %vm7412, %v7396, %v7399
    %v7417 = vsel %vm7415, %v7405, 2102212464
    %v7418 = vsel %vm7414, %v7402, %v7417
    %v7419 = vsel %vm7413, %v7416, %v7418
    %v7420 = vsel %vm7412, %v7399, %v7402
    %v7421 = vsel %vm7415, %v7408, 920167782
    %v7422 = vsel %vm7414, %v7405, %v7421
    %v7423 = vsel %vm7413, %v7420, %v7422
    %v7424 = vsel %vm7412, %v7402, %v7405
    %v7425 = vsel %vm7415, %v7411, 1326507024
    %v7426 = vsel %vm7414, %v7408, %v7425
    %v7427 = vsel %vm7413, %v7424, %v7426
    %v7428 = vshll.u32 %v7388, 8
    %v7429 = vmul.u32.u64.compose %v7428, %v7427
    %v7430 = vextract.low.u32 %v7429
    %v7431 = vextract.high.u32 %v7429
    %v7432 = vmul.u32.u64.compose %v7428, %v7423
    %v7433 = vextract.low.u32 %v7432
    %v7434 = vextract.high.u32 %v7432
    %v7435 = vmul.u32 %v7428, %v7419
    %v7436 = vadd.s32 %v7431, %v7433
    %vm7437 = vc.u32 %v7431, %v7433
    %v7438 = vadd.s32 %v7434, 1
    %v7439 = vsel %vm7437, %v7438, %v7434
    %v7440 = vadd.s32 %v7435, %v7439
    %v7441 = vadd.s32 %v7440, 536870912
    %v7442 = vshrl.u32 %v7441, 30
    %v7443 = vshll.u32 %v7442, 30
    %v7444 = vsub.s32 %v7440, %v7443
    %vm7445 = vcmp.lt.s32.totalorder %v7444, 0
    %v7446 = vsub.s32 0, %v7444
    %v7447 = vsel %vm7445, %v7446, %v7444
    %v7448 = vclz %v7447
    %v7449 = vsub.s32 %v7448, 2
    %vm7450 = vcmp.gt.s32.totalorder 0, %v7449
    %v7451 = vsel %vm7450, 0, %v7449
    %v7452 = vsub.s32 32, %v7451
    %v7453 = vshll.u32 %v7444, %v7451
    %v7454 = vshrl.u32 %v7436, %v7452
    %v7455 = vor.u32 %v7453, %v7454
    %v7456 = vsub.s32 4294967266, %v7451
    %v7457 = vadd.s32 %v7456, 127
    %v7458 = vshll.u32 %v7457, 23
    %v7459 = vor.u32 4788187, %v7458
    %v7460 = vand.u32 2147483647, %v7459
    %v7462 = vcvt.s32.f32 %v7455
    %v7463 = vmul.f32 %v7462, %v7460
    %v7464 = vxor.u32 %v7463, 2147483648
    %v7465 = vsel %vm7382, %v7464, %v7463
    %v7466 = vsub.s32 4, %v7442
    %v7467 = vsel %vm7382, %v7466, %v7442
    %v7468 = vsel %vm7381, %v6131, %v7465
    %v7469 = vsel %vm7381, 0, %v7467
    %v7470 = vcosq.f32.pop %v7468
    %v7471 = vsinq.f32.pop %v7468
    %vm7472 = vweird.f32 %v6131
    %v7473 = vadd.s32 %v7469, 3
    %v7474 = vand.u32 %v7473, 3
    %vm7475 = vcmp.lt.s32.totalorder %v7474, 2
    %vm7476 = vcmp.eq.s32.totalorder %v7474, 0
    %v7477 = vxor.u32 %v7471, 2147483648
    %v7478 = vsel %vm7476, %v7470, %v7477
    %vm7479 = vcmp.eq.s32.totalorder %v7474, 2
    %v7480 = vxor.u32 %v7470, 2147483648
    %v7481 = vsel %vm7479, %v7480, %v7471
    %v7482 = vsel %vm7475, %v7478, %v7481
    %v7483 = vsel %vm7472, nan, %v7482
    %v7484 = vld [vmem:[%s4] sm:$0xff]
    %v7485 = vld [vmem:[%s4 + $0x8] sm:$0x1f]
    %v7488 = vlaneseq
    %v7489 = vshrl.u32 %v7488, 7
    %v7490 = vsub.s32 0, %v7489
    %v7491 = vrot.slane %v7484, %v7490
    %v7492 = vlaneseq
    %v7493 = vshrl.u32 %v7492, 7
    %v7494 = vsub.s32 1, %v7493
    %v7495 = vrot.slane %v7484, %v7494
    %v7496 = vlaneseq
    %v7497 = vshrl.u32 %v7496, 7
    %v7498 = vsub.s32 2, %v7497
    %v7499 = vrot.slane %v7484, %v7498
    %v7500 = vlaneseq
    %v7501 = vshrl.u32 %v7500, 7
    %v7502 = vsub.s32 3, %v7501
    %v7503 = vrot.slane %v7484, %v7502
    %v7504 = vlaneseq
    %v7505 = vshrl.u32 %v7504, 7
    %v7506 = vsub.s32 4, %v7505
    %v7507 = vrot.slane %v7484, %v7506
    %v7508 = vlaneseq
    %v7509 = vshrl.u32 %v7508, 7
    %v7510 = vsub.s32 5, %v7509
    %v7511 = vrot.slane %v7484, %v7510
    %v7512 = vlaneseq
    %v7513 = vshrl.u32 %v7512, 7
    %v7514 = vsub.s32 6, %v7513
    %v7515 = vrot.slane %v7484, %v7514
    %v7516 = vlaneseq
    %v7517 = vshrl.u32 %v7516, 7
    %v7518 = vsub.s32 7, %v7517
    %v7519 = vrot.slane %v7484, %v7518
    %v7520 = vlaneseq
    %v7521 = vshrl.u32 %v7520, 7
    %v7522 = vsub.s32 0, %v7521
    %v7523 = vrot.slane %v7485, %v7522
    %v7524 = vlaneseq
    %v7525 = vshrl.u32 %v7524, 7
    %v7526 = vsub.s32 1, %v7525
    %v7527 = vrot.slane %v7485, %v7526
    %v7528 = vlaneseq
    %v7529 = vshrl.u32 %v7528, 7
    %v7530 = vsub.s32 2, %v7529
    %v7531 = vrot.slane %v7485, %v7530
    %v7532 = vlaneseq
    %v7533 = vshrl.u32 %v7532, 7
    %v7534 = vsub.s32 3, %v7533
    %v7535 = vrot.slane %v7485, %v7534
    %v7536 = vlaneseq
    %v7537 = vshrl.u32 %v7536, 7
    %v7538 = vsub.s32 4, %v7537
    %v7539 = vrot.slane %v7485, %v7538
    %v7553 = vmul.f32 %v7491, %v1130
    %v7554 = vmul.f32 %v7495, %v1132
    %v7555 = vmul.f32 %v7499, %v1985
    %v7556 = vmul.f32 %v7503, %v1987
    %v7557 = vmul.f32 %v7507, %v2840
    %v7558 = vmul.f32 %v7511, %v2842
    %v7559 = vmul.f32 %v7515, %v3695
    %v7560 = vmul.f32 %v7519, %v3697
    %v7561 = vmul.f32 %v7523, %v4550
    %v7562 = vmul.f32 %v7527, %v4552
    %v7563 = vmul.f32 %v7531, %v5405
    %v7564 = vmul.f32 %v7535, %v5407
    %v7565 = vmul.f32 %v7539, %v6047
    %v7566 = vld [vmem:[#allocation7] sm:$0xff]
    %v7567 = vld [vmem:[#allocation7 + $0x8] sm:$0x1f]
    %v7570 = vlaneseq
    %v7571 = vshrl.u32 %v7570, 7
    %v7572 = vsub.s32 0, %v7571
    %v7573 = vrot.slane %v7566, %v7572
    %v7574 = vlaneseq
    %v7575 = vshrl.u32 %v7574, 7
    %v7576 = vsub.s32 1, %v7575
    %v7577 = vrot.slane %v7566, %v7576
    %v7578 = vlaneseq
    %v7579 = vshrl.u32 %v7578, 7
    %v7580 = vsub.s32 2, %v7579
    %v7581 = vrot.slane %v7566, %v7580
    %v7582 = vlaneseq
    %v7583 = vshrl.u32 %v7582, 7
    %v7584 = vsub.s32 3, %v7583
    %v7585 = vrot.slane %v7566, %v7584
    %v7586 = vlaneseq
    %v7587 = vshrl.u32 %v7586, 7
    %v7588 = vsub.s32 4, %v7587
    %v7589 = vrot.slane %v7566, %v7588
    %v7590 = vlaneseq
    %v7591 = vshrl.u32 %v7590, 7
    %v7592 = vsub.s32 5, %v7591
    %v7593 = vrot.slane %v7566, %v7592
    %v7594 = vlaneseq
    %v7595 = vshrl.u32 %v7594, 7
    %v7596 = vsub.s32 6, %v7595
    %v7597 = vrot.slane %v7566, %v7596
    %v7598 = vlaneseq
    %v7599 = vshrl.u32 %v7598, 7
    %v7600 = vsub.s32 7, %v7599
    %v7601 = vrot.slane %v7566, %v7600
    %v7602 = vlaneseq
    %v7603 = vshrl.u32 %v7602, 7
    %v7604 = vsub.s32 0, %v7603
    %v7605 = vrot.slane %v7567, %v7604
    %v7606 = vlaneseq
    %v7607 = vshrl.u32 %v7606, 7
    %v7608 = vsub.s32 1, %v7607
    %v7609 = vrot.slane %v7567, %v7608
    %v7610 = vlaneseq
    %v7611 = vshrl.u32 %v7610, 7
    %v7612 = vsub.s32 2, %v7611
    %v7613 = vrot.slane %v7567, %v7612
    %v7614 = vlaneseq
    %v7615 = vshrl.u32 %v7614, 7
    %v7616 = vsub.s32 3, %v7615
    %v7617 = vrot.slane %v7567, %v7616
    %v7618 = vlaneseq
    %v7619 = vshrl.u32 %v7618, 7
    %v7620 = vsub.s32 4, %v7619
    %v7621 = vrot.slane %v7567, %v7620
    %v7635 = vmul.f32 %v7573, %v6235
    %v7636 = vmul.f32 %v7577, %v6339
    %v7637 = vmul.f32 %v7581, %v6443
    %v7638 = vmul.f32 %v7585, %v6547
    %v7639 = vmul.f32 %v7589, %v6651
    %v7640 = vmul.f32 %v7593, %v6755
    %v7641 = vmul.f32 %v7597, %v6859
    %v7642 = vmul.f32 %v7601, %v6963
    %v7643 = vmul.f32 %v7605, %v7067
    %v7644 = vmul.f32 %v7609, %v7171
    %v7645 = vmul.f32 %v7613, %v7275
    %v7646 = vmul.f32 %v7617, %v7379
    %v7647 = vmul.f32 %v7621, %v7483
    %v7648 = vadd.f32 %v7553, %v7635
    %v7649 = vadd.f32 %v7554, %v7636
    %v7650 = vadd.f32 %v7555, %v7637
    %v7651 = vadd.f32 %v7556, %v7638
    %v7652 = vadd.f32 %v7557, %v7639
    %v7653 = vadd.f32 %v7558, %v7640
    %v7654 = vadd.f32 %v7559, %v7641
    %v7655 = vadd.f32 %v7560, %v7642
    %v7656 = vadd.f32 %v7561, %v7643
    %v7657 = vadd.f32 %v7562, %v7644
    %v7658 = vadd.f32 %v7563, %v7645
    %v7659 = vadd.f32 %v7564, %v7646
    %v7660 = vadd.f32 %v7565, %v7647
    %7661 = vst [vmem:[#allocation10] sm:$0xff] %v7648
    %7662 = vst [vmem:[#allocation10 + $0x8] sm:$0xff] %v7649
    %7663 = vst [vmem:[#allocation10 + $0x10] sm:$0xff] %v7650
    %7664 = vst [vmem:[#allocation10 + $0x18] sm:$0xff] %v7651
    %7665 = vst [vmem:[#allocation10 + $0x20] sm:$0xff] %v7652
    %7666 = vst [vmem:[#allocation10 + $0x28] sm:$0xff] %v7653
    %7667 = vst [vmem:[#allocation10 + $0x30] sm:$0xff] %v7654
    %7668 = vst [vmem:[#allocation10 + $0x38] sm:$0xff] %v7655
    %7669 = vst [vmem:[#allocation10 + $0x40] sm:$0xff] %v7656
    %7670 = vst [vmem:[#allocation10 + $0x48] sm:$0xff] %v7657
    %7671 = vst [vmem:[#allocation10 + $0x50] sm:$0xff] %v7658
    %7672 = vst [vmem:[#allocation10 + $0x58] sm:$0xff] %v7659
    %7673 = vst [vmem:[#allocation10 + $0x60] sm:$0xff] %v7660
    // Predicated region
    $region38: #{tpu_custom_call.1} parent=1 // pred_check
      _
    $region39: #{tpu_custom_call.1} parent=1 // pred_check_branch
      %7675 = sbr.rel (0) target = $region41
    $region40: #{tpu_custom_call.1} parent=1 // pred_region
      %s7677 = ssub.s32 1664, 1664
      %7678 = vsyncadd [#allocation4], %s7677
      %s7680 = sshll.u32 [#allocation10], 4
      %s7681 = int_to_ptr.vmem [resolvable:$true] %s7680
      %7683 = dma.vmem_to_hbm [thread:$0]  %s7681, 1664, %s5, [#allocation4]
    $region41: #{tpu_custom_call.1} parent=1 // pred_fallthru
      _
    // Predicated region
    $region42: #{tpu_custom_call.1} parent=1 // pred_check
      _
    $region43: #{tpu_custom_call.1} parent=1 // pred_check_branch
      %7685 = sbr.rel (0) target = $region45
    $region44: #{tpu_custom_call.1} parent=1 // pred_region
      %7686 = dma.done [#allocation4], 1664
    $region45: #{tpu_custom_call.1} parent=1 // pred_fallthru
      _
    %7687 = vsyncpa [#allocation3], 1
    %7688 = vsyncpa [#allocation6], 1
    %7689 = vsyncpa [#allocation9], 1
    %7690 = vsyncpa [#allocation4], 1

</llo_original>
